<compile_context>
chip_gen: v5e
topology: v5e:2x2
jax: 0.10.0
libtpu: 0.0.40
codegen_flags: <defaults>
</compile_context>

<pallas_src>
import math

import jax
import jax.numpy as jnp
from jax.experimental import pallas as pl
from jax.experimental.pallas import tpu as pltpu


def basic_block_kernel(x_ref, w1_ref, s1_ref, b1_ref, w2_ref, s2_ref, b2_ref,
                       out_ref, xpad_ref, hpad_ref, patch_ref):
    """Fused conv3x3 -> BN -> ReLU -> conv3x3 -> BN -> +identity -> ReLU.

    Per grid step (one image):
      x_ref     : (1, H, W, Cin)   unpadded input block (f32)
      w1_ref    : (9*Cin, Cout)    conv1 weights, tap-major (bf16)
      s1_ref/b1 : (1, Cout)        folded BN1 scale / bias (f32)
      w2_ref    : (9*Cout, Cout)   conv2 weights (bf16)
      s2_ref/b2 : (1, Cout)        folded BN2 scale / bias (f32)
      out_ref   : (1, H, W, Cout)
      xpad_ref  : (H+2, W+2, Cin)  VMEM scratch, padded input (bf16)
      hpad_ref  : (H+2, W+2, Cout) VMEM scratch, padded intermediate (bf16)
      patch_ref : (H*W, 9*Cout)    VMEM scratch, im2col patches (bf16)
    """
    _, H, W, Cin = x_ref.shape
    Cout = out_ref.shape[-1]
    Hp, Wp = H + 2, W + 2
    M = H * W
    cdt = jnp.bfloat16  # MXU operand dtype

    def zero_border(ref, C):
        # Zero ONLY the 1-wide halo border (2 rows + 2 cols), not the whole
        # tensor.  Done every step (not pl.when(program_id==0)) so it stays
        # correct when the "parallel" grid axis is split across TensorCores.
        ref[0:1, :, :] = jnp.zeros((1, Wp, C), cdt)
        ref[Hp - 1:Hp, :, :] = jnp.zeros((1, Wp, C), cdt)
        ref[:, 0:1, :] = jnp.zeros((Hp, 1, C), cdt)
        ref[:, Wp - 1:Wp, :] = jnp.zeros((Hp, 1, C), cdt)

    def im2col(src_ref, C):
        # Pack the 9 taps into one lane-contiguous (M, 9*C) bf16 buffer so the
        # conv becomes a single K=9*C MXU matmul.
        for dh in range(3):
            for dw in range(3):
                t = dh * 3 + dw
                patch_ref[:, t * C:(t + 1) * C] = (
                    src_ref[dh:dh + H, dw:dw + W, :].reshape(M, C))
        return patch_ref[...]

    # ---- stage input into padded scratch (halo handled in-kernel) ----------
    zero_border(xpad_ref, Cin)
    xpad_ref[1:H + 1, 1:W + 1, :] = x_ref[0].astype(cdt)

    # ---- conv1 (single im2col matmul) + bn1 + relu --------------------------
    a1 = jnp.dot(im2col(xpad_ref, Cin), w1_ref[...],
                 preferred_element_type=jnp.float32)           # (M, Cout) f32
    h = jnp.maximum(a1 * s1_ref[...] + b1_ref[...], 0.0)

    # ---- stage intermediate into padded scratch -----------------------------
    zero_border(hpad_ref, Cout)
    hpad_ref[1:H + 1, 1:W + 1, :] = h.reshape(H, W, Cout).astype(cdt)

    # ---- conv2 (single im2col matmul) + bn2 + residual + relu ---------------
    a2 = jnp.dot(im2col(hpad_ref, Cout), w2_ref[...],
                 preferred_element_type=jnp.float32)           # (M, Cout) f32
    o = (a2 * s2_ref[...] + b2_ref[...]).reshape(H, W, Cout)
    o = o + x_ref[0]                    # identity: unpadded input block (f32)
    out_ref[...] = jnp.maximum(o, 0.0).reshape(1, H, W, Cout)


def fold_bn(gamma, beta, mean, var, eps=1e-5):
    scale = gamma / jnp.sqrt(var + eps)
    bias = beta - mean * scale
    return (scale.reshape(1, -1).astype(jnp.float32),
            bias.reshape(1, -1).astype(jnp.float32))


@jax.jit
def basic_block_forward(x_nchw, params):
    """Wrapper: NCHW in/out (PyTorch convention), NHWC inside the kernel."""
    x = jnp.transpose(x_nchw, (0, 2, 3, 1)).astype(jnp.float32)       # NHWC
    N, H, W, Cin = x.shape

    w1, w2 = params["w1"], params["w2"]                               # OIHW
    Cout = w1.shape[0]
    assert Cin == Cout, "identity residual requires inplanes == planes"
    # TODO(synk): stride>1 / downsample branch not implemented.

    # OIHW -> (kh, kw, Cin, Cout) -> (9*Cin, Cout); bf16 operands for the MXU.
    w1k = jnp.transpose(w1, (2, 3, 1, 0)).reshape(9 * Cin, Cout).astype(jnp.bfloat16)
    w2k = jnp.transpose(w2, (2, 3, 1, 0)).reshape(9 * Cout, Cout).astype(jnp.bfloat16)

    s1, b1 = fold_bn(params["g1"], params["be1"], params["m1"], params["v1"])
    s2, b2 = fold_bn(params["g2"], params["be2"], params["m2"], params["v2"])

    M = H * W

    def nbytes(shape, dtype):
        return math.prod(shape) * jnp.dtype(dtype).itemsize

    scratch_bytes = (nbytes((H + 2, W + 2, Cin), jnp.bfloat16)
                     + nbytes((H + 2, W + 2, Cout), jnp.bfloat16)
                     + nbytes((M, 9 * Cout), jnp.bfloat16))
    per_step_bytes = (2 * nbytes((1, H, W, Cin), jnp.float32)       # x (double-buffered)
                      + 2 * nbytes((1, H, W, Cout), jnp.float32)    # out (double-buffered)
                      + nbytes(w1k.shape, jnp.bfloat16)
                      + nbytes(w2k.shape, jnp.bfloat16)
                      + 4 * nbytes((1, Cout), jnp.float32)
                      + scratch_bytes
                      + 8 * nbytes((M, Cout), jnp.float32))         # live f32 temporaries
    # Explicit scoped-VMEM budget with headroom, capped at v7x's 64 MiB VMEM.
    vmem_limit = int(min(64 * 2**20, max(32 * 2**20, 4 * per_step_bytes)))

    out_nhwc = pl.pallas_call(
        basic_block_kernel,
        out_shape=jax.ShapeDtypeStruct((N, H, W, Cout), jnp.float32),
        grid_spec=pltpu.PrefetchScalarGridSpec(
            num_scalar_prefetch=0,
            grid=(N,),                                   # one image per grid step
            in_specs=[
                pl.BlockSpec((1, H, W, Cin), lambda n: (n, 0, 0, 0)),
                pl.BlockSpec((9 * Cin, Cout), lambda n: (0, 0)),
                pl.BlockSpec((1, Cout), lambda n: (0, 0)),
                pl.BlockSpec((1, Cout), lambda n: (0, 0)),
                pl.BlockSpec((9 * Cout, Cout), lambda n: (0, 0)),
                pl.BlockSpec((1, Cout), lambda n: (0, 0)),
                pl.BlockSpec((1, Cout), lambda n: (0, 0)),
            ],
            out_specs=pl.BlockSpec((1, H, W, Cout), lambda n: (n, 0, 0, 0)),
            scratch_shapes=[
                pltpu.VMEM((H + 2, W + 2, Cin), jnp.bfloat16),   # padded input
                pltpu.VMEM((H + 2, W + 2, Cout), jnp.bfloat16),  # padded intermediate
                pltpu.VMEM((M, 9 * Cout), jnp.bfloat16),         # im2col patches
            ]),
        compiler_params=pltpu.CompilerParams(
            dimension_semantics=("parallel",),           # megacore split over batch
            vmem_limit_bytes=vmem_limit),
    )(x, w1k, s1, b1, w2k, s2, b2)

    return jnp.transpose(out_nhwc, (0, 3, 1, 2))                      # NCHW


def basic_block_reference(x_nchw, params):
    """Pure-JAX reference (NCHW, matches PyTorch semantics) for validation."""
    def conv(x, w):
        return jax.lax.conv_general_dilated(
            x, w, window_strides=(1, 1), padding=((1, 1), (1, 1)),
            dimension_numbers=("NCHW", "OIHW", "NCHW"))

    def bn(x, g, b, m, v, eps=1e-5):
        s = g / jnp.sqrt(v + eps)
        return x * s[None, :, None, None] + (b - m * s)[None, :, None, None]

    out = conv(x_nchw, params["w1"])
    out = jnp.maximum(bn(out, params["g1"], params["be1"], params["m1"], params["v1"]), 0.0)
    out = conv(out, params["w2"])
    out = bn(out, params["g2"], params["be2"], params["m2"], params["v2"])
    return jnp.maximum(out + x_nchw, 0.0)


if __name__ == "__main__":
    # Small shapes consistent with the module: inplanes = planes = 4, stride = 1.
    N, C, H, W = 2, 4, 16, 16
    key = jax.random.PRNGKey(0)
    ks = jax.random.split(key, 10)

    x = jax.random.normal(ks[0], (N, C, H, W), dtype=jnp.float32)

    params = {
        # conv weights (OIHW, PyTorch layout), no bias
        "w1": 0.1 * jax.random.normal(ks[1], (C, C, 3, 3), dtype=jnp.float32),
        "w2": 0.1 * jax.random.normal(ks[2], (C, C, 3, 3), dtype=jnp.float32),
        # BatchNorm (inference) params, deterministic but non-trivial
        "g1": 1.0 + 0.1 * jax.random.normal(ks[3], (C,), dtype=jnp.float32),
        "be1": 0.1 * jax.random.normal(ks[4], (C,), dtype=jnp.float32),
        "m1": 0.1 * jax.random.normal(ks[5], (C,), dtype=jnp.float32),
        "v1": 1.0 + 0.1 * jax.random.uniform(ks[6], (C,), dtype=jnp.float32),
        "g2": 1.0 + 0.1 * jax.random.normal(ks[7], (C,), dtype=jnp.float32),
        "be2": 0.1 * jax.random.normal(ks[8], (C,), dtype=jnp.float32),
        "m2": 0.1 * jax.random.normal(ks[9], (C,), dtype=jnp.float32),
        "v2": jnp.ones((C,), dtype=jnp.float32),
    }

    out = jax.block_until_ready(basic_block_forward(x, params))
    ref = jax.block_until_ready(basic_block_reference(x, params))

    assert out.shape == (N, C, H, W)
    max_err = jnp.max(jnp.abs(out - ref))
    # bf16 MXU operands with f32 accumulation -> loosened tolerance.
    assert jnp.allclose(out, ref, atol=5e-2, rtol=5e-2), f"max abs err = {max_err}"

    print("KERNEL_OK")
</pallas_src>

<mosaic_0001>
module attributes {stable_mosaic.version = 11 : i64} {
  func.func @basic_block_kernel(%arg0: i32, %arg1: memref<1x16x16x4xf32, #tpu.memory_space<vmem>>, %arg2: memref<36x4xbf16, #tpu.memory_space<vmem>>, %arg3: memref<1x4xf32, #tpu.memory_space<vmem>>, %arg4: memref<1x4xf32, #tpu.memory_space<vmem>>, %arg5: memref<36x4xbf16, #tpu.memory_space<vmem>>, %arg6: memref<1x4xf32, #tpu.memory_space<vmem>>, %arg7: memref<1x4xf32, #tpu.memory_space<vmem>>, %arg8: memref<1x16x16x4xf32, #tpu.memory_space<vmem>>, %arg9: memref<18x18x4xbf16, #tpu.memory_space<vmem>>, %arg10: memref<18x18x4xbf16, #tpu.memory_space<vmem>>, %arg11: memref<256x36xbf16, #tpu.memory_space<vmem>>) attributes {dimension_semantics = [#tpu.dimension_semantics<parallel>], iteration_bounds = array<i64: 2>, scalar_prefetch = 0 : i64, scratch_operands = 3 : i64, tpu.core_type = #tpu.core_type<tc>, window_params = [{transform_indices = @transform_0, window_bounds = array<i64: 1, 16, 16, 4>}, {pipeline_mode = #tpu.pipeline_mode<synchronous>, transform_indices = @transform_1, window_bounds = array<i64: 36, 4>}, {pipeline_mode = #tpu.pipeline_mode<synchronous>, transform_indices = @transform_2, window_bounds = array<i64: 1, 4>}, {pipeline_mode = #tpu.pipeline_mode<synchronous>, transform_indices = @transform_3, window_bounds = array<i64: 1, 4>}, {pipeline_mode = #tpu.pipeline_mode<synchronous>, transform_indices = @transform_4, window_bounds = array<i64: 36, 4>}, {pipeline_mode = #tpu.pipeline_mode<synchronous>, transform_indices = @transform_5, window_bounds = array<i64: 1, 4>}, {pipeline_mode = #tpu.pipeline_mode<synchronous>, transform_indices = @transform_6, window_bounds = array<i64: 1, 4>}, {transform_indices = @transform_7, window_bounds = array<i64: 1, 16, 16, 4>}]} {
    %cst = arith.constant 0.000000e+00 : bf16
    %0 = vector.broadcast %cst : bf16 to vector<1x18x4xbf16>
    %c0 = arith.constant 0 : index
    %c0_0 = arith.constant 0 : index
    %c0_1 = arith.constant 0 : index
    %1 = vector.load %arg9[%c0, %c0_0, %c0_1] : memref<18x18x4xbf16, #tpu.memory_space<vmem>>, vector<1x18x4xbf16>
    tpu.vector_store %arg9[%c0, %c0_0, %c0_1], %0 {strides = array<i32>} : memref<18x18x4xbf16, #tpu.memory_space<vmem>>, vector<1x18x4xbf16>,
    %cst_2 = arith.constant 0.000000e+00 : bf16
    %2 = vector.broadcast %cst_2 : bf16 to vector<1x18x4xbf16>
    %c17 = arith.constant 17 : index
    %c0_3 = arith.constant 0 : index
    %c0_4 = arith.constant 0 : index
    %3 = vector.load %arg9[%c17, %c0_3, %c0_4] : memref<18x18x4xbf16, #tpu.memory_space<vmem>>, vector<1x18x4xbf16>
    tpu.vector_store %arg9[%c17, %c0_3, %c0_4], %2 {strides = array<i32>} : memref<18x18x4xbf16, #tpu.memory_space<vmem>>, vector<1x18x4xbf16>,
    %cst_5 = arith.constant 0.000000e+00 : bf16
    %4 = vector.broadcast %cst_5 : bf16 to vector<18x1x4xbf16>
    %c0_6 = arith.constant 0 : index
    %c0_7 = arith.constant 0 : index
    %c0_8 = arith.constant 0 : index
    %5 = vector.load %arg9[%c0_6, %c0_7, %c0_8] : memref<18x18x4xbf16, #tpu.memory_space<vmem>>, vector<18x1x4xbf16>
    tpu.vector_store %arg9[%c0_6, %c0_7, %c0_8], %4 {strides = array<i32>} : memref<18x18x4xbf16, #tpu.memory_space<vmem>>, vector<18x1x4xbf16>,
    %cst_9 = arith.constant 0.000000e+00 : bf16
    %6 = vector.broadcast %cst_9 : bf16 to vector<18x1x4xbf16>
    %c0_10 = arith.constant 0 : index
    %c17_11 = arith.constant 17 : index
    %c0_12 = arith.constant 0 : index
    %7 = vector.load %arg9[%c0_10, %c17_11, %c0_12] : memref<18x18x4xbf16, #tpu.memory_space<vmem>>, vector<18x1x4xbf16>
    tpu.vector_store %arg9[%c0_10, %c17_11, %c0_12], %6 {strides = array<i32>} : memref<18x18x4xbf16, #tpu.memory_space<vmem>>, vector<18x1x4xbf16>,
    %c0_13 = arith.constant 0 : index
    %c0_14 = arith.constant 0 : index
    %c0_15 = arith.constant 0 : index
    %c0_16 = arith.constant 0 : index
    %8 = vector.load %arg1[%c0_13, %c0_14, %c0_15, %c0_16] : memref<1x16x16x4xf32, #tpu.memory_space<vmem>>, vector<1x16x16x4xf32>
    %9 = vector.shape_cast %8 : vector<1x16x16x4xf32> to vector<16x16x4xf32>
    %10 = arith.truncf %9 : vector<16x16x4xf32> to vector<16x16x4xbf16>
    %c1 = arith.constant 1 : index
    %c1_17 = arith.constant 1 : index
    %c0_18 = arith.constant 0 : index
    %11 = vector.load %arg9[%c1, %c1_17, %c0_18] : memref<18x18x4xbf16, #tpu.memory_space<vmem>>, vector<16x16x4xbf16>
    tpu.vector_store %arg9[%c1, %c1_17, %c0_18], %10 {strides = array<i32>} : memref<18x18x4xbf16, #tpu.memory_space<vmem>>, vector<16x16x4xbf16>,
    %c0_19 = arith.constant 0 : index
    %c0_20 = arith.constant 0 : index
    %c0_21 = arith.constant 0 : index
    %12 = vector.load %arg9[%c0_19, %c0_20, %c0_21] : memref<18x18x4xbf16, #tpu.memory_space<vmem>>, vector<16x16x4xbf16>
    %13 = vector.shape_cast %12 : vector<16x16x4xbf16> to vector<256x4xbf16>
    %c0_22 = arith.constant 0 : index
    %c0_23 = arith.constant 0 : index
    %14 = vector.load %arg11[%c0_22, %c0_23] : memref<256x36xbf16, #tpu.memory_space<vmem>>, vector<256x4xbf16>
    tpu.vector_store %arg11[%c0_22, %c0_23], %13 {strides = array<i32>} : memref<256x36xbf16, #tpu.memory_space<vmem>>, vector<256x4xbf16>,
    %c0_24 = arith.constant 0 : index
    %c1_25 = arith.constant 1 : index
    %c0_26 = arith.constant 0 : index
    %15 = vector.load %arg9[%c0_24, %c1_25, %c0_26] : memref<18x18x4xbf16, #tpu.memory_space<vmem>>, vector<16x16x4xbf16>
    %16 = vector.shape_cast %15 : vector<16x16x4xbf16> to vector<256x4xbf16>
    %c0_27 = arith.constant 0 : index
    %c4 = arith.constant 4 : index
    %17 = vector.load %arg11[%c0_27, %c4] : memref<256x36xbf16, #tpu.memory_space<vmem>>, vector<256x4xbf16>
    tpu.vector_store %arg11[%c0_27, %c4], %16 {strides = array<i32>} : memref<256x36xbf16, #tpu.memory_space<vmem>>, vector<256x4xbf16>,
    %c0_28 = arith.constant 0 : index
    %c2 = arith.constant 2 : index
    %c0_29 = arith.constant 0 : index
    %18 = vector.load %arg9[%c0_28, %c2, %c0_29] : memref<18x18x4xbf16, #tpu.memory_space<vmem>>, vector<16x16x4xbf16>
    %19 = vector.shape_cast %18 : vector<16x16x4xbf16> to vector<256x4xbf16>
    %c0_30 = arith.constant 0 : index
    %c8 = arith.constant 8 : index
    %20 = vector.load %arg11[%c0_30, %c8] : memref<256x36xbf16, #tpu.memory_space<vmem>>, vector<256x4xbf16>
    tpu.vector_store %arg11[%c0_30, %c8], %19 {strides = array<i32>} : memref<256x36xbf16, #tpu.memory_space<vmem>>, vector<256x4xbf16>,
    %c1_31 = arith.constant 1 : index
    %c0_32 = arith.constant 0 : index
    %c0_33 = arith.constant 0 : index
    %21 = vector.load %arg9[%c1_31, %c0_32, %c0_33] : memref<18x18x4xbf16, #tpu.memory_space<vmem>>, vector<16x16x4xbf16>
    %22 = vector.shape_cast %21 : vector<16x16x4xbf16> to vector<256x4xbf16>
    %c0_34 = arith.constant 0 : index
    %c12 = arith.constant 12 : index
    %23 = vector.load %arg11[%c0_34, %c12] : memref<256x36xbf16, #tpu.memory_space<vmem>>, vector<256x4xbf16>
    tpu.vector_store %arg11[%c0_34, %c12], %22 {strides = array<i32>} : memref<256x36xbf16, #tpu.memory_space<vmem>>, vector<256x4xbf16>,
    %c1_35 = arith.constant 1 : index
    %c1_36 = arith.constant 1 : index
    %c0_37 = arith.constant 0 : index
    %24 = vector.load %arg9[%c1_35, %c1_36, %c0_37] : memref<18x18x4xbf16, #tpu.memory_space<vmem>>, vector<16x16x4xbf16>
    %25 = vector.shape_cast %24 : vector<16x16x4xbf16> to vector<256x4xbf16>
    %c0_38 = arith.constant 0 : index
    %c16 = arith.constant 16 : index
    %26 = vector.load %arg11[%c0_38, %c16] : memref<256x36xbf16, #tpu.memory_space<vmem>>, vector<256x4xbf16>
    tpu.vector_store %arg11[%c0_38, %c16], %25 {strides = array<i32>} : memref<256x36xbf16, #tpu.memory_space<vmem>>, vector<256x4xbf16>,
    %c1_39 = arith.constant 1 : index
    %c2_40 = arith.constant 2 : index
    %c0_41 = arith.constant 0 : index
    %27 = vector.load %arg9[%c1_39, %c2_40, %c0_41] : memref<18x18x4xbf16, #tpu.memory_space<vmem>>, vector<16x16x4xbf16>
    %28 = vector.shape_cast %27 : vector<16x16x4xbf16> to vector<256x4xbf16>
    %c0_42 = arith.constant 0 : index
    %c20 = arith.constant 20 : index
    %29 = vector.load %arg11[%c0_42, %c20] : memref<256x36xbf16, #tpu.memory_space<vmem>>, vector<256x4xbf16>
    tpu.vector_store %arg11[%c0_42, %c20], %28 {strides = array<i32>} : memref<256x36xbf16, #tpu.memory_space<vmem>>, vector<256x4xbf16>,
    %c2_43 = arith.constant 2 : index
    %c0_44 = arith.constant 0 : index
    %c0_45 = arith.constant 0 : index
    %30 = vector.load %arg9[%c2_43, %c0_44, %c0_45] : memref<18x18x4xbf16, #tpu.memory_space<vmem>>, vector<16x16x4xbf16>
    %31 = vector.shape_cast %30 : vector<16x16x4xbf16> to vector<256x4xbf16>
    %c0_46 = arith.constant 0 : index
    %c24 = arith.constant 24 : index
    %32 = vector.load %arg11[%c0_46, %c24] : memref<256x36xbf16, #tpu.memory_space<vmem>>, vector<256x4xbf16>
    tpu.vector_store %arg11[%c0_46, %c24], %31 {strides = array<i32>} : memref<256x36xbf16, #tpu.memory_space<vmem>>, vector<256x4xbf16>,
    %c2_47 = arith.constant 2 : index
    %c1_48 = arith.constant 1 : index
    %c0_49 = arith.constant 0 : index
    %33 = vector.load %arg9[%c2_47, %c1_48, %c0_49] : memref<18x18x4xbf16, #tpu.memory_space<vmem>>, vector<16x16x4xbf16>
    %34 = vector.shape_cast %33 : vector<16x16x4xbf16> to vector<256x4xbf16>
    %c0_50 = arith.constant 0 : index
    %c28 = arith.constant 28 : index
    %35 = vector.load %arg11[%c0_50, %c28] : memref<256x36xbf16, #tpu.memory_space<vmem>>, vector<256x4xbf16>
    tpu.vector_store %arg11[%c0_50, %c28], %34 {strides = array<i32>} : memref<256x36xbf16, #tpu.memory_space<vmem>>, vector<256x4xbf16>,
    %c2_51 = arith.constant 2 : index
    %c2_52 = arith.constant 2 : index
    %c0_53 = arith.constant 0 : index
    %36 = vector.load %arg9[%c2_51, %c2_52, %c0_53] : memref<18x18x4xbf16, #tpu.memory_space<vmem>>, vector<16x16x4xbf16>
    %37 = vector.shape_cast %36 : vector<16x16x4xbf16> to vector<256x4xbf16>
    %c0_54 = arith.constant 0 : index
    %c32 = arith.constant 32 : index
    %38 = vector.load %arg11[%c0_54, %c32] : memref<256x36xbf16, #tpu.memory_space<vmem>>, vector<256x4xbf16>
    tpu.vector_store %arg11[%c0_54, %c32], %37 {strides = array<i32>} : memref<256x36xbf16, #tpu.memory_space<vmem>>, vector<256x4xbf16>,
    %c0_55 = arith.constant 0 : index
    %c0_56 = arith.constant 0 : index
    %39 = vector.load %arg11[%c0_55, %c0_56] : memref<256x36xbf16, #tpu.memory_space<vmem>>, vector<256x36xbf16>
    %c0_57 = arith.constant 0 : index
    %c0_58 = arith.constant 0 : index
    %40 = vector.load %arg2[%c0_57, %c0_58] : memref<36x4xbf16, #tpu.memory_space<vmem>>, vector<36x4xbf16>
    %cst_59 = arith.constant dense<0.000000e+00> : vector<256x4xf32>
    %41 = tpu.matmul %39, %40, %cst_59 {dimension_numbers = #tpu.dot_dimension_numbers<[1], [0], [0], [1], [0, 0, 1, 1], [], []>} : vector<256x36xbf16>, vector<36x4xbf16>, vector<256x4xf32> -> vector<256x4xf32>
    %c0_60 = arith.constant 0 : index
    %c0_61 = arith.constant 0 : index
    %42 = vector.load %arg3[%c0_60, %c0_61] : memref<1x4xf32, #tpu.memory_space<vmem>>, vector<1x4xf32>
    %43 = vector.broadcast %42 : vector<1x4xf32> to vector<256x4xf32>
    %44 = arith.mulf %41, %43 : vector<256x4xf32>
    %c0_62 = arith.constant 0 : index
    %c0_63 = arith.constant 0 : index
    %45 = vector.load %arg4[%c0_62, %c0_63] : memref<1x4xf32, #tpu.memory_space<vmem>>, vector<1x4xf32>
    %46 = vector.broadcast %45 : vector<1x4xf32> to vector<256x4xf32>
    %47 = arith.addf %44, %46 : vector<256x4xf32>
    %cst_64 = arith.constant 0.000000e+00 : f32
    %48 = vector.broadcast %cst_64 : f32 to vector<256x4xf32>
    %49 = arith.maximumf %47, %48 : vector<256x4xf32>
    %cst_65 = arith.constant 0.000000e+00 : bf16
    %50 = vector.broadcast %cst_65 : bf16 to vector<1x18x4xbf16>
    %c0_66 = arith.constant 0 : index
    %c0_67 = arith.constant 0 : index
    %c0_68 = arith.constant 0 : index
    %51 = vector.load %arg10[%c0_66, %c0_67, %c0_68] : memref<18x18x4xbf16, #tpu.memory_space<vmem>>, vector<1x18x4xbf16>
    tpu.vector_store %arg10[%c0_66, %c0_67, %c0_68], %50 {strides = array<i32>} : memref<18x18x4xbf16, #tpu.memory_space<vmem>>, vector<1x18x4xbf16>,
    %cst_69 = arith.constant 0.000000e+00 : bf16
    %52 = vector.broadcast %cst_69 : bf16 to vector<1x18x4xbf16>
    %c17_70 = arith.constant 17 : index
    %c0_71 = arith.constant 0 : index
    %c0_72 = arith.constant 0 : index
    %53 = vector.load %arg10[%c17_70, %c0_71, %c0_72] : memref<18x18x4xbf16, #tpu.memory_space<vmem>>, vector<1x18x4xbf16>
    tpu.vector_store %arg10[%c17_70, %c0_71, %c0_72], %52 {strides = array<i32>} : memref<18x18x4xbf16, #tpu.memory_space<vmem>>, vector<1x18x4xbf16>,
    %cst_73 = arith.constant 0.000000e+00 : bf16
    %54 = vector.broadcast %cst_73 : bf16 to vector<18x1x4xbf16>
    %c0_74 = arith.constant 0 : index
    %c0_75 = arith.constant 0 : index
    %c0_76 = arith.constant 0 : index
    %55 = vector.load %arg10[%c0_74, %c0_75, %c0_76] : memref<18x18x4xbf16, #tpu.memory_space<vmem>>, vector<18x1x4xbf16>
    tpu.vector_store %arg10[%c0_74, %c0_75, %c0_76], %54 {strides = array<i32>} : memref<18x18x4xbf16, #tpu.memory_space<vmem>>, vector<18x1x4xbf16>,
    %cst_77 = arith.constant 0.000000e+00 : bf16
    %56 = vector.broadcast %cst_77 : bf16 to vector<18x1x4xbf16>
    %c0_78 = arith.constant 0 : index
    %c17_79 = arith.constant 17 : index
    %c0_80 = arith.constant 0 : index
    %57 = vector.load %arg10[%c0_78, %c17_79, %c0_80] : memref<18x18x4xbf16, #tpu.memory_space<vmem>>, vector<18x1x4xbf16>
    tpu.vector_store %arg10[%c0_78, %c17_79, %c0_80], %56 {strides = array<i32>} : memref<18x18x4xbf16, #tpu.memory_space<vmem>>, vector<18x1x4xbf16>,
    %58 = vector.shape_cast %49 : vector<256x4xf32> to vector<16x16x4xf32>
    %59 = arith.truncf %58 : vector<16x16x4xf32> to vector<16x16x4xbf16>
    %c1_81 = arith.constant 1 : index
    %c1_82 = arith.constant 1 : index
    %c0_83 = arith.constant 0 : index
    %60 = vector.load %arg10[%c1_81, %c1_82, %c0_83] : memref<18x18x4xbf16, #tpu.memory_space<vmem>>, vector<16x16x4xbf16>
    tpu.vector_store %arg10[%c1_81, %c1_82, %c0_83], %59 {strides = array<i32>} : memref<18x18x4xbf16, #tpu.memory_space<vmem>>, vector<16x16x4xbf16>,
    %c0_84 = arith.constant 0 : index
    %c0_85 = arith.constant 0 : index
    %c0_86 = arith.constant 0 : index
    %61 = vector.load %arg10[%c0_84, %c0_85, %c0_86] : memref<18x18x4xbf16, #tpu.memory_space<vmem>>, vector<16x16x4xbf16>
    %62 = vector.shape_cast %61 : vector<16x16x4xbf16> to vector<256x4xbf16>
    %c0_87 = arith.constant 0 : index
    %c0_88 = arith.constant 0 : index
    %63 = vector.load %arg11[%c0_87, %c0_88] : memref<256x36xbf16, #tpu.memory_space<vmem>>, vector<256x4xbf16>
    tpu.vector_store %arg11[%c0_87, %c0_88], %62 {strides = array<i32>} : memref<256x36xbf16, #tpu.memory_space<vmem>>, vector<256x4xbf16>,
    %c0_89 = arith.constant 0 : index
    %c1_90 = arith.constant 1 : index
    %c0_91 = arith.constant 0 : index
    %64 = vector.load %arg10[%c0_89, %c1_90, %c0_91] : memref<18x18x4xbf16, #tpu.memory_space<vmem>>, vector<16x16x4xbf16>
    %65 = vector.shape_cast %64 : vector<16x16x4xbf16> to vector<256x4xbf16>
    %c0_92 = arith.constant 0 : index
    %c4_93 = arith.constant 4 : index
    %66 = vector.load %arg11[%c0_92, %c4_93] : memref<256x36xbf16, #tpu.memory_space<vmem>>, vector<256x4xbf16>
    tpu.vector_store %arg11[%c0_92, %c4_93], %65 {strides = array<i32>} : memref<256x36xbf16, #tpu.memory_space<vmem>>, vector<256x4xbf16>,
    %c0_94 = arith.constant 0 : index
    %c2_95 = arith.constant 2 : index
    %c0_96 = arith.constant 0 : index
    %67 = vector.load %arg10[%c0_94, %c2_95, %c0_96] : memref<18x18x4xbf16, #tpu.memory_space<vmem>>, vector<16x16x4xbf16>
    %68 = vector.shape_cast %67 : vector<16x16x4xbf16> to vector<256x4xbf16>
    %c0_97 = arith.constant 0 : index
    %c8_98 = arith.constant 8 : index
    %69 = vector.load %arg11[%c0_97, %c8_98] : memref<256x36xbf16, #tpu.memory_space<vmem>>, vector<256x4xbf16>
    tpu.vector_store %arg11[%c0_97, %c8_98], %68 {strides = array<i32>} : memref<256x36xbf16, #tpu.memory_space<vmem>>, vector<256x4xbf16>,
    %c1_99 = arith.constant 1 : index
    %c0_100 = arith.constant 0 : index
    %c0_101 = arith.constant 0 : index
    %70 = vector.load %arg10[%c1_99, %c0_100, %c0_101] : memref<18x18x4xbf16, #tpu.memory_space<vmem>>, vector<16x16x4xbf16>
    %71 = vector.shape_cast %70 : vector<16x16x4xbf16> to vector<256x4xbf16>
    %c0_102 = arith.constant 0 : index
    %c12_103 = arith.constant 12 : index
    %72 = vector.load %arg11[%c0_102, %c12_103] : memref<256x36xbf16, #tpu.memory_space<vmem>>, vector<256x4xbf16>
    tpu.vector_store %arg11[%c0_102, %c12_103], %71 {strides = array<i32>} : memref<256x36xbf16, #tpu.memory_space<vmem>>, vector<256x4xbf16>,
    %c1_104 = arith.constant 1 : index
    %c1_105 = arith.constant 1 : index
    %c0_106 = arith.constant 0 : index
    %73 = vector.load %arg10[%c1_104, %c1_105, %c0_106] : memref<18x18x4xbf16, #tpu.memory_space<vmem>>, vector<16x16x4xbf16>
    %74 = vector.shape_cast %73 : vector<16x16x4xbf16> to vector<256x4xbf16>
    %c0_107 = arith.constant 0 : index
    %c16_108 = arith.constant 16 : index
    %75 = vector.load %arg11[%c0_107, %c16_108] : memref<256x36xbf16, #tpu.memory_space<vmem>>, vector<256x4xbf16>
    tpu.vector_store %arg11[%c0_107, %c16_108], %74 {strides = array<i32>} : memref<256x36xbf16, #tpu.memory_space<vmem>>, vector<256x4xbf16>,
    %c1_109 = arith.constant 1 : index
    %c2_110 = arith.constant 2 : index
    %c0_111 = arith.constant 0 : index
    %76 = vector.load %arg10[%c1_109, %c2_110, %c0_111] : memref<18x18x4xbf16, #tpu.memory_space<vmem>>, vector<16x16x4xbf16>
    %77 = vector.shape_cast %76 : vector<16x16x4xbf16> to vector<256x4xbf16>
    %c0_112 = arith.constant 0 : index
    %c20_113 = arith.constant 20 : index
    %78 = vector.load %arg11[%c0_112, %c20_113] : memref<256x36xbf16, #tpu.memory_space<vmem>>, vector<256x4xbf16>
    tpu.vector_store %arg11[%c0_112, %c20_113], %77 {strides = array<i32>} : memref<256x36xbf16, #tpu.memory_space<vmem>>, vector<256x4xbf16>,
    %c2_114 = arith.constant 2 : index
    %c0_115 = arith.constant 0 : index
    %c0_116 = arith.constant 0 : index
    %79 = vector.load %arg10[%c2_114, %c0_115, %c0_116] : memref<18x18x4xbf16, #tpu.memory_space<vmem>>, vector<16x16x4xbf16>
    %80 = vector.shape_cast %79 : vector<16x16x4xbf16> to vector<256x4xbf16>
    %c0_117 = arith.constant 0 : index
    %c24_118 = arith.constant 24 : index
    %81 = vector.load %arg11[%c0_117, %c24_118] : memref<256x36xbf16, #tpu.memory_space<vmem>>, vector<256x4xbf16>
    tpu.vector_store %arg11[%c0_117, %c24_118], %80 {strides = array<i32>} : memref<256x36xbf16, #tpu.memory_space<vmem>>, vector<256x4xbf16>,
    %c2_119 = arith.constant 2 : index
    %c1_120 = arith.constant 1 : index
    %c0_121 = arith.constant 0 : index
    %82 = vector.load %arg10[%c2_119, %c1_120, %c0_121] : memref<18x18x4xbf16, #tpu.memory_space<vmem>>, vector<16x16x4xbf16>
    %83 = vector.shape_cast %82 : vector<16x16x4xbf16> to vector<256x4xbf16>
    %c0_122 = arith.constant 0 : index
    %c28_123 = arith.constant 28 : index
    %84 = vector.load %arg11[%c0_122, %c28_123] : memref<256x36xbf16, #tpu.memory_space<vmem>>, vector<256x4xbf16>
    tpu.vector_store %arg11[%c0_122, %c28_123], %83 {strides = array<i32>} : memref<256x36xbf16, #tpu.memory_space<vmem>>, vector<256x4xbf16>,
    %c2_124 = arith.constant 2 : index
    %c2_125 = arith.constant 2 : index
    %c0_126 = arith.constant 0 : index
    %85 = vector.load %arg10[%c2_124, %c2_125, %c0_126] : memref<18x18x4xbf16, #tpu.memory_space<vmem>>, vector<16x16x4xbf16>
    %86 = vector.shape_cast %85 : vector<16x16x4xbf16> to vector<256x4xbf16>
    %c0_127 = arith.constant 0 : index
    %c32_128 = arith.constant 32 : index
    %87 = vector.load %arg11[%c0_127, %c32_128] : memref<256x36xbf16, #tpu.memory_space<vmem>>, vector<256x4xbf16>
    tpu.vector_store %arg11[%c0_127, %c32_128], %86 {strides = array<i32>} : memref<256x36xbf16, #tpu.memory_space<vmem>>, vector<256x4xbf16>,
    %c0_129 = arith.constant 0 : index
    %c0_130 = arith.constant 0 : index
    %88 = vector.load %arg11[%c0_129, %c0_130] : memref<256x36xbf16, #tpu.memory_space<vmem>>, vector<256x36xbf16>
    %c0_131 = arith.constant 0 : index
    %c0_132 = arith.constant 0 : index
    %89 = vector.load %arg5[%c0_131, %c0_132] : memref<36x4xbf16, #tpu.memory_space<vmem>>, vector<36x4xbf16>
    %cst_133 = arith.constant dense<0.000000e+00> : vector<256x4xf32>
    %90 = tpu.matmul %88, %89, %cst_133 {dimension_numbers = #tpu.dot_dimension_numbers<[1], [0], [0], [1], [0, 0, 1, 1], [], []>} : vector<256x36xbf16>, vector<36x4xbf16>, vector<256x4xf32> -> vector<256x4xf32>
    %c0_134 = arith.constant 0 : index
    %c0_135 = arith.constant 0 : index
    %91 = vector.load %arg6[%c0_134, %c0_135] : memref<1x4xf32, #tpu.memory_space<vmem>>, vector<1x4xf32>
    %92 = vector.broadcast %91 : vector<1x4xf32> to vector<256x4xf32>
    %93 = arith.mulf %90, %92 : vector<256x4xf32>
    %c0_136 = arith.constant 0 : index
    %c0_137 = arith.constant 0 : index
    %94 = vector.load %arg7[%c0_136, %c0_137] : memref<1x4xf32, #tpu.memory_space<vmem>>, vector<1x4xf32>
    %95 = vector.broadcast %94 : vector<1x4xf32> to vector<256x4xf32>
    %96 = arith.addf %93, %95 : vector<256x4xf32>
    %97 = vector.shape_cast %96 : vector<256x4xf32> to vector<16x16x4xf32>
    %c0_138 = arith.constant 0 : index
    %c0_139 = arith.constant 0 : index
    %c0_140 = arith.constant 0 : index
    %c0_141 = arith.constant 0 : index
    %98 = vector.load %arg1[%c0_138, %c0_139, %c0_140, %c0_141] : memref<1x16x16x4xf32, #tpu.memory_space<vmem>>, vector<1x16x16x4xf32>
    %99 = vector.shape_cast %98 : vector<1x16x16x4xf32> to vector<16x16x4xf32>
    %100 = arith.addf %97, %99 : vector<16x16x4xf32>
    %cst_142 = arith.constant 0.000000e+00 : f32
    %101 = vector.broadcast %cst_142 : f32 to vector<16x16x4xf32>
    %102 = arith.maximumf %100, %101 : vector<16x16x4xf32>
    %103 = vector.shape_cast %102 : vector<16x16x4xf32> to vector<1x16x16x4xf32>
    %c0_143 = arith.constant 0 : index
    %c0_144 = arith.constant 0 : index
    %c0_145 = arith.constant 0 : index
    %c0_146 = arith.constant 0 : index
    %104 = vector.load %arg8[%c0_143, %c0_144, %c0_145, %c0_146] : memref<1x16x16x4xf32, #tpu.memory_space<vmem>>, vector<1x16x16x4xf32>
    tpu.vector_store %arg8[%c0_143, %c0_144, %c0_145, %c0_146], %103 {strides = array<i32>} : memref<1x16x16x4xf32, #tpu.memory_space<vmem>>, vector<1x16x16x4xf32>,
    return
  }
  func.func @transform_0(%arg0: i32) -> (i32, i32, i32, i32) {
    %c0_i32 = arith.constant 0 : i32
    %c0_i32_0 = arith.constant 0 : i32
    %c0_i32_1 = arith.constant 0 : i32
    %c0_i32_2 = arith.constant 0 : i32
    return %arg0, %c0_i32, %c0_i32_0, %c0_i32_1 : i32, i32, i32, i32
  }
  func.func @transform_1(%arg0: i32) -> (i32, i32) {
    %c0_i32 = arith.constant 0 : i32
    %c0_i32_0 = arith.constant 0 : i32
    %c0_i32_1 = arith.constant 0 : i32
    return %c0_i32, %c0_i32_0 : i32, i32
  }
  func.func @transform_2(%arg0: i32) -> (i32, i32) {
    %c0_i32 = arith.constant 0 : i32
    %c0_i32_0 = arith.constant 0 : i32
    %c0_i32_1 = arith.constant 0 : i32
    return %c0_i32, %c0_i32_0 : i32, i32
  }
  func.func @transform_3(%arg0: i32) -> (i32, i32) {
    %c0_i32 = arith.constant 0 : i32
    %c0_i32_0 = arith.constant 0 : i32
    %c0_i32_1 = arith.constant 0 : i32
    return %c0_i32, %c0_i32_0 : i32, i32
  }
  func.func @transform_4(%arg0: i32) -> (i32, i32) {
    %c0_i32 = arith.constant 0 : i32
    %c0_i32_0 = arith.constant 0 : i32
    %c0_i32_1 = arith.constant 0 : i32
    return %c0_i32, %c0_i32_0 : i32, i32
  }
  func.func @transform_5(%arg0: i32) -> (i32, i32) {
    %c0_i32 = arith.constant 0 : i32
    %c0_i32_0 = arith.constant 0 : i32
    %c0_i32_1 = arith.constant 0 : i32
    return %c0_i32, %c0_i32_0 : i32, i32
  }
  func.func @transform_6(%arg0: i32) -> (i32, i32) {
    %c0_i32 = arith.constant 0 : i32
    %c0_i32_0 = arith.constant 0 : i32
    %c0_i32_1 = arith.constant 0 : i32
    return %c0_i32, %c0_i32_0 : i32, i32
  }
  func.func @transform_7(%arg0: i32) -> (i32, i32, i32, i32) {
    %c0_i32 = arith.constant 0 : i32
    %c0_i32_0 = arith.constant 0 : i32
    %c0_i32_1 = arith.constant 0 : i32
    %c0_i32_2 = arith.constant 0 : i32
    return %arg0, %c0_i32, %c0_i32_0, %c0_i32_1 : i32, i32, i32, i32
  }
}

</mosaic_0001>

<llo_original>
// kernel: basic_block_forward.1
$region0: #{basic_block_forward.1}
  #allocation0 [shape = 'u32[]', space=smem, size = 0x4, offset = 0x4, fixed_abs, tag = 'smem constant byte address 0x4 - core index']
  #allocation1 [shape = 'u32[72,128]{1,0:T(1,128)}', space=vmem, size = 0x9000, scoped, tag = 'internal scratch']
  #allocation2 [shape = 'bf16[18,18,4]{2,1,0:T(8,128)(2,1)}', space=vmem, size = 0x1b000, scoped, tag = 'scratch operand']
  #allocation3 [shape = 'bf16[18,18,4]{2,1,0:T(8,128)(2,1)}', space=vmem, size = 0x1b000, scoped, tag = 'scratch operand']
  #allocation4 [shape = 'bf16[256,36]{1,0:T(8,128)(2,1)}', space=vmem, size = 0x10000, scoped, tag = 'scratch operand']
  %s0 = inlined_call_operand.vmem [shape: f32[2,16,16,4], index: 0, kind: input, shape index: {}]
  %s1 = inlined_call_operand.vmem [shape: bf16[36,4], index: 1, kind: input, shape index: {}]
  %s2 = inlined_call_operand.vmem [shape: f32[1,4], index: 2, kind: input, shape index: {}]
  %s3 = inlined_call_operand.vmem [shape: f32[1,4], index: 3, kind: input, shape index: {}]
  %s4 = inlined_call_operand.vmem [shape: bf16[36,4], index: 4, kind: input, shape index: {}]
  %s5 = inlined_call_operand.vmem [shape: f32[1,4], index: 5, kind: input, shape index: {}]
  %s6 = inlined_call_operand.vmem [shape: f32[1,4], index: 6, kind: input, shape index: {}]
  %s7 = inlined_call_operand.vmem [shape: f32[2,16,16,4], index: 7, kind: output, shape index: {}]
  %s8 = sld [smem:[#allocation0]]
  $region61: #{basic_block_forward.1} parent=0
    _
  %s10 = ssub.s32 1, %s8
  %s11 = scalar_select 0, %s10, %s8
  loop: start=0, step=1, limit=4
  $region2: #{basic_block_forward.1} parent=0 // loop_pre_header
    _
  $region3: #{basic_block_forward.1} parent=0 // loop_header
    %s13 = sphi 0, %s17
    %p14 = scmp.ge.s32.totalorder %s13, 4
    %s23 = sphi 0, %s25
    %s26 = sphi 0, %s23
    %s27 = sphi 0, %s26
    %s43 = sphi 0, %s27
    %s47 = sphi 0, %s47
    %s49 = sphi 0, %s47
    %s50 = sphi 0, %s49
    %s64 = sphi 0, %s50
    %s68 = sphi 0, %s68
    %s70 = sphi 0, %s68
    %s71 = sphi 0, %s70
    %s85 = sphi 0, %s71
    %s89 = sphi 0, %s89
    %s91 = sphi 0, %s89
    %s92 = sphi 0, %s91
    %s106 = sphi 0, %s92
    %s110 = sphi 0, %s110
    %s112 = sphi 0, %s110
    %s113 = sphi 0, %s112
    %s127 = sphi 0, %s113
    %s131 = sphi 0, %s131
    %s133 = sphi 0, %s131
    %s134 = sphi 0, %s133
    %s148 = sphi 0, %s134
    %s152 = sphi 0, %s152
    %s154 = sphi 0, %s152
    %s155 = sphi 0, %s154
    %s169 = sphi 0, %s155
    %s175 = sphi 0, %s177
    %s178 = sphi 0, %s175
    %s179 = sphi 0, %s178
    %s195 = sphi 0, %s179
  $region4: #{basic_block_forward.1} parent=0 // loop_header_branch
    %16 = sbr.rel (%p14) target = $region8
  $region5: #{basic_block_forward.1} parent=0 // loop_body
    %s18 = ssub.s32 %s13, 1
    %s19 = ssub.s32 %s13, 2
    %s20 = sadd.s32 %s13, 1
    %s21 = ssub.s32 %s13, %s20
    %p22 = scmp.eq.s32.totalorder %s21, 0
    %s24 = sadd.s32 %s23, 1
    %s25 = scalar_select %p22, %s23, %s24
    %p28 = pneg %p22
    %p29 = scmp.eq.s32.totalorder %s13, 1
    %p30 = por %p28, %p29
    %p31 = scmp.ne.s32.totalorder %s23, %s26
    %p32 = scmp.eq.s32.totalorder %s13, 0
    %p33 = por %p31, %p32
    %p34 = scmp.ne.s32.totalorder %s23, %s26
    %p35 = scmp.eq.s32.totalorder %s18, 1
    %p36 = por %p34, %p35
    %p37 = scmp.ne.s32.totalorder %s26, %s27
    %p38 = scmp.eq.s32.totalorder %s18, 0
    %p39 = por %p37, %p38
    %p40 = scmp.ne.s32.totalorder %s26, %s27
    %p41 = scmp.eq.s32.totalorder %s19, 1
    %p42 = por %p40, %p41
    %p44 = scmp.ne.s32.totalorder %s27, %s43
    %p45 = scmp.eq.s32.totalorder %s19, 0
    %p46 = por %p44, %p45
    %s48 = sadd.s32 %s47, 1
    %p51 = scmp.eq.s32.totalorder %s13, 1
    %p52 = scmp.ne.s32.totalorder %s47, %s49
    %p53 = scmp.eq.s32.totalorder %s13, 0
    %p54 = por %p52, %p53
    %p55 = scmp.ne.s32.totalorder %s47, %s49
    %p56 = scmp.eq.s32.totalorder %s18, 1
    %p57 = por %p55, %p56
    %p58 = scmp.ne.s32.totalorder %s49, %s50
    %p59 = scmp.eq.s32.totalorder %s18, 0
    %p60 = por %p58, %p59
    %p61 = scmp.ne.s32.totalorder %s49, %s50
    %p62 = scmp.eq.s32.totalorder %s19, 1
    %p63 = por %p61, %p62
    %p65 = scmp.ne.s32.totalorder %s50, %s64
    %p66 = scmp.eq.s32.totalorder %s19, 0
    %p67 = por %p65, %p66
    %s69 = sadd.s32 %s68, 1
    %p72 = scmp.eq.s32.totalorder %s13, 1
    %p73 = scmp.ne.s32.totalorder %s68, %s70
    %p74 = scmp.eq.s32.totalorder %s13, 0
    %p75 = por %p73, %p74
    %p76 = scmp.ne.s32.totalorder %s68, %s70
    %p77 = scmp.eq.s32.totalorder %s18, 1
    %p78 = por %p76, %p77
    %p79 = scmp.ne.s32.totalorder %s70, %s71
    %p80 = scmp.eq.s32.totalorder %s18, 0
    %p81 = por %p79, %p80
    %p82 = scmp.ne.s32.totalorder %s70, %s71
    %p83 = scmp.eq.s32.totalorder %s19, 1
    %p84 = por %p82, %p83
    %p86 = scmp.ne.s32.totalorder %s71, %s85
    %p87 = scmp.eq.s32.totalorder %s19, 0
    %p88 = por %p86, %p87
    %s90 = sadd.s32 %s89, 1
    %p93 = scmp.eq.s32.totalorder %s13, 1
    %p94 = scmp.ne.s32.totalorder %s89, %s91
    %p95 = scmp.eq.s32.totalorder %s13, 0
    %p96 = por %p94, %p95
    %p97 = scmp.ne.s32.totalorder %s89, %s91
    %p98 = scmp.eq.s32.totalorder %s18, 1
    %p99 = por %p97, %p98
    %p100 = scmp.ne.s32.totalorder %s91, %s92
    %p101 = scmp.eq.s32.totalorder %s18, 0
    %p102 = por %p100, %p101
    %p103 = scmp.ne.s32.totalorder %s91, %s92
    %p104 = scmp.eq.s32.totalorder %s19, 1
    %p105 = por %p103, %p104
    %p107 = scmp.ne.s32.totalorder %s92, %s106
    %p108 = scmp.eq.s32.totalorder %s19, 0
    %p109 = por %p107, %p108
    %s111 = sadd.s32 %s110, 1
    %p114 = scmp.eq.s32.totalorder %s13, 1
    %p115 = scmp.ne.s32.totalorder %s110, %s112
    %p116 = scmp.eq.s32.totalorder %s13, 0
    %p117 = por %p115, %p116
    %p118 = scmp.ne.s32.totalorder %s110, %s112
    %p119 = scmp.eq.s32.totalorder %s18, 1
    %p120 = por %p118, %p119
    %p121 = scmp.ne.s32.totalorder %s112, %s113
    %p122 = scmp.eq.s32.totalorder %s18, 0
    %p123 = por %p121, %p122
    %p124 = scmp.ne.s32.totalorder %s112, %s113
    %p125 = scmp.eq.s32.totalorder %s19, 1
    %p126 = por %p124, %p125
    %p128 = scmp.ne.s32.totalorder %s113, %s127
    %p129 = scmp.eq.s32.totalorder %s19, 0
    %p130 = por %p128, %p129
    %s132 = sadd.s32 %s131, 1
    %p135 = scmp.eq.s32.totalorder %s13, 1
    %p136 = scmp.ne.s32.totalorder %s131, %s133
    %p137 = scmp.eq.s32.totalorder %s13, 0
    %p138 = por %p136, %p137
    %p139 = scmp.ne.s32.totalorder %s131, %s133
    %p140 = scmp.eq.s32.totalorder %s18, 1
    %p141 = por %p139, %p140
    %p142 = scmp.ne.s32.totalorder %s133, %s134
    %p143 = scmp.eq.s32.totalorder %s18, 0
    %p144 = por %p142, %p143
    %p145 = scmp.ne.s32.totalorder %s133, %s134
    %p146 = scmp.eq.s32.totalorder %s19, 1
    %p147 = por %p145, %p146
    %p149 = scmp.ne.s32.totalorder %s134, %s148
    %p150 = scmp.eq.s32.totalorder %s19, 0
    %p151 = por %p149, %p150
    %s153 = sadd.s32 %s152, 1
    %p156 = scmp.eq.s32.totalorder %s13, 1
    %p157 = scmp.ne.s32.totalorder %s152, %s154
    %p158 = scmp.eq.s32.totalorder %s13, 0
    %p159 = por %p157, %p158
    %p160 = scmp.ne.s32.totalorder %s152, %s154
    %p161 = scmp.eq.s32.totalorder %s18, 1
    %p162 = por %p160, %p161
    %p163 = scmp.ne.s32.totalorder %s154, %s155
    %p164 = scmp.eq.s32.totalorder %s18, 0
    %p165 = por %p163, %p164
    %p166 = scmp.ne.s32.totalorder %s154, %s155
    %p167 = scmp.eq.s32.totalorder %s19, 1
    %p168 = por %p166, %p167
    %p170 = scmp.ne.s32.totalorder %s155, %s169
    %p171 = scmp.eq.s32.totalorder %s19, 0
    %p172 = por %p170, %p171
    %s173 = ssub.s32 %s13, %s20
    %p174 = scmp.eq.s32.totalorder %s173, 0
    %s176 = sadd.s32 %s175, 1
    %s177 = scalar_select %p174, %s175, %s176
    %p180 = pneg %p174
    %p181 = scmp.eq.s32.totalorder %s13, 1
    %p182 = por %p180, %p181
    %p183 = scmp.ne.s32.totalorder %s175, %s178
    %p184 = scmp.eq.s32.totalorder %s13, 0
    %p185 = por %p183, %p184
    %p186 = scmp.ne.s32.totalorder %s175, %s178
    %p187 = scmp.eq.s32.totalorder %s18, 1
    %p188 = por %p186, %p187
    %p189 = scmp.ne.s32.totalorder %s178, %s179
    %p190 = scmp.eq.s32.totalorder %s18, 0
    %p191 = por %p189, %p190
    %p192 = scmp.ne.s32.totalorder %s178, %s179
    %p193 = scmp.eq.s32.totalorder %s19, 1
    %p194 = por %p192, %p193
    %p196 = scmp.ne.s32.totalorder %s179, %s195
    %p197 = scmp.eq.s32.totalorder %s19, 0
    %p198 = por %p196, %p197
    %p199 = scmp.le.s32.totalorder 1, %s13
    %p200 = scmp.lt.s32.totalorder %s13, 3
    %p201 = pnand %p199, %p200
    %p202 = pneg %p201
    // Predicated region
    $region9: #{basic_block_forward.1} parent=5 // pred_check
      _
    $region10: #{basic_block_forward.1} parent=5 // pred_check_branch
      %204 = sbr.rel (%p201) target = $region12
    $region11: #{basic_block_forward.1} parent=5 // pred_region
      %s205 = ssub.s32 %s13, 1
      // Predicated region
      $region13: #{basic_block_forward.1} parent=11 // pred_check
        %p206 = pneg %p60
      $region14: #{basic_block_forward.1} parent=11 // pred_check_branch
        %208 = sbr.rel (%p206) target = $region16
      $region15: #{basic_block_forward.1} parent=11 // pred_region
        _
      $region16: #{basic_block_forward.1} parent=11 // pred_fallthru
        _
      // Predicated region
      $region17: #{basic_block_forward.1} parent=11 // pred_check
        %p209 = pneg %p81
      $region18: #{basic_block_forward.1} parent=11 // pred_check_branch
        %211 = sbr.rel (%p209) target = $region20
      $region19: #{basic_block_forward.1} parent=11 // pred_region
        _
      $region20: #{basic_block_forward.1} parent=11 // pred_fallthru
        _
      // Predicated region
      $region21: #{basic_block_forward.1} parent=11 // pred_check
        %p212 = pneg %p102
      $region22: #{basic_block_forward.1} parent=11 // pred_check_branch
        %214 = sbr.rel (%p212) target = $region24
      $region23: #{basic_block_forward.1} parent=11 // pred_region
        _
      $region24: #{basic_block_forward.1} parent=11 // pred_fallthru
        _
      // Predicated region
      $region25: #{basic_block_forward.1} parent=11 // pred_check
        %p215 = pneg %p123
      $region26: #{basic_block_forward.1} parent=11 // pred_check_branch
        %217 = sbr.rel (%p215) target = $region28
      $region27: #{basic_block_forward.1} parent=11 // pred_region
        _
      $region28: #{basic_block_forward.1} parent=11 // pred_fallthru
        _
      // Predicated region
      $region29: #{basic_block_forward.1} parent=11 // pred_check
        %p218 = pneg %p144
      $region30: #{basic_block_forward.1} parent=11 // pred_check_branch
        %220 = sbr.rel (%p218) target = $region32
      $region31: #{basic_block_forward.1} parent=11 // pred_region
        _
      $region32: #{basic_block_forward.1} parent=11 // pred_fallthru
        _
      // Predicated region
      $region33: #{basic_block_forward.1} parent=11 // pred_check
        %p221 = pneg %p165
      $region34: #{basic_block_forward.1} parent=11 // pred_check_branch
        %223 = sbr.rel (%p221) target = $region36
      $region35: #{basic_block_forward.1} parent=11 // pred_region
        _
      $region36: #{basic_block_forward.1} parent=11 // pred_fallthru
        _
    $region12: #{basic_block_forward.1} parent=5 // pred_fallthru
      _
    %p224 = scmp.lt.s32.totalorder %s13, 2
    // Predicated region
    $region37: #{basic_block_forward.1} parent=5 // pred_check
      %p225 = pneg %p224
    $region38: #{basic_block_forward.1} parent=5 // pred_check_branch
      %227 = sbr.rel (%p225) target = $region40
    $region39: #{basic_block_forward.1} parent=5 // pred_region
      // Predicated region
      $region41: #{basic_block_forward.1} parent=39 // pred_check
        %p228 = pneg %p33
      $region42: #{basic_block_forward.1} parent=39 // pred_check_branch
        %230 = sbr.rel (%p228) target = $region44
      $region43: #{basic_block_forward.1} parent=39 // pred_region
        %p231 = scmp.lt.s32.totalorder %s13, 1
        %s232 = scalar_select %p231, %s13, 1
        %s233 = smul.addr %s232, 32
        %s234 = smul.addr %s233, 8
        %s235 = scalar_lea.vmem %s0, %s234
      $region44: #{basic_block_forward.1} parent=39 // pred_fallthru
        _
    $region40: #{basic_block_forward.1} parent=5 // pred_fallthru
      _
    %p236 = scmp.le.s32.totalorder 1, %s13
    %p237 = scmp.lt.s32.totalorder %s13, 3
    %p238 = pnand %p236, %p237
    %p239 = pneg %p238
    // Predicated region
    $region45: #{basic_block_forward.1} parent=5 // pred_check
      _
    $region46: #{basic_block_forward.1} parent=5 // pred_check_branch
      %241 = sbr.rel (%p238) target = $region48
    $region47: #{basic_block_forward.1} parent=5 // pred_region
      %s242 = ssub.s32 %s13, 1
      %p243 = scmp.lt.s32.totalorder %s18, 1
      %s244 = scalar_select %p243, %s18, 1
      %s245 = smul.addr %s244, 32
      %s246 = smul.addr %s245, 8
      %s247 = scalar_lea.vmem %s0, %s246
      %p248 = pneg %p39
      %p249 = pneg %p36
      %p250 = pneg %p60
      %p251 = pneg %p57
      %p252 = pneg %p81
      %p253 = pneg %p78
      %p254 = pneg %p102
      %p255 = pneg %p99
      %p256 = pneg %p123
      %p257 = pneg %p120
      %p258 = pneg %p144
      %p259 = pneg %p141
      %p260 = pneg %p165
      %p261 = pneg %p162
      %p262 = pneg %p191
      %p263 = pneg %p188
      %p264 = scmp.lt.s32.totalorder %s18, 1
      %s265 = scalar_select %p264, %s18, 1
      %s266 = smul.addr %s265, 32
      %s267 = smul.addr %s266, 8
      %s268 = scalar_lea.vmem %s7, %s267
      %p269 = scmp.lt.s32.totalorder %s18, 1
      %s270 = scalar_select %p269, %s18, 1
      %s271 = smul.addr %s270, 32
      %s272 = smul.addr %s271, 8
      %s273 = scalar_lea.vmem %s0, %s272
      %p274 = scmp.lt.s32.totalorder %s18, 1
      %s275 = scalar_select %p274, %s18, 1
      %s276 = smul.addr %s275, 32
      %s277 = smul.addr %s276, 8
      %s278 = scalar_lea.vmem %s7, %s277
      %vm280 = vcmask 27648
      %281 = vst.msk [vmem:[#allocation2] sm:$0xf] %vm280, 0
      %282 = vst.msk [vmem:[#allocation2 + $0x4] sm:$0xf] %vm280, 0
      %vm283 = vcmask 24576
      %284 = vst.msk [vmem:[#allocation2 + $0x8] sm:$0x1] %vm283, 0
      %s285 = scalar_lea.vmem [#allocation2], 204
      %286 = vst.msk [vmem:[%s285] sm:$0xf] %vm280, 0
      %287 = vst.msk [vmem:[%s285 + $0x4] sm:$0xf] %vm280, 0
      %288 = vst.msk [vmem:[%s285 + $0x8] sm:$0x1] %vm283, 0
      %vm289 = vcmask 24576
      %vm290 = vsmask.f32 256
      %vm291 = vmand %vm289, %vm290
      %v292 = vld [vmem:[#allocation2] sm:$0x1]
      %v293 = vsel %vm291, 0, %v292
      %294 = vst [vmem:[#allocation2] sm:$0x1] %v293
      %v295 = vld [vmem:[#allocation2 + $0xc] sm:$0x1]
      %v296 = vsel %vm291, 0, %v295
      %297 = vst [vmem:[#allocation2 + $0xc] sm:$0x1] %v296
      %v298 = vld [vmem:[#allocation2 + $0x18] sm:$0x1]
      %v299 = vsel %vm291, 0, %v298
      %300 = vst [vmem:[#allocation2 + $0x18] sm:$0x1] %v299
      %v301 = vld [vmem:[#allocation2 + $0x24] sm:$0x1]
      %v302 = vsel %vm291, 0, %v301
      %303 = vst [vmem:[#allocation2 + $0x24] sm:$0x1] %v302
      %v304 = vld [vmem:[#allocation2 + $0x30] sm:$0x1]
      %v305 = vsel %vm291, 0, %v304
      %306 = vst [vmem:[#allocation2 + $0x30] sm:$0x1] %v305
      %v307 = vld [vmem:[#allocation2 + $0x3c] sm:$0x1]
      %v308 = vsel %vm291, 0, %v307
      %309 = vst [vmem:[#allocation2 + $0x3c] sm:$0x1] %v308
      %v310 = vld [vmem:[#allocation2 + $0x48] sm:$0x1]
      %v311 = vsel %vm291, 0, %v310
      %312 = vst [vmem:[#allocation2 + $0x48] sm:$0x1] %v311
      %v313 = vld [vmem:[#allocation2 + $0x54] sm:$0x1]
      %v314 = vsel %vm291, 0, %v313
      %315 = vst [vmem:[#allocation2 + $0x54] sm:$0x1] %v314
      %v316 = vld [vmem:[#allocation2 + $0x60] sm:$0x1]
      %v317 = vsel %vm291, 0, %v316
      %318 = vst [vmem:[#allocation2 + $0x60] sm:$0x1] %v317
      %v319 = vld [vmem:[#allocation2 + $0x6c] sm:$0x1]
      %v320 = vsel %vm291, 0, %v319
      %321 = vst [vmem:[#allocation2 + $0x6c] sm:$0x1] %v320
      %v322 = vld [vmem:[#allocation2 + $0x78] sm:$0x1]
      %v323 = vsel %vm291, 0, %v322
      %324 = vst [vmem:[#allocation2 + $0x78] sm:$0x1] %v323
      %v325 = vld [vmem:[#allocation2 + $0x84] sm:$0x1]
      %v326 = vsel %vm291, 0, %v325
      %327 = vst [vmem:[#allocation2 + $0x84] sm:$0x1] %v326
      %v328 = vld [vmem:[#allocation2 + $0x90] sm:$0x1]
      %v329 = vsel %vm291, 0, %v328
      %330 = vst [vmem:[#allocation2 + $0x90] sm:$0x1] %v329
      %v331 = vld [vmem:[#allocation2 + $0x9c] sm:$0x1]
      %v332 = vsel %vm291, 0, %v331
      %333 = vst [vmem:[#allocation2 + $0x9c] sm:$0x1] %v332
      %v334 = vld [vmem:[#allocation2 + $0xa8] sm:$0x1]
      %v335 = vsel %vm291, 0, %v334
      %336 = vst [vmem:[#allocation2 + $0xa8] sm:$0x1] %v335
      %v337 = vld [vmem:[#allocation2 + $0xb4] sm:$0x1]
      %v338 = vsel %vm291, 0, %v337
      %339 = vst [vmem:[#allocation2 + $0xb4] sm:$0x1] %v338
      %v340 = vld [vmem:[#allocation2 + $0xc0] sm:$0x1]
      %v341 = vsel %vm291, 0, %v340
      %342 = vst [vmem:[#allocation2 + $0xc0] sm:$0x1] %v341
      %v343 = vld [vmem:[#allocation2 + $0xcc] sm:$0x1]
      %v344 = vsel %vm291, 0, %v343
      %345 = vst [vmem:[#allocation2 + $0xcc] sm:$0x1] %v344
      %vm346 = vsmask.f32 7938
      %vm347 = vmand %vm289, %vm346
      %v348 = vld [vmem:[#allocation2 + $0x8] sm:$0x1]
      %v349 = vsel %vm347, 0, %v348
      %350 = vst [vmem:[#allocation2 + $0x8] sm:$0x1] %v349
      %v351 = vld [vmem:[#allocation2 + $0x14] sm:$0x1]
      %v352 = vsel %vm347, 0, %v351
      %353 = vst [vmem:[#allocation2 + $0x14] sm:$0x1] %v352
      %v354 = vld [vmem:[#allocation2 + $0x20] sm:$0x1]
      %v355 = vsel %vm347, 0, %v354
      %356 = vst [vmem:[#allocation2 + $0x20] sm:$0x1] %v355
      %v357 = vld [vmem:[#allocation2 + $0x2c] sm:$0x1]
      %v358 = vsel %vm347, 0, %v357
      %359 = vst [vmem:[#allocation2 + $0x2c] sm:$0x1] %v358
      %v360 = vld [vmem:[#allocation2 + $0x38] sm:$0x1]
      %v361 = vsel %vm347, 0, %v360
      %362 = vst [vmem:[#allocation2 + $0x38] sm:$0x1] %v361
      %v363 = vld [vmem:[#allocation2 + $0x44] sm:$0x1]
      %v364 = vsel %vm347, 0, %v363
      %365 = vst [vmem:[#allocation2 + $0x44] sm:$0x1] %v364
      %v366 = vld [vmem:[#allocation2 + $0x50] sm:$0x1]
      %v367 = vsel %vm347, 0, %v366
      %368 = vst [vmem:[#allocation2 + $0x50] sm:$0x1] %v367
      %v369 = vld [vmem:[#allocation2 + $0x5c] sm:$0x1]
      %v370 = vsel %vm347, 0, %v369
      %371 = vst [vmem:[#allocation2 + $0x5c] sm:$0x1] %v370
      %v372 = vld [vmem:[#allocation2 + $0x68] sm:$0x1]
      %v373 = vsel %vm347, 0, %v372
      %374 = vst [vmem:[#allocation2 + $0x68] sm:$0x1] %v373
      %v375 = vld [vmem:[#allocation2 + $0x74] sm:$0x1]
      %v376 = vsel %vm347, 0, %v375
      %377 = vst [vmem:[#allocation2 + $0x74] sm:$0x1] %v376
      %v378 = vld [vmem:[#allocation2 + $0x80] sm:$0x1]
      %v379 = vsel %vm347, 0, %v378
      %380 = vst [vmem:[#allocation2 + $0x80] sm:$0x1] %v379
      %v381 = vld [vmem:[#allocation2 + $0x8c] sm:$0x1]
      %v382 = vsel %vm347, 0, %v381
      %383 = vst [vmem:[#allocation2 + $0x8c] sm:$0x1] %v382
      %v384 = vld [vmem:[#allocation2 + $0x98] sm:$0x1]
      %v385 = vsel %vm347, 0, %v384
      %386 = vst [vmem:[#allocation2 + $0x98] sm:$0x1] %v385
      %v387 = vld [vmem:[#allocation2 + $0xa4] sm:$0x1]
      %v388 = vsel %vm347, 0, %v387
      %389 = vst [vmem:[#allocation2 + $0xa4] sm:$0x1] %v388
      %v390 = vld [vmem:[#allocation2 + $0xb0] sm:$0x1]
      %v391 = vsel %vm347, 0, %v390
      %392 = vst [vmem:[#allocation2 + $0xb0] sm:$0x1] %v391
      %v393 = vld [vmem:[#allocation2 + $0xbc] sm:$0x1]
      %v394 = vsel %vm347, 0, %v393
      %395 = vst [vmem:[#allocation2 + $0xbc] sm:$0x1] %v394
      %v396 = vld [vmem:[#allocation2 + $0xc8] sm:$0x1]
      %v397 = vsel %vm347, 0, %v396
      %398 = vst [vmem:[#allocation2 + $0xc8] sm:$0x1] %v397
      %v399 = vld [vmem:[#allocation2 + $0xd4] sm:$0x1]
      %v400 = vsel %vm347, 0, %v399
      %401 = vst [vmem:[#allocation2 + $0xd4] sm:$0x1] %v400
      %v402 = vld [vmem:[%s273] sm:$0xff]
      %v403 = vld [vmem:[%s273 + $0x8] sm:$0xff]
      %v404 = vld [vmem:[%s273 + $0x10] sm:$0xff]
      %v405 = vld [vmem:[%s273 + $0x18] sm:$0xff]
      %v406 = vld [vmem:[%s273 + $0x20] sm:$0xff]
      %v407 = vld [vmem:[%s273 + $0x28] sm:$0xff]
      %v408 = vld [vmem:[%s273 + $0x30] sm:$0xff]
      %v409 = vld [vmem:[%s273 + $0x38] sm:$0xff]
      %v410 = vld [vmem:[%s273 + $0x40] sm:$0xff]
      %v411 = vld [vmem:[%s273 + $0x48] sm:$0xff]
      %v412 = vld [vmem:[%s273 + $0x50] sm:$0xff]
      %v413 = vld [vmem:[%s273 + $0x58] sm:$0xff]
      %v414 = vld [vmem:[%s273 + $0x60] sm:$0xff]
      %v415 = vld [vmem:[%s273 + $0x68] sm:$0xff]
      %v416 = vld [vmem:[%s273 + $0x70] sm:$0xff]
      %v417 = vld [vmem:[%s273 + $0x78] sm:$0xff]
      %v418 = vld [vmem:[%s273 + $0x80] sm:$0xff]
      %v419 = vld [vmem:[%s273 + $0x88] sm:$0xff]
      %v420 = vld [vmem:[%s273 + $0x90] sm:$0xff]
      %v421 = vld [vmem:[%s273 + $0x98] sm:$0xff]
      %v422 = vld [vmem:[%s273 + $0xa0] sm:$0xff]
      %v423 = vld [vmem:[%s273 + $0xa8] sm:$0xff]
      %v424 = vld [vmem:[%s273 + $0xb0] sm:$0xff]
      %v425 = vld [vmem:[%s273 + $0xb8] sm:$0xff]
      %v426 = vld [vmem:[%s273 + $0xc0] sm:$0xff]
      %v427 = vld [vmem:[%s273 + $0xc8] sm:$0xff]
      %v428 = vld [vmem:[%s273 + $0xd0] sm:$0xff]
      %v429 = vld [vmem:[%s273 + $0xd8] sm:$0xff]
      %v430 = vld [vmem:[%s273 + $0xe0] sm:$0xff]
      %v431 = vld [vmem:[%s273 + $0xe8] sm:$0xff]
      %v432 = vld [vmem:[%s273 + $0xf0] sm:$0xff]
      %v433 = vld [vmem:[%s273 + $0xf8] sm:$0xff]
      %v434 = vpack.c.bf16 %v402, %v402
      %v435 = vpack.c.bf16 %v403, %v403
      %v436 = vpack.c.bf16 %v404, %v404
      %v437 = vpack.c.bf16 %v405, %v405
      %v438 = vpack.c.bf16 %v406, %v406
      %v439 = vpack.c.bf16 %v407, %v407
      %v440 = vpack.c.bf16 %v408, %v408
      %v441 = vpack.c.bf16 %v409, %v409
      %v442 = vpack.c.bf16 %v410, %v410
      %v443 = vpack.c.bf16 %v411, %v411
      %v444 = vpack.c.bf16 %v412, %v412
      %v445 = vpack.c.bf16 %v413, %v413
      %v446 = vpack.c.bf16 %v414, %v414
      %v447 = vpack.c.bf16 %v415, %v415
      %v448 = vpack.c.bf16 %v416, %v416
      %v449 = vpack.c.bf16 %v417, %v417
      %v450 = vpack.c.bf16 %v418, %v418
      %v451 = vpack.c.bf16 %v419, %v419
      %v452 = vpack.c.bf16 %v420, %v420
      %v453 = vpack.c.bf16 %v421, %v421
      %v454 = vpack.c.bf16 %v422, %v422
      %v455 = vpack.c.bf16 %v423, %v423
      %v456 = vpack.c.bf16 %v424, %v424
      %v457 = vpack.c.bf16 %v425, %v425
      %v458 = vpack.c.bf16 %v426, %v426
      %v459 = vpack.c.bf16 %v427, %v427
      %v460 = vpack.c.bf16 %v428, %v428
      %v461 = vpack.c.bf16 %v429, %v429
      %v462 = vpack.c.bf16 %v430, %v430
      %v463 = vpack.c.bf16 %v431, %v431
      %v464 = vpack.c.bf16 %v432, %v432
      %v465 = vpack.c.bf16 %v433, %v433
      %vm466 = vsmask.f32 4368
      %vm467 = vmor %vm290, %vm466
      %v469 = vshrl.u32 %v434, 16
      %v471 = vrot.slane %v469, 7
      %v472 = vshll.u32 %v434, 16
      %v474 = vor.u32 %v471, %v472
      %v475 = vrot.slane %v471, 4
      %v477 = vshrl.u32 %v435, 16
      %v479 = vrot.slane %v477, 7
      %v480 = vshll.u32 %v435, 16
      %v482 = vor.u32 %v479, %v480
      %v483 = vsel %vm467, %v475, %v482
      %v484 = vrot.slane %v479, 4
      %v486 = vshrl.u32 %v436, 16
      %v488 = vrot.slane %v486, 7
      %v489 = vshll.u32 %v436, 16
      %v491 = vor.u32 %v488, %v489
      %v492 = vrot.slane %v488, 4
      %v494 = vshrl.u32 %v437, 16
      %v496 = vrot.slane %v494, 7
      %v497 = vshll.u32 %v437, 16
      %v499 = vor.u32 %v496, %v497
      %v500 = vsel %vm467, %v492, %v499
      %v501 = vrot.slane %v496, 4
      %v503 = vshrl.u32 %v438, 16
      %v505 = vrot.slane %v503, 7
      %v506 = vshll.u32 %v438, 16
      %v508 = vor.u32 %v505, %v506
      %v509 = vrot.slane %v505, 4
      %v511 = vshrl.u32 %v439, 16
      %v513 = vrot.slane %v511, 7
      %v514 = vshll.u32 %v439, 16
      %v516 = vor.u32 %v513, %v514
      %v517 = vsel %vm467, %v509, %v516
      %v518 = vrot.slane %v513, 4
      %v520 = vshrl.u32 %v440, 16
      %v522 = vrot.slane %v520, 7
      %v523 = vshll.u32 %v440, 16
      %v525 = vor.u32 %v522, %v523
      %v526 = vrot.slane %v522, 4
      %v528 = vshrl.u32 %v441, 16
      %v530 = vrot.slane %v528, 7
      %v531 = vshll.u32 %v441, 16
      %v533 = vor.u32 %v530, %v531
      %v534 = vsel %vm467, %v526, %v533
      %v535 = vrot.slane %v530, 4
      %v537 = vshrl.u32 %v442, 16
      %v539 = vrot.slane %v537, 7
      %v540 = vshll.u32 %v442, 16
      %v542 = vor.u32 %v539, %v540
      %v543 = vrot.slane %v539, 4
      %v545 = vshrl.u32 %v443, 16
      %v547 = vrot.slane %v545, 7
      %v548 = vshll.u32 %v443, 16
      %v550 = vor.u32 %v547, %v548
      %v551 = vsel %vm467, %v543, %v550
      %v552 = vrot.slane %v547, 4
      %v554 = vshrl.u32 %v444, 16
      %v556 = vrot.slane %v554, 7
      %v557 = vshll.u32 %v444, 16
      %v559 = vor.u32 %v556, %v557
      %v560 = vrot.slane %v556, 4
      %v562 = vshrl.u32 %v445, 16
      %v564 = vrot.slane %v562, 7
      %v565 = vshll.u32 %v445, 16
      %v567 = vor.u32 %v564, %v565
      %v568 = vsel %vm467, %v560, %v567
      %v569 = vrot.slane %v564, 4
      %v571 = vshrl.u32 %v446, 16
      %v573 = vrot.slane %v571, 7
      %v574 = vshll.u32 %v446, 16
      %v576 = vor.u32 %v573, %v574
      %v577 = vrot.slane %v573, 4
      %v579 = vshrl.u32 %v447, 16
      %v581 = vrot.slane %v579, 7
      %v582 = vshll.u32 %v447, 16
      %v584 = vor.u32 %v581, %v582
      %v585 = vsel %vm467, %v577, %v584
      %v586 = vrot.slane %v581, 4
      %v588 = vshrl.u32 %v448, 16
      %v590 = vrot.slane %v588, 7
      %v591 = vshll.u32 %v448, 16
      %v593 = vor.u32 %v590, %v591
      %v594 = vrot.slane %v590, 4
      %v596 = vshrl.u32 %v449, 16
      %v598 = vrot.slane %v596, 7
      %v599 = vshll.u32 %v449, 16
      %v601 = vor.u32 %v598, %v599
      %v602 = vsel %vm467, %v594, %v601
      %v603 = vrot.slane %v598, 4
      %v605 = vshrl.u32 %v450, 16
      %v607 = vrot.slane %v605, 7
      %v608 = vshll.u32 %v450, 16
      %v610 = vor.u32 %v607, %v608
      %v611 = vrot.slane %v607, 4
      %v613 = vshrl.u32 %v451, 16
      %v615 = vrot.slane %v613, 7
      %v616 = vshll.u32 %v451, 16
      %v618 = vor.u32 %v615, %v616
      %v619 = vsel %vm467, %v611, %v618
      %v620 = vrot.slane %v615, 4
      %v622 = vshrl.u32 %v452, 16
      %v624 = vrot.slane %v622, 7
      %v625 = vshll.u32 %v452, 16
      %v627 = vor.u32 %v624, %v625
      %v628 = vrot.slane %v624, 4
      %v630 = vshrl.u32 %v453, 16
      %v632 = vrot.slane %v630, 7
      %v633 = vshll.u32 %v453, 16
      %v635 = vor.u32 %v632, %v633
      %v636 = vsel %vm467, %v628, %v635
      %v637 = vrot.slane %v632, 4
      %v639 = vshrl.u32 %v454, 16
      %v641 = vrot.slane %v639, 7
      %v642 = vshll.u32 %v454, 16
      %v644 = vor.u32 %v641, %v642
      %v645 = vrot.slane %v641, 4
      %v647 = vshrl.u32 %v455, 16
      %v649 = vrot.slane %v647, 7
      %v650 = vshll.u32 %v455, 16
      %v652 = vor.u32 %v649, %v650
      %v653 = vsel %vm467, %v645, %v652
      %v654 = vrot.slane %v649, 4
      %v656 = vshrl.u32 %v456, 16
      %v658 = vrot.slane %v656, 7
      %v659 = vshll.u32 %v456, 16
      %v661 = vor.u32 %v658, %v659
      %v662 = vrot.slane %v658, 4
      %v664 = vshrl.u32 %v457, 16
      %v666 = vrot.slane %v664, 7
      %v667 = vshll.u32 %v457, 16
      %v669 = vor.u32 %v666, %v667
      %v670 = vsel %vm467, %v662, %v669
      %v671 = vrot.slane %v666, 4
      %v673 = vshrl.u32 %v458, 16
      %v675 = vrot.slane %v673, 7
      %v676 = vshll.u32 %v458, 16
      %v678 = vor.u32 %v675, %v676
      %v679 = vrot.slane %v675, 4
      %v681 = vshrl.u32 %v459, 16
      %v683 = vrot.slane %v681, 7
      %v684 = vshll.u32 %v459, 16
      %v686 = vor.u32 %v683, %v684
      %v687 = vsel %vm467, %v679, %v686
      %v688 = vrot.slane %v683, 4
      %v690 = vshrl.u32 %v460, 16
      %v692 = vrot.slane %v690, 7
      %v693 = vshll.u32 %v460, 16
      %v695 = vor.u32 %v692, %v693
      %v696 = vrot.slane %v692, 4
      %v698 = vshrl.u32 %v461, 16
      %v700 = vrot.slane %v698, 7
      %v701 = vshll.u32 %v461, 16
      %v703 = vor.u32 %v700, %v701
      %v704 = vsel %vm467, %v696, %v703
      %v705 = vrot.slane %v700, 4
      %v707 = vshrl.u32 %v462, 16
      %v709 = vrot.slane %v707, 7
      %v710 = vshll.u32 %v462, 16
      %v712 = vor.u32 %v709, %v710
      %v713 = vrot.slane %v709, 4
      %v715 = vshrl.u32 %v463, 16
      %v717 = vrot.slane %v715, 7
      %v718 = vshll.u32 %v463, 16
      %v720 = vor.u32 %v717, %v718
      %v721 = vsel %vm467, %v713, %v720
      %v722 = vrot.slane %v717, 4
      %v724 = vshrl.u32 %v464, 16
      %v726 = vrot.slane %v724, 7
      %v727 = vshll.u32 %v464, 16
      %v729 = vor.u32 %v726, %v727
      %v730 = vrot.slane %v726, 4
      %v732 = vshrl.u32 %v465, 16
      %v734 = vrot.slane %v732, 7
      %v735 = vshll.u32 %v465, 16
      %v737 = vor.u32 %v734, %v735
      %v738 = vsel %vm467, %v730, %v737
      %v739 = vrot.slane %v734, 4
      %s788 = scalar_lea.vmem [#allocation2], 12
      %vm789 = vcmask 27648
      %vm790 = vmand %vm789, %vm346
      %v791 = vld [vmem:[%s788] sm:$0xf]
      %v792 = vsel %vm790, %v474, %v791
      %793 = vst [vmem:[%s788] sm:$0xf] %v792
      %794 = vst.msk [vmem:[%s788 + $0x4] sm:$0xf] %vm280, %v483
      %v795 = vld [vmem:[%s788 + $0x8] sm:$0x1]
      %v796 = vsel %vm291, %v484, %v795
      %797 = vst [vmem:[%s788 + $0x8] sm:$0x1] %v796
      %v798 = vld [vmem:[%s788 + $0xc] sm:$0xf]
      %v799 = vsel %vm790, %v491, %v798
      %800 = vst [vmem:[%s788 + $0xc] sm:$0xf] %v799
      %801 = vst.msk [vmem:[%s788 + $0x10] sm:$0xf] %vm280, %v500
      %v802 = vld [vmem:[%s788 + $0x14] sm:$0x1]
      %v803 = vsel %vm291, %v501, %v802
      %804 = vst [vmem:[%s788 + $0x14] sm:$0x1] %v803
      %v805 = vld [vmem:[%s788 + $0x18] sm:$0xf]
      %v806 = vsel %vm790, %v508, %v805
      %807 = vst [vmem:[%s788 + $0x18] sm:$0xf] %v806
      %808 = vst.msk [vmem:[%s788 + $0x1c] sm:$0xf] %vm280, %v517
      %v809 = vld [vmem:[%s788 + $0x20] sm:$0x1]
      %v810 = vsel %vm291, %v518, %v809
      %811 = vst [vmem:[%s788 + $0x20] sm:$0x1] %v810
      %v812 = vld [vmem:[%s788 + $0x24] sm:$0xf]
      %v813 = vsel %vm790, %v525, %v812
      %814 = vst [vmem:[%s788 + $0x24] sm:$0xf] %v813
      %815 = vst.msk [vmem:[%s788 + $0x28] sm:$0xf] %vm280, %v534
      %v816 = vld [vmem:[%s788 + $0x2c] sm:$0x1]
      %v817 = vsel %vm291, %v535, %v816
      %818 = vst [vmem:[%s788 + $0x2c] sm:$0x1] %v817
      %v819 = vld [vmem:[%s788 + $0x30] sm:$0xf]
      %v820 = vsel %vm790, %v542, %v819
      %821 = vst [vmem:[%s788 + $0x30] sm:$0xf] %v820
      %822 = vst.msk [vmem:[%s788 + $0x34] sm:$0xf] %vm280, %v551
      %v823 = vld [vmem:[%s788 + $0x38] sm:$0x1]
      %v824 = vsel %vm291, %v552, %v823
      %825 = vst [vmem:[%s788 + $0x38] sm:$0x1] %v824
      %v826 = vld [vmem:[%s788 + $0x3c] sm:$0xf]
      %v827 = vsel %vm790, %v559, %v826
      %828 = vst [vmem:[%s788 + $0x3c] sm:$0xf] %v827
      %829 = vst.msk [vmem:[%s788 + $0x40] sm:$0xf] %vm280, %v568
      %v830 = vld [vmem:[%s788 + $0x44] sm:$0x1]
      %v831 = vsel %vm291, %v569, %v830
      %832 = vst [vmem:[%s788 + $0x44] sm:$0x1] %v831
      %v833 = vld [vmem:[%s788 + $0x48] sm:$0xf]
      %v834 = vsel %vm790, %v576, %v833
      %835 = vst [vmem:[%s788 + $0x48] sm:$0xf] %v834
      %836 = vst.msk [vmem:[%s788 + $0x4c] sm:$0xf] %vm280, %v585
      %v837 = vld [vmem:[%s788 + $0x50] sm:$0x1]
      %v838 = vsel %vm291, %v586, %v837
      %839 = vst [vmem:[%s788 + $0x50] sm:$0x1] %v838
      %v840 = vld [vmem:[%s788 + $0x54] sm:$0xf]
      %v841 = vsel %vm790, %v593, %v840
      %842 = vst [vmem:[%s788 + $0x54] sm:$0xf] %v841
      %843 = vst.msk [vmem:[%s788 + $0x58] sm:$0xf] %vm280, %v602
      %v844 = vld [vmem:[%s788 + $0x5c] sm:$0x1]
      %v845 = vsel %vm291, %v603, %v844
      %846 = vst [vmem:[%s788 + $0x5c] sm:$0x1] %v845
      %v847 = vld [vmem:[%s788 + $0x60] sm:$0xf]
      %v848 = vsel %vm790, %v610, %v847
      %849 = vst [vmem:[%s788 + $0x60] sm:$0xf] %v848
      %850 = vst.msk [vmem:[%s788 + $0x64] sm:$0xf] %vm280, %v619
      %v851 = vld [vmem:[%s788 + $0x68] sm:$0x1]
      %v852 = vsel %vm291, %v620, %v851
      %853 = vst [vmem:[%s788 + $0x68] sm:$0x1] %v852
      %v854 = vld [vmem:[%s788 + $0x6c] sm:$0xf]
      %v855 = vsel %vm790, %v627, %v854
      %856 = vst [vmem:[%s788 + $0x6c] sm:$0xf] %v855
      %857 = vst.msk [vmem:[%s788 + $0x70] sm:$0xf] %vm280, %v636
      %v858 = vld [vmem:[%s788 + $0x74] sm:$0x1]
      %v859 = vsel %vm291, %v637, %v858
      %860 = vst [vmem:[%s788 + $0x74] sm:$0x1] %v859
      %v861 = vld [vmem:[%s788 + $0x78] sm:$0xf]
      %v862 = vsel %vm790, %v644, %v861
      %863 = vst [vmem:[%s788 + $0x78] sm:$0xf] %v862
      %864 = vst.msk [vmem:[%s788 + $0x7c] sm:$0xf] %vm280, %v653
      %v865 = vld [vmem:[%s788 + $0x80] sm:$0x1]
      %v866 = vsel %vm291, %v654, %v865
      %867 = vst [vmem:[%s788 + $0x80] sm:$0x1] %v866
      %v868 = vld [vmem:[%s788 + $0x84] sm:$0xf]
      %v869 = vsel %vm790, %v661, %v868
      %870 = vst [vmem:[%s788 + $0x84] sm:$0xf] %v869
      %871 = vst.msk [vmem:[%s788 + $0x88] sm:$0xf] %vm280, %v670
      %v872 = vld [vmem:[%s788 + $0x8c] sm:$0x1]
      %v873 = vsel %vm291, %v671, %v872
      %874 = vst [vmem:[%s788 + $0x8c] sm:$0x1] %v873
      %v875 = vld [vmem:[%s788 + $0x90] sm:$0xf]
      %v876 = vsel %vm790, %v678, %v875
      %877 = vst [vmem:[%s788 + $0x90] sm:$0xf] %v876
      %878 = vst.msk [vmem:[%s788 + $0x94] sm:$0xf] %vm280, %v687
      %v879 = vld [vmem:[%s788 + $0x98] sm:$0x1]
      %v880 = vsel %vm291, %v688, %v879
      %881 = vst [vmem:[%s788 + $0x98] sm:$0x1] %v880
      %v882 = vld [vmem:[%s788 + $0x9c] sm:$0xf]
      %v883 = vsel %vm790, %v695, %v882
      %884 = vst [vmem:[%s788 + $0x9c] sm:$0xf] %v883
      %885 = vst.msk [vmem:[%s788 + $0xa0] sm:$0xf] %vm280, %v704
      %v886 = vld [vmem:[%s788 + $0xa4] sm:$0x1]
      %v887 = vsel %vm291, %v705, %v886
      %888 = vst [vmem:[%s788 + $0xa4] sm:$0x1] %v887
      %v889 = vld [vmem:[%s788 + $0xa8] sm:$0xf]
      %v890 = vsel %vm790, %v712, %v889
      %891 = vst [vmem:[%s788 + $0xa8] sm:$0xf] %v890
      %892 = vst.msk [vmem:[%s788 + $0xac] sm:$0xf] %vm280, %v721
      %v893 = vld [vmem:[%s788 + $0xb0] sm:$0x1]
      %v894 = vsel %vm291, %v722, %v893
      %895 = vst [vmem:[%s788 + $0xb0] sm:$0x1] %v894
      %v896 = vld [vmem:[%s788 + $0xb4] sm:$0xf]
      %v897 = vsel %vm790, %v729, %v896
      %898 = vst [vmem:[%s788 + $0xb4] sm:$0xf] %v897
      %899 = vst.msk [vmem:[%s788 + $0xb8] sm:$0xf] %vm280, %v738
      %v900 = vld [vmem:[%s788 + $0xbc] sm:$0x1]
      %v901 = vsel %vm291, %v739, %v900
      %902 = vst [vmem:[%s788 + $0xbc] sm:$0x1] %v901
      %v903 = vld [vmem:[#allocation2] sm:$0xf]
      %v904 = vld [vmem:[#allocation2 + $0x4] sm:$0xf]
      %v905 = vld [vmem:[#allocation2 + $0xc] sm:$0xf]
      %v906 = vld [vmem:[#allocation2 + $0x10] sm:$0xf]
      %v907 = vld [vmem:[#allocation2 + $0x18] sm:$0xf]
      %v908 = vld [vmem:[#allocation2 + $0x1c] sm:$0xf]
      %v909 = vld [vmem:[#allocation2 + $0x24] sm:$0xf]
      %v910 = vld [vmem:[#allocation2 + $0x28] sm:$0xf]
      %v911 = vld [vmem:[#allocation2 + $0x30] sm:$0xf]
      %v912 = vld [vmem:[#allocation2 + $0x34] sm:$0xf]
      %v913 = vld [vmem:[#allocation2 + $0x3c] sm:$0xf]
      %v914 = vld [vmem:[#allocation2 + $0x40] sm:$0xf]
      %v915 = vld [vmem:[#allocation2 + $0x48] sm:$0xf]
      %v916 = vld [vmem:[#allocation2 + $0x4c] sm:$0xf]
      %v917 = vld [vmem:[#allocation2 + $0x54] sm:$0xf]
      %v918 = vld [vmem:[#allocation2 + $0x58] sm:$0xf]
      %v919 = vld [vmem:[#allocation2 + $0x60] sm:$0xf]
      %v920 = vld [vmem:[#allocation2 + $0x64] sm:$0xf]
      %v921 = vld [vmem:[#allocation2 + $0x6c] sm:$0xf]
      %v922 = vld [vmem:[#allocation2 + $0x70] sm:$0xf]
      %v923 = vld [vmem:[#allocation2 + $0x78] sm:$0xf]
      %v924 = vld [vmem:[#allocation2 + $0x7c] sm:$0xf]
      %v925 = vld [vmem:[#allocation2 + $0x84] sm:$0xf]
      %v926 = vld [vmem:[#allocation2 + $0x88] sm:$0xf]
      %v927 = vld [vmem:[#allocation2 + $0x90] sm:$0xf]
      %v928 = vld [vmem:[#allocation2 + $0x94] sm:$0xf]
      %v929 = vld [vmem:[#allocation2 + $0x9c] sm:$0xf]
      %v930 = vld [vmem:[#allocation2 + $0xa0] sm:$0xf]
      %v931 = vld [vmem:[#allocation2 + $0xa8] sm:$0xf]
      %v932 = vld [vmem:[#allocation2 + $0xac] sm:$0xf]
      %v933 = vld [vmem:[#allocation2 + $0xb4] sm:$0xf]
      %v934 = vld [vmem:[#allocation2 + $0xb8] sm:$0xf]
      %935 = vst.msk [vmem:[#allocation4] sm:$0xf] %vm280, %v903
      %936 = vst.msk [vmem:[#allocation4 + $0x4] sm:$0xf] %vm280, %v904
      %937 = vst.msk [vmem:[#allocation4 + $0x8] sm:$0xf] %vm280, %v905
      %938 = vst.msk [vmem:[#allocation4 + $0xc] sm:$0xf] %vm280, %v906
      %939 = vst.msk [vmem:[#allocation4 + $0x10] sm:$0xf] %vm280, %v907
      %940 = vst.msk [vmem:[#allocation4 + $0x14] sm:$0xf] %vm280, %v908
      %941 = vst.msk [vmem:[#allocation4 + $0x18] sm:$0xf] %vm280, %v909
      %942 = vst.msk [vmem:[#allocation4 + $0x1c] sm:$0xf] %vm280, %v910
      %943 = vst.msk [vmem:[#allocation4 + $0x20] sm:$0xf] %vm280, %v911
      %944 = vst.msk [vmem:[#allocation4 + $0x24] sm:$0xf] %vm280, %v912
      %945 = vst.msk [vmem:[#allocation4 + $0x28] sm:$0xf] %vm280, %v913
      %946 = vst.msk [vmem:[#allocation4 + $0x2c] sm:$0xf] %vm280, %v914
      %947 = vst.msk [vmem:[#allocation4 + $0x30] sm:$0xf] %vm280, %v915
      %948 = vst.msk [vmem:[#allocation4 + $0x34] sm:$0xf] %vm280, %v916
      %949 = vst.msk [vmem:[#allocation4 + $0x38] sm:$0xf] %vm280, %v917
      %950 = vst.msk [vmem:[#allocation4 + $0x3c] sm:$0xf] %vm280, %v918
      %951 = vst.msk [vmem:[#allocation4 + $0x40] sm:$0xf] %vm280, %v919
      %952 = vst.msk [vmem:[#allocation4 + $0x44] sm:$0xf] %vm280, %v920
      %953 = vst.msk [vmem:[#allocation4 + $0x48] sm:$0xf] %vm280, %v921
      %954 = vst.msk [vmem:[#allocation4 + $0x4c] sm:$0xf] %vm280, %v922
      %955 = vst.msk [vmem:[#allocation4 + $0x50] sm:$0xf] %vm280, %v923
      %956 = vst.msk [vmem:[#allocation4 + $0x54] sm:$0xf] %vm280, %v924
      %957 = vst.msk [vmem:[#allocation4 + $0x58] sm:$0xf] %vm280, %v925
      %958 = vst.msk [vmem:[#allocation4 + $0x5c] sm:$0xf] %vm280, %v926
      %959 = vst.msk [vmem:[#allocation4 + $0x60] sm:$0xf] %vm280, %v927
      %960 = vst.msk [vmem:[#allocation4 + $0x64] sm:$0xf] %vm280, %v928
      %961 = vst.msk [vmem:[#allocation4 + $0x68] sm:$0xf] %vm280, %v929
      %962 = vst.msk [vmem:[#allocation4 + $0x6c] sm:$0xf] %vm280, %v930
      %963 = vst.msk [vmem:[#allocation4 + $0x70] sm:$0xf] %vm280, %v931
      %964 = vst.msk [vmem:[#allocation4 + $0x74] sm:$0xf] %vm280, %v932
      %965 = vst.msk [vmem:[#allocation4 + $0x78] sm:$0xf] %vm280, %v933
      %966 = vst.msk [vmem:[#allocation4 + $0x7c] sm:$0xf] %vm280, %v934
      %v967 = vld [vmem:[#allocation2] sm:$0xf]
      %v968 = vld [vmem:[#allocation2 + $0x4] sm:$0xf]
      %v969 = vld [vmem:[#allocation2 + $0x8] sm:$0x1]
      %v970 = vld [vmem:[#allocation2 + $0xc] sm:$0xf]
      %v971 = vld [vmem:[#allocation2 + $0x10] sm:$0xf]
      %v972 = vld [vmem:[#allocation2 + $0x14] sm:$0x1]
      %v973 = vld [vmem:[#allocation2 + $0x18] sm:$0xf]
      %v974 = vld [vmem:[#allocation2 + $0x1c] sm:$0xf]
      %v975 = vld [vmem:[#allocation2 + $0x20] sm:$0x1]
      %v976 = vld [vmem:[#allocation2 + $0x24] sm:$0xf]
      %v977 = vld [vmem:[#allocation2 + $0x28] sm:$0xf]
      %v978 = vld [vmem:[#allocation2 + $0x2c] sm:$0x1]
      %v979 = vld [vmem:[#allocation2 + $0x30] sm:$0xf]
      %v980 = vld [vmem:[#allocation2 + $0x34] sm:$0xf]
      %v981 = vld [vmem:[#allocation2 + $0x38] sm:$0x1]
      %v982 = vld [vmem:[#allocation2 + $0x3c] sm:$0xf]
      %v983 = vld [vmem:[#allocation2 + $0x40] sm:$0xf]
      %v984 = vld [vmem:[#allocation2 + $0x44] sm:$0x1]
      %v985 = vld [vmem:[#allocation2 + $0x48] sm:$0xf]
      %v986 = vld [vmem:[#allocation2 + $0x4c] sm:$0xf]
      %v987 = vld [vmem:[#allocation2 + $0x50] sm:$0x1]
      %v988 = vld [vmem:[#allocation2 + $0x54] sm:$0xf]
      %v989 = vld [vmem:[#allocation2 + $0x58] sm:$0xf]
      %v990 = vld [vmem:[#allocation2 + $0x5c] sm:$0x1]
      %v991 = vld [vmem:[#allocation2 + $0x60] sm:$0xf]
      %v992 = vld [vmem:[#allocation2 + $0x64] sm:$0xf]
      %v993 = vld [vmem:[#allocation2 + $0x68] sm:$0x1]
      %v994 = vld [vmem:[#allocation2 + $0x6c] sm:$0xf]
      %v995 = vld [vmem:[#allocation2 + $0x70] sm:$0xf]
      %v996 = vld [vmem:[#allocation2 + $0x74] sm:$0x1]
      %v997 = vld [vmem:[#allocation2 + $0x78] sm:$0xf]
      %v998 = vld [vmem:[#allocation2 + $0x7c] sm:$0xf]
      %v999 = vld [vmem:[#allocation2 + $0x80] sm:$0x1]
      %v1000 = vld [vmem:[#allocation2 + $0x84] sm:$0xf]
      %v1001 = vld [vmem:[#allocation2 + $0x88] sm:$0xf]
      %v1002 = vld [vmem:[#allocation2 + $0x8c] sm:$0x1]
      %v1003 = vld [vmem:[#allocation2 + $0x90] sm:$0xf]
      %v1004 = vld [vmem:[#allocation2 + $0x94] sm:$0xf]
      %v1005 = vld [vmem:[#allocation2 + $0x98] sm:$0x1]
      %v1006 = vld [vmem:[#allocation2 + $0x9c] sm:$0xf]
      %v1007 = vld [vmem:[#allocation2 + $0xa0] sm:$0xf]
      %v1008 = vld [vmem:[#allocation2 + $0xa4] sm:$0x1]
      %v1009 = vld [vmem:[#allocation2 + $0xa8] sm:$0xf]
      %v1010 = vld [vmem:[#allocation2 + $0xac] sm:$0xf]
      %v1011 = vld [vmem:[#allocation2 + $0xb0] sm:$0x1]
      %v1012 = vld [vmem:[#allocation2 + $0xb4] sm:$0xf]
      %v1013 = vld [vmem:[#allocation2 + $0xb8] sm:$0xf]
      %v1014 = vld [vmem:[#allocation2 + $0xbc] sm:$0x1]
      %vm1015 = vsmask.f32 3328
      %vm1016 = vsmask.f32 7440
      %vm1017 = vmor %vm1015, %vm1016
      %v1019 = vshrl.u32 %v967, 16
      %v1021 = vrot.slane %v1019, 4
      %v1022 = vshll.u32 %v967, 16
      %v1024 = vrot.slane %v1022, 5
      %v1025 = vor.u32 %v1021, %v1024
      %v1026 = vrot.slane %v1025, 4
      %v1028 = vshll.u32 %v968, 16
      %v1030 = vrot.slane %v1028, 5
      %v1031 = vsel %vm1017, %v1026, %v1030
      %v1032 = vshrl.u32 %v968, 16
      %v1034 = vrot.slane %v1032, 4
      %v1035 = vor.u32 %v1034, %v1030
      %v1036 = vrot.slane %v1035, 4
      %v1038 = vshll.u32 %v969, 16
      %v1040 = vrot.slane %v1038, 5
      %v1041 = vsel %vm1017, %v1036, %v1040
      %v1043 = vshrl.u32 %v970, 16
      %v1045 = vrot.slane %v1043, 4
      %v1046 = vshll.u32 %v970, 16
      %v1048 = vrot.slane %v1046, 5
      %v1049 = vor.u32 %v1045, %v1048
      %v1050 = vrot.slane %v1049, 4
      %v1052 = vshll.u32 %v971, 16
      %v1054 = vrot.slane %v1052, 5
      %v1055 = vsel %vm1017, %v1050, %v1054
      %v1056 = vshrl.u32 %v971, 16
      %v1058 = vrot.slane %v1056, 4
      %v1059 = vor.u32 %v1058, %v1054
      %v1060 = vrot.slane %v1059, 4
      %v1062 = vshll.u32 %v972, 16
      %v1064 = vrot.slane %v1062, 5
      %v1065 = vsel %vm1017, %v1060, %v1064
      %v1067 = vshrl.u32 %v973, 16
      %v1069 = vrot.slane %v1067, 4
      %v1070 = vshll.u32 %v973, 16
      %v1072 = vrot.slane %v1070, 5
      %v1073 = vor.u32 %v1069, %v1072
      %v1074 = vrot.slane %v1073, 4
      %v1076 = vshll.u32 %v974, 16
      %v1078 = vrot.slane %v1076, 5
      %v1079 = vsel %vm1017, %v1074, %v1078
      %v1080 = vshrl.u32 %v974, 16
      %v1082 = vrot.slane %v1080, 4
      %v1083 = vor.u32 %v1082, %v1078
      %v1084 = vrot.slane %v1083, 4
      %v1086 = vshll.u32 %v975, 16
      %v1088 = vrot.slane %v1086, 5
      %v1089 = vsel %vm1017, %v1084, %v1088
      %v1091 = vshrl.u32 %v976, 16
      %v1093 = vrot.slane %v1091, 4
      %v1094 = vshll.u32 %v976, 16
      %v1096 = vrot.slane %v1094, 5
      %v1097 = vor.u32 %v1093, %v1096
      %v1098 = vrot.slane %v1097, 4
      %v1100 = vshll.u32 %v977, 16
      %v1102 = vrot.slane %v1100, 5
      %v1103 = vsel %vm1017, %v1098, %v1102
      %v1104 = vshrl.u32 %v977, 16
      %v1106 = vrot.slane %v1104, 4
      %v1107 = vor.u32 %v1106, %v1102
      %v1108 = vrot.slane %v1107, 4
      %v1110 = vshll.u32 %v978, 16
      %v1112 = vrot.slane %v1110, 5
      %v1113 = vsel %vm1017, %v1108, %v1112
      %v1115 = vshrl.u32 %v979, 16
      %v1117 = vrot.slane %v1115, 4
      %v1118 = vshll.u32 %v979, 16
      %v1120 = vrot.slane %v1118, 5
      %v1121 = vor.u32 %v1117, %v1120
      %v1122 = vrot.slane %v1121, 4
      %v1124 = vshll.u32 %v980, 16
      %v1126 = vrot.slane %v1124, 5
      %v1127 = vsel %vm1017, %v1122, %v1126
      %v1128 = vshrl.u32 %v980, 16
      %v1130 = vrot.slane %v1128, 4
      %v1131 = vor.u32 %v1130, %v1126
      %v1132 = vrot.slane %v1131, 4
      %v1134 = vshll.u32 %v981, 16
      %v1136 = vrot.slane %v1134, 5
      %v1137 = vsel %vm1017, %v1132, %v1136
      %v1139 = vshrl.u32 %v982, 16
      %v1141 = vrot.slane %v1139, 4
      %v1142 = vshll.u32 %v982, 16
      %v1144 = vrot.slane %v1142, 5
      %v1145 = vor.u32 %v1141, %v1144
      %v1146 = vrot.slane %v1145, 4
      %v1148 = vshll.u32 %v983, 16
      %v1150 = vrot.slane %v1148, 5
      %v1151 = vsel %vm1017, %v1146, %v1150
      %v1152 = vshrl.u32 %v983, 16
      %v1154 = vrot.slane %v1152, 4
      %v1155 = vor.u32 %v1154, %v1150
      %v1156 = vrot.slane %v1155, 4
      %v1158 = vshll.u32 %v984, 16
      %v1160 = vrot.slane %v1158, 5
      %v1161 = vsel %vm1017, %v1156, %v1160
      %v1163 = vshrl.u32 %v985, 16
      %v1165 = vrot.slane %v1163, 4
      %v1166 = vshll.u32 %v985, 16
      %v1168 = vrot.slane %v1166, 5
      %v1169 = vor.u32 %v1165, %v1168
      %v1170 = vrot.slane %v1169, 4
      %v1172 = vshll.u32 %v986, 16
      %v1174 = vrot.slane %v1172, 5
      %v1175 = vsel %vm1017, %v1170, %v1174
      %v1176 = vshrl.u32 %v986, 16
      %v1178 = vrot.slane %v1176, 4
      %v1179 = vor.u32 %v1178, %v1174
      %v1180 = vrot.slane %v1179, 4
      %v1182 = vshll.u32 %v987, 16
      %v1184 = vrot.slane %v1182, 5
      %v1185 = vsel %vm1017, %v1180, %v1184
      %v1187 = vshrl.u32 %v988, 16
      %v1189 = vrot.slane %v1187, 4
      %v1190 = vshll.u32 %v988, 16
      %v1192 = vrot.slane %v1190, 5
      %v1193 = vor.u32 %v1189, %v1192
      %v1194 = vrot.slane %v1193, 4
      %v1196 = vshll.u32 %v989, 16
      %v1198 = vrot.slane %v1196, 5
      %v1199 = vsel %vm1017, %v1194, %v1198
      %v1200 = vshrl.u32 %v989, 16
      %v1202 = vrot.slane %v1200, 4
      %v1203 = vor.u32 %v1202, %v1198
      %v1204 = vrot.slane %v1203, 4
      %v1206 = vshll.u32 %v990, 16
      %v1208 = vrot.slane %v1206, 5
      %v1209 = vsel %vm1017, %v1204, %v1208
      %v1211 = vshrl.u32 %v991, 16
      %v1213 = vrot.slane %v1211, 4
      %v1214 = vshll.u32 %v991, 16
      %v1216 = vrot.slane %v1214, 5
      %v1217 = vor.u32 %v1213, %v1216
      %v1218 = vrot.slane %v1217, 4
      %v1220 = vshll.u32 %v992, 16
      %v1222 = vrot.slane %v1220, 5
      %v1223 = vsel %vm1017, %v1218, %v1222
      %v1224 = vshrl.u32 %v992, 16
      %v1226 = vrot.slane %v1224, 4
      %v1227 = vor.u32 %v1226, %v1222
      %v1228 = vrot.slane %v1227, 4
      %v1230 = vshll.u32 %v993, 16
      %v1232 = vrot.slane %v1230, 5
      %v1233 = vsel %vm1017, %v1228, %v1232
      %v1235 = vshrl.u32 %v994, 16
      %v1237 = vrot.slane %v1235, 4
      %v1238 = vshll.u32 %v994, 16
      %v1240 = vrot.slane %v1238, 5
      %v1241 = vor.u32 %v1237, %v1240
      %v1242 = vrot.slane %v1241, 4
      %v1244 = vshll.u32 %v995, 16
      %v1246 = vrot.slane %v1244, 5
      %v1247 = vsel %vm1017, %v1242, %v1246
      %v1248 = vshrl.u32 %v995, 16
      %v1250 = vrot.slane %v1248, 4
      %v1251 = vor.u32 %v1250, %v1246
      %v1252 = vrot.slane %v1251, 4
      %v1254 = vshll.u32 %v996, 16
      %v1256 = vrot.slane %v1254, 5
      %v1257 = vsel %vm1017, %v1252, %v1256
      %v1259 = vshrl.u32 %v997, 16
      %v1261 = vrot.slane %v1259, 4
      %v1262 = vshll.u32 %v997, 16
      %v1264 = vrot.slane %v1262, 5
      %v1265 = vor.u32 %v1261, %v1264
      %v1266 = vrot.slane %v1265, 4
      %v1268 = vshll.u32 %v998, 16
      %v1270 = vrot.slane %v1268, 5
      %v1271 = vsel %vm1017, %v1266, %v1270
      %v1272 = vshrl.u32 %v998, 16
      %v1274 = vrot.slane %v1272, 4
      %v1275 = vor.u32 %v1274, %v1270
      %v1276 = vrot.slane %v1275, 4
      %v1278 = vshll.u32 %v999, 16
      %v1280 = vrot.slane %v1278, 5
      %v1281 = vsel %vm1017, %v1276, %v1280
      %v1283 = vshrl.u32 %v1000, 16
      %v1285 = vrot.slane %v1283, 4
      %v1286 = vshll.u32 %v1000, 16
      %v1288 = vrot.slane %v1286, 5
      %v1289 = vor.u32 %v1285, %v1288
      %v1290 = vrot.slane %v1289, 4
      %v1292 = vshll.u32 %v1001, 16
      %v1294 = vrot.slane %v1292, 5
      %v1295 = vsel %vm1017, %v1290, %v1294
      %v1296 = vshrl.u32 %v1001, 16
      %v1298 = vrot.slane %v1296, 4
      %v1299 = vor.u32 %v1298, %v1294
      %v1300 = vrot.slane %v1299, 4
      %v1302 = vshll.u32 %v1002, 16
      %v1304 = vrot.slane %v1302, 5
      %v1305 = vsel %vm1017, %v1300, %v1304
      %v1307 = vshrl.u32 %v1003, 16
      %v1309 = vrot.slane %v1307, 4
      %v1310 = vshll.u32 %v1003, 16
      %v1312 = vrot.slane %v1310, 5
      %v1313 = vor.u32 %v1309, %v1312
      %v1314 = vrot.slane %v1313, 4
      %v1316 = vshll.u32 %v1004, 16
      %v1318 = vrot.slane %v1316, 5
      %v1319 = vsel %vm1017, %v1314, %v1318
      %v1320 = vshrl.u32 %v1004, 16
      %v1322 = vrot.slane %v1320, 4
      %v1323 = vor.u32 %v1322, %v1318
      %v1324 = vrot.slane %v1323, 4
      %v1326 = vshll.u32 %v1005, 16
      %v1328 = vrot.slane %v1326, 5
      %v1329 = vsel %vm1017, %v1324, %v1328
      %v1331 = vshrl.u32 %v1006, 16
      %v1333 = vrot.slane %v1331, 4
      %v1334 = vshll.u32 %v1006, 16
      %v1336 = vrot.slane %v1334, 5
      %v1337 = vor.u32 %v1333, %v1336
      %v1338 = vrot.slane %v1337, 4
      %v1340 = vshll.u32 %v1007, 16
      %v1342 = vrot.slane %v1340, 5
      %v1343 = vsel %vm1017, %v1338, %v1342
      %v1344 = vshrl.u32 %v1007, 16
      %v1346 = vrot.slane %v1344, 4
      %v1347 = vor.u32 %v1346, %v1342
      %v1348 = vrot.slane %v1347, 4
      %v1350 = vshll.u32 %v1008, 16
      %v1352 = vrot.slane %v1350, 5
      %v1353 = vsel %vm1017, %v1348, %v1352
      %v1355 = vshrl.u32 %v1009, 16
      %v1357 = vrot.slane %v1355, 4
      %v1358 = vshll.u32 %v1009, 16
      %v1360 = vrot.slane %v1358, 5
      %v1361 = vor.u32 %v1357, %v1360
      %v1362 = vrot.slane %v1361, 4
      %v1364 = vshll.u32 %v1010, 16
      %v1366 = vrot.slane %v1364, 5
      %v1367 = vsel %vm1017, %v1362, %v1366
      %v1368 = vshrl.u32 %v1010, 16
      %v1370 = vrot.slane %v1368, 4
      %v1371 = vor.u32 %v1370, %v1366
      %v1372 = vrot.slane %v1371, 4
      %v1374 = vshll.u32 %v1011, 16
      %v1376 = vrot.slane %v1374, 5
      %v1377 = vsel %vm1017, %v1372, %v1376
      %v1379 = vshrl.u32 %v1012, 16
      %v1381 = vrot.slane %v1379, 4
      %v1382 = vshll.u32 %v1012, 16
      %v1384 = vrot.slane %v1382, 5
      %v1385 = vor.u32 %v1381, %v1384
      %v1386 = vrot.slane %v1385, 4
      %v1388 = vshll.u32 %v1013, 16
      %v1390 = vrot.slane %v1388, 5
      %v1391 = vsel %vm1017, %v1386, %v1390
      %v1392 = vshrl.u32 %v1013, 16
      %v1394 = vrot.slane %v1392, 4
      %v1395 = vor.u32 %v1394, %v1390
      %v1396 = vrot.slane %v1395, 4
      %v1398 = vshll.u32 %v1014, 16
      %v1400 = vrot.slane %v1398, 5
      %v1401 = vsel %vm1017, %v1396, %v1400
      %1402 = vrot.lane.b32.xlu0 %v1031, 4
      %v1403 = vpop.permute.xlu0 %1402
      %1404 = vrot.lane.b32.xlu0 %v1041, 4
      %v1405 = vpop.permute.xlu0 %1404
      %1406 = vrot.lane.b32.xlu0 %v1055, 4
      %v1407 = vpop.permute.xlu0 %1406
      %1408 = vrot.lane.b32.xlu0 %v1065, 4
      %v1409 = vpop.permute.xlu0 %1408
      %1410 = vrot.lane.b32.xlu0 %v1079, 4
      %v1411 = vpop.permute.xlu0 %1410
      %1412 = vrot.lane.b32.xlu0 %v1089, 4
      %v1413 = vpop.permute.xlu0 %1412
      %1414 = vrot.lane.b32.xlu0 %v1103, 4
      %v1415 = vpop.permute.xlu0 %1414
      %1416 = vrot.lane.b32.xlu0 %v1113, 4
      %v1417 = vpop.permute.xlu0 %1416
      %1418 = vrot.lane.b32.xlu0 %v1127, 4
      %v1419 = vpop.permute.xlu0 %1418
      %1420 = vrot.lane.b32.xlu0 %v1137, 4
      %v1421 = vpop.permute.xlu0 %1420
      %1422 = vrot.lane.b32.xlu0 %v1151, 4
      %v1423 = vpop.permute.xlu0 %1422
      %1424 = vrot.lane.b32.xlu0 %v1161, 4
      %v1425 = vpop.permute.xlu0 %1424
      %1426 = vrot.lane.b32.xlu0 %v1175, 4
      %v1427 = vpop.permute.xlu0 %1426
      %1428 = vrot.lane.b32.xlu0 %v1185, 4
      %v1429 = vpop.permute.xlu0 %1428
      %1430 = vrot.lane.b32.xlu0 %v1199, 4
      %v1431 = vpop.permute.xlu0 %1430
      %1432 = vrot.lane.b32.xlu0 %v1209, 4
      %v1433 = vpop.permute.xlu0 %1432
      %1434 = vrot.lane.b32.xlu0 %v1223, 4
      %v1435 = vpop.permute.xlu0 %1434
      %1436 = vrot.lane.b32.xlu0 %v1233, 4
      %v1437 = vpop.permute.xlu0 %1436
      %1438 = vrot.lane.b32.xlu0 %v1247, 4
      %v1439 = vpop.permute.xlu0 %1438
      %1440 = vrot.lane.b32.xlu0 %v1257, 4
      %v1441 = vpop.permute.xlu0 %1440
      %1442 = vrot.lane.b32.xlu0 %v1271, 4
      %v1443 = vpop.permute.xlu0 %1442
      %1444 = vrot.lane.b32.xlu0 %v1281, 4
      %v1445 = vpop.permute.xlu0 %1444
      %1446 = vrot.lane.b32.xlu0 %v1295, 4
      %v1447 = vpop.permute.xlu0 %1446
      %1448 = vrot.lane.b32.xlu0 %v1305, 4
      %v1449 = vpop.permute.xlu0 %1448
      %1450 = vrot.lane.b32.xlu0 %v1319, 4
      %v1451 = vpop.permute.xlu0 %1450
      %1452 = vrot.lane.b32.xlu0 %v1329, 4
      %v1453 = vpop.permute.xlu0 %1452
      %1454 = vrot.lane.b32.xlu0 %v1343, 4
      %v1455 = vpop.permute.xlu0 %1454
      %1456 = vrot.lane.b32.xlu0 %v1353, 4
      %v1457 = vpop.permute.xlu0 %1456
      %1458 = vrot.lane.b32.xlu0 %v1367, 4
      %v1459 = vpop.permute.xlu0 %1458
      %1460 = vrot.lane.b32.xlu0 %v1377, 4
      %v1461 = vpop.permute.xlu0 %1460
      %1462 = vrot.lane.b32.xlu0 %v1391, 4
      %v1463 = vpop.permute.xlu0 %1462
      %1464 = vrot.lane.b32.xlu0 %v1401, 4
      %v1465 = vpop.permute.xlu0 %1464
      %vm1498 = vcmask 60448
      %1499 = vst.msk [vmem:[#allocation4] sm:$0xf] %vm1498, %v1403
      %1500 = vst.msk [vmem:[#allocation4 + $0x4] sm:$0xf] %vm1498, %v1405
      %1501 = vst.msk [vmem:[#allocation4 + $0x8] sm:$0xf] %vm1498, %v1407
      %1502 = vst.msk [vmem:[#allocation4 + $0xc] sm:$0xf] %vm1498, %v1409
      %1503 = vst.msk [vmem:[#allocation4 + $0x10] sm:$0xf] %vm1498, %v1411
      %1504 = vst.msk [vmem:[#allocation4 + $0x14] sm:$0xf] %vm1498, %v1413
      %1505 = vst.msk [vmem:[#allocation4 + $0x18] sm:$0xf] %vm1498, %v1415
      %1506 = vst.msk [vmem:[#allocation4 + $0x1c] sm:$0xf] %vm1498, %v1417
      %1507 = vst.msk [vmem:[#allocation4 + $0x20] sm:$0xf] %vm1498, %v1419
      %1508 = vst.msk [vmem:[#allocation4 + $0x24] sm:$0xf] %vm1498, %v1421
      %1509 = vst.msk [vmem:[#allocation4 + $0x28] sm:$0xf] %vm1498, %v1423
      %1510 = vst.msk [vmem:[#allocation4 + $0x2c] sm:$0xf] %vm1498, %v1425
      %1511 = vst.msk [vmem:[#allocation4 + $0x30] sm:$0xf] %vm1498, %v1427
      %1512 = vst.msk [vmem:[#allocation4 + $0x34] sm:$0xf] %vm1498, %v1429
      %1513 = vst.msk [vmem:[#allocation4 + $0x38] sm:$0xf] %vm1498, %v1431
      %1514 = vst.msk [vmem:[#allocation4 + $0x3c] sm:$0xf] %vm1498, %v1433
      %1515 = vst.msk [vmem:[#allocation4 + $0x40] sm:$0xf] %vm1498, %v1435
      %1516 = vst.msk [vmem:[#allocation4 + $0x44] sm:$0xf] %vm1498, %v1437
      %1517 = vst.msk [vmem:[#allocation4 + $0x48] sm:$0xf] %vm1498, %v1439
      %1518 = vst.msk [vmem:[#allocation4 + $0x4c] sm:$0xf] %vm1498, %v1441
      %1519 = vst.msk [vmem:[#allocation4 + $0x50] sm:$0xf] %vm1498, %v1443
      %1520 = vst.msk [vmem:[#allocation4 + $0x54] sm:$0xf] %vm1498, %v1445
      %1521 = vst.msk [vmem:[#allocation4 + $0x58] sm:$0xf] %vm1498, %v1447
      %1522 = vst.msk [vmem:[#allocation4 + $0x5c] sm:$0xf] %vm1498, %v1449
      %1523 = vst.msk [vmem:[#allocation4 + $0x60] sm:$0xf] %vm1498, %v1451
      %1524 = vst.msk [vmem:[#allocation4 + $0x64] sm:$0xf] %vm1498, %v1453
      %1525 = vst.msk [vmem:[#allocation4 + $0x68] sm:$0xf] %vm1498, %v1455
      %1526 = vst.msk [vmem:[#allocation4 + $0x6c] sm:$0xf] %vm1498, %v1457
      %1527 = vst.msk [vmem:[#allocation4 + $0x70] sm:$0xf] %vm1498, %v1459
      %1528 = vst.msk [vmem:[#allocation4 + $0x74] sm:$0xf] %vm1498, %v1461
      %1529 = vst.msk [vmem:[#allocation4 + $0x78] sm:$0xf] %vm1498, %v1463
      %1530 = vst.msk [vmem:[#allocation4 + $0x7c] sm:$0xf] %vm1498, %v1465
      %v1531 = vld [vmem:[#allocation2] sm:$0xe]
      %v1532 = vld [vmem:[#allocation2 + $0x4] sm:$0xf]
      %v1533 = vld [vmem:[#allocation2 + $0x8] sm:$0x1]
      %v1534 = vld [vmem:[#allocation2 + $0xc] sm:$0xe]
      %v1535 = vld [vmem:[#allocation2 + $0x10] sm:$0xf]
      %v1536 = vld [vmem:[#allocation2 + $0x14] sm:$0x1]
      %v1537 = vld [vmem:[#allocation2 + $0x18] sm:$0xe]
      %v1538 = vld [vmem:[#allocation2 + $0x1c] sm:$0xf]
      %v1539 = vld [vmem:[#allocation2 + $0x20] sm:$0x1]
      %v1540 = vld [vmem:[#allocation2 + $0x24] sm:$0xe]
      %v1541 = vld [vmem:[#allocation2 + $0x28] sm:$0xf]
      %v1542 = vld [vmem:[#allocation2 + $0x2c] sm:$0x1]
      %v1543 = vld [vmem:[#allocation2 + $0x30] sm:$0xe]
      %v1544 = vld [vmem:[#allocation2 + $0x34] sm:$0xf]
      %v1545 = vld [vmem:[#allocation2 + $0x38] sm:$0x1]
      %v1546 = vld [vmem:[#allocation2 + $0x3c] sm:$0xe]
      %v1547 = vld [vmem:[#allocation2 + $0x40] sm:$0xf]
      %v1548 = vld [vmem:[#allocation2 + $0x44] sm:$0x1]
      %v1549 = vld [vmem:[#allocation2 + $0x48] sm:$0xe]
      %v1550 = vld [vmem:[#allocation2 + $0x4c] sm:$0xf]
      %v1551 = vld [vmem:[#allocation2 + $0x50] sm:$0x1]
      %v1552 = vld [vmem:[#allocation2 + $0x54] sm:$0xe]
      %v1553 = vld [vmem:[#allocation2 + $0x58] sm:$0xf]
      %v1554 = vld [vmem:[#allocation2 + $0x5c] sm:$0x1]
      %v1555 = vld [vmem:[#allocation2 + $0x60] sm:$0xe]
      %v1556 = vld [vmem:[#allocation2 + $0x64] sm:$0xf]
      %v1557 = vld [vmem:[#allocation2 + $0x68] sm:$0x1]
      %v1558 = vld [vmem:[#allocation2 + $0x6c] sm:$0xe]
      %v1559 = vld [vmem:[#allocation2 + $0x70] sm:$0xf]
      %v1560 = vld [vmem:[#allocation2 + $0x74] sm:$0x1]
      %v1561 = vld [vmem:[#allocation2 + $0x78] sm:$0xe]
      %v1562 = vld [vmem:[#allocation2 + $0x7c] sm:$0xf]
      %v1563 = vld [vmem:[#allocation2 + $0x80] sm:$0x1]
      %v1564 = vld [vmem:[#allocation2 + $0x84] sm:$0xe]
      %v1565 = vld [vmem:[#allocation2 + $0x88] sm:$0xf]
      %v1566 = vld [vmem:[#allocation2 + $0x8c] sm:$0x1]
      %v1567 = vld [vmem:[#allocation2 + $0x90] sm:$0xe]
      %v1568 = vld [vmem:[#allocation2 + $0x94] sm:$0xf]
      %v1569 = vld [vmem:[#allocation2 + $0x98] sm:$0x1]
      %v1570 = vld [vmem:[#allocation2 + $0x9c] sm:$0xe]
      %v1571 = vld [vmem:[#allocation2 + $0xa0] sm:$0xf]
      %v1572 = vld [vmem:[#allocation2 + $0xa4] sm:$0x1]
      %v1573 = vld [vmem:[#allocation2 + $0xa8] sm:$0xe]
      %v1574 = vld [vmem:[#allocation2 + $0xac] sm:$0xf]
      %v1575 = vld [vmem:[#allocation2 + $0xb0] sm:$0x1]
      %v1576 = vld [vmem:[#allocation2 + $0xb4] sm:$0xe]
      %v1577 = vld [vmem:[#allocation2 + $0xb8] sm:$0xf]
      %v1578 = vld [vmem:[#allocation2 + $0xbc] sm:$0x1]
      %vm1627 = vcmask 1042432
      %vm1628 = vcmask 1046532
      %vm1629 = vmor %vm1627, %vm1628
      %v1630 = vrot.slane %v1531, 5
      %v1631 = vrot.slane %v1630, 4
      %v1632 = vrot.slane %v1532, 5
      %v1633 = vsel %vm1629, %v1631, %v1632
      %v1634 = vrot.slane %v1632, 4
      %v1635 = vrot.slane %v1533, 5
      %v1636 = vsel %vm1629, %v1634, %v1635
      %v1637 = vrot.slane %v1534, 5
      %v1638 = vrot.slane %v1637, 4
      %v1639 = vrot.slane %v1535, 5
      %v1640 = vsel %vm1629, %v1638, %v1639
      %v1641 = vrot.slane %v1639, 4
      %v1642 = vrot.slane %v1536, 5
      %v1643 = vsel %vm1629, %v1641, %v1642
      %v1644 = vrot.slane %v1537, 5
      %v1645 = vrot.slane %v1644, 4
      %v1646 = vrot.slane %v1538, 5
      %v1647 = vsel %vm1629, %v1645, %v1646
      %v1648 = vrot.slane %v1646, 4
      %v1649 = vrot.slane %v1539, 5
      %v1650 = vsel %vm1629, %v1648, %v1649
      %v1651 = vrot.slane %v1540, 5
      %v1652 = vrot.slane %v1651, 4
      %v1653 = vrot.slane %v1541, 5
      %v1654 = vsel %vm1629, %v1652, %v1653
      %v1655 = vrot.slane %v1653, 4
      %v1656 = vrot.slane %v1542, 5
      %v1657 = vsel %vm1629, %v1655, %v1656
      %v1658 = vrot.slane %v1543, 5
      %v1659 = vrot.slane %v1658, 4
      %v1660 = vrot.slane %v1544, 5
      %v1661 = vsel %vm1629, %v1659, %v1660
      %v1662 = vrot.slane %v1660, 4
      %v1663 = vrot.slane %v1545, 5
      %v1664 = vsel %vm1629, %v1662, %v1663
      %v1665 = vrot.slane %v1546, 5
      %v1666 = vrot.slane %v1665, 4
      %v1667 = vrot.slane %v1547, 5
      %v1668 = vsel %vm1629, %v1666, %v1667
      %v1669 = vrot.slane %v1667, 4
      %v1670 = vrot.slane %v1548, 5
      %v1671 = vsel %vm1629, %v1669, %v1670
      %v1672 = vrot.slane %v1549, 5
      %v1673 = vrot.slane %v1672, 4
      %v1674 = vrot.slane %v1550, 5
      %v1675 = vsel %vm1629, %v1673, %v1674
      %v1676 = vrot.slane %v1674, 4
      %v1677 = vrot.slane %v1551, 5
      %v1678 = vsel %vm1629, %v1676, %v1677
      %v1679 = vrot.slane %v1552, 5
      %v1680 = vrot.slane %v1679, 4
      %v1681 = vrot.slane %v1553, 5
      %v1682 = vsel %vm1629, %v1680, %v1681
      %v1683 = vrot.slane %v1681, 4
      %v1684 = vrot.slane %v1554, 5
      %v1685 = vsel %vm1629, %v1683, %v1684
      %v1686 = vrot.slane %v1555, 5
      %v1687 = vrot.slane %v1686, 4
      %v1688 = vrot.slane %v1556, 5
      %v1689 = vsel %vm1629, %v1687, %v1688
      %v1690 = vrot.slane %v1688, 4
      %v1691 = vrot.slane %v1557, 5
      %v1692 = vsel %vm1629, %v1690, %v1691
      %v1693 = vrot.slane %v1558, 5
      %v1694 = vrot.slane %v1693, 4
      %v1695 = vrot.slane %v1559, 5
      %v1696 = vsel %vm1629, %v1694, %v1695
      %v1697 = vrot.slane %v1695, 4
      %v1698 = vrot.slane %v1560, 5
      %v1699 = vsel %vm1629, %v1697, %v1698
      %v1700 = vrot.slane %v1561, 5
      %v1701 = vrot.slane %v1700, 4
      %v1702 = vrot.slane %v1562, 5
      %v1703 = vsel %vm1629, %v1701, %v1702
      %v1704 = vrot.slane %v1702, 4
      %v1705 = vrot.slane %v1563, 5
      %v1706 = vsel %vm1629, %v1704, %v1705
      %v1707 = vrot.slane %v1564, 5
      %v1708 = vrot.slane %v1707, 4
      %v1709 = vrot.slane %v1565, 5
      %v1710 = vsel %vm1629, %v1708, %v1709
      %v1711 = vrot.slane %v1709, 4
      %v1712 = vrot.slane %v1566, 5
      %v1713 = vsel %vm1629, %v1711, %v1712
      %v1714 = vrot.slane %v1567, 5
      %v1715 = vrot.slane %v1714, 4
      %v1716 = vrot.slane %v1568, 5
      %v1717 = vsel %vm1629, %v1715, %v1716
      %v1718 = vrot.slane %v1716, 4
      %v1719 = vrot.slane %v1569, 5
      %v1720 = vsel %vm1629, %v1718, %v1719
      %v1721 = vrot.slane %v1570, 5
      %v1722 = vrot.slane %v1721, 4
      %v1723 = vrot.slane %v1571, 5
      %v1724 = vsel %vm1629, %v1722, %v1723
      %v1725 = vrot.slane %v1723, 4
      %v1726 = vrot.slane %v1572, 5
      %v1727 = vsel %vm1629, %v1725, %v1726
      %v1728 = vrot.slane %v1573, 5
      %v1729 = vrot.slane %v1728, 4
      %v1730 = vrot.slane %v1574, 5
      %v1731 = vsel %vm1629, %v1729, %v1730
      %v1732 = vrot.slane %v1730, 4
      %v1733 = vrot.slane %v1575, 5
      %v1734 = vsel %vm1629, %v1732, %v1733
      %v1735 = vrot.slane %v1576, 5
      %v1736 = vrot.slane %v1735, 4
      %v1737 = vrot.slane %v1577, 5
      %v1738 = vsel %vm1629, %v1736, %v1737
      %v1739 = vrot.slane %v1737, 4
      %v1740 = vrot.slane %v1578, 5
      %v1741 = vsel %vm1629, %v1739, %v1740
      %1742 = vrot.lane.b32.xlu0 %v1633, 8
      %v1743 = vpop.permute.xlu0 %1742
      %1744 = vrot.lane.b32.xlu0 %v1636, 8
      %v1745 = vpop.permute.xlu0 %1744
      %1746 = vrot.lane.b32.xlu0 %v1640, 8
      %v1747 = vpop.permute.xlu0 %1746
      %1748 = vrot.lane.b32.xlu0 %v1643, 8
      %v1749 = vpop.permute.xlu0 %1748
      %1750 = vrot.lane.b32.xlu0 %v1647, 8
      %v1751 = vpop.permute.xlu0 %1750
      %1752 = vrot.lane.b32.xlu0 %v1650, 8
      %v1753 = vpop.permute.xlu0 %1752
      %1754 = vrot.lane.b32.xlu0 %v1654, 8
      %v1755 = vpop.permute.xlu0 %1754
      %1756 = vrot.lane.b32.xlu0 %v1657, 8
      %v1757 = vpop.permute.xlu0 %1756
      %1758 = vrot.lane.b32.xlu0 %v1661, 8
      %v1759 = vpop.permute.xlu0 %1758
      %1760 = vrot.lane.b32.xlu0 %v1664, 8
      %v1761 = vpop.permute.xlu0 %1760
      %1762 = vrot.lane.b32.xlu0 %v1668, 8
      %v1763 = vpop.permute.xlu0 %1762
      %1764 = vrot.lane.b32.xlu0 %v1671, 8
      %v1765 = vpop.permute.xlu0 %1764
      %1766 = vrot.lane.b32.xlu0 %v1675, 8
      %v1767 = vpop.permute.xlu0 %1766
      %1768 = vrot.lane.b32.xlu0 %v1678, 8
      %v1769 = vpop.permute.xlu0 %1768
      %1770 = vrot.lane.b32.xlu0 %v1682, 8
      %v1771 = vpop.permute.xlu0 %1770
      %1772 = vrot.lane.b32.xlu0 %v1685, 8
      %v1773 = vpop.permute.xlu0 %1772
      %1774 = vrot.lane.b32.xlu0 %v1689, 8
      %v1775 = vpop.permute.xlu0 %1774
      %1776 = vrot.lane.b32.xlu0 %v1692, 8
      %v1777 = vpop.permute.xlu0 %1776
      %1778 = vrot.lane.b32.xlu0 %v1696, 8
      %v1779 = vpop.permute.xlu0 %1778
      %1780 = vrot.lane.b32.xlu0 %v1699, 8
      %v1781 = vpop.permute.xlu0 %1780
      %1782 = vrot.lane.b32.xlu0 %v1703, 8
      %v1783 = vpop.permute.xlu0 %1782
      %1784 = vrot.lane.b32.xlu0 %v1706, 8
      %v1785 = vpop.permute.xlu0 %1784
      %1786 = vrot.lane.b32.xlu0 %v1710, 8
      %v1787 = vpop.permute.xlu0 %1786
      %1788 = vrot.lane.b32.xlu0 %v1713, 8
      %v1789 = vpop.permute.xlu0 %1788
      %1790 = vrot.lane.b32.xlu0 %v1717, 8
      %v1791 = vpop.permute.xlu0 %1790
      %1792 = vrot.lane.b32.xlu0 %v1720, 8
      %v1793 = vpop.permute.xlu0 %1792
      %1794 = vrot.lane.b32.xlu0 %v1724, 8
      %v1795 = vpop.permute.xlu0 %1794
      %1796 = vrot.lane.b32.xlu0 %v1727, 8
      %v1797 = vpop.permute.xlu0 %1796
      %1798 = vrot.lane.b32.xlu0 %v1731, 8
      %v1799 = vpop.permute.xlu0 %1798
      %1800 = vrot.lane.b32.xlu0 %v1734, 8
      %v1801 = vpop.permute.xlu0 %1800
      %1802 = vrot.lane.b32.xlu0 %v1738, 8
      %v1803 = vpop.permute.xlu0 %1802
      %1804 = vrot.lane.b32.xlu0 %v1741, 8
      %v1805 = vpop.permute.xlu0 %1804
      %vm1838 = vcmask 93248
      %1839 = vst.msk [vmem:[#allocation4] sm:$0xf] %vm1838, %v1743
      %1840 = vst.msk [vmem:[#allocation4 + $0x4] sm:$0xf] %vm1838, %v1745
      %1841 = vst.msk [vmem:[#allocation4 + $0x8] sm:$0xf] %vm1838, %v1747
      %1842 = vst.msk [vmem:[#allocation4 + $0xc] sm:$0xf] %vm1838, %v1749
      %1843 = vst.msk [vmem:[#allocation4 + $0x10] sm:$0xf] %vm1838, %v1751
      %1844 = vst.msk [vmem:[#allocation4 + $0x14] sm:$0xf] %vm1838, %v1753
      %1845 = vst.msk [vmem:[#allocation4 + $0x18] sm:$0xf] %vm1838, %v1755
      %1846 = vst.msk [vmem:[#allocation4 + $0x1c] sm:$0xf] %vm1838, %v1757
      %1847 = vst.msk [vmem:[#allocation4 + $0x20] sm:$0xf] %vm1838, %v1759
      %1848 = vst.msk [vmem:[#allocation4 + $0x24] sm:$0xf] %vm1838, %v1761
      %1849 = vst.msk [vmem:[#allocation4 + $0x28] sm:$0xf] %vm1838, %v1763
      %1850 = vst.msk [vmem:[#allocation4 + $0x2c] sm:$0xf] %vm1838, %v1765
      %1851 = vst.msk [vmem:[#allocation4 + $0x30] sm:$0xf] %vm1838, %v1767
      %1852 = vst.msk [vmem:[#allocation4 + $0x34] sm:$0xf] %vm1838, %v1769
      %1853 = vst.msk [vmem:[#allocation4 + $0x38] sm:$0xf] %vm1838, %v1771
      %1854 = vst.msk [vmem:[#allocation4 + $0x3c] sm:$0xf] %vm1838, %v1773
      %1855 = vst.msk [vmem:[#allocation4 + $0x40] sm:$0xf] %vm1838, %v1775
      %1856 = vst.msk [vmem:[#allocation4 + $0x44] sm:$0xf] %vm1838, %v1777
      %1857 = vst.msk [vmem:[#allocation4 + $0x48] sm:$0xf] %vm1838, %v1779
      %1858 = vst.msk [vmem:[#allocation4 + $0x4c] sm:$0xf] %vm1838, %v1781
      %1859 = vst.msk [vmem:[#allocation4 + $0x50] sm:$0xf] %vm1838, %v1783
      %1860 = vst.msk [vmem:[#allocation4 + $0x54] sm:$0xf] %vm1838, %v1785
      %1861 = vst.msk [vmem:[#allocation4 + $0x58] sm:$0xf] %vm1838, %v1787
      %1862 = vst.msk [vmem:[#allocation4 + $0x5c] sm:$0xf] %vm1838, %v1789
      %1863 = vst.msk [vmem:[#allocation4 + $0x60] sm:$0xf] %vm1838, %v1791
      %1864 = vst.msk [vmem:[#allocation4 + $0x64] sm:$0xf] %vm1838, %v1793
      %1865 = vst.msk [vmem:[#allocation4 + $0x68] sm:$0xf] %vm1838, %v1795
      %1866 = vst.msk [vmem:[#allocation4 + $0x6c] sm:$0xf] %vm1838, %v1797
      %1867 = vst.msk [vmem:[#allocation4 + $0x70] sm:$0xf] %vm1838, %v1799
      %1868 = vst.msk [vmem:[#allocation4 + $0x74] sm:$0xf] %vm1838, %v1801
      %1869 = vst.msk [vmem:[#allocation4 + $0x78] sm:$0xf] %vm1838, %v1803
      %1870 = vst.msk [vmem:[#allocation4 + $0x7c] sm:$0xf] %vm1838, %v1805
      %v1871 = vld [vmem:[%s788] sm:$0xf]
      %v1872 = vld [vmem:[%s788 + $0x4] sm:$0xf]
      %v1873 = vld [vmem:[%s788 + $0xc] sm:$0xf]
      %v1874 = vld [vmem:[%s788 + $0x10] sm:$0xf]
      %v1875 = vld [vmem:[%s788 + $0x18] sm:$0xf]
      %v1876 = vld [vmem:[%s788 + $0x1c] sm:$0xf]
      %v1877 = vld [vmem:[%s788 + $0x24] sm:$0xf]
      %v1878 = vld [vmem:[%s788 + $0x28] sm:$0xf]
      %v1879 = vld [vmem:[%s788 + $0x30] sm:$0xf]
      %v1880 = vld [vmem:[%s788 + $0x34] sm:$0xf]
      %v1881 = vld [vmem:[%s788 + $0x3c] sm:$0xf]
      %v1882 = vld [vmem:[%s788 + $0x40] sm:$0xf]
      %v1883 = vld [vmem:[%s788 + $0x48] sm:$0xf]
      %v1884 = vld [vmem:[%s788 + $0x4c] sm:$0xf]
      %v1885 = vld [vmem:[%s788 + $0x54] sm:$0xf]
      %v1886 = vld [vmem:[%s788 + $0x58] sm:$0xf]
      %v1887 = vld [vmem:[%s788 + $0x60] sm:$0xf]
      %v1888 = vld [vmem:[%s788 + $0x64] sm:$0xf]
      %v1889 = vld [vmem:[%s788 + $0x6c] sm:$0xf]
      %v1890 = vld [vmem:[%s788 + $0x70] sm:$0xf]
      %v1891 = vld [vmem:[%s788 + $0x78] sm:$0xf]
      %v1892 = vld [vmem:[%s788 + $0x7c] sm:$0xf]
      %v1893 = vld [vmem:[%s788 + $0x84] sm:$0xf]
      %v1894 = vld [vmem:[%s788 + $0x88] sm:$0xf]
      %v1895 = vld [vmem:[%s788 + $0x90] sm:$0xf]
      %v1896 = vld [vmem:[%s788 + $0x94] sm:$0xf]
      %v1897 = vld [vmem:[%s788 + $0x9c] sm:$0xf]
      %v1898 = vld [vmem:[%s788 + $0xa0] sm:$0xf]
      %v1899 = vld [vmem:[%s788 + $0xa8] sm:$0xf]
      %v1900 = vld [vmem:[%s788 + $0xac] sm:$0xf]
      %v1901 = vld [vmem:[%s788 + $0xb4] sm:$0xf]
      %v1902 = vld [vmem:[%s788 + $0xb8] sm:$0xf]
      %1935 = vrot.lane.b32.xlu0 %v1871, 12
      %v1936 = vpop.permute.xlu0 %1935
      %1937 = vrot.lane.b32.xlu0 %v1872, 12
      %v1938 = vpop.permute.xlu0 %1937
      %1939 = vrot.lane.b32.xlu0 %v1873, 12
      %v1940 = vpop.permute.xlu0 %1939
      %1941 = vrot.lane.b32.xlu0 %v1874, 12
      %v1942 = vpop.permute.xlu0 %1941
      %1943 = vrot.lane.b32.xlu0 %v1875, 12
      %v1944 = vpop.permute.xlu0 %1943
      %1945 = vrot.lane.b32.xlu0 %v1876, 12
      %v1946 = vpop.permute.xlu0 %1945
      %1947 = vrot.lane.b32.xlu0 %v1877, 12
      %v1948 = vpop.permute.xlu0 %1947
      %1949 = vrot.lane.b32.xlu0 %v1878, 12
      %v1950 = vpop.permute.xlu0 %1949
      %1951 = vrot.lane.b32.xlu0 %v1879, 12
      %v1952 = vpop.permute.xlu0 %1951
      %1953 = vrot.lane.b32.xlu0 %v1880, 12
      %v1954 = vpop.permute.xlu0 %1953
      %1955 = vrot.lane.b32.xlu0 %v1881, 12
      %v1956 = vpop.permute.xlu0 %1955
      %1957 = vrot.lane.b32.xlu0 %v1882, 12
      %v1958 = vpop.permute.xlu0 %1957
      %1959 = vrot.lane.b32.xlu0 %v1883, 12
      %v1960 = vpop.permute.xlu0 %1959
      %1961 = vrot.lane.b32.xlu0 %v1884, 12
      %v1962 = vpop.permute.xlu0 %1961
      %1963 = vrot.lane.b32.xlu0 %v1885, 12
      %v1964 = vpop.permute.xlu0 %1963
      %1965 = vrot.lane.b32.xlu0 %v1886, 12
      %v1966 = vpop.permute.xlu0 %1965
      %1967 = vrot.lane.b32.xlu0 %v1887, 12
      %v1968 = vpop.permute.xlu0 %1967
      %1969 = vrot.lane.b32.xlu0 %v1888, 12
      %v1970 = vpop.permute.xlu0 %1969
      %1971 = vrot.lane.b32.xlu0 %v1889, 12
      %v1972 = vpop.permute.xlu0 %1971
      %1973 = vrot.lane.b32.xlu0 %v1890, 12
      %v1974 = vpop.permute.xlu0 %1973
      %1975 = vrot.lane.b32.xlu0 %v1891, 12
      %v1976 = vpop.permute.xlu0 %1975
      %1977 = vrot.lane.b32.xlu0 %v1892, 12
      %v1978 = vpop.permute.xlu0 %1977
      %1979 = vrot.lane.b32.xlu0 %v1893, 12
      %v1980 = vpop.permute.xlu0 %1979
      %1981 = vrot.lane.b32.xlu0 %v1894, 12
      %v1982 = vpop.permute.xlu0 %1981
      %1983 = vrot.lane.b32.xlu0 %v1895, 12
      %v1984 = vpop.permute.xlu0 %1983
      %1985 = vrot.lane.b32.xlu0 %v1896, 12
      %v1986 = vpop.permute.xlu0 %1985
      %1987 = vrot.lane.b32.xlu0 %v1897, 12
      %v1988 = vpop.permute.xlu0 %1987
      %1989 = vrot.lane.b32.xlu0 %v1898, 12
      %v1990 = vpop.permute.xlu0 %1989
      %1991 = vrot.lane.b32.xlu0 %v1899, 12
      %v1992 = vpop.permute.xlu0 %1991
      %1993 = vrot.lane.b32.xlu0 %v1900, 12
      %v1994 = vpop.permute.xlu0 %1993
      %1995 = vrot.lane.b32.xlu0 %v1901, 12
      %v1996 = vpop.permute.xlu0 %1995
      %1997 = vrot.lane.b32.xlu0 %v1902, 12
      %v1998 = vpop.permute.xlu0 %1997
      %vm2031 = vcmask 126048
      %2032 = vst.msk [vmem:[#allocation4] sm:$0xf] %vm2031, %v1936
      %2033 = vst.msk [vmem:[#allocation4 + $0x4] sm:$0xf] %vm2031, %v1938
      %2034 = vst.msk [vmem:[#allocation4 + $0x8] sm:$0xf] %vm2031, %v1940
      %2035 = vst.msk [vmem:[#allocation4 + $0xc] sm:$0xf] %vm2031, %v1942
      %2036 = vst.msk [vmem:[#allocation4 + $0x10] sm:$0xf] %vm2031, %v1944
      %2037 = vst.msk [vmem:[#allocation4 + $0x14] sm:$0xf] %vm2031, %v1946
      %2038 = vst.msk [vmem:[#allocation4 + $0x18] sm:$0xf] %vm2031, %v1948
      %2039 = vst.msk [vmem:[#allocation4 + $0x1c] sm:$0xf] %vm2031, %v1950
      %2040 = vst.msk [vmem:[#allocation4 + $0x20] sm:$0xf] %vm2031, %v1952
      %2041 = vst.msk [vmem:[#allocation4 + $0x24] sm:$0xf] %vm2031, %v1954
      %2042 = vst.msk [vmem:[#allocation4 + $0x28] sm:$0xf] %vm2031, %v1956
      %2043 = vst.msk [vmem:[#allocation4 + $0x2c] sm:$0xf] %vm2031, %v1958
      %2044 = vst.msk [vmem:[#allocation4 + $0x30] sm:$0xf] %vm2031, %v1960
      %2045 = vst.msk [vmem:[#allocation4 + $0x34] sm:$0xf] %vm2031, %v1962
      %2046 = vst.msk [vmem:[#allocation4 + $0x38] sm:$0xf] %vm2031, %v1964
      %2047 = vst.msk [vmem:[#allocation4 + $0x3c] sm:$0xf] %vm2031, %v1966
      %2048 = vst.msk [vmem:[#allocation4 + $0x40] sm:$0xf] %vm2031, %v1968
      %2049 = vst.msk [vmem:[#allocation4 + $0x44] sm:$0xf] %vm2031, %v1970
      %2050 = vst.msk [vmem:[#allocation4 + $0x48] sm:$0xf] %vm2031, %v1972
      %2051 = vst.msk [vmem:[#allocation4 + $0x4c] sm:$0xf] %vm2031, %v1974
      %2052 = vst.msk [vmem:[#allocation4 + $0x50] sm:$0xf] %vm2031, %v1976
      %2053 = vst.msk [vmem:[#allocation4 + $0x54] sm:$0xf] %vm2031, %v1978
      %2054 = vst.msk [vmem:[#allocation4 + $0x58] sm:$0xf] %vm2031, %v1980
      %2055 = vst.msk [vmem:[#allocation4 + $0x5c] sm:$0xf] %vm2031, %v1982
      %2056 = vst.msk [vmem:[#allocation4 + $0x60] sm:$0xf] %vm2031, %v1984
      %2057 = vst.msk [vmem:[#allocation4 + $0x64] sm:$0xf] %vm2031, %v1986
      %2058 = vst.msk [vmem:[#allocation4 + $0x68] sm:$0xf] %vm2031, %v1988
      %2059 = vst.msk [vmem:[#allocation4 + $0x6c] sm:$0xf] %vm2031, %v1990
      %2060 = vst.msk [vmem:[#allocation4 + $0x70] sm:$0xf] %vm2031, %v1992
      %2061 = vst.msk [vmem:[#allocation4 + $0x74] sm:$0xf] %vm2031, %v1994
      %2062 = vst.msk [vmem:[#allocation4 + $0x78] sm:$0xf] %vm2031, %v1996
      %2063 = vst.msk [vmem:[#allocation4 + $0x7c] sm:$0xf] %vm2031, %v1998
      %v2064 = vld [vmem:[%s788] sm:$0xf]
      %v2065 = vld [vmem:[%s788 + $0x4] sm:$0xf]
      %v2066 = vld [vmem:[%s788 + $0x8] sm:$0x1]
      %v2067 = vld [vmem:[%s788 + $0xc] sm:$0xf]
      %v2068 = vld [vmem:[%s788 + $0x10] sm:$0xf]
      %v2069 = vld [vmem:[%s788 + $0x14] sm:$0x1]
      %v2070 = vld [vmem:[%s788 + $0x18] sm:$0xf]
      %v2071 = vld [vmem:[%s788 + $0x1c] sm:$0xf]
      %v2072 = vld [vmem:[%s788 + $0x20] sm:$0x1]
      %v2073 = vld [vmem:[%s788 + $0x24] sm:$0xf]
      %v2074 = vld [vmem:[%s788 + $0x28] sm:$0xf]
      %v2075 = vld [vmem:[%s788 + $0x2c] sm:$0x1]
      %v2076 = vld [vmem:[%s788 + $0x30] sm:$0xf]
      %v2077 = vld [vmem:[%s788 + $0x34] sm:$0xf]
      %v2078 = vld [vmem:[%s788 + $0x38] sm:$0x1]
      %v2079 = vld [vmem:[%s788 + $0x3c] sm:$0xf]
      %v2080 = vld [vmem:[%s788 + $0x40] sm:$0xf]
      %v2081 = vld [vmem:[%s788 + $0x44] sm:$0x1]
      %v2082 = vld [vmem:[%s788 + $0x48] sm:$0xf]
      %v2083 = vld [vmem:[%s788 + $0x4c] sm:$0xf]
      %v2084 = vld [vmem:[%s788 + $0x50] sm:$0x1]
      %v2085 = vld [vmem:[%s788 + $0x54] sm:$0xf]
      %v2086 = vld [vmem:[%s788 + $0x58] sm:$0xf]
      %v2087 = vld [vmem:[%s788 + $0x5c] sm:$0x1]
      %v2088 = vld [vmem:[%s788 + $0x60] sm:$0xf]
      %v2089 = vld [vmem:[%s788 + $0x64] sm:$0xf]
      %v2090 = vld [vmem:[%s788 + $0x68] sm:$0x1]
      %v2091 = vld [vmem:[%s788 + $0x6c] sm:$0xf]
      %v2092 = vld [vmem:[%s788 + $0x70] sm:$0xf]
      %v2093 = vld [vmem:[%s788 + $0x74] sm:$0x1]
      %v2094 = vld [vmem:[%s788 + $0x78] sm:$0xf]
      %v2095 = vld [vmem:[%s788 + $0x7c] sm:$0xf]
      %v2096 = vld [vmem:[%s788 + $0x80] sm:$0x1]
      %v2097 = vld [vmem:[%s788 + $0x84] sm:$0xf]
      %v2098 = vld [vmem:[%s788 + $0x88] sm:$0xf]
      %v2099 = vld [vmem:[%s788 + $0x8c] sm:$0x1]
      %v2100 = vld [vmem:[%s788 + $0x90] sm:$0xf]
      %v2101 = vld [vmem:[%s788 + $0x94] sm:$0xf]
      %v2102 = vld [vmem:[%s788 + $0x98] sm:$0x1]
      %v2103 = vld [vmem:[%s788 + $0x9c] sm:$0xf]
      %v2104 = vld [vmem:[%s788 + $0xa0] sm:$0xf]
      %v2105 = vld [vmem:[%s788 + $0xa4] sm:$0x1]
      %v2106 = vld [vmem:[%s788 + $0xa8] sm:$0xf]
      %v2107 = vld [vmem:[%s788 + $0xac] sm:$0xf]
      %v2108 = vld [vmem:[%s788 + $0xb0] sm:$0x1]
      %v2109 = vld [vmem:[%s788 + $0xb4] sm:$0xf]
      %v2110 = vld [vmem:[%s788 + $0xb8] sm:$0xf]
      %v2111 = vld [vmem:[%s788 + $0xbc] sm:$0x1]
      %v2113 = vshrl.u32 %v2064, 16
      %v2115 = vrot.slane %v2113, 4
      %v2116 = vshll.u32 %v2064, 16
      %v2118 = vrot.slane %v2116, 5
      %v2119 = vor.u32 %v2115, %v2118
      %v2120 = vrot.slane %v2119, 4
      %v2122 = vshll.u32 %v2065, 16
      %v2124 = vrot.slane %v2122, 5
      %v2125 = vsel %vm1017, %v2120, %v2124
      %v2126 = vshrl.u32 %v2065, 16
      %v2128 = vrot.slane %v2126, 4
      %v2129 = vor.u32 %v2128, %v2124
      %v2130 = vrot.slane %v2129, 4
      %v2132 = vshll.u32 %v2066, 16
      %v2134 = vrot.slane %v2132, 5
      %v2135 = vsel %vm1017, %v2130, %v2134
      %v2137 = vshrl.u32 %v2067, 16
      %v2139 = vrot.slane %v2137, 4
      %v2140 = vshll.u32 %v2067, 16
      %v2142 = vrot.slane %v2140, 5
      %v2143 = vor.u32 %v2139, %v2142
      %v2144 = vrot.slane %v2143, 4
      %v2146 = vshll.u32 %v2068, 16
      %v2148 = vrot.slane %v2146, 5
      %v2149 = vsel %vm1017, %v2144, %v2148
      %v2150 = vshrl.u32 %v2068, 16
      %v2152 = vrot.slane %v2150, 4
      %v2153 = vor.u32 %v2152, %v2148
      %v2154 = vrot.slane %v2153, 4
      %v2156 = vshll.u32 %v2069, 16
      %v2158 = vrot.slane %v2156, 5
      %v2159 = vsel %vm1017, %v2154, %v2158
      %v2161 = vshrl.u32 %v2070, 16
      %v2163 = vrot.slane %v2161, 4
      %v2164 = vshll.u32 %v2070, 16
      %v2166 = vrot.slane %v2164, 5
      %v2167 = vor.u32 %v2163, %v2166
      %v2168 = vrot.slane %v2167, 4
      %v2170 = vshll.u32 %v2071, 16
      %v2172 = vrot.slane %v2170, 5
      %v2173 = vsel %vm1017, %v2168, %v2172
      %v2174 = vshrl.u32 %v2071, 16
      %v2176 = vrot.slane %v2174, 4
      %v2177 = vor.u32 %v2176, %v2172
      %v2178 = vrot.slane %v2177, 4
      %v2180 = vshll.u32 %v2072, 16
      %v2182 = vrot.slane %v2180, 5
      %v2183 = vsel %vm1017, %v2178, %v2182
      %v2185 = vshrl.u32 %v2073, 16
      %v2187 = vrot.slane %v2185, 4
      %v2188 = vshll.u32 %v2073, 16
      %v2190 = vrot.slane %v2188, 5
      %v2191 = vor.u32 %v2187, %v2190
      %v2192 = vrot.slane %v2191, 4
      %v2194 = vshll.u32 %v2074, 16
      %v2196 = vrot.slane %v2194, 5
      %v2197 = vsel %vm1017, %v2192, %v2196
      %v2198 = vshrl.u32 %v2074, 16
      %v2200 = vrot.slane %v2198, 4
      %v2201 = vor.u32 %v2200, %v2196
      %v2202 = vrot.slane %v2201, 4
      %v2204 = vshll.u32 %v2075, 16
      %v2206 = vrot.slane %v2204, 5
      %v2207 = vsel %vm1017, %v2202, %v2206
      %v2209 = vshrl.u32 %v2076, 16
      %v2211 = vrot.slane %v2209, 4
      %v2212 = vshll.u32 %v2076, 16
      %v2214 = vrot.slane %v2212, 5
      %v2215 = vor.u32 %v2211, %v2214
      %v2216 = vrot.slane %v2215, 4
      %v2218 = vshll.u32 %v2077, 16
      %v2220 = vrot.slane %v2218, 5
      %v2221 = vsel %vm1017, %v2216, %v2220
      %v2222 = vshrl.u32 %v2077, 16
      %v2224 = vrot.slane %v2222, 4
      %v2225 = vor.u32 %v2224, %v2220
      %v2226 = vrot.slane %v2225, 4
      %v2228 = vshll.u32 %v2078, 16
      %v2230 = vrot.slane %v2228, 5
      %v2231 = vsel %vm1017, %v2226, %v2230
      %v2233 = vshrl.u32 %v2079, 16
      %v2235 = vrot.slane %v2233, 4
      %v2236 = vshll.u32 %v2079, 16
      %v2238 = vrot.slane %v2236, 5
      %v2239 = vor.u32 %v2235, %v2238
      %v2240 = vrot.slane %v2239, 4
      %v2242 = vshll.u32 %v2080, 16
      %v2244 = vrot.slane %v2242, 5
      %v2245 = vsel %vm1017, %v2240, %v2244
      %v2246 = vshrl.u32 %v2080, 16
      %v2248 = vrot.slane %v2246, 4
      %v2249 = vor.u32 %v2248, %v2244
      %v2250 = vrot.slane %v2249, 4
      %v2252 = vshll.u32 %v2081, 16
      %v2254 = vrot.slane %v2252, 5
      %v2255 = vsel %vm1017, %v2250, %v2254
      %v2257 = vshrl.u32 %v2082, 16
      %v2259 = vrot.slane %v2257, 4
      %v2260 = vshll.u32 %v2082, 16
      %v2262 = vrot.slane %v2260, 5
      %v2263 = vor.u32 %v2259, %v2262
      %v2264 = vrot.slane %v2263, 4
      %v2266 = vshll.u32 %v2083, 16
      %v2268 = vrot.slane %v2266, 5
      %v2269 = vsel %vm1017, %v2264, %v2268
      %v2270 = vshrl.u32 %v2083, 16
      %v2272 = vrot.slane %v2270, 4
      %v2273 = vor.u32 %v2272, %v2268
      %v2274 = vrot.slane %v2273, 4
      %v2276 = vshll.u32 %v2084, 16
      %v2278 = vrot.slane %v2276, 5
      %v2279 = vsel %vm1017, %v2274, %v2278
      %v2281 = vshrl.u32 %v2085, 16
      %v2283 = vrot.slane %v2281, 4
      %v2284 = vshll.u32 %v2085, 16
      %v2286 = vrot.slane %v2284, 5
      %v2287 = vor.u32 %v2283, %v2286
      %v2288 = vrot.slane %v2287, 4
      %v2290 = vshll.u32 %v2086, 16
      %v2292 = vrot.slane %v2290, 5
      %v2293 = vsel %vm1017, %v2288, %v2292
      %v2294 = vshrl.u32 %v2086, 16
      %v2296 = vrot.slane %v2294, 4
      %v2297 = vor.u32 %v2296, %v2292
      %v2298 = vrot.slane %v2297, 4
      %v2300 = vshll.u32 %v2087, 16
      %v2302 = vrot.slane %v2300, 5
      %v2303 = vsel %vm1017, %v2298, %v2302
      %v2305 = vshrl.u32 %v2088, 16
      %v2307 = vrot.slane %v2305, 4
      %v2308 = vshll.u32 %v2088, 16
      %v2310 = vrot.slane %v2308, 5
      %v2311 = vor.u32 %v2307, %v2310
      %v2312 = vrot.slane %v2311, 4
      %v2314 = vshll.u32 %v2089, 16
      %v2316 = vrot.slane %v2314, 5
      %v2317 = vsel %vm1017, %v2312, %v2316
      %v2318 = vshrl.u32 %v2089, 16
      %v2320 = vrot.slane %v2318, 4
      %v2321 = vor.u32 %v2320, %v2316
      %v2322 = vrot.slane %v2321, 4
      %v2324 = vshll.u32 %v2090, 16
      %v2326 = vrot.slane %v2324, 5
      %v2327 = vsel %vm1017, %v2322, %v2326
      %v2329 = vshrl.u32 %v2091, 16
      %v2331 = vrot.slane %v2329, 4
      %v2332 = vshll.u32 %v2091, 16
      %v2334 = vrot.slane %v2332, 5
      %v2335 = vor.u32 %v2331, %v2334
      %v2336 = vrot.slane %v2335, 4
      %v2338 = vshll.u32 %v2092, 16
      %v2340 = vrot.slane %v2338, 5
      %v2341 = vsel %vm1017, %v2336, %v2340
      %v2342 = vshrl.u32 %v2092, 16
      %v2344 = vrot.slane %v2342, 4
      %v2345 = vor.u32 %v2344, %v2340
      %v2346 = vrot.slane %v2345, 4
      %v2348 = vshll.u32 %v2093, 16
      %v2350 = vrot.slane %v2348, 5
      %v2351 = vsel %vm1017, %v2346, %v2350
      %v2353 = vshrl.u32 %v2094, 16
      %v2355 = vrot.slane %v2353, 4
      %v2356 = vshll.u32 %v2094, 16
      %v2358 = vrot.slane %v2356, 5
      %v2359 = vor.u32 %v2355, %v2358
      %v2360 = vrot.slane %v2359, 4
      %v2362 = vshll.u32 %v2095, 16
      %v2364 = vrot.slane %v2362, 5
      %v2365 = vsel %vm1017, %v2360, %v2364
      %v2366 = vshrl.u32 %v2095, 16
      %v2368 = vrot.slane %v2366, 4
      %v2369 = vor.u32 %v2368, %v2364
      %v2370 = vrot.slane %v2369, 4
      %v2372 = vshll.u32 %v2096, 16
      %v2374 = vrot.slane %v2372, 5
      %v2375 = vsel %vm1017, %v2370, %v2374
      %v2377 = vshrl.u32 %v2097, 16
      %v2379 = vrot.slane %v2377, 4
      %v2380 = vshll.u32 %v2097, 16
      %v2382 = vrot.slane %v2380, 5
      %v2383 = vor.u32 %v2379, %v2382
      %v2384 = vrot.slane %v2383, 4
      %v2386 = vshll.u32 %v2098, 16
      %v2388 = vrot.slane %v2386, 5
      %v2389 = vsel %vm1017, %v2384, %v2388
      %v2390 = vshrl.u32 %v2098, 16
      %v2392 = vrot.slane %v2390, 4
      %v2393 = vor.u32 %v2392, %v2388
      %v2394 = vrot.slane %v2393, 4
      %v2396 = vshll.u32 %v2099, 16
      %v2398 = vrot.slane %v2396, 5
      %v2399 = vsel %vm1017, %v2394, %v2398
      %v2401 = vshrl.u32 %v2100, 16
      %v2403 = vrot.slane %v2401, 4
      %v2404 = vshll.u32 %v2100, 16
      %v2406 = vrot.slane %v2404, 5
      %v2407 = vor.u32 %v2403, %v2406
      %v2408 = vrot.slane %v2407, 4
      %v2410 = vshll.u32 %v2101, 16
      %v2412 = vrot.slane %v2410, 5
      %v2413 = vsel %vm1017, %v2408, %v2412
      %v2414 = vshrl.u32 %v2101, 16
      %v2416 = vrot.slane %v2414, 4
      %v2417 = vor.u32 %v2416, %v2412
      %v2418 = vrot.slane %v2417, 4
      %v2420 = vshll.u32 %v2102, 16
      %v2422 = vrot.slane %v2420, 5
      %v2423 = vsel %vm1017, %v2418, %v2422
      %v2425 = vshrl.u32 %v2103, 16
      %v2427 = vrot.slane %v2425, 4
      %v2428 = vshll.u32 %v2103, 16
      %v2430 = vrot.slane %v2428, 5
      %v2431 = vor.u32 %v2427, %v2430
      %v2432 = vrot.slane %v2431, 4
      %v2434 = vshll.u32 %v2104, 16
      %v2436 = vrot.slane %v2434, 5
      %v2437 = vsel %vm1017, %v2432, %v2436
      %v2438 = vshrl.u32 %v2104, 16
      %v2440 = vrot.slane %v2438, 4
      %v2441 = vor.u32 %v2440, %v2436
      %v2442 = vrot.slane %v2441, 4
      %v2444 = vshll.u32 %v2105, 16
      %v2446 = vrot.slane %v2444, 5
      %v2447 = vsel %vm1017, %v2442, %v2446
      %v2449 = vshrl.u32 %v2106, 16
      %v2451 = vrot.slane %v2449, 4
      %v2452 = vshll.u32 %v2106, 16
      %v2454 = vrot.slane %v2452, 5
      %v2455 = vor.u32 %v2451, %v2454
      %v2456 = vrot.slane %v2455, 4
      %v2458 = vshll.u32 %v2107, 16
      %v2460 = vrot.slane %v2458, 5
      %v2461 = vsel %vm1017, %v2456, %v2460
      %v2462 = vshrl.u32 %v2107, 16
      %v2464 = vrot.slane %v2462, 4
      %v2465 = vor.u32 %v2464, %v2460
      %v2466 = vrot.slane %v2465, 4
      %v2468 = vshll.u32 %v2108, 16
      %v2470 = vrot.slane %v2468, 5
      %v2471 = vsel %vm1017, %v2466, %v2470
      %v2473 = vshrl.u32 %v2109, 16
      %v2475 = vrot.slane %v2473, 4
      %v2476 = vshll.u32 %v2109, 16
      %v2478 = vrot.slane %v2476, 5
      %v2479 = vor.u32 %v2475, %v2478
      %v2480 = vrot.slane %v2479, 4
      %v2482 = vshll.u32 %v2110, 16
      %v2484 = vrot.slane %v2482, 5
      %v2485 = vsel %vm1017, %v2480, %v2484
      %v2486 = vshrl.u32 %v2110, 16
      %v2488 = vrot.slane %v2486, 4
      %v2489 = vor.u32 %v2488, %v2484
      %v2490 = vrot.slane %v2489, 4
      %v2492 = vshll.u32 %v2111, 16
      %v2494 = vrot.slane %v2492, 5
      %v2495 = vsel %vm1017, %v2490, %v2494
      %2496 = vrot.lane.b32.xlu0 %v2125, 16
      %v2497 = vpop.permute.xlu0 %2496
      %2498 = vrot.lane.b32.xlu0 %v2135, 16
      %v2499 = vpop.permute.xlu0 %2498
      %2500 = vrot.lane.b32.xlu0 %v2149, 16
      %v2501 = vpop.permute.xlu0 %2500
      %2502 = vrot.lane.b32.xlu0 %v2159, 16
      %v2503 = vpop.permute.xlu0 %2502
      %2504 = vrot.lane.b32.xlu0 %v2173, 16
      %v2505 = vpop.permute.xlu0 %2504
      %2506 = vrot.lane.b32.xlu0 %v2183, 16
      %v2507 = vpop.permute.xlu0 %2506
      %2508 = vrot.lane.b32.xlu0 %v2197, 16
      %v2509 = vpop.permute.xlu0 %2508
      %2510 = vrot.lane.b32.xlu0 %v2207, 16
      %v2511 = vpop.permute.xlu0 %2510
      %2512 = vrot.lane.b32.xlu0 %v2221, 16
      %v2513 = vpop.permute.xlu0 %2512
      %2514 = vrot.lane.b32.xlu0 %v2231, 16
      %v2515 = vpop.permute.xlu0 %2514
      %2516 = vrot.lane.b32.xlu0 %v2245, 16
      %v2517 = vpop.permute.xlu0 %2516
      %2518 = vrot.lane.b32.xlu0 %v2255, 16
      %v2519 = vpop.permute.xlu0 %2518
      %2520 = vrot.lane.b32.xlu0 %v2269, 16
      %v2521 = vpop.permute.xlu0 %2520
      %2522 = vrot.lane.b32.xlu0 %v2279, 16
      %v2523 = vpop.permute.xlu0 %2522
      %2524 = vrot.lane.b32.xlu0 %v2293, 16
      %v2525 = vpop.permute.xlu0 %2524
      %2526 = vrot.lane.b32.xlu0 %v2303, 16
      %v2527 = vpop.permute.xlu0 %2526
      %2528 = vrot.lane.b32.xlu0 %v2317, 16
      %v2529 = vpop.permute.xlu0 %2528
      %2530 = vrot.lane.b32.xlu0 %v2327, 16
      %v2531 = vpop.permute.xlu0 %2530
      %2532 = vrot.lane.b32.xlu0 %v2341, 16
      %v2533 = vpop.permute.xlu0 %2532
      %2534 = vrot.lane.b32.xlu0 %v2351, 16
      %v2535 = vpop.permute.xlu0 %2534
      %2536 = vrot.lane.b32.xlu0 %v2365, 16
      %v2537 = vpop.permute.xlu0 %2536
      %2538 = vrot.lane.b32.xlu0 %v2375, 16
      %v2539 = vpop.permute.xlu0 %2538
      %2540 = vrot.lane.b32.xlu0 %v2389, 16
      %v2541 = vpop.permute.xlu0 %2540
      %2542 = vrot.lane.b32.xlu0 %v2399, 16
      %v2543 = vpop.permute.xlu0 %2542
      %2544 = vrot.lane.b32.xlu0 %v2413, 16
      %v2545 = vpop.permute.xlu0 %2544
      %2546 = vrot.lane.b32.xlu0 %v2423, 16
      %v2547 = vpop.permute.xlu0 %2546
      %2548 = vrot.lane.b32.xlu0 %v2437, 16
      %v2549 = vpop.permute.xlu0 %2548
      %2550 = vrot.lane.b32.xlu0 %v2447, 16
      %v2551 = vpop.permute.xlu0 %2550
      %2552 = vrot.lane.b32.xlu0 %v2461, 16
      %v2553 = vpop.permute.xlu0 %2552
      %2554 = vrot.lane.b32.xlu0 %v2471, 16
      %v2555 = vpop.permute.xlu0 %2554
      %2556 = vrot.lane.b32.xlu0 %v2485, 16
      %v2557 = vpop.permute.xlu0 %2556
      %2558 = vrot.lane.b32.xlu0 %v2495, 16
      %v2559 = vpop.permute.xlu0 %2558
      %vm2592 = vcmask 158848
      %2593 = vst.msk [vmem:[#allocation4] sm:$0xf] %vm2592, %v2497
      %2594 = vst.msk [vmem:[#allocation4 + $0x4] sm:$0xf] %vm2592, %v2499
      %2595 = vst.msk [vmem:[#allocation4 + $0x8] sm:$0xf] %vm2592, %v2501
      %2596 = vst.msk [vmem:[#allocation4 + $0xc] sm:$0xf] %vm2592, %v2503
      %2597 = vst.msk [vmem:[#allocation4 + $0x10] sm:$0xf] %vm2592, %v2505
      %2598 = vst.msk [vmem:[#allocation4 + $0x14] sm:$0xf] %vm2592, %v2507
      %2599 = vst.msk [vmem:[#allocation4 + $0x18] sm:$0xf] %vm2592, %v2509
      %2600 = vst.msk [vmem:[#allocation4 + $0x1c] sm:$0xf] %vm2592, %v2511
      %2601 = vst.msk [vmem:[#allocation4 + $0x20] sm:$0xf] %vm2592, %v2513
      %2602 = vst.msk [vmem:[#allocation4 + $0x24] sm:$0xf] %vm2592, %v2515
      %2603 = vst.msk [vmem:[#allocation4 + $0x28] sm:$0xf] %vm2592, %v2517
      %2604 = vst.msk [vmem:[#allocation4 + $0x2c] sm:$0xf] %vm2592, %v2519
      %2605 = vst.msk [vmem:[#allocation4 + $0x30] sm:$0xf] %vm2592, %v2521
      %2606 = vst.msk [vmem:[#allocation4 + $0x34] sm:$0xf] %vm2592, %v2523
      %2607 = vst.msk [vmem:[#allocation4 + $0x38] sm:$0xf] %vm2592, %v2525
      %2608 = vst.msk [vmem:[#allocation4 + $0x3c] sm:$0xf] %vm2592, %v2527
      %2609 = vst.msk [vmem:[#allocation4 + $0x40] sm:$0xf] %vm2592, %v2529
      %2610 = vst.msk [vmem:[#allocation4 + $0x44] sm:$0xf] %vm2592, %v2531
      %2611 = vst.msk [vmem:[#allocation4 + $0x48] sm:$0xf] %vm2592, %v2533
      %2612 = vst.msk [vmem:[#allocation4 + $0x4c] sm:$0xf] %vm2592, %v2535
      %2613 = vst.msk [vmem:[#allocation4 + $0x50] sm:$0xf] %vm2592, %v2537
      %2614 = vst.msk [vmem:[#allocation4 + $0x54] sm:$0xf] %vm2592, %v2539
      %2615 = vst.msk [vmem:[#allocation4 + $0x58] sm:$0xf] %vm2592, %v2541
      %2616 = vst.msk [vmem:[#allocation4 + $0x5c] sm:$0xf] %vm2592, %v2543
      %2617 = vst.msk [vmem:[#allocation4 + $0x60] sm:$0xf] %vm2592, %v2545
      %2618 = vst.msk [vmem:[#allocation4 + $0x64] sm:$0xf] %vm2592, %v2547
      %2619 = vst.msk [vmem:[#allocation4 + $0x68] sm:$0xf] %vm2592, %v2549
      %2620 = vst.msk [vmem:[#allocation4 + $0x6c] sm:$0xf] %vm2592, %v2551
      %2621 = vst.msk [vmem:[#allocation4 + $0x70] sm:$0xf] %vm2592, %v2553
      %2622 = vst.msk [vmem:[#allocation4 + $0x74] sm:$0xf] %vm2592, %v2555
      %2623 = vst.msk [vmem:[#allocation4 + $0x78] sm:$0xf] %vm2592, %v2557
      %2624 = vst.msk [vmem:[#allocation4 + $0x7c] sm:$0xf] %vm2592, %v2559
      %v2625 = vld [vmem:[%s788] sm:$0xe]
      %v2626 = vld [vmem:[%s788 + $0x4] sm:$0xf]
      %v2627 = vld [vmem:[%s788 + $0x8] sm:$0x1]
      %v2628 = vld [vmem:[%s788 + $0xc] sm:$0xe]
      %v2629 = vld [vmem:[%s788 + $0x10] sm:$0xf]
      %v2630 = vld [vmem:[%s788 + $0x14] sm:$0x1]
      %v2631 = vld [vmem:[%s788 + $0x18] sm:$0xe]
      %v2632 = vld [vmem:[%s788 + $0x1c] sm:$0xf]
      %v2633 = vld [vmem:[%s788 + $0x20] sm:$0x1]
      %v2634 = vld [vmem:[%s788 + $0x24] sm:$0xe]
      %v2635 = vld [vmem:[%s788 + $0x28] sm:$0xf]
      %v2636 = vld [vmem:[%s788 + $0x2c] sm:$0x1]
      %v2637 = vld [vmem:[%s788 + $0x30] sm:$0xe]
      %v2638 = vld [vmem:[%s788 + $0x34] sm:$0xf]
      %v2639 = vld [vmem:[%s788 + $0x38] sm:$0x1]
      %v2640 = vld [vmem:[%s788 + $0x3c] sm:$0xe]
      %v2641 = vld [vmem:[%s788 + $0x40] sm:$0xf]
      %v2642 = vld [vmem:[%s788 + $0x44] sm:$0x1]
      %v2643 = vld [vmem:[%s788 + $0x48] sm:$0xe]
      %v2644 = vld [vmem:[%s788 + $0x4c] sm:$0xf]
      %v2645 = vld [vmem:[%s788 + $0x50] sm:$0x1]
      %v2646 = vld [vmem:[%s788 + $0x54] sm:$0xe]
      %v2647 = vld [vmem:[%s788 + $0x58] sm:$0xf]
      %v2648 = vld [vmem:[%s788 + $0x5c] sm:$0x1]
      %v2649 = vld [vmem:[%s788 + $0x60] sm:$0xe]
      %v2650 = vld [vmem:[%s788 + $0x64] sm:$0xf]
      %v2651 = vld [vmem:[%s788 + $0x68] sm:$0x1]
      %v2652 = vld [vmem:[%s788 + $0x6c] sm:$0xe]
      %v2653 = vld [vmem:[%s788 + $0x70] sm:$0xf]
      %v2654 = vld [vmem:[%s788 + $0x74] sm:$0x1]
      %v2655 = vld [vmem:[%s788 + $0x78] sm:$0xe]
      %v2656 = vld [vmem:[%s788 + $0x7c] sm:$0xf]
      %v2657 = vld [vmem:[%s788 + $0x80] sm:$0x1]
      %v2658 = vld [vmem:[%s788 + $0x84] sm:$0xe]
      %v2659 = vld [vmem:[%s788 + $0x88] sm:$0xf]
      %v2660 = vld [vmem:[%s788 + $0x8c] sm:$0x1]
      %v2661 = vld [vmem:[%s788 + $0x90] sm:$0xe]
      %v2662 = vld [vmem:[%s788 + $0x94] sm:$0xf]
      %v2663 = vld [vmem:[%s788 + $0x98] sm:$0x1]
      %v2664 = vld [vmem:[%s788 + $0x9c] sm:$0xe]
      %v2665 = vld [vmem:[%s788 + $0xa0] sm:$0xf]
      %v2666 = vld [vmem:[%s788 + $0xa4] sm:$0x1]
      %v2667 = vld [vmem:[%s788 + $0xa8] sm:$0xe]
      %v2668 = vld [vmem:[%s788 + $0xac] sm:$0xf]
      %v2669 = vld [vmem:[%s788 + $0xb0] sm:$0x1]
      %v2670 = vld [vmem:[%s788 + $0xb4] sm:$0xe]
      %v2671 = vld [vmem:[%s788 + $0xb8] sm:$0xf]
      %v2672 = vld [vmem:[%s788 + $0xbc] sm:$0x1]
      %v2721 = vrot.slane %v2625, 5
      %v2722 = vrot.slane %v2721, 4
      %v2723 = vrot.slane %v2626, 5
      %v2724 = vsel %vm1629, %v2722, %v2723
      %v2725 = vrot.slane %v2723, 4
      %v2726 = vrot.slane %v2627, 5
      %v2727 = vsel %vm1629, %v2725, %v2726
      %v2728 = vrot.slane %v2628, 5
      %v2729 = vrot.slane %v2728, 4
      %v2730 = vrot.slane %v2629, 5
      %v2731 = vsel %vm1629, %v2729, %v2730
      %v2732 = vrot.slane %v2730, 4
      %v2733 = vrot.slane %v2630, 5
      %v2734 = vsel %vm1629, %v2732, %v2733
      %v2735 = vrot.slane %v2631, 5
      %v2736 = vrot.slane %v2735, 4
      %v2737 = vrot.slane %v2632, 5
      %v2738 = vsel %vm1629, %v2736, %v2737
      %v2739 = vrot.slane %v2737, 4
      %v2740 = vrot.slane %v2633, 5
      %v2741 = vsel %vm1629, %v2739, %v2740
      %v2742 = vrot.slane %v2634, 5
      %v2743 = vrot.slane %v2742, 4
      %v2744 = vrot.slane %v2635, 5
      %v2745 = vsel %vm1629, %v2743, %v2744
      %v2746 = vrot.slane %v2744, 4
      %v2747 = vrot.slane %v2636, 5
      %v2748 = vsel %vm1629, %v2746, %v2747
      %v2749 = vrot.slane %v2637, 5
      %v2750 = vrot.slane %v2749, 4
      %v2751 = vrot.slane %v2638, 5
      %v2752 = vsel %vm1629, %v2750, %v2751
      %v2753 = vrot.slane %v2751, 4
      %v2754 = vrot.slane %v2639, 5
      %v2755 = vsel %vm1629, %v2753, %v2754
      %v2756 = vrot.slane %v2640, 5
      %v2757 = vrot.slane %v2756, 4
      %v2758 = vrot.slane %v2641, 5
      %v2759 = vsel %vm1629, %v2757, %v2758
      %v2760 = vrot.slane %v2758, 4
      %v2761 = vrot.slane %v2642, 5
      %v2762 = vsel %vm1629, %v2760, %v2761
      %v2763 = vrot.slane %v2643, 5
      %v2764 = vrot.slane %v2763, 4
      %v2765 = vrot.slane %v2644, 5
      %v2766 = vsel %vm1629, %v2764, %v2765
      %v2767 = vrot.slane %v2765, 4
      %v2768 = vrot.slane %v2645, 5
      %v2769 = vsel %vm1629, %v2767, %v2768
      %v2770 = vrot.slane %v2646, 5
      %v2771 = vrot.slane %v2770, 4
      %v2772 = vrot.slane %v2647, 5
      %v2773 = vsel %vm1629, %v2771, %v2772
      %v2774 = vrot.slane %v2772, 4
      %v2775 = vrot.slane %v2648, 5
      %v2776 = vsel %vm1629, %v2774, %v2775
      %v2777 = vrot.slane %v2649, 5
      %v2778 = vrot.slane %v2777, 4
      %v2779 = vrot.slane %v2650, 5
      %v2780 = vsel %vm1629, %v2778, %v2779
      %v2781 = vrot.slane %v2779, 4
      %v2782 = vrot.slane %v2651, 5
      %v2783 = vsel %vm1629, %v2781, %v2782
      %v2784 = vrot.slane %v2652, 5
      %v2785 = vrot.slane %v2784, 4
      %v2786 = vrot.slane %v2653, 5
      %v2787 = vsel %vm1629, %v2785, %v2786
      %v2788 = vrot.slane %v2786, 4
      %v2789 = vrot.slane %v2654, 5
      %v2790 = vsel %vm1629, %v2788, %v2789
      %v2791 = vrot.slane %v2655, 5
      %v2792 = vrot.slane %v2791, 4
      %v2793 = vrot.slane %v2656, 5
      %v2794 = vsel %vm1629, %v2792, %v2793
      %v2795 = vrot.slane %v2793, 4
      %v2796 = vrot.slane %v2657, 5
      %v2797 = vsel %vm1629, %v2795, %v2796
      %v2798 = vrot.slane %v2658, 5
      %v2799 = vrot.slane %v2798, 4
      %v2800 = vrot.slane %v2659, 5
      %v2801 = vsel %vm1629, %v2799, %v2800
      %v2802 = vrot.slane %v2800, 4
      %v2803 = vrot.slane %v2660, 5
      %v2804 = vsel %vm1629, %v2802, %v2803
      %v2805 = vrot.slane %v2661, 5
      %v2806 = vrot.slane %v2805, 4
      %v2807 = vrot.slane %v2662, 5
      %v2808 = vsel %vm1629, %v2806, %v2807
      %v2809 = vrot.slane %v2807, 4
      %v2810 = vrot.slane %v2663, 5
      %v2811 = vsel %vm1629, %v2809, %v2810
      %v2812 = vrot.slane %v2664, 5
      %v2813 = vrot.slane %v2812, 4
      %v2814 = vrot.slane %v2665, 5
      %v2815 = vsel %vm1629, %v2813, %v2814
      %v2816 = vrot.slane %v2814, 4
      %v2817 = vrot.slane %v2666, 5
      %v2818 = vsel %vm1629, %v2816, %v2817
      %v2819 = vrot.slane %v2667, 5
      %v2820 = vrot.slane %v2819, 4
      %v2821 = vrot.slane %v2668, 5
      %v2822 = vsel %vm1629, %v2820, %v2821
      %v2823 = vrot.slane %v2821, 4
      %v2824 = vrot.slane %v2669, 5
      %v2825 = vsel %vm1629, %v2823, %v2824
      %v2826 = vrot.slane %v2670, 5
      %v2827 = vrot.slane %v2826, 4
      %v2828 = vrot.slane %v2671, 5
      %v2829 = vsel %vm1629, %v2827, %v2828
      %v2830 = vrot.slane %v2828, 4
      %v2831 = vrot.slane %v2672, 5
      %v2832 = vsel %vm1629, %v2830, %v2831
      %2833 = vrot.lane.b32.xlu0 %v2724, 20
      %v2834 = vpop.permute.xlu0 %2833
      %2835 = vrot.lane.b32.xlu0 %v2727, 20
      %v2836 = vpop.permute.xlu0 %2835
      %2837 = vrot.lane.b32.xlu0 %v2731, 20
      %v2838 = vpop.permute.xlu0 %2837
      %2839 = vrot.lane.b32.xlu0 %v2734, 20
      %v2840 = vpop.permute.xlu0 %2839
      %2841 = vrot.lane.b32.xlu0 %v2738, 20
      %v2842 = vpop.permute.xlu0 %2841
      %2843 = vrot.lane.b32.xlu0 %v2741, 20
      %v2844 = vpop.permute.xlu0 %2843
      %2845 = vrot.lane.b32.xlu0 %v2745, 20
      %v2846 = vpop.permute.xlu0 %2845
      %2847 = vrot.lane.b32.xlu0 %v2748, 20
      %v2848 = vpop.permute.xlu0 %2847
      %2849 = vrot.lane.b32.xlu0 %v2752, 20
      %v2850 = vpop.permute.xlu0 %2849
      %2851 = vrot.lane.b32.xlu0 %v2755, 20
      %v2852 = vpop.permute.xlu0 %2851
      %2853 = vrot.lane.b32.xlu0 %v2759, 20
      %v2854 = vpop.permute.xlu0 %2853
      %2855 = vrot.lane.b32.xlu0 %v2762, 20
      %v2856 = vpop.permute.xlu0 %2855
      %2857 = vrot.lane.b32.xlu0 %v2766, 20
      %v2858 = vpop.permute.xlu0 %2857
      %2859 = vrot.lane.b32.xlu0 %v2769, 20
      %v2860 = vpop.permute.xlu0 %2859
      %2861 = vrot.lane.b32.xlu0 %v2773, 20
      %v2862 = vpop.permute.xlu0 %2861
      %2863 = vrot.lane.b32.xlu0 %v2776, 20
      %v2864 = vpop.permute.xlu0 %2863
      %2865 = vrot.lane.b32.xlu0 %v2780, 20
      %v2866 = vpop.permute.xlu0 %2865
      %2867 = vrot.lane.b32.xlu0 %v2783, 20
      %v2868 = vpop.permute.xlu0 %2867
      %2869 = vrot.lane.b32.xlu0 %v2787, 20
      %v2870 = vpop.permute.xlu0 %2869
      %2871 = vrot.lane.b32.xlu0 %v2790, 20
      %v2872 = vpop.permute.xlu0 %2871
      %2873 = vrot.lane.b32.xlu0 %v2794, 20
      %v2874 = vpop.permute.xlu0 %2873
      %2875 = vrot.lane.b32.xlu0 %v2797, 20
      %v2876 = vpop.permute.xlu0 %2875
      %2877 = vrot.lane.b32.xlu0 %v2801, 20
      %v2878 = vpop.permute.xlu0 %2877
      %2879 = vrot.lane.b32.xlu0 %v2804, 20
      %v2880 = vpop.permute.xlu0 %2879
      %2881 = vrot.lane.b32.xlu0 %v2808, 20
      %v2882 = vpop.permute.xlu0 %2881
      %2883 = vrot.lane.b32.xlu0 %v2811, 20
      %v2884 = vpop.permute.xlu0 %2883
      %2885 = vrot.lane.b32.xlu0 %v2815, 20
      %v2886 = vpop.permute.xlu0 %2885
      %2887 = vrot.lane.b32.xlu0 %v2818, 20
      %v2888 = vpop.permute.xlu0 %2887
      %2889 = vrot.lane.b32.xlu0 %v2822, 20
      %v2890 = vpop.permute.xlu0 %2889
      %2891 = vrot.lane.b32.xlu0 %v2825, 20
      %v2892 = vpop.permute.xlu0 %2891
      %2893 = vrot.lane.b32.xlu0 %v2829, 20
      %v2894 = vpop.permute.xlu0 %2893
      %2895 = vrot.lane.b32.xlu0 %v2832, 20
      %v2896 = vpop.permute.xlu0 %2895
      %vm2929 = vcmask 191648
      %2930 = vst.msk [vmem:[#allocation4] sm:$0xf] %vm2929, %v2834
      %2931 = vst.msk [vmem:[#allocation4 + $0x4] sm:$0xf] %vm2929, %v2836
      %2932 = vst.msk [vmem:[#allocation4 + $0x8] sm:$0xf] %vm2929, %v2838
      %2933 = vst.msk [vmem:[#allocation4 + $0xc] sm:$0xf] %vm2929, %v2840
      %2934 = vst.msk [vmem:[#allocation4 + $0x10] sm:$0xf] %vm2929, %v2842
      %2935 = vst.msk [vmem:[#allocation4 + $0x14] sm:$0xf] %vm2929, %v2844
      %2936 = vst.msk [vmem:[#allocation4 + $0x18] sm:$0xf] %vm2929, %v2846
      %2937 = vst.msk [vmem:[#allocation4 + $0x1c] sm:$0xf] %vm2929, %v2848
      %2938 = vst.msk [vmem:[#allocation4 + $0x20] sm:$0xf] %vm2929, %v2850
      %2939 = vst.msk [vmem:[#allocation4 + $0x24] sm:$0xf] %vm2929, %v2852
      %2940 = vst.msk [vmem:[#allocation4 + $0x28] sm:$0xf] %vm2929, %v2854
      %2941 = vst.msk [vmem:[#allocation4 + $0x2c] sm:$0xf] %vm2929, %v2856
      %2942 = vst.msk [vmem:[#allocation4 + $0x30] sm:$0xf] %vm2929, %v2858
      %2943 = vst.msk [vmem:[#allocation4 + $0x34] sm:$0xf] %vm2929, %v2860
      %2944 = vst.msk [vmem:[#allocation4 + $0x38] sm:$0xf] %vm2929, %v2862
      %2945 = vst.msk [vmem:[#allocation4 + $0x3c] sm:$0xf] %vm2929, %v2864
      %2946 = vst.msk [vmem:[#allocation4 + $0x40] sm:$0xf] %vm2929, %v2866
      %2947 = vst.msk [vmem:[#allocation4 + $0x44] sm:$0xf] %vm2929, %v2868
      %2948 = vst.msk [vmem:[#allocation4 + $0x48] sm:$0xf] %vm2929, %v2870
      %2949 = vst.msk [vmem:[#allocation4 + $0x4c] sm:$0xf] %vm2929, %v2872
      %2950 = vst.msk [vmem:[#allocation4 + $0x50] sm:$0xf] %vm2929, %v2874
      %2951 = vst.msk [vmem:[#allocation4 + $0x54] sm:$0xf] %vm2929, %v2876
      %2952 = vst.msk [vmem:[#allocation4 + $0x58] sm:$0xf] %vm2929, %v2878
      %2953 = vst.msk [vmem:[#allocation4 + $0x5c] sm:$0xf] %vm2929, %v2880
      %2954 = vst.msk [vmem:[#allocation4 + $0x60] sm:$0xf] %vm2929, %v2882
      %2955 = vst.msk [vmem:[#allocation4 + $0x64] sm:$0xf] %vm2929, %v2884
      %2956 = vst.msk [vmem:[#allocation4 + $0x68] sm:$0xf] %vm2929, %v2886
      %2957 = vst.msk [vmem:[#allocation4 + $0x6c] sm:$0xf] %vm2929, %v2888
      %2958 = vst.msk [vmem:[#allocation4 + $0x70] sm:$0xf] %vm2929, %v2890
      %2959 = vst.msk [vmem:[#allocation4 + $0x74] sm:$0xf] %vm2929, %v2892
      %2960 = vst.msk [vmem:[#allocation4 + $0x78] sm:$0xf] %vm2929, %v2894
      %2961 = vst.msk [vmem:[#allocation4 + $0x7c] sm:$0xf] %vm2929, %v2896
      %s2962 = scalar_lea.vmem [#allocation2], 24
      %v2963 = vld [vmem:[%s2962] sm:$0xf]
      %v2964 = vld [vmem:[%s2962 + $0x4] sm:$0xf]
      %v2965 = vld [vmem:[%s2962 + $0xc] sm:$0xf]
      %v2966 = vld [vmem:[%s2962 + $0x10] sm:$0xf]
      %v2967 = vld [vmem:[%s2962 + $0x18] sm:$0xf]
      %v2968 = vld [vmem:[%s2962 + $0x1c] sm:$0xf]
      %v2969 = vld [vmem:[%s2962 + $0x24] sm:$0xf]
      %v2970 = vld [vmem:[%s2962 + $0x28] sm:$0xf]
      %v2971 = vld [vmem:[%s2962 + $0x30] sm:$0xf]
      %v2972 = vld [vmem:[%s2962 + $0x34] sm:$0xf]
      %v2973 = vld [vmem:[%s2962 + $0x3c] sm:$0xf]
      %v2974 = vld [vmem:[%s2962 + $0x40] sm:$0xf]
      %v2975 = vld [vmem:[%s2962 + $0x48] sm:$0xf]
      %v2976 = vld [vmem:[%s2962 + $0x4c] sm:$0xf]
      %v2977 = vld [vmem:[%s2962 + $0x54] sm:$0xf]
      %v2978 = vld [vmem:[%s2962 + $0x58] sm:$0xf]
      %v2979 = vld [vmem:[%s2962 + $0x60] sm:$0xf]
      %v2980 = vld [vmem:[%s2962 + $0x64] sm:$0xf]
      %v2981 = vld [vmem:[%s2962 + $0x6c] sm:$0xf]
      %v2982 = vld [vmem:[%s2962 + $0x70] sm:$0xf]
      %v2983 = vld [vmem:[%s2962 + $0x78] sm:$0xf]
      %v2984 = vld [vmem:[%s2962 + $0x7c] sm:$0xf]
      %v2985 = vld [vmem:[%s2962 + $0x84] sm:$0xf]
      %v2986 = vld [vmem:[%s2962 + $0x88] sm:$0xf]
      %v2987 = vld [vmem:[%s2962 + $0x90] sm:$0xf]
      %v2988 = vld [vmem:[%s2962 + $0x94] sm:$0xf]
      %v2989 = vld [vmem:[%s2962 + $0x9c] sm:$0xf]
      %v2990 = vld [vmem:[%s2962 + $0xa0] sm:$0xf]
      %v2991 = vld [vmem:[%s2962 + $0xa8] sm:$0xf]
      %v2992 = vld [vmem:[%s2962 + $0xac] sm:$0xf]
      %v2993 = vld [vmem:[%s2962 + $0xb4] sm:$0xf]
      %v2994 = vld [vmem:[%s2962 + $0xb8] sm:$0xf]
      %3027 = vrot.lane.b32.xlu0 %v2963, 24
      %v3028 = vpop.permute.xlu0 %3027
      %3029 = vrot.lane.b32.xlu0 %v2964, 24
      %v3030 = vpop.permute.xlu0 %3029
      %3031 = vrot.lane.b32.xlu0 %v2965, 24
      %v3032 = vpop.permute.xlu0 %3031
      %3033 = vrot.lane.b32.xlu0 %v2966, 24
      %v3034 = vpop.permute.xlu0 %3033
      %3035 = vrot.lane.b32.xlu0 %v2967, 24
      %v3036 = vpop.permute.xlu0 %3035
      %3037 = vrot.lane.b32.xlu0 %v2968, 24
      %v3038 = vpop.permute.xlu0 %3037
      %3039 = vrot.lane.b32.xlu0 %v2969, 24
      %v3040 = vpop.permute.xlu0 %3039
      %3041 = vrot.lane.b32.xlu0 %v2970, 24
      %v3042 = vpop.permute.xlu0 %3041
      %3043 = vrot.lane.b32.xlu0 %v2971, 24
      %v3044 = vpop.permute.xlu0 %3043
      %3045 = vrot.lane.b32.xlu0 %v2972, 24
      %v3046 = vpop.permute.xlu0 %3045
      %3047 = vrot.lane.b32.xlu0 %v2973, 24
      %v3048 = vpop.permute.xlu0 %3047
      %3049 = vrot.lane.b32.xlu0 %v2974, 24
      %v3050 = vpop.permute.xlu0 %3049
      %3051 = vrot.lane.b32.xlu0 %v2975, 24
      %v3052 = vpop.permute.xlu0 %3051
      %3053 = vrot.lane.b32.xlu0 %v2976, 24
      %v3054 = vpop.permute.xlu0 %3053
      %3055 = vrot.lane.b32.xlu0 %v2977, 24
      %v3056 = vpop.permute.xlu0 %3055
      %3057 = vrot.lane.b32.xlu0 %v2978, 24
      %v3058 = vpop.permute.xlu0 %3057
      %3059 = vrot.lane.b32.xlu0 %v2979, 24
      %v3060 = vpop.permute.xlu0 %3059
      %3061 = vrot.lane.b32.xlu0 %v2980, 24
      %v3062 = vpop.permute.xlu0 %3061
      %3063 = vrot.lane.b32.xlu0 %v2981, 24
      %v3064 = vpop.permute.xlu0 %3063
      %3065 = vrot.lane.b32.xlu0 %v2982, 24
      %v3066 = vpop.permute.xlu0 %3065
      %3067 = vrot.lane.b32.xlu0 %v2983, 24
      %v3068 = vpop.permute.xlu0 %3067
      %3069 = vrot.lane.b32.xlu0 %v2984, 24
      %v3070 = vpop.permute.xlu0 %3069
      %3071 = vrot.lane.b32.xlu0 %v2985, 24
      %v3072 = vpop.permute.xlu0 %3071
      %3073 = vrot.lane.b32.xlu0 %v2986, 24
      %v3074 = vpop.permute.xlu0 %3073
      %3075 = vrot.lane.b32.xlu0 %v2987, 24
      %v3076 = vpop.permute.xlu0 %3075
      %3077 = vrot.lane.b32.xlu0 %v2988, 24
      %v3078 = vpop.permute.xlu0 %3077
      %3079 = vrot.lane.b32.xlu0 %v2989, 24
      %v3080 = vpop.permute.xlu0 %3079
      %3081 = vrot.lane.b32.xlu0 %v2990, 24
      %v3082 = vpop.permute.xlu0 %3081
      %3083 = vrot.lane.b32.xlu0 %v2991, 24
      %v3084 = vpop.permute.xlu0 %3083
      %3085 = vrot.lane.b32.xlu0 %v2992, 24
      %v3086 = vpop.permute.xlu0 %3085
      %3087 = vrot.lane.b32.xlu0 %v2993, 24
      %v3088 = vpop.permute.xlu0 %3087
      %3089 = vrot.lane.b32.xlu0 %v2994, 24
      %v3090 = vpop.permute.xlu0 %3089
      %vm3123 = vcmask 224448
      %3124 = vst.msk [vmem:[#allocation4] sm:$0xf] %vm3123, %v3028
      %3125 = vst.msk [vmem:[#allocation4 + $0x4] sm:$0xf] %vm3123, %v3030
      %3126 = vst.msk [vmem:[#allocation4 + $0x8] sm:$0xf] %vm3123, %v3032
      %3127 = vst.msk [vmem:[#allocation4 + $0xc] sm:$0xf] %vm3123, %v3034
      %3128 = vst.msk [vmem:[#allocation4 + $0x10] sm:$0xf] %vm3123, %v3036
      %3129 = vst.msk [vmem:[#allocation4 + $0x14] sm:$0xf] %vm3123, %v3038
      %3130 = vst.msk [vmem:[#allocation4 + $0x18] sm:$0xf] %vm3123, %v3040
      %3131 = vst.msk [vmem:[#allocation4 + $0x1c] sm:$0xf] %vm3123, %v3042
      %3132 = vst.msk [vmem:[#allocation4 + $0x20] sm:$0xf] %vm3123, %v3044
      %3133 = vst.msk [vmem:[#allocation4 + $0x24] sm:$0xf] %vm3123, %v3046
      %3134 = vst.msk [vmem:[#allocation4 + $0x28] sm:$0xf] %vm3123, %v3048
      %3135 = vst.msk [vmem:[#allocation4 + $0x2c] sm:$0xf] %vm3123, %v3050
      %3136 = vst.msk [vmem:[#allocation4 + $0x30] sm:$0xf] %vm3123, %v3052
      %3137 = vst.msk [vmem:[#allocation4 + $0x34] sm:$0xf] %vm3123, %v3054
      %3138 = vst.msk [vmem:[#allocation4 + $0x38] sm:$0xf] %vm3123, %v3056
      %3139 = vst.msk [vmem:[#allocation4 + $0x3c] sm:$0xf] %vm3123, %v3058
      %3140 = vst.msk [vmem:[#allocation4 + $0x40] sm:$0xf] %vm3123, %v3060
      %3141 = vst.msk [vmem:[#allocation4 + $0x44] sm:$0xf] %vm3123, %v3062
      %3142 = vst.msk [vmem:[#allocation4 + $0x48] sm:$0xf] %vm3123, %v3064
      %3143 = vst.msk [vmem:[#allocation4 + $0x4c] sm:$0xf] %vm3123, %v3066
      %3144 = vst.msk [vmem:[#allocation4 + $0x50] sm:$0xf] %vm3123, %v3068
      %3145 = vst.msk [vmem:[#allocation4 + $0x54] sm:$0xf] %vm3123, %v3070
      %3146 = vst.msk [vmem:[#allocation4 + $0x58] sm:$0xf] %vm3123, %v3072
      %3147 = vst.msk [vmem:[#allocation4 + $0x5c] sm:$0xf] %vm3123, %v3074
      %3148 = vst.msk [vmem:[#allocation4 + $0x60] sm:$0xf] %vm3123, %v3076
      %3149 = vst.msk [vmem:[#allocation4 + $0x64] sm:$0xf] %vm3123, %v3078
      %3150 = vst.msk [vmem:[#allocation4 + $0x68] sm:$0xf] %vm3123, %v3080
      %3151 = vst.msk [vmem:[#allocation4 + $0x6c] sm:$0xf] %vm3123, %v3082
      %3152 = vst.msk [vmem:[#allocation4 + $0x70] sm:$0xf] %vm3123, %v3084
      %3153 = vst.msk [vmem:[#allocation4 + $0x74] sm:$0xf] %vm3123, %v3086
      %3154 = vst.msk [vmem:[#allocation4 + $0x78] sm:$0xf] %vm3123, %v3088
      %3155 = vst.msk [vmem:[#allocation4 + $0x7c] sm:$0xf] %vm3123, %v3090
      %v3156 = vld [vmem:[%s2962] sm:$0xf]
      %v3157 = vld [vmem:[%s2962 + $0x4] sm:$0xf]
      %v3158 = vld [vmem:[%s2962 + $0x8] sm:$0x1]
      %v3159 = vld [vmem:[%s2962 + $0xc] sm:$0xf]
      %v3160 = vld [vmem:[%s2962 + $0x10] sm:$0xf]
      %v3161 = vld [vmem:[%s2962 + $0x14] sm:$0x1]
      %v3162 = vld [vmem:[%s2962 + $0x18] sm:$0xf]
      %v3163 = vld [vmem:[%s2962 + $0x1c] sm:$0xf]
      %v3164 = vld [vmem:[%s2962 + $0x20] sm:$0x1]
      %v3165 = vld [vmem:[%s2962 + $0x24] sm:$0xf]
      %v3166 = vld [vmem:[%s2962 + $0x28] sm:$0xf]
      %v3167 = vld [vmem:[%s2962 + $0x2c] sm:$0x1]
      %v3168 = vld [vmem:[%s2962 + $0x30] sm:$0xf]
      %v3169 = vld [vmem:[%s2962 + $0x34] sm:$0xf]
      %v3170 = vld [vmem:[%s2962 + $0x38] sm:$0x1]
      %v3171 = vld [vmem:[%s2962 + $0x3c] sm:$0xf]
      %v3172 = vld [vmem:[%s2962 + $0x40] sm:$0xf]
      %v3173 = vld [vmem:[%s2962 + $0x44] sm:$0x1]
      %v3174 = vld [vmem:[%s2962 + $0x48] sm:$0xf]
      %v3175 = vld [vmem:[%s2962 + $0x4c] sm:$0xf]
      %v3176 = vld [vmem:[%s2962 + $0x50] sm:$0x1]
      %v3177 = vld [vmem:[%s2962 + $0x54] sm:$0xf]
      %v3178 = vld [vmem:[%s2962 + $0x58] sm:$0xf]
      %v3179 = vld [vmem:[%s2962 + $0x5c] sm:$0x1]
      %v3180 = vld [vmem:[%s2962 + $0x60] sm:$0xf]
      %v3181 = vld [vmem:[%s2962 + $0x64] sm:$0xf]
      %v3182 = vld [vmem:[%s2962 + $0x68] sm:$0x1]
      %v3183 = vld [vmem:[%s2962 + $0x6c] sm:$0xf]
      %v3184 = vld [vmem:[%s2962 + $0x70] sm:$0xf]
      %v3185 = vld [vmem:[%s2962 + $0x74] sm:$0x1]
      %v3186 = vld [vmem:[%s2962 + $0x78] sm:$0xf]
      %v3187 = vld [vmem:[%s2962 + $0x7c] sm:$0xf]
      %v3188 = vld [vmem:[%s2962 + $0x80] sm:$0x1]
      %v3189 = vld [vmem:[%s2962 + $0x84] sm:$0xf]
      %v3190 = vld [vmem:[%s2962 + $0x88] sm:$0xf]
      %v3191 = vld [vmem:[%s2962 + $0x8c] sm:$0x1]
      %v3192 = vld [vmem:[%s2962 + $0x90] sm:$0xf]
      %v3193 = vld [vmem:[%s2962 + $0x94] sm:$0xf]
      %v3194 = vld [vmem:[%s2962 + $0x98] sm:$0x1]
      %v3195 = vld [vmem:[%s2962 + $0x9c] sm:$0xf]
      %v3196 = vld [vmem:[%s2962 + $0xa0] sm:$0xf]
      %v3197 = vld [vmem:[%s2962 + $0xa4] sm:$0x1]
      %v3198 = vld [vmem:[%s2962 + $0xa8] sm:$0xf]
      %v3199 = vld [vmem:[%s2962 + $0xac] sm:$0xf]
      %v3200 = vld [vmem:[%s2962 + $0xb0] sm:$0x1]
      %v3201 = vld [vmem:[%s2962 + $0xb4] sm:$0xf]
      %v3202 = vld [vmem:[%s2962 + $0xb8] sm:$0xf]
      %v3203 = vld [vmem:[%s2962 + $0xbc] sm:$0x1]
      %v3205 = vshrl.u32 %v3156, 16
      %v3207 = vrot.slane %v3205, 4
      %v3208 = vshll.u32 %v3156, 16
      %v3210 = vrot.slane %v3208, 5
      %v3211 = vor.u32 %v3207, %v3210
      %v3212 = vrot.slane %v3211, 4
      %v3214 = vshll.u32 %v3157, 16
      %v3216 = vrot.slane %v3214, 5
      %v3217 = vsel %vm1017, %v3212, %v3216
      %v3218 = vshrl.u32 %v3157, 16
      %v3220 = vrot.slane %v3218, 4
      %v3221 = vor.u32 %v3220, %v3216
      %v3222 = vrot.slane %v3221, 4
      %v3224 = vshll.u32 %v3158, 16
      %v3226 = vrot.slane %v3224, 5
      %v3227 = vsel %vm1017, %v3222, %v3226
      %v3229 = vshrl.u32 %v3159, 16
      %v3231 = vrot.slane %v3229, 4
      %v3232 = vshll.u32 %v3159, 16
      %v3234 = vrot.slane %v3232, 5
      %v3235 = vor.u32 %v3231, %v3234
      %v3236 = vrot.slane %v3235, 4
      %v3238 = vshll.u32 %v3160, 16
      %v3240 = vrot.slane %v3238, 5
      %v3241 = vsel %vm1017, %v3236, %v3240
      %v3242 = vshrl.u32 %v3160, 16
      %v3244 = vrot.slane %v3242, 4
      %v3245 = vor.u32 %v3244, %v3240
      %v3246 = vrot.slane %v3245, 4
      %v3248 = vshll.u32 %v3161, 16
      %v3250 = vrot.slane %v3248, 5
      %v3251 = vsel %vm1017, %v3246, %v3250
      %v3253 = vshrl.u32 %v3162, 16
      %v3255 = vrot.slane %v3253, 4
      %v3256 = vshll.u32 %v3162, 16
      %v3258 = vrot.slane %v3256, 5
      %v3259 = vor.u32 %v3255, %v3258
      %v3260 = vrot.slane %v3259, 4
      %v3262 = vshll.u32 %v3163, 16
      %v3264 = vrot.slane %v3262, 5
      %v3265 = vsel %vm1017, %v3260, %v3264
      %v3266 = vshrl.u32 %v3163, 16
      %v3268 = vrot.slane %v3266, 4
      %v3269 = vor.u32 %v3268, %v3264
      %v3270 = vrot.slane %v3269, 4
      %v3272 = vshll.u32 %v3164, 16
      %v3274 = vrot.slane %v3272, 5
      %v3275 = vsel %vm1017, %v3270, %v3274
      %v3277 = vshrl.u32 %v3165, 16
      %v3279 = vrot.slane %v3277, 4
      %v3280 = vshll.u32 %v3165, 16
      %v3282 = vrot.slane %v3280, 5
      %v3283 = vor.u32 %v3279, %v3282
      %v3284 = vrot.slane %v3283, 4
      %v3286 = vshll.u32 %v3166, 16
      %v3288 = vrot.slane %v3286, 5
      %v3289 = vsel %vm1017, %v3284, %v3288
      %v3290 = vshrl.u32 %v3166, 16
      %v3292 = vrot.slane %v3290, 4
      %v3293 = vor.u32 %v3292, %v3288
      %v3294 = vrot.slane %v3293, 4
      %v3296 = vshll.u32 %v3167, 16
      %v3298 = vrot.slane %v3296, 5
      %v3299 = vsel %vm1017, %v3294, %v3298
      %v3301 = vshrl.u32 %v3168, 16
      %v3303 = vrot.slane %v3301, 4
      %v3304 = vshll.u32 %v3168, 16
      %v3306 = vrot.slane %v3304, 5
      %v3307 = vor.u32 %v3303, %v3306
      %v3308 = vrot.slane %v3307, 4
      %v3310 = vshll.u32 %v3169, 16
      %v3312 = vrot.slane %v3310, 5
      %v3313 = vsel %vm1017, %v3308, %v3312
      %v3314 = vshrl.u32 %v3169, 16
      %v3316 = vrot.slane %v3314, 4
      %v3317 = vor.u32 %v3316, %v3312
      %v3318 = vrot.slane %v3317, 4
      %v3320 = vshll.u32 %v3170, 16
      %v3322 = vrot.slane %v3320, 5
      %v3323 = vsel %vm1017, %v3318, %v3322
      %v3325 = vshrl.u32 %v3171, 16
      %v3327 = vrot.slane %v3325, 4
      %v3328 = vshll.u32 %v3171, 16
      %v3330 = vrot.slane %v3328, 5
      %v3331 = vor.u32 %v3327, %v3330
      %v3332 = vrot.slane %v3331, 4
      %v3334 = vshll.u32 %v3172, 16
      %v3336 = vrot.slane %v3334, 5
      %v3337 = vsel %vm1017, %v3332, %v3336
      %v3338 = vshrl.u32 %v3172, 16
      %v3340 = vrot.slane %v3338, 4
      %v3341 = vor.u32 %v3340, %v3336
      %v3342 = vrot.slane %v3341, 4
      %v3344 = vshll.u32 %v3173, 16
      %v3346 = vrot.slane %v3344, 5
      %v3347 = vsel %vm1017, %v3342, %v3346
      %v3349 = vshrl.u32 %v3174, 16
      %v3351 = vrot.slane %v3349, 4
      %v3352 = vshll.u32 %v3174, 16
      %v3354 = vrot.slane %v3352, 5
      %v3355 = vor.u32 %v3351, %v3354
      %v3356 = vrot.slane %v3355, 4
      %v3358 = vshll.u32 %v3175, 16
      %v3360 = vrot.slane %v3358, 5
      %v3361 = vsel %vm1017, %v3356, %v3360
      %v3362 = vshrl.u32 %v3175, 16
      %v3364 = vrot.slane %v3362, 4
      %v3365 = vor.u32 %v3364, %v3360
      %v3366 = vrot.slane %v3365, 4
      %v3368 = vshll.u32 %v3176, 16
      %v3370 = vrot.slane %v3368, 5
      %v3371 = vsel %vm1017, %v3366, %v3370
      %v3373 = vshrl.u32 %v3177, 16
      %v3375 = vrot.slane %v3373, 4
      %v3376 = vshll.u32 %v3177, 16
      %v3378 = vrot.slane %v3376, 5
      %v3379 = vor.u32 %v3375, %v3378
      %v3380 = vrot.slane %v3379, 4
      %v3382 = vshll.u32 %v3178, 16
      %v3384 = vrot.slane %v3382, 5
      %v3385 = vsel %vm1017, %v3380, %v3384
      %v3386 = vshrl.u32 %v3178, 16
      %v3388 = vrot.slane %v3386, 4
      %v3389 = vor.u32 %v3388, %v3384
      %v3390 = vrot.slane %v3389, 4
      %v3392 = vshll.u32 %v3179, 16
      %v3394 = vrot.slane %v3392, 5
      %v3395 = vsel %vm1017, %v3390, %v3394
      %v3397 = vshrl.u32 %v3180, 16
      %v3399 = vrot.slane %v3397, 4
      %v3400 = vshll.u32 %v3180, 16
      %v3402 = vrot.slane %v3400, 5
      %v3403 = vor.u32 %v3399, %v3402
      %v3404 = vrot.slane %v3403, 4
      %v3406 = vshll.u32 %v3181, 16
      %v3408 = vrot.slane %v3406, 5
      %v3409 = vsel %vm1017, %v3404, %v3408
      %v3410 = vshrl.u32 %v3181, 16
      %v3412 = vrot.slane %v3410, 4
      %v3413 = vor.u32 %v3412, %v3408
      %v3414 = vrot.slane %v3413, 4
      %v3416 = vshll.u32 %v3182, 16
      %v3418 = vrot.slane %v3416, 5
      %v3419 = vsel %vm1017, %v3414, %v3418
      %v3421 = vshrl.u32 %v3183, 16
      %v3423 = vrot.slane %v3421, 4
      %v3424 = vshll.u32 %v3183, 16
      %v3426 = vrot.slane %v3424, 5
      %v3427 = vor.u32 %v3423, %v3426
      %v3428 = vrot.slane %v3427, 4
      %v3430 = vshll.u32 %v3184, 16
      %v3432 = vrot.slane %v3430, 5
      %v3433 = vsel %vm1017, %v3428, %v3432
      %v3434 = vshrl.u32 %v3184, 16
      %v3436 = vrot.slane %v3434, 4
      %v3437 = vor.u32 %v3436, %v3432
      %v3438 = vrot.slane %v3437, 4
      %v3440 = vshll.u32 %v3185, 16
      %v3442 = vrot.slane %v3440, 5
      %v3443 = vsel %vm1017, %v3438, %v3442
      %v3445 = vshrl.u32 %v3186, 16
      %v3447 = vrot.slane %v3445, 4
      %v3448 = vshll.u32 %v3186, 16
      %v3450 = vrot.slane %v3448, 5
      %v3451 = vor.u32 %v3447, %v3450
      %v3452 = vrot.slane %v3451, 4
      %v3454 = vshll.u32 %v3187, 16
      %v3456 = vrot.slane %v3454, 5
      %v3457 = vsel %vm1017, %v3452, %v3456
      %v3458 = vshrl.u32 %v3187, 16
      %v3460 = vrot.slane %v3458, 4
      %v3461 = vor.u32 %v3460, %v3456
      %v3462 = vrot.slane %v3461, 4
      %v3464 = vshll.u32 %v3188, 16
      %v3466 = vrot.slane %v3464, 5
      %v3467 = vsel %vm1017, %v3462, %v3466
      %v3469 = vshrl.u32 %v3189, 16
      %v3471 = vrot.slane %v3469, 4
      %v3472 = vshll.u32 %v3189, 16
      %v3474 = vrot.slane %v3472, 5
      %v3475 = vor.u32 %v3471, %v3474
      %v3476 = vrot.slane %v3475, 4
      %v3478 = vshll.u32 %v3190, 16
      %v3480 = vrot.slane %v3478, 5
      %v3481 = vsel %vm1017, %v3476, %v3480
      %v3482 = vshrl.u32 %v3190, 16
      %v3484 = vrot.slane %v3482, 4
      %v3485 = vor.u32 %v3484, %v3480
      %v3486 = vrot.slane %v3485, 4
      %v3488 = vshll.u32 %v3191, 16
      %v3490 = vrot.slane %v3488, 5
      %v3491 = vsel %vm1017, %v3486, %v3490
      %v3493 = vshrl.u32 %v3192, 16
      %v3495 = vrot.slane %v3493, 4
      %v3496 = vshll.u32 %v3192, 16
      %v3498 = vrot.slane %v3496, 5
      %v3499 = vor.u32 %v3495, %v3498
      %v3500 = vrot.slane %v3499, 4
      %v3502 = vshll.u32 %v3193, 16
      %v3504 = vrot.slane %v3502, 5
      %v3505 = vsel %vm1017, %v3500, %v3504
      %v3506 = vshrl.u32 %v3193, 16
      %v3508 = vrot.slane %v3506, 4
      %v3509 = vor.u32 %v3508, %v3504
      %v3510 = vrot.slane %v3509, 4
      %v3512 = vshll.u32 %v3194, 16
      %v3514 = vrot.slane %v3512, 5
      %v3515 = vsel %vm1017, %v3510, %v3514
      %v3517 = vshrl.u32 %v3195, 16
      %v3519 = vrot.slane %v3517, 4
      %v3520 = vshll.u32 %v3195, 16
      %v3522 = vrot.slane %v3520, 5
      %v3523 = vor.u32 %v3519, %v3522
      %v3524 = vrot.slane %v3523, 4
      %v3526 = vshll.u32 %v3196, 16
      %v3528 = vrot.slane %v3526, 5
      %v3529 = vsel %vm1017, %v3524, %v3528
      %v3530 = vshrl.u32 %v3196, 16
      %v3532 = vrot.slane %v3530, 4
      %v3533 = vor.u32 %v3532, %v3528
      %v3534 = vrot.slane %v3533, 4
      %v3536 = vshll.u32 %v3197, 16
      %v3538 = vrot.slane %v3536, 5
      %v3539 = vsel %vm1017, %v3534, %v3538
      %v3541 = vshrl.u32 %v3198, 16
      %v3543 = vrot.slane %v3541, 4
      %v3544 = vshll.u32 %v3198, 16
      %v3546 = vrot.slane %v3544, 5
      %v3547 = vor.u32 %v3543, %v3546
      %v3548 = vrot.slane %v3547, 4
      %v3550 = vshll.u32 %v3199, 16
      %v3552 = vrot.slane %v3550, 5
      %v3553 = vsel %vm1017, %v3548, %v3552
      %v3554 = vshrl.u32 %v3199, 16
      %v3556 = vrot.slane %v3554, 4
      %v3557 = vor.u32 %v3556, %v3552
      %v3558 = vrot.slane %v3557, 4
      %v3560 = vshll.u32 %v3200, 16
      %v3562 = vrot.slane %v3560, 5
      %v3563 = vsel %vm1017, %v3558, %v3562
      %v3565 = vshrl.u32 %v3201, 16
      %v3567 = vrot.slane %v3565, 4
      %v3568 = vshll.u32 %v3201, 16
      %v3570 = vrot.slane %v3568, 5
      %v3571 = vor.u32 %v3567, %v3570
      %v3572 = vrot.slane %v3571, 4
      %v3574 = vshll.u32 %v3202, 16
      %v3576 = vrot.slane %v3574, 5
      %v3577 = vsel %vm1017, %v3572, %v3576
      %v3578 = vshrl.u32 %v3202, 16
      %v3580 = vrot.slane %v3578, 4
      %v3581 = vor.u32 %v3580, %v3576
      %v3582 = vrot.slane %v3581, 4
      %v3584 = vshll.u32 %v3203, 16
      %v3586 = vrot.slane %v3584, 5
      %v3587 = vsel %vm1017, %v3582, %v3586
      %3588 = vrot.lane.b32.xlu0 %v3217, 28
      %v3589 = vpop.permute.xlu0 %3588
      %3590 = vrot.lane.b32.xlu0 %v3227, 28
      %v3591 = vpop.permute.xlu0 %3590
      %3592 = vrot.lane.b32.xlu0 %v3241, 28
      %v3593 = vpop.permute.xlu0 %3592
      %3594 = vrot.lane.b32.xlu0 %v3251, 28
      %v3595 = vpop.permute.xlu0 %3594
      %3596 = vrot.lane.b32.xlu0 %v3265, 28
      %v3597 = vpop.permute.xlu0 %3596
      %3598 = vrot.lane.b32.xlu0 %v3275, 28
      %v3599 = vpop.permute.xlu0 %3598
      %3600 = vrot.lane.b32.xlu0 %v3289, 28
      %v3601 = vpop.permute.xlu0 %3600
      %3602 = vrot.lane.b32.xlu0 %v3299, 28
      %v3603 = vpop.permute.xlu0 %3602
      %3604 = vrot.lane.b32.xlu0 %v3313, 28
      %v3605 = vpop.permute.xlu0 %3604
      %3606 = vrot.lane.b32.xlu0 %v3323, 28
      %v3607 = vpop.permute.xlu0 %3606
      %3608 = vrot.lane.b32.xlu0 %v3337, 28
      %v3609 = vpop.permute.xlu0 %3608
      %3610 = vrot.lane.b32.xlu0 %v3347, 28
      %v3611 = vpop.permute.xlu0 %3610
      %3612 = vrot.lane.b32.xlu0 %v3361, 28
      %v3613 = vpop.permute.xlu0 %3612
      %3614 = vrot.lane.b32.xlu0 %v3371, 28
      %v3615 = vpop.permute.xlu0 %3614
      %3616 = vrot.lane.b32.xlu0 %v3385, 28
      %v3617 = vpop.permute.xlu0 %3616
      %3618 = vrot.lane.b32.xlu0 %v3395, 28
      %v3619 = vpop.permute.xlu0 %3618
      %3620 = vrot.lane.b32.xlu0 %v3409, 28
      %v3621 = vpop.permute.xlu0 %3620
      %3622 = vrot.lane.b32.xlu0 %v3419, 28
      %v3623 = vpop.permute.xlu0 %3622
      %3624 = vrot.lane.b32.xlu0 %v3433, 28
      %v3625 = vpop.permute.xlu0 %3624
      %3626 = vrot.lane.b32.xlu0 %v3443, 28
      %v3627 = vpop.permute.xlu0 %3626
      %3628 = vrot.lane.b32.xlu0 %v3457, 28
      %v3629 = vpop.permute.xlu0 %3628
      %3630 = vrot.lane.b32.xlu0 %v3467, 28
      %v3631 = vpop.permute.xlu0 %3630
      %3632 = vrot.lane.b32.xlu0 %v3481, 28
      %v3633 = vpop.permute.xlu0 %3632
      %3634 = vrot.lane.b32.xlu0 %v3491, 28
      %v3635 = vpop.permute.xlu0 %3634
      %3636 = vrot.lane.b32.xlu0 %v3505, 28
      %v3637 = vpop.permute.xlu0 %3636
      %3638 = vrot.lane.b32.xlu0 %v3515, 28
      %v3639 = vpop.permute.xlu0 %3638
      %3640 = vrot.lane.b32.xlu0 %v3529, 28
      %v3641 = vpop.permute.xlu0 %3640
      %3642 = vrot.lane.b32.xlu0 %v3539, 28
      %v3643 = vpop.permute.xlu0 %3642
      %3644 = vrot.lane.b32.xlu0 %v3553, 28
      %v3645 = vpop.permute.xlu0 %3644
      %3646 = vrot.lane.b32.xlu0 %v3563, 28
      %v3647 = vpop.permute.xlu0 %3646
      %3648 = vrot.lane.b32.xlu0 %v3577, 28
      %v3649 = vpop.permute.xlu0 %3648
      %3650 = vrot.lane.b32.xlu0 %v3587, 28
      %v3651 = vpop.permute.xlu0 %3650
      %vm3684 = vcmask 257248
      %3685 = vst.msk [vmem:[#allocation4] sm:$0xf] %vm3684, %v3589
      %3686 = vst.msk [vmem:[#allocation4 + $0x4] sm:$0xf] %vm3684, %v3591
      %3687 = vst.msk [vmem:[#allocation4 + $0x8] sm:$0xf] %vm3684, %v3593
      %3688 = vst.msk [vmem:[#allocation4 + $0xc] sm:$0xf] %vm3684, %v3595
      %3689 = vst.msk [vmem:[#allocation4 + $0x10] sm:$0xf] %vm3684, %v3597
      %3690 = vst.msk [vmem:[#allocation4 + $0x14] sm:$0xf] %vm3684, %v3599
      %3691 = vst.msk [vmem:[#allocation4 + $0x18] sm:$0xf] %vm3684, %v3601
      %3692 = vst.msk [vmem:[#allocation4 + $0x1c] sm:$0xf] %vm3684, %v3603
      %3693 = vst.msk [vmem:[#allocation4 + $0x20] sm:$0xf] %vm3684, %v3605
      %3694 = vst.msk [vmem:[#allocation4 + $0x24] sm:$0xf] %vm3684, %v3607
      %3695 = vst.msk [vmem:[#allocation4 + $0x28] sm:$0xf] %vm3684, %v3609
      %3696 = vst.msk [vmem:[#allocation4 + $0x2c] sm:$0xf] %vm3684, %v3611
      %3697 = vst.msk [vmem:[#allocation4 + $0x30] sm:$0xf] %vm3684, %v3613
      %3698 = vst.msk [vmem:[#allocation4 + $0x34] sm:$0xf] %vm3684, %v3615
      %3699 = vst.msk [vmem:[#allocation4 + $0x38] sm:$0xf] %vm3684, %v3617
      %3700 = vst.msk [vmem:[#allocation4 + $0x3c] sm:$0xf] %vm3684, %v3619
      %3701 = vst.msk [vmem:[#allocation4 + $0x40] sm:$0xf] %vm3684, %v3621
      %3702 = vst.msk [vmem:[#allocation4 + $0x44] sm:$0xf] %vm3684, %v3623
      %3703 = vst.msk [vmem:[#allocation4 + $0x48] sm:$0xf] %vm3684, %v3625
      %3704 = vst.msk [vmem:[#allocation4 + $0x4c] sm:$0xf] %vm3684, %v3627
      %3705 = vst.msk [vmem:[#allocation4 + $0x50] sm:$0xf] %vm3684, %v3629
      %3706 = vst.msk [vmem:[#allocation4 + $0x54] sm:$0xf] %vm3684, %v3631
      %3707 = vst.msk [vmem:[#allocation4 + $0x58] sm:$0xf] %vm3684, %v3633
      %3708 = vst.msk [vmem:[#allocation4 + $0x5c] sm:$0xf] %vm3684, %v3635
      %3709 = vst.msk [vmem:[#allocation4 + $0x60] sm:$0xf] %vm3684, %v3637
      %3710 = vst.msk [vmem:[#allocation4 + $0x64] sm:$0xf] %vm3684, %v3639
      %3711 = vst.msk [vmem:[#allocation4 + $0x68] sm:$0xf] %vm3684, %v3641
      %3712 = vst.msk [vmem:[#allocation4 + $0x6c] sm:$0xf] %vm3684, %v3643
      %3713 = vst.msk [vmem:[#allocation4 + $0x70] sm:$0xf] %vm3684, %v3645
      %3714 = vst.msk [vmem:[#allocation4 + $0x74] sm:$0xf] %vm3684, %v3647
      %3715 = vst.msk [vmem:[#allocation4 + $0x78] sm:$0xf] %vm3684, %v3649
      %3716 = vst.msk [vmem:[#allocation4 + $0x7c] sm:$0xf] %vm3684, %v3651
      %v3717 = vld [vmem:[%s2962] sm:$0xe]
      %v3718 = vld [vmem:[%s2962 + $0x4] sm:$0xf]
      %v3719 = vld [vmem:[%s2962 + $0x8] sm:$0x1]
      %v3720 = vld [vmem:[%s2962 + $0xc] sm:$0xe]
      %v3721 = vld [vmem:[%s2962 + $0x10] sm:$0xf]
      %v3722 = vld [vmem:[%s2962 + $0x14] sm:$0x1]
      %v3723 = vld [vmem:[%s2962 + $0x18] sm:$0xe]
      %v3724 = vld [vmem:[%s2962 + $0x1c] sm:$0xf]
      %v3725 = vld [vmem:[%s2962 + $0x20] sm:$0x1]
      %v3726 = vld [vmem:[%s2962 + $0x24] sm:$0xe]
      %v3727 = vld [vmem:[%s2962 + $0x28] sm:$0xf]
      %v3728 = vld [vmem:[%s2962 + $0x2c] sm:$0x1]
      %v3729 = vld [vmem:[%s2962 + $0x30] sm:$0xe]
      %v3730 = vld [vmem:[%s2962 + $0x34] sm:$0xf]
      %v3731 = vld [vmem:[%s2962 + $0x38] sm:$0x1]
      %v3732 = vld [vmem:[%s2962 + $0x3c] sm:$0xe]
      %v3733 = vld [vmem:[%s2962 + $0x40] sm:$0xf]
      %v3734 = vld [vmem:[%s2962 + $0x44] sm:$0x1]
      %v3735 = vld [vmem:[%s2962 + $0x48] sm:$0xe]
      %v3736 = vld [vmem:[%s2962 + $0x4c] sm:$0xf]
      %v3737 = vld [vmem:[%s2962 + $0x50] sm:$0x1]
      %v3738 = vld [vmem:[%s2962 + $0x54] sm:$0xe]
      %v3739 = vld [vmem:[%s2962 + $0x58] sm:$0xf]
      %v3740 = vld [vmem:[%s2962 + $0x5c] sm:$0x1]
      %v3741 = vld [vmem:[%s2962 + $0x60] sm:$0xe]
      %v3742 = vld [vmem:[%s2962 + $0x64] sm:$0xf]
      %v3743 = vld [vmem:[%s2962 + $0x68] sm:$0x1]
      %v3744 = vld [vmem:[%s2962 + $0x6c] sm:$0xe]
      %v3745 = vld [vmem:[%s2962 + $0x70] sm:$0xf]
      %v3746 = vld [vmem:[%s2962 + $0x74] sm:$0x1]
      %v3747 = vld [vmem:[%s2962 + $0x78] sm:$0xe]
      %v3748 = vld [vmem:[%s2962 + $0x7c] sm:$0xf]
      %v3749 = vld [vmem:[%s2962 + $0x80] sm:$0x1]
      %v3750 = vld [vmem:[%s2962 + $0x84] sm:$0xe]
      %v3751 = vld [vmem:[%s2962 + $0x88] sm:$0xf]
      %v3752 = vld [vmem:[%s2962 + $0x8c] sm:$0x1]
      %v3753 = vld [vmem:[%s2962 + $0x90] sm:$0xe]
      %v3754 = vld [vmem:[%s2962 + $0x94] sm:$0xf]
      %v3755 = vld [vmem:[%s2962 + $0x98] sm:$0x1]
      %v3756 = vld [vmem:[%s2962 + $0x9c] sm:$0xe]
      %v3757 = vld [vmem:[%s2962 + $0xa0] sm:$0xf]
      %v3758 = vld [vmem:[%s2962 + $0xa4] sm:$0x1]
      %v3759 = vld [vmem:[%s2962 + $0xa8] sm:$0xe]
      %v3760 = vld [vmem:[%s2962 + $0xac] sm:$0xf]
      %v3761 = vld [vmem:[%s2962 + $0xb0] sm:$0x1]
      %v3762 = vld [vmem:[%s2962 + $0xb4] sm:$0xe]
      %v3763 = vld [vmem:[%s2962 + $0xb8] sm:$0xf]
      %v3764 = vld [vmem:[%s2962 + $0xbc] sm:$0x1]
      %v3813 = vrot.slane %v3717, 5
      %v3814 = vrot.slane %v3813, 4
      %v3815 = vrot.slane %v3718, 5
      %v3816 = vsel %vm1629, %v3814, %v3815
      %v3817 = vrot.slane %v3815, 4
      %v3818 = vrot.slane %v3719, 5
      %v3819 = vsel %vm1629, %v3817, %v3818
      %v3820 = vrot.slane %v3720, 5
      %v3821 = vrot.slane %v3820, 4
      %v3822 = vrot.slane %v3721, 5
      %v3823 = vsel %vm1629, %v3821, %v3822
      %v3824 = vrot.slane %v3822, 4
      %v3825 = vrot.slane %v3722, 5
      %v3826 = vsel %vm1629, %v3824, %v3825
      %v3827 = vrot.slane %v3723, 5
      %v3828 = vrot.slane %v3827, 4
      %v3829 = vrot.slane %v3724, 5
      %v3830 = vsel %vm1629, %v3828, %v3829
      %v3831 = vrot.slane %v3829, 4
      %v3832 = vrot.slane %v3725, 5
      %v3833 = vsel %vm1629, %v3831, %v3832
      %v3834 = vrot.slane %v3726, 5
      %v3835 = vrot.slane %v3834, 4
      %v3836 = vrot.slane %v3727, 5
      %v3837 = vsel %vm1629, %v3835, %v3836
      %v3838 = vrot.slane %v3836, 4
      %v3839 = vrot.slane %v3728, 5
      %v3840 = vsel %vm1629, %v3838, %v3839
      %v3841 = vrot.slane %v3729, 5
      %v3842 = vrot.slane %v3841, 4
      %v3843 = vrot.slane %v3730, 5
      %v3844 = vsel %vm1629, %v3842, %v3843
      %v3845 = vrot.slane %v3843, 4
      %v3846 = vrot.slane %v3731, 5
      %v3847 = vsel %vm1629, %v3845, %v3846
      %v3848 = vrot.slane %v3732, 5
      %v3849 = vrot.slane %v3848, 4
      %v3850 = vrot.slane %v3733, 5
      %v3851 = vsel %vm1629, %v3849, %v3850
      %v3852 = vrot.slane %v3850, 4
      %v3853 = vrot.slane %v3734, 5
      %v3854 = vsel %vm1629, %v3852, %v3853
      %v3855 = vrot.slane %v3735, 5
      %v3856 = vrot.slane %v3855, 4
      %v3857 = vrot.slane %v3736, 5
      %v3858 = vsel %vm1629, %v3856, %v3857
      %v3859 = vrot.slane %v3857, 4
      %v3860 = vrot.slane %v3737, 5
      %v3861 = vsel %vm1629, %v3859, %v3860
      %v3862 = vrot.slane %v3738, 5
      %v3863 = vrot.slane %v3862, 4
      %v3864 = vrot.slane %v3739, 5
      %v3865 = vsel %vm1629, %v3863, %v3864
      %v3866 = vrot.slane %v3864, 4
      %v3867 = vrot.slane %v3740, 5
      %v3868 = vsel %vm1629, %v3866, %v3867
      %v3869 = vrot.slane %v3741, 5
      %v3870 = vrot.slane %v3869, 4
      %v3871 = vrot.slane %v3742, 5
      %v3872 = vsel %vm1629, %v3870, %v3871
      %v3873 = vrot.slane %v3871, 4
      %v3874 = vrot.slane %v3743, 5
      %v3875 = vsel %vm1629, %v3873, %v3874
      %v3876 = vrot.slane %v3744, 5
      %v3877 = vrot.slane %v3876, 4
      %v3878 = vrot.slane %v3745, 5
      %v3879 = vsel %vm1629, %v3877, %v3878
      %v3880 = vrot.slane %v3878, 4
      %v3881 = vrot.slane %v3746, 5
      %v3882 = vsel %vm1629, %v3880, %v3881
      %v3883 = vrot.slane %v3747, 5
      %v3884 = vrot.slane %v3883, 4
      %v3885 = vrot.slane %v3748, 5
      %v3886 = vsel %vm1629, %v3884, %v3885
      %v3887 = vrot.slane %v3885, 4
      %v3888 = vrot.slane %v3749, 5
      %v3889 = vsel %vm1629, %v3887, %v3888
      %v3890 = vrot.slane %v3750, 5
      %v3891 = vrot.slane %v3890, 4
      %v3892 = vrot.slane %v3751, 5
      %v3893 = vsel %vm1629, %v3891, %v3892
      %v3894 = vrot.slane %v3892, 4
      %v3895 = vrot.slane %v3752, 5
      %v3896 = vsel %vm1629, %v3894, %v3895
      %v3897 = vrot.slane %v3753, 5
      %v3898 = vrot.slane %v3897, 4
      %v3899 = vrot.slane %v3754, 5
      %v3900 = vsel %vm1629, %v3898, %v3899
      %v3901 = vrot.slane %v3899, 4
      %v3902 = vrot.slane %v3755, 5
      %v3903 = vsel %vm1629, %v3901, %v3902
      %v3904 = vrot.slane %v3756, 5
      %v3905 = vrot.slane %v3904, 4
      %v3906 = vrot.slane %v3757, 5
      %v3907 = vsel %vm1629, %v3905, %v3906
      %v3908 = vrot.slane %v3906, 4
      %v3909 = vrot.slane %v3758, 5
      %v3910 = vsel %vm1629, %v3908, %v3909
      %v3911 = vrot.slane %v3759, 5
      %v3912 = vrot.slane %v3911, 4
      %v3913 = vrot.slane %v3760, 5
      %v3914 = vsel %vm1629, %v3912, %v3913
      %v3915 = vrot.slane %v3913, 4
      %v3916 = vrot.slane %v3761, 5
      %v3917 = vsel %vm1629, %v3915, %v3916
      %v3918 = vrot.slane %v3762, 5
      %v3919 = vrot.slane %v3918, 4
      %v3920 = vrot.slane %v3763, 5
      %v3921 = vsel %vm1629, %v3919, %v3920
      %v3922 = vrot.slane %v3920, 4
      %v3923 = vrot.slane %v3764, 5
      %v3924 = vsel %vm1629, %v3922, %v3923
      %3925 = vrot.lane.b32.xlu0 %v3816, 32
      %v3926 = vpop.permute.xlu0 %3925
      %3927 = vrot.lane.b32.xlu0 %v3819, 32
      %v3928 = vpop.permute.xlu0 %3927
      %3929 = vrot.lane.b32.xlu0 %v3823, 32
      %v3930 = vpop.permute.xlu0 %3929
      %3931 = vrot.lane.b32.xlu0 %v3826, 32
      %v3932 = vpop.permute.xlu0 %3931
      %3933 = vrot.lane.b32.xlu0 %v3830, 32
      %v3934 = vpop.permute.xlu0 %3933
      %3935 = vrot.lane.b32.xlu0 %v3833, 32
      %v3936 = vpop.permute.xlu0 %3935
      %3937 = vrot.lane.b32.xlu0 %v3837, 32
      %v3938 = vpop.permute.xlu0 %3937
      %3939 = vrot.lane.b32.xlu0 %v3840, 32
      %v3940 = vpop.permute.xlu0 %3939
      %3941 = vrot.lane.b32.xlu0 %v3844, 32
      %v3942 = vpop.permute.xlu0 %3941
      %3943 = vrot.lane.b32.xlu0 %v3847, 32
      %v3944 = vpop.permute.xlu0 %3943
      %3945 = vrot.lane.b32.xlu0 %v3851, 32
      %v3946 = vpop.permute.xlu0 %3945
      %3947 = vrot.lane.b32.xlu0 %v3854, 32
      %v3948 = vpop.permute.xlu0 %3947
      %3949 = vrot.lane.b32.xlu0 %v3858, 32
      %v3950 = vpop.permute.xlu0 %3949
      %3951 = vrot.lane.b32.xlu0 %v3861, 32
      %v3952 = vpop.permute.xlu0 %3951
      %3953 = vrot.lane.b32.xlu0 %v3865, 32
      %v3954 = vpop.permute.xlu0 %3953
      %3955 = vrot.lane.b32.xlu0 %v3868, 32
      %v3956 = vpop.permute.xlu0 %3955
      %3957 = vrot.lane.b32.xlu0 %v3872, 32
      %v3958 = vpop.permute.xlu0 %3957
      %3959 = vrot.lane.b32.xlu0 %v3875, 32
      %v3960 = vpop.permute.xlu0 %3959
      %3961 = vrot.lane.b32.xlu0 %v3879, 32
      %v3962 = vpop.permute.xlu0 %3961
      %3963 = vrot.lane.b32.xlu0 %v3882, 32
      %v3964 = vpop.permute.xlu0 %3963
      %3965 = vrot.lane.b32.xlu0 %v3886, 32
      %v3966 = vpop.permute.xlu0 %3965
      %3967 = vrot.lane.b32.xlu0 %v3889, 32
      %v3968 = vpop.permute.xlu0 %3967
      %3969 = vrot.lane.b32.xlu0 %v3893, 32
      %v3970 = vpop.permute.xlu0 %3969
      %3971 = vrot.lane.b32.xlu0 %v3896, 32
      %v3972 = vpop.permute.xlu0 %3971
      %3973 = vrot.lane.b32.xlu0 %v3900, 32
      %v3974 = vpop.permute.xlu0 %3973
      %3975 = vrot.lane.b32.xlu0 %v3903, 32
      %v3976 = vpop.permute.xlu0 %3975
      %3977 = vrot.lane.b32.xlu0 %v3907, 32
      %v3978 = vpop.permute.xlu0 %3977
      %3979 = vrot.lane.b32.xlu0 %v3910, 32
      %v3980 = vpop.permute.xlu0 %3979
      %3981 = vrot.lane.b32.xlu0 %v3914, 32
      %v3982 = vpop.permute.xlu0 %3981
      %3983 = vrot.lane.b32.xlu0 %v3917, 32
      %v3984 = vpop.permute.xlu0 %3983
      %3985 = vrot.lane.b32.xlu0 %v3921, 32
      %v3986 = vpop.permute.xlu0 %3985
      %3987 = vrot.lane.b32.xlu0 %v3924, 32
      %v3988 = vpop.permute.xlu0 %3987
      %vm4021 = vcmask 290048
      %4022 = vst.msk [vmem:[#allocation4] sm:$0xf] %vm4021, %v3926
      %4023 = vst.msk [vmem:[#allocation4 + $0x4] sm:$0xf] %vm4021, %v3928
      %4024 = vst.msk [vmem:[#allocation4 + $0x8] sm:$0xf] %vm4021, %v3930
      %4025 = vst.msk [vmem:[#allocation4 + $0xc] sm:$0xf] %vm4021, %v3932
      %4026 = vst.msk [vmem:[#allocation4 + $0x10] sm:$0xf] %vm4021, %v3934
      %4027 = vst.msk [vmem:[#allocation4 + $0x14] sm:$0xf] %vm4021, %v3936
      %4028 = vst.msk [vmem:[#allocation4 + $0x18] sm:$0xf] %vm4021, %v3938
      %4029 = vst.msk [vmem:[#allocation4 + $0x1c] sm:$0xf] %vm4021, %v3940
      %4030 = vst.msk [vmem:[#allocation4 + $0x20] sm:$0xf] %vm4021, %v3942
      %4031 = vst.msk [vmem:[#allocation4 + $0x24] sm:$0xf] %vm4021, %v3944
      %4032 = vst.msk [vmem:[#allocation4 + $0x28] sm:$0xf] %vm4021, %v3946
      %4033 = vst.msk [vmem:[#allocation4 + $0x2c] sm:$0xf] %vm4021, %v3948
      %4034 = vst.msk [vmem:[#allocation4 + $0x30] sm:$0xf] %vm4021, %v3950
      %4035 = vst.msk [vmem:[#allocation4 + $0x34] sm:$0xf] %vm4021, %v3952
      %4036 = vst.msk [vmem:[#allocation4 + $0x38] sm:$0xf] %vm4021, %v3954
      %4037 = vst.msk [vmem:[#allocation4 + $0x3c] sm:$0xf] %vm4021, %v3956
      %4038 = vst.msk [vmem:[#allocation4 + $0x40] sm:$0xf] %vm4021, %v3958
      %4039 = vst.msk [vmem:[#allocation4 + $0x44] sm:$0xf] %vm4021, %v3960
      %4040 = vst.msk [vmem:[#allocation4 + $0x48] sm:$0xf] %vm4021, %v3962
      %4041 = vst.msk [vmem:[#allocation4 + $0x4c] sm:$0xf] %vm4021, %v3964
      %4042 = vst.msk [vmem:[#allocation4 + $0x50] sm:$0xf] %vm4021, %v3966
      %4043 = vst.msk [vmem:[#allocation4 + $0x54] sm:$0xf] %vm4021, %v3968
      %4044 = vst.msk [vmem:[#allocation4 + $0x58] sm:$0xf] %vm4021, %v3970
      %4045 = vst.msk [vmem:[#allocation4 + $0x5c] sm:$0xf] %vm4021, %v3972
      %4046 = vst.msk [vmem:[#allocation4 + $0x60] sm:$0xf] %vm4021, %v3974
      %4047 = vst.msk [vmem:[#allocation4 + $0x64] sm:$0xf] %vm4021, %v3976
      %4048 = vst.msk [vmem:[#allocation4 + $0x68] sm:$0xf] %vm4021, %v3978
      %4049 = vst.msk [vmem:[#allocation4 + $0x6c] sm:$0xf] %vm4021, %v3980
      %4050 = vst.msk [vmem:[#allocation4 + $0x70] sm:$0xf] %vm4021, %v3982
      %4051 = vst.msk [vmem:[#allocation4 + $0x74] sm:$0xf] %vm4021, %v3984
      %4052 = vst.msk [vmem:[#allocation4 + $0x78] sm:$0xf] %vm4021, %v3986
      %4053 = vst.msk [vmem:[#allocation4 + $0x7c] sm:$0xf] %vm4021, %v3988
      %v4054 = vld [vmem:[#allocation4] sm:$0xf]
      %v4055 = vld [vmem:[#allocation4 + $0x4] sm:$0xf]
      %v4056 = vld [vmem:[#allocation4 + $0x8] sm:$0xf]
      %v4057 = vld [vmem:[#allocation4 + $0xc] sm:$0xf]
      %v4058 = vld [vmem:[#allocation4 + $0x10] sm:$0xf]
      %v4059 = vld [vmem:[#allocation4 + $0x14] sm:$0xf]
      %v4060 = vld [vmem:[#allocation4 + $0x18] sm:$0xf]
      %v4061 = vld [vmem:[#allocation4 + $0x1c] sm:$0xf]
      %v4062 = vld [vmem:[#allocation4 + $0x20] sm:$0xf]
      %v4063 = vld [vmem:[#allocation4 + $0x24] sm:$0xf]
      %v4064 = vld [vmem:[#allocation4 + $0x28] sm:$0xf]
      %v4065 = vld [vmem:[#allocation4 + $0x2c] sm:$0xf]
      %v4066 = vld [vmem:[#allocation4 + $0x30] sm:$0xf]
      %v4067 = vld [vmem:[#allocation4 + $0x34] sm:$0xf]
      %v4068 = vld [vmem:[#allocation4 + $0x38] sm:$0xf]
      %v4069 = vld [vmem:[#allocation4 + $0x3c] sm:$0xf]
      %v4070 = vld [vmem:[#allocation4 + $0x40] sm:$0xf]
      %v4071 = vld [vmem:[#allocation4 + $0x44] sm:$0xf]
      %v4072 = vld [vmem:[#allocation4 + $0x48] sm:$0xf]
      %v4073 = vld [vmem:[#allocation4 + $0x4c] sm:$0xf]
      %v4074 = vld [vmem:[#allocation4 + $0x50] sm:$0xf]
      %v4075 = vld [vmem:[#allocation4 + $0x54] sm:$0xf]
      %v4076 = vld [vmem:[#allocation4 + $0x58] sm:$0xf]
      %v4077 = vld [vmem:[#allocation4 + $0x5c] sm:$0xf]
      %v4078 = vld [vmem:[#allocation4 + $0x60] sm:$0xf]
      %v4079 = vld [vmem:[#allocation4 + $0x64] sm:$0xf]
      %v4080 = vld [vmem:[#allocation4 + $0x68] sm:$0xf]
      %v4081 = vld [vmem:[#allocation4 + $0x6c] sm:$0xf]
      %v4082 = vld [vmem:[#allocation4 + $0x70] sm:$0xf]
      %v4083 = vld [vmem:[#allocation4 + $0x74] sm:$0xf]
      %v4084 = vld [vmem:[#allocation4 + $0x78] sm:$0xf]
      %v4085 = vld [vmem:[#allocation4 + $0x7c] sm:$0xf]
      %v4086 = vld [vmem:[%s1] sm:$0xf]
      %v4087 = vld [vmem:[%s1 + $0x4] sm:$0xf]
      %v4088 = vld [vmem:[%s1 + $0x8] sm:$0xf]
      %v4089 = vld [vmem:[%s1 + $0xc] sm:$0xf]
      %v4090 = vld [vmem:[%s1 + $0x10] sm:$0x3]
      %v4123 = vunpack.c.l.b16 %v4054
      %v4124 = vunpack.c.l.b16 %v4055
      %v4125 = vunpack.c.l.b16 %v4056
      %v4126 = vunpack.c.l.b16 %v4057
      %v4127 = vunpack.c.l.b16 %v4058
      %v4128 = vunpack.c.l.b16 %v4059
      %v4129 = vunpack.c.l.b16 %v4060
      %v4130 = vunpack.c.l.b16 %v4061
      %v4131 = vunpack.c.l.b16 %v4062
      %v4132 = vunpack.c.l.b16 %v4063
      %v4133 = vunpack.c.l.b16 %v4064
      %v4134 = vunpack.c.l.b16 %v4065
      %v4135 = vunpack.c.l.b16 %v4066
      %v4136 = vunpack.c.l.b16 %v4067
      %v4137 = vunpack.c.l.b16 %v4068
      %v4138 = vunpack.c.l.b16 %v4069
      %v4139 = vunpack.c.l.b16 %v4070
      %v4140 = vunpack.c.l.b16 %v4071
      %v4141 = vunpack.c.l.b16 %v4072
      %v4142 = vunpack.c.l.b16 %v4073
      %v4143 = vunpack.c.l.b16 %v4074
      %v4144 = vunpack.c.l.b16 %v4075
      %v4145 = vunpack.c.l.b16 %v4076
      %v4146 = vunpack.c.l.b16 %v4077
      %v4147 = vunpack.c.l.b16 %v4078
      %v4148 = vunpack.c.l.b16 %v4079
      %v4149 = vunpack.c.l.b16 %v4080
      %v4150 = vunpack.c.l.b16 %v4081
      %v4151 = vunpack.c.l.b16 %v4082
      %v4152 = vunpack.c.l.b16 %v4083
      %v4153 = vunpack.c.l.b16 %v4084
      %v4154 = vunpack.c.l.b16 %v4085
      %v4155 = vpack.c.b16 %v4124, %v4123
      %v4156 = vpack.c.b16 %v4126, %v4125
      %v4157 = vpack.c.b16 %v4128, %v4127
      %v4158 = vpack.c.b16 %v4130, %v4129
      %v4159 = vpack.c.b16 %v4132, %v4131
      %v4160 = vpack.c.b16 %v4134, %v4133
      %v4161 = vpack.c.b16 %v4136, %v4135
      %v4162 = vpack.c.b16 %v4138, %v4137
      %v4163 = vpack.c.b16 %v4140, %v4139
      %v4164 = vpack.c.b16 %v4142, %v4141
      %v4165 = vpack.c.b16 %v4144, %v4143
      %v4166 = vpack.c.b16 %v4146, %v4145
      %v4167 = vpack.c.b16 %v4148, %v4147
      %v4168 = vpack.c.b16 %v4150, %v4149
      %v4169 = vpack.c.b16 %v4152, %v4151
      %v4170 = vpack.c.b16 %v4154, %v4153
      %v4176 = vunpack.c.l.b16 %v4086
      %v4177 = vunpack.c.l.b16 %v4087
      %v4178 = vunpack.c.l.b16 %v4088
      %v4179 = vunpack.c.l.b16 %v4089
      %v4180 = vunpack.c.l.b16 %v4090
      %v4181 = vpack.c.b16 %v4177, %v4176
      %v4182 = vpack.c.b16 %v4179, %v4178
      %v4183 = vpack.c.b16 %v4180, %v4180
      %vm4186 = vcmask 293888
      %v4188 = vsel %vm4186, %v4155, 0
      %v4191 = vsel %vm4186, %v4156, 0
      %v4194 = vsel %vm4186, %v4157, 0
      %v4197 = vsel %vm4186, %v4158, 0
      %v4200 = vsel %vm4186, %v4159, 0
      %v4203 = vsel %vm4186, %v4160, 0
      %v4206 = vsel %vm4186, %v4161, 0
      %v4209 = vsel %vm4186, %v4162, 0
      %v4212 = vsel %vm4186, %v4163, 0
      %v4215 = vsel %vm4186, %v4164, 0
      %v4218 = vsel %vm4186, %v4165, 0
      %v4221 = vsel %vm4186, %v4166, 0
      %v4224 = vsel %vm4186, %v4167, 0
      %v4227 = vsel %vm4186, %v4168, 0
      %v4230 = vsel %vm4186, %v4169, 0
      %v4233 = vsel %vm4186, %v4170, 0
      %vm4235 = vcmask 1041408
      %v4237 = vsel %vm4235, %v4183, 0
      %4239 = vmatpush.bf16.msra.mxu0 0
      %4240 = vmatpush.bf16.msra.mxu0 0
      %4241 = vmatpush.bf16.msra.mxu0 0
      %4242 = vmatpush.bf16.msra.mxu0 0
      %4243 = vmatpush.bf16.msra.mxu0 0
      %4244 = vmatpush.bf16.msra.mxu0 %v4237
      %4245 = vmatpush.bf16.msra.mxu0 %v4182
      %4246 = vmatpush.bf16.msra.mxu0 %v4181
      %4247 = vmatmul.bf16.gmra.mxu0 %v4188
      %v4248 = vpop.f32.mrf.mxu0
      %v4249 = vadd.f32 0.0, %v4248
      %v4250 = vpop.f32.mrf.mxu0
      %v4251 = vadd.f32 0.0, %v4250
      %4252 = vmatmul.bf16.gmra.mxu0 %v4191
      %v4253 = vpop.f32.mrf.mxu0
      %v4254 = vadd.f32 0.0, %v4253
      %v4255 = vpop.f32.mrf.mxu0
      %v4256 = vadd.f32 0.0, %v4255
      %4257 = vmatmul.bf16.gmra.mxu0 %v4194
      %v4258 = vpop.f32.mrf.mxu0
      %v4259 = vadd.f32 0.0, %v4258
      %v4260 = vpop.f32.mrf.mxu0
      %v4261 = vadd.f32 0.0, %v4260
      %4262 = vmatmul.bf16.gmra.mxu0 %v4197
      %v4263 = vpop.f32.mrf.mxu0
      %v4264 = vadd.f32 0.0, %v4263
      %v4265 = vpop.f32.mrf.mxu0
      %v4266 = vadd.f32 0.0, %v4265
      %4267 = vmatmul.bf16.gmra.mxu0 %v4200
      %v4268 = vpop.f32.mrf.mxu0
      %v4269 = vadd.f32 0.0, %v4268
      %v4270 = vpop.f32.mrf.mxu0
      %v4271 = vadd.f32 0.0, %v4270
      %4272 = vmatmul.bf16.gmra.mxu0 %v4203
      %v4273 = vpop.f32.mrf.mxu0
      %v4274 = vadd.f32 0.0, %v4273
      %v4275 = vpop.f32.mrf.mxu0
      %v4276 = vadd.f32 0.0, %v4275
      %4277 = vmatmul.bf16.gmra.mxu0 %v4206
      %v4278 = vpop.f32.mrf.mxu0
      %v4279 = vadd.f32 0.0, %v4278
      %v4280 = vpop.f32.mrf.mxu0
      %v4281 = vadd.f32 0.0, %v4280
      %4282 = vmatmul.bf16.gmra.mxu0 %v4209
      %v4283 = vpop.f32.mrf.mxu0
      %v4284 = vadd.f32 0.0, %v4283
      %v4285 = vpop.f32.mrf.mxu0
      %v4286 = vadd.f32 0.0, %v4285
      %4287 = vmatmul.bf16.gmra.mxu0 %v4212
      %v4288 = vpop.f32.mrf.mxu0
      %v4289 = vadd.f32 0.0, %v4288
      %v4290 = vpop.f32.mrf.mxu0
      %v4291 = vadd.f32 0.0, %v4290
      %4292 = vmatmul.bf16.gmra.mxu0 %v4215
      %v4293 = vpop.f32.mrf.mxu0
      %v4294 = vadd.f32 0.0, %v4293
      %v4295 = vpop.f32.mrf.mxu0
      %v4296 = vadd.f32 0.0, %v4295
      %4297 = vmatmul.bf16.gmra.mxu0 %v4218
      %v4298 = vpop.f32.mrf.mxu0
      %v4299 = vadd.f32 0.0, %v4298
      %v4300 = vpop.f32.mrf.mxu0
      %v4301 = vadd.f32 0.0, %v4300
      %4302 = vmatmul.bf16.gmra.mxu0 %v4221
      %v4303 = vpop.f32.mrf.mxu0
      %v4304 = vadd.f32 0.0, %v4303
      %v4305 = vpop.f32.mrf.mxu0
      %v4306 = vadd.f32 0.0, %v4305
      %4307 = vmatmul.bf16.gmra.mxu0 %v4224
      %v4308 = vpop.f32.mrf.mxu0
      %v4309 = vadd.f32 0.0, %v4308
      %v4310 = vpop.f32.mrf.mxu0
      %v4311 = vadd.f32 0.0, %v4310
      %4312 = vmatmul.bf16.gmra.mxu0 %v4227
      %v4313 = vpop.f32.mrf.mxu0
      %v4314 = vadd.f32 0.0, %v4313
      %v4315 = vpop.f32.mrf.mxu0
      %v4316 = vadd.f32 0.0, %v4315
      %4317 = vmatmul.bf16.gmra.mxu0 %v4230
      %v4318 = vpop.f32.mrf.mxu0
      %v4319 = vadd.f32 0.0, %v4318
      %v4320 = vpop.f32.mrf.mxu0
      %v4321 = vadd.f32 0.0, %v4320
      %4322 = vmatmul.bf16.gmra.mxu0 %v4233
      %v4323 = vpop.f32.mrf.mxu0
      %v4324 = vadd.f32 0.0, %v4323
      %v4325 = vpop.f32.mrf.mxu0
      %v4326 = vadd.f32 0.0, %v4325
      %4327 = vdwg.mxu0
      %v4328 = vld [vmem:[%s2] sm:$0x1]
      %v4330 = vperm.slane %v4328, 0
      %v4332 = vmul.f32 %v4249, %v4330
      %v4333 = vmul.f32 %v4251, %v4330
      %v4334 = vmul.f32 %v4254, %v4330
      %v4335 = vmul.f32 %v4256, %v4330
      %v4336 = vmul.f32 %v4259, %v4330
      %v4337 = vmul.f32 %v4261, %v4330
      %v4338 = vmul.f32 %v4264, %v4330
      %v4339 = vmul.f32 %v4266, %v4330
      %v4340 = vmul.f32 %v4269, %v4330
      %v4341 = vmul.f32 %v4271, %v4330
      %v4342 = vmul.f32 %v4274, %v4330
      %v4343 = vmul.f32 %v4276, %v4330
      %v4344 = vmul.f32 %v4279, %v4330
      %v4345 = vmul.f32 %v4281, %v4330
      %v4346 = vmul.f32 %v4284, %v4330
      %v4347 = vmul.f32 %v4286, %v4330
      %v4348 = vmul.f32 %v4289, %v4330
      %v4349 = vmul.f32 %v4291, %v4330
      %v4350 = vmul.f32 %v4294, %v4330
      %v4351 = vmul.f32 %v4296, %v4330
      %v4352 = vmul.f32 %v4299, %v4330
      %v4353 = vmul.f32 %v4301, %v4330
      %v4354 = vmul.f32 %v4304, %v4330
      %v4355 = vmul.f32 %v4306, %v4330
      %v4356 = vmul.f32 %v4309, %v4330
      %v4357 = vmul.f32 %v4311, %v4330
      %v4358 = vmul.f32 %v4314, %v4330
      %v4359 = vmul.f32 %v4316, %v4330
      %v4360 = vmul.f32 %v4319, %v4330
      %v4361 = vmul.f32 %v4321, %v4330
      %v4362 = vmul.f32 %v4324, %v4330
      %v4363 = vmul.f32 %v4326, %v4330
      %v4364 = vld [vmem:[%s3] sm:$0x1]
      %v4366 = vperm.slane %v4364, 0
      %v4368 = vadd.f32 %v4332, %v4366
      %v4369 = vadd.f32 %v4333, %v4366
      %v4370 = vadd.f32 %v4334, %v4366
      %v4371 = vadd.f32 %v4335, %v4366
      %v4372 = vadd.f32 %v4336, %v4366
      %v4373 = vadd.f32 %v4337, %v4366
      %v4374 = vadd.f32 %v4338, %v4366
      %v4375 = vadd.f32 %v4339, %v4366
      %v4376 = vadd.f32 %v4340, %v4366
      %v4377 = vadd.f32 %v4341, %v4366
      %v4378 = vadd.f32 %v4342, %v4366
      %v4379 = vadd.f32 %v4343, %v4366
      %v4380 = vadd.f32 %v4344, %v4366
      %v4381 = vadd.f32 %v4345, %v4366
      %v4382 = vadd.f32 %v4346, %v4366
      %v4383 = vadd.f32 %v4347, %v4366
      %v4384 = vadd.f32 %v4348, %v4366
      %v4385 = vadd.f32 %v4349, %v4366
      %v4386 = vadd.f32 %v4350, %v4366
      %v4387 = vadd.f32 %v4351, %v4366
      %v4388 = vadd.f32 %v4352, %v4366
      %v4389 = vadd.f32 %v4353, %v4366
      %v4390 = vadd.f32 %v4354, %v4366
      %v4391 = vadd.f32 %v4355, %v4366
      %v4392 = vadd.f32 %v4356, %v4366
      %v4393 = vadd.f32 %v4357, %v4366
      %v4394 = vadd.f32 %v4358, %v4366
      %v4395 = vadd.f32 %v4359, %v4366
      %v4396 = vadd.f32 %v4360, %v4366
      %v4397 = vadd.f32 %v4361, %v4366
      %v4398 = vadd.f32 %v4362, %v4366
      %v4399 = vadd.f32 %v4363, %v4366
      %v4400 = vmax.f32 %v4368, 0.0
      %v4401 = vmax.f32 %v4369, 0.0
      %v4402 = vmax.f32 %v4370, 0.0
      %v4403 = vmax.f32 %v4371, 0.0
      %v4404 = vmax.f32 %v4372, 0.0
      %v4405 = vmax.f32 %v4373, 0.0
      %v4406 = vmax.f32 %v4374, 0.0
      %v4407 = vmax.f32 %v4375, 0.0
      %v4408 = vmax.f32 %v4376, 0.0
      %v4409 = vmax.f32 %v4377, 0.0
      %v4410 = vmax.f32 %v4378, 0.0
      %v4411 = vmax.f32 %v4379, 0.0
      %v4412 = vmax.f32 %v4380, 0.0
      %v4413 = vmax.f32 %v4381, 0.0
      %v4414 = vmax.f32 %v4382, 0.0
      %v4415 = vmax.f32 %v4383, 0.0
      %v4416 = vmax.f32 %v4384, 0.0
      %v4417 = vmax.f32 %v4385, 0.0
      %v4418 = vmax.f32 %v4386, 0.0
      %v4419 = vmax.f32 %v4387, 0.0
      %v4420 = vmax.f32 %v4388, 0.0
      %v4421 = vmax.f32 %v4389, 0.0
      %v4422 = vmax.f32 %v4390, 0.0
      %v4423 = vmax.f32 %v4391, 0.0
      %v4424 = vmax.f32 %v4392, 0.0
      %v4425 = vmax.f32 %v4393, 0.0
      %v4426 = vmax.f32 %v4394, 0.0
      %v4427 = vmax.f32 %v4395, 0.0
      %v4428 = vmax.f32 %v4396, 0.0
      %v4429 = vmax.f32 %v4397, 0.0
      %v4430 = vmax.f32 %v4398, 0.0
      %v4431 = vmax.f32 %v4399, 0.0
      %4432 = vst.msk [vmem:[#allocation3] sm:$0xf] %vm280, 0
      %4433 = vst.msk [vmem:[#allocation3 + $0x4] sm:$0xf] %vm280, 0
      %4434 = vst.msk [vmem:[#allocation3 + $0x8] sm:$0x1] %vm283, 0
      %s4435 = scalar_lea.vmem [#allocation3], 204
      %4436 = vst.msk [vmem:[%s4435] sm:$0xf] %vm280, 0
      %4437 = vst.msk [vmem:[%s4435 + $0x4] sm:$0xf] %vm280, 0
      %4438 = vst.msk [vmem:[%s4435 + $0x8] sm:$0x1] %vm283, 0
      %v4439 = vld [vmem:[#allocation3] sm:$0x1]
      %v4440 = vsel %vm291, 0, %v4439
      %4441 = vst [vmem:[#allocation3] sm:$0x1] %v4440
      %v4442 = vld [vmem:[#allocation3 + $0xc] sm:$0x1]
      %v4443 = vsel %vm291, 0, %v4442
      %4444 = vst [vmem:[#allocation3 + $0xc] sm:$0x1] %v4443
      %v4445 = vld [vmem:[#allocation3 + $0x18] sm:$0x1]
      %v4446 = vsel %vm291, 0, %v4445
      %4447 = vst [vmem:[#allocation3 + $0x18] sm:$0x1] %v4446
      %v4448 = vld [vmem:[#allocation3 + $0x24] sm:$0x1]
      %v4449 = vsel %vm291, 0, %v4448
      %4450 = vst [vmem:[#allocation3 + $0x24] sm:$0x1] %v4449
      %v4451 = vld [vmem:[#allocation3 + $0x30] sm:$0x1]
      %v4452 = vsel %vm291, 0, %v4451
      %4453 = vst [vmem:[#allocation3 + $0x30] sm:$0x1] %v4452
      %v4454 = vld [vmem:[#allocation3 + $0x3c] sm:$0x1]
      %v4455 = vsel %vm291, 0, %v4454
      %4456 = vst [vmem:[#allocation3 + $0x3c] sm:$0x1] %v4455
      %v4457 = vld [vmem:[#allocation3 + $0x48] sm:$0x1]
      %v4458 = vsel %vm291, 0, %v4457
      %4459 = vst [vmem:[#allocation3 + $0x48] sm:$0x1] %v4458
      %v4460 = vld [vmem:[#allocation3 + $0x54] sm:$0x1]
      %v4461 = vsel %vm291, 0, %v4460
      %4462 = vst [vmem:[#allocation3 + $0x54] sm:$0x1] %v4461
      %v4463 = vld [vmem:[#allocation3 + $0x60] sm:$0x1]
      %v4464 = vsel %vm291, 0, %v4463
      %4465 = vst [vmem:[#allocation3 + $0x60] sm:$0x1] %v4464
      %v4466 = vld [vmem:[#allocation3 + $0x6c] sm:$0x1]
      %v4467 = vsel %vm291, 0, %v4466
      %4468 = vst [vmem:[#allocation3 + $0x6c] sm:$0x1] %v4467
      %v4469 = vld [vmem:[#allocation3 + $0x78] sm:$0x1]
      %v4470 = vsel %vm291, 0, %v4469
      %4471 = vst [vmem:[#allocation3 + $0x78] sm:$0x1] %v4470
      %v4472 = vld [vmem:[#allocation3 + $0x84] sm:$0x1]
      %v4473 = vsel %vm291, 0, %v4472
      %4474 = vst [vmem:[#allocation3 + $0x84] sm:$0x1] %v4473
      %v4475 = vld [vmem:[#allocation3 + $0x90] sm:$0x1]
      %v4476 = vsel %vm291, 0, %v4475
      %4477 = vst [vmem:[#allocation3 + $0x90] sm:$0x1] %v4476
      %v4478 = vld [vmem:[#allocation3 + $0x9c] sm:$0x1]
      %v4479 = vsel %vm291, 0, %v4478
      %4480 = vst [vmem:[#allocation3 + $0x9c] sm:$0x1] %v4479
      %v4481 = vld [vmem:[#allocation3 + $0xa8] sm:$0x1]
      %v4482 = vsel %vm291, 0, %v4481
      %4483 = vst [vmem:[#allocation3 + $0xa8] sm:$0x1] %v4482
      %v4484 = vld [vmem:[#allocation3 + $0xb4] sm:$0x1]
      %v4485 = vsel %vm291, 0, %v4484
      %4486 = vst [vmem:[#allocation3 + $0xb4] sm:$0x1] %v4485
      %v4487 = vld [vmem:[#allocation3 + $0xc0] sm:$0x1]
      %v4488 = vsel %vm291, 0, %v4487
      %4489 = vst [vmem:[#allocation3 + $0xc0] sm:$0x1] %v4488
      %v4490 = vld [vmem:[#allocation3 + $0xcc] sm:$0x1]
      %v4491 = vsel %vm291, 0, %v4490
      %4492 = vst [vmem:[#allocation3 + $0xcc] sm:$0x1] %v4491
      %v4493 = vld [vmem:[#allocation3 + $0x8] sm:$0x1]
      %v4494 = vsel %vm347, 0, %v4493
      %4495 = vst [vmem:[#allocation3 + $0x8] sm:$0x1] %v4494
      %v4496 = vld [vmem:[#allocation3 + $0x14] sm:$0x1]
      %v4497 = vsel %vm347, 0, %v4496
      %4498 = vst [vmem:[#allocation3 + $0x14] sm:$0x1] %v4497
      %v4499 = vld [vmem:[#allocation3 + $0x20] sm:$0x1]
      %v4500 = vsel %vm347, 0, %v4499
      %4501 = vst [vmem:[#allocation3 + $0x20] sm:$0x1] %v4500
      %v4502 = vld [vmem:[#allocation3 + $0x2c] sm:$0x1]
      %v4503 = vsel %vm347, 0, %v4502
      %4504 = vst [vmem:[#allocation3 + $0x2c] sm:$0x1] %v4503
      %v4505 = vld [vmem:[#allocation3 + $0x38] sm:$0x1]
      %v4506 = vsel %vm347, 0, %v4505
      %4507 = vst [vmem:[#allocation3 + $0x38] sm:$0x1] %v4506
      %v4508 = vld [vmem:[#allocation3 + $0x44] sm:$0x1]
      %v4509 = vsel %vm347, 0, %v4508
      %4510 = vst [vmem:[#allocation3 + $0x44] sm:$0x1] %v4509
      %v4511 = vld [vmem:[#allocation3 + $0x50] sm:$0x1]
      %v4512 = vsel %vm347, 0, %v4511
      %4513 = vst [vmem:[#allocation3 + $0x50] sm:$0x1] %v4512
      %v4514 = vld [vmem:[#allocation3 + $0x5c] sm:$0x1]
      %v4515 = vsel %vm347, 0, %v4514
      %4516 = vst [vmem:[#allocation3 + $0x5c] sm:$0x1] %v4515
      %v4517 = vld [vmem:[#allocation3 + $0x68] sm:$0x1]
      %v4518 = vsel %vm347, 0, %v4517
      %4519 = vst [vmem:[#allocation3 + $0x68] sm:$0x1] %v4518
      %v4520 = vld [vmem:[#allocation3 + $0x74] sm:$0x1]
      %v4521 = vsel %vm347, 0, %v4520
      %4522 = vst [vmem:[#allocation3 + $0x74] sm:$0x1] %v4521
      %v4523 = vld [vmem:[#allocation3 + $0x80] sm:$0x1]
      %v4524 = vsel %vm347, 0, %v4523
      %4525 = vst [vmem:[#allocation3 + $0x80] sm:$0x1] %v4524
      %v4526 = vld [vmem:[#allocation3 + $0x8c] sm:$0x1]
      %v4527 = vsel %vm347, 0, %v4526
      %4528 = vst [vmem:[#allocation3 + $0x8c] sm:$0x1] %v4527
      %v4529 = vld [vmem:[#allocation3 + $0x98] sm:$0x1]
      %v4530 = vsel %vm347, 0, %v4529
      %4531 = vst [vmem:[#allocation3 + $0x98] sm:$0x1] %v4530
      %v4532 = vld [vmem:[#allocation3 + $0xa4] sm:$0x1]
      %v4533 = vsel %vm347, 0, %v4532
      %4534 = vst [vmem:[#allocation3 + $0xa4] sm:$0x1] %v4533
      %v4535 = vld [vmem:[#allocation3 + $0xb0] sm:$0x1]
      %v4536 = vsel %vm347, 0, %v4535
      %4537 = vst [vmem:[#allocation3 + $0xb0] sm:$0x1] %v4536
      %v4538 = vld [vmem:[#allocation3 + $0xbc] sm:$0x1]
      %v4539 = vsel %vm347, 0, %v4538
      %4540 = vst [vmem:[#allocation3 + $0xbc] sm:$0x1] %v4539
      %v4541 = vld [vmem:[#allocation3 + $0xc8] sm:$0x1]
      %v4542 = vsel %vm347, 0, %v4541
      %4543 = vst [vmem:[#allocation3 + $0xc8] sm:$0x1] %v4542
      %v4544 = vld [vmem:[#allocation3 + $0xd4] sm:$0x1]
      %v4545 = vsel %vm347, 0, %v4544
      %4546 = vst [vmem:[#allocation3 + $0xd4] sm:$0x1] %v4545
      %v4547 = vpack.c.bf16 %v4400, %v4400
      %v4548 = vpack.c.bf16 %v4401, %v4401
      %v4549 = vpack.c.bf16 %v4402, %v4402
      %v4550 = vpack.c.bf16 %v4403, %v4403
      %v4551 = vpack.c.bf16 %v4404, %v4404
      %v4552 = vpack.c.bf16 %v4405, %v4405
      %v4553 = vpack.c.bf16 %v4406, %v4406
      %v4554 = vpack.c.bf16 %v4407, %v4407
      %v4555 = vpack.c.bf16 %v4408, %v4408
      %v4556 = vpack.c.bf16 %v4409, %v4409
      %v4557 = vpack.c.bf16 %v4410, %v4410
      %v4558 = vpack.c.bf16 %v4411, %v4411
      %v4559 = vpack.c.bf16 %v4412, %v4412
      %v4560 = vpack.c.bf16 %v4413, %v4413
      %v4561 = vpack.c.bf16 %v4414, %v4414
      %v4562 = vpack.c.bf16 %v4415, %v4415
      %v4563 = vpack.c.bf16 %v4416, %v4416
      %v4564 = vpack.c.bf16 %v4417, %v4417
      %v4565 = vpack.c.bf16 %v4418, %v4418
      %v4566 = vpack.c.bf16 %v4419, %v4419
      %v4567 = vpack.c.bf16 %v4420, %v4420
      %v4568 = vpack.c.bf16 %v4421, %v4421
      %v4569 = vpack.c.bf16 %v4422, %v4422
      %v4570 = vpack.c.bf16 %v4423, %v4423
      %v4571 = vpack.c.bf16 %v4424, %v4424
      %v4572 = vpack.c.bf16 %v4425, %v4425
      %v4573 = vpack.c.bf16 %v4426, %v4426
      %v4574 = vpack.c.bf16 %v4427, %v4427
      %v4575 = vpack.c.bf16 %v4428, %v4428
      %v4576 = vpack.c.bf16 %v4429, %v4429
      %v4577 = vpack.c.bf16 %v4430, %v4430
      %v4578 = vpack.c.bf16 %v4431, %v4431
      %v4580 = vshrl.u32 %v4547, 16
      %v4582 = vrot.slane %v4580, 7
      %v4583 = vshll.u32 %v4547, 16
      %v4585 = vor.u32 %v4582, %v4583
      %v4586 = vrot.slane %v4582, 4
      %v4588 = vshrl.u32 %v4548, 16
      %v4590 = vrot.slane %v4588, 7
      %v4591 = vshll.u32 %v4548, 16
      %v4593 = vor.u32 %v4590, %v4591
      %v4594 = vsel %vm467, %v4586, %v4593
      %v4595 = vrot.slane %v4590, 4
      %v4597 = vshrl.u32 %v4549, 16
      %v4599 = vrot.slane %v4597, 7
      %v4600 = vshll.u32 %v4549, 16
      %v4602 = vor.u32 %v4599, %v4600
      %v4603 = vrot.slane %v4599, 4
      %v4605 = vshrl.u32 %v4550, 16
      %v4607 = vrot.slane %v4605, 7
      %v4608 = vshll.u32 %v4550, 16
      %v4610 = vor.u32 %v4607, %v4608
      %v4611 = vsel %vm467, %v4603, %v4610
      %v4612 = vrot.slane %v4607, 4
      %v4614 = vshrl.u32 %v4551, 16
      %v4616 = vrot.slane %v4614, 7
      %v4617 = vshll.u32 %v4551, 16
      %v4619 = vor.u32 %v4616, %v4617
      %v4620 = vrot.slane %v4616, 4
      %v4622 = vshrl.u32 %v4552, 16
      %v4624 = vrot.slane %v4622, 7
      %v4625 = vshll.u32 %v4552, 16
      %v4627 = vor.u32 %v4624, %v4625
      %v4628 = vsel %vm467, %v4620, %v4627
      %v4629 = vrot.slane %v4624, 4
      %v4631 = vshrl.u32 %v4553, 16
      %v4633 = vrot.slane %v4631, 7
      %v4634 = vshll.u32 %v4553, 16
      %v4636 = vor.u32 %v4633, %v4634
      %v4637 = vrot.slane %v4633, 4
      %v4639 = vshrl.u32 %v4554, 16
      %v4641 = vrot.slane %v4639, 7
      %v4642 = vshll.u32 %v4554, 16
      %v4644 = vor.u32 %v4641, %v4642
      %v4645 = vsel %vm467, %v4637, %v4644
      %v4646 = vrot.slane %v4641, 4
      %v4648 = vshrl.u32 %v4555, 16
      %v4650 = vrot.slane %v4648, 7
      %v4651 = vshll.u32 %v4555, 16
      %v4653 = vor.u32 %v4650, %v4651
      %v4654 = vrot.slane %v4650, 4
      %v4656 = vshrl.u32 %v4556, 16
      %v4658 = vrot.slane %v4656, 7
      %v4659 = vshll.u32 %v4556, 16
      %v4661 = vor.u32 %v4658, %v4659
      %v4662 = vsel %vm467, %v4654, %v4661
      %v4663 = vrot.slane %v4658, 4
      %v4665 = vshrl.u32 %v4557, 16
      %v4667 = vrot.slane %v4665, 7
      %v4668 = vshll.u32 %v4557, 16
      %v4670 = vor.u32 %v4667, %v4668
      %v4671 = vrot.slane %v4667, 4
      %v4673 = vshrl.u32 %v4558, 16
      %v4675 = vrot.slane %v4673, 7
      %v4676 = vshll.u32 %v4558, 16
      %v4678 = vor.u32 %v4675, %v4676
      %v4679 = vsel %vm467, %v4671, %v4678
      %v4680 = vrot.slane %v4675, 4
      %v4682 = vshrl.u32 %v4559, 16
      %v4684 = vrot.slane %v4682, 7
      %v4685 = vshll.u32 %v4559, 16
      %v4687 = vor.u32 %v4684, %v4685
      %v4688 = vrot.slane %v4684, 4
      %v4690 = vshrl.u32 %v4560, 16
      %v4692 = vrot.slane %v4690, 7
      %v4693 = vshll.u32 %v4560, 16
      %v4695 = vor.u32 %v4692, %v4693
      %v4696 = vsel %vm467, %v4688, %v4695
      %v4697 = vrot.slane %v4692, 4
      %v4699 = vshrl.u32 %v4561, 16
      %v4701 = vrot.slane %v4699, 7
      %v4702 = vshll.u32 %v4561, 16
      %v4704 = vor.u32 %v4701, %v4702
      %v4705 = vrot.slane %v4701, 4
      %v4707 = vshrl.u32 %v4562, 16
      %v4709 = vrot.slane %v4707, 7
      %v4710 = vshll.u32 %v4562, 16
      %v4712 = vor.u32 %v4709, %v4710
      %v4713 = vsel %vm467, %v4705, %v4712
      %v4714 = vrot.slane %v4709, 4
      %v4716 = vshrl.u32 %v4563, 16
      %v4718 = vrot.slane %v4716, 7
      %v4719 = vshll.u32 %v4563, 16
      %v4721 = vor.u32 %v4718, %v4719
      %v4722 = vrot.slane %v4718, 4
      %v4724 = vshrl.u32 %v4564, 16
      %v4726 = vrot.slane %v4724, 7
      %v4727 = vshll.u32 %v4564, 16
      %v4729 = vor.u32 %v4726, %v4727
      %v4730 = vsel %vm467, %v4722, %v4729
      %v4731 = vrot.slane %v4726, 4
      %v4733 = vshrl.u32 %v4565, 16
      %v4735 = vrot.slane %v4733, 7
      %v4736 = vshll.u32 %v4565, 16
      %v4738 = vor.u32 %v4735, %v4736
      %v4739 = vrot.slane %v4735, 4
      %v4741 = vshrl.u32 %v4566, 16
      %v4743 = vrot.slane %v4741, 7
      %v4744 = vshll.u32 %v4566, 16
      %v4746 = vor.u32 %v4743, %v4744
      %v4747 = vsel %vm467, %v4739, %v4746
      %v4748 = vrot.slane %v4743, 4
      %v4750 = vshrl.u32 %v4567, 16
      %v4752 = vrot.slane %v4750, 7
      %v4753 = vshll.u32 %v4567, 16
      %v4755 = vor.u32 %v4752, %v4753
      %v4756 = vrot.slane %v4752, 4
      %v4758 = vshrl.u32 %v4568, 16
      %v4760 = vrot.slane %v4758, 7
      %v4761 = vshll.u32 %v4568, 16
      %v4763 = vor.u32 %v4760, %v4761
      %v4764 = vsel %vm467, %v4756, %v4763
      %v4765 = vrot.slane %v4760, 4
      %v4767 = vshrl.u32 %v4569, 16
      %v4769 = vrot.slane %v4767, 7
      %v4770 = vshll.u32 %v4569, 16
      %v4772 = vor.u32 %v4769, %v4770
      %v4773 = vrot.slane %v4769, 4
      %v4775 = vshrl.u32 %v4570, 16
      %v4777 = vrot.slane %v4775, 7
      %v4778 = vshll.u32 %v4570, 16
      %v4780 = vor.u32 %v4777, %v4778
      %v4781 = vsel %vm467, %v4773, %v4780
      %v4782 = vrot.slane %v4777, 4
      %v4784 = vshrl.u32 %v4571, 16
      %v4786 = vrot.slane %v4784, 7
      %v4787 = vshll.u32 %v4571, 16
      %v4789 = vor.u32 %v4786, %v4787
      %v4790 = vrot.slane %v4786, 4
      %v4792 = vshrl.u32 %v4572, 16
      %v4794 = vrot.slane %v4792, 7
      %v4795 = vshll.u32 %v4572, 16
      %v4797 = vor.u32 %v4794, %v4795
      %v4798 = vsel %vm467, %v4790, %v4797
      %v4799 = vrot.slane %v4794, 4
      %v4801 = vshrl.u32 %v4573, 16
      %v4803 = vrot.slane %v4801, 7
      %v4804 = vshll.u32 %v4573, 16
      %v4806 = vor.u32 %v4803, %v4804
      %v4807 = vrot.slane %v4803, 4
      %v4809 = vshrl.u32 %v4574, 16
      %v4811 = vrot.slane %v4809, 7
      %v4812 = vshll.u32 %v4574, 16
      %v4814 = vor.u32 %v4811, %v4812
      %v4815 = vsel %vm467, %v4807, %v4814
      %v4816 = vrot.slane %v4811, 4
      %v4818 = vshrl.u32 %v4575, 16
      %v4820 = vrot.slane %v4818, 7
      %v4821 = vshll.u32 %v4575, 16
      %v4823 = vor.u32 %v4820, %v4821
      %v4824 = vrot.slane %v4820, 4
      %v4826 = vshrl.u32 %v4576, 16
      %v4828 = vrot.slane %v4826, 7
      %v4829 = vshll.u32 %v4576, 16
      %v4831 = vor.u32 %v4828, %v4829
      %v4832 = vsel %vm467, %v4824, %v4831
      %v4833 = vrot.slane %v4828, 4
      %v4835 = vshrl.u32 %v4577, 16
      %v4837 = vrot.slane %v4835, 7
      %v4838 = vshll.u32 %v4577, 16
      %v4840 = vor.u32 %v4837, %v4838
      %v4841 = vrot.slane %v4837, 4
      %v4843 = vshrl.u32 %v4578, 16
      %v4845 = vrot.slane %v4843, 7
      %v4846 = vshll.u32 %v4578, 16
      %v4848 = vor.u32 %v4845, %v4846
      %v4849 = vsel %vm467, %v4841, %v4848
      %v4850 = vrot.slane %v4845, 4
      %s4899 = scalar_lea.vmem [#allocation3], 12
      %v4900 = vld [vmem:[%s4899] sm:$0xf]
      %v4901 = vsel %vm790, %v4585, %v4900
      %4902 = vst [vmem:[%s4899] sm:$0xf] %v4901
      %4903 = vst.msk [vmem:[%s4899 + $0x4] sm:$0xf] %vm280, %v4594
      %v4904 = vld [vmem:[%s4899 + $0x8] sm:$0x1]
      %v4905 = vsel %vm291, %v4595, %v4904
      %4906 = vst [vmem:[%s4899 + $0x8] sm:$0x1] %v4905
      %v4907 = vld [vmem:[%s4899 + $0xc] sm:$0xf]
      %v4908 = vsel %vm790, %v4602, %v4907
      %4909 = vst [vmem:[%s4899 + $0xc] sm:$0xf] %v4908
      %4910 = vst.msk [vmem:[%s4899 + $0x10] sm:$0xf] %vm280, %v4611
      %v4911 = vld [vmem:[%s4899 + $0x14] sm:$0x1]
      %v4912 = vsel %vm291, %v4612, %v4911
      %4913 = vst [vmem:[%s4899 + $0x14] sm:$0x1] %v4912
      %v4914 = vld [vmem:[%s4899 + $0x18] sm:$0xf]
      %v4915 = vsel %vm790, %v4619, %v4914
      %4916 = vst [vmem:[%s4899 + $0x18] sm:$0xf] %v4915
      %4917 = vst.msk [vmem:[%s4899 + $0x1c] sm:$0xf] %vm280, %v4628
      %v4918 = vld [vmem:[%s4899 + $0x20] sm:$0x1]
      %v4919 = vsel %vm291, %v4629, %v4918
      %4920 = vst [vmem:[%s4899 + $0x20] sm:$0x1] %v4919
      %v4921 = vld [vmem:[%s4899 + $0x24] sm:$0xf]
      %v4922 = vsel %vm790, %v4636, %v4921
      %4923 = vst [vmem:[%s4899 + $0x24] sm:$0xf] %v4922
      %4924 = vst.msk [vmem:[%s4899 + $0x28] sm:$0xf] %vm280, %v4645
      %v4925 = vld [vmem:[%s4899 + $0x2c] sm:$0x1]
      %v4926 = vsel %vm291, %v4646, %v4925
      %4927 = vst [vmem:[%s4899 + $0x2c] sm:$0x1] %v4926
      %v4928 = vld [vmem:[%s4899 + $0x30] sm:$0xf]
      %v4929 = vsel %vm790, %v4653, %v4928
      %4930 = vst [vmem:[%s4899 + $0x30] sm:$0xf] %v4929
      %4931 = vst.msk [vmem:[%s4899 + $0x34] sm:$0xf] %vm280, %v4662
      %v4932 = vld [vmem:[%s4899 + $0x38] sm:$0x1]
      %v4933 = vsel %vm291, %v4663, %v4932
      %4934 = vst [vmem:[%s4899 + $0x38] sm:$0x1] %v4933
      %v4935 = vld [vmem:[%s4899 + $0x3c] sm:$0xf]
      %v4936 = vsel %vm790, %v4670, %v4935
      %4937 = vst [vmem:[%s4899 + $0x3c] sm:$0xf] %v4936
      %4938 = vst.msk [vmem:[%s4899 + $0x40] sm:$0xf] %vm280, %v4679
      %v4939 = vld [vmem:[%s4899 + $0x44] sm:$0x1]
      %v4940 = vsel %vm291, %v4680, %v4939
      %4941 = vst [vmem:[%s4899 + $0x44] sm:$0x1] %v4940
      %v4942 = vld [vmem:[%s4899 + $0x48] sm:$0xf]
      %v4943 = vsel %vm790, %v4687, %v4942
      %4944 = vst [vmem:[%s4899 + $0x48] sm:$0xf] %v4943
      %4945 = vst.msk [vmem:[%s4899 + $0x4c] sm:$0xf] %vm280, %v4696
      %v4946 = vld [vmem:[%s4899 + $0x50] sm:$0x1]
      %v4947 = vsel %vm291, %v4697, %v4946
      %4948 = vst [vmem:[%s4899 + $0x50] sm:$0x1] %v4947
      %v4949 = vld [vmem:[%s4899 + $0x54] sm:$0xf]
      %v4950 = vsel %vm790, %v4704, %v4949
      %4951 = vst [vmem:[%s4899 + $0x54] sm:$0xf] %v4950
      %4952 = vst.msk [vmem:[%s4899 + $0x58] sm:$0xf] %vm280, %v4713
      %v4953 = vld [vmem:[%s4899 + $0x5c] sm:$0x1]
      %v4954 = vsel %vm291, %v4714, %v4953
      %4955 = vst [vmem:[%s4899 + $0x5c] sm:$0x1] %v4954
      %v4956 = vld [vmem:[%s4899 + $0x60] sm:$0xf]
      %v4957 = vsel %vm790, %v4721, %v4956
      %4958 = vst [vmem:[%s4899 + $0x60] sm:$0xf] %v4957
      %4959 = vst.msk [vmem:[%s4899 + $0x64] sm:$0xf] %vm280, %v4730
      %v4960 = vld [vmem:[%s4899 + $0x68] sm:$0x1]
      %v4961 = vsel %vm291, %v4731, %v4960
      %4962 = vst [vmem:[%s4899 + $0x68] sm:$0x1] %v4961
      %v4963 = vld [vmem:[%s4899 + $0x6c] sm:$0xf]
      %v4964 = vsel %vm790, %v4738, %v4963
      %4965 = vst [vmem:[%s4899 + $0x6c] sm:$0xf] %v4964
      %4966 = vst.msk [vmem:[%s4899 + $0x70] sm:$0xf] %vm280, %v4747
      %v4967 = vld [vmem:[%s4899 + $0x74] sm:$0x1]
      %v4968 = vsel %vm291, %v4748, %v4967
      %4969 = vst [vmem:[%s4899 + $0x74] sm:$0x1] %v4968
      %v4970 = vld [vmem:[%s4899 + $0x78] sm:$0xf]
      %v4971 = vsel %vm790, %v4755, %v4970
      %4972 = vst [vmem:[%s4899 + $0x78] sm:$0xf] %v4971
      %4973 = vst.msk [vmem:[%s4899 + $0x7c] sm:$0xf] %vm280, %v4764
      %v4974 = vld [vmem:[%s4899 + $0x80] sm:$0x1]
      %v4975 = vsel %vm291, %v4765, %v4974
      %4976 = vst [vmem:[%s4899 + $0x80] sm:$0x1] %v4975
      %v4977 = vld [vmem:[%s4899 + $0x84] sm:$0xf]
      %v4978 = vsel %vm790, %v4772, %v4977
      %4979 = vst [vmem:[%s4899 + $0x84] sm:$0xf] %v4978
      %4980 = vst.msk [vmem:[%s4899 + $0x88] sm:$0xf] %vm280, %v4781
      %v4981 = vld [vmem:[%s4899 + $0x8c] sm:$0x1]
      %v4982 = vsel %vm291, %v4782, %v4981
      %4983 = vst [vmem:[%s4899 + $0x8c] sm:$0x1] %v4982
      %v4984 = vld [vmem:[%s4899 + $0x90] sm:$0xf]
      %v4985 = vsel %vm790, %v4789, %v4984
      %4986 = vst [vmem:[%s4899 + $0x90] sm:$0xf] %v4985
      %4987 = vst.msk [vmem:[%s4899 + $0x94] sm:$0xf] %vm280, %v4798
      %v4988 = vld [vmem:[%s4899 + $0x98] sm:$0x1]
      %v4989 = vsel %vm291, %v4799, %v4988
      %4990 = vst [vmem:[%s4899 + $0x98] sm:$0x1] %v4989
      %v4991 = vld [vmem:[%s4899 + $0x9c] sm:$0xf]
      %v4992 = vsel %vm790, %v4806, %v4991
      %4993 = vst [vmem:[%s4899 + $0x9c] sm:$0xf] %v4992
      %4994 = vst.msk [vmem:[%s4899 + $0xa0] sm:$0xf] %vm280, %v4815
      %v4995 = vld [vmem:[%s4899 + $0xa4] sm:$0x1]
      %v4996 = vsel %vm291, %v4816, %v4995
      %4997 = vst [vmem:[%s4899 + $0xa4] sm:$0x1] %v4996
      %v4998 = vld [vmem:[%s4899 + $0xa8] sm:$0xf]
      %v4999 = vsel %vm790, %v4823, %v4998
      %5000 = vst [vmem:[%s4899 + $0xa8] sm:$0xf] %v4999
      %5001 = vst.msk [vmem:[%s4899 + $0xac] sm:$0xf] %vm280, %v4832
      %v5002 = vld [vmem:[%s4899 + $0xb0] sm:$0x1]
      %v5003 = vsel %vm291, %v4833, %v5002
      %5004 = vst [vmem:[%s4899 + $0xb0] sm:$0x1] %v5003
      %v5005 = vld [vmem:[%s4899 + $0xb4] sm:$0xf]
      %v5006 = vsel %vm790, %v4840, %v5005
      %5007 = vst [vmem:[%s4899 + $0xb4] sm:$0xf] %v5006
      %5008 = vst.msk [vmem:[%s4899 + $0xb8] sm:$0xf] %vm280, %v4849
      %v5009 = vld [vmem:[%s4899 + $0xbc] sm:$0x1]
      %v5010 = vsel %vm291, %v4850, %v5009
      %5011 = vst [vmem:[%s4899 + $0xbc] sm:$0x1] %v5010
      %v5012 = vld [vmem:[#allocation3] sm:$0xf]
      %v5013 = vld [vmem:[#allocation3 + $0x4] sm:$0xf]
      %v5014 = vld [vmem:[#allocation3 + $0xc] sm:$0xf]
      %v5015 = vld [vmem:[#allocation3 + $0x10] sm:$0xf]
      %v5016 = vld [vmem:[#allocation3 + $0x18] sm:$0xf]
      %v5017 = vld [vmem:[#allocation3 + $0x1c] sm:$0xf]
      %v5018 = vld [vmem:[#allocation3 + $0x24] sm:$0xf]
      %v5019 = vld [vmem:[#allocation3 + $0x28] sm:$0xf]
      %v5020 = vld [vmem:[#allocation3 + $0x30] sm:$0xf]
      %v5021 = vld [vmem:[#allocation3 + $0x34] sm:$0xf]
      %v5022 = vld [vmem:[#allocation3 + $0x3c] sm:$0xf]
      %v5023 = vld [vmem:[#allocation3 + $0x40] sm:$0xf]
      %v5024 = vld [vmem:[#allocation3 + $0x48] sm:$0xf]
      %v5025 = vld [vmem:[#allocation3 + $0x4c] sm:$0xf]
      %v5026 = vld [vmem:[#allocation3 + $0x54] sm:$0xf]
      %v5027 = vld [vmem:[#allocation3 + $0x58] sm:$0xf]
      %v5028 = vld [vmem:[#allocation3 + $0x60] sm:$0xf]
      %v5029 = vld [vmem:[#allocation3 + $0x64] sm:$0xf]
      %v5030 = vld [vmem:[#allocation3 + $0x6c] sm:$0xf]
      %v5031 = vld [vmem:[#allocation3 + $0x70] sm:$0xf]
      %v5032 = vld [vmem:[#allocation3 + $0x78] sm:$0xf]
      %v5033 = vld [vmem:[#allocation3 + $0x7c] sm:$0xf]
      %v5034 = vld [vmem:[#allocation3 + $0x84] sm:$0xf]
      %v5035 = vld [vmem:[#allocation3 + $0x88] sm:$0xf]
      %v5036 = vld [vmem:[#allocation3 + $0x90] sm:$0xf]
      %v5037 = vld [vmem:[#allocation3 + $0x94] sm:$0xf]
      %v5038 = vld [vmem:[#allocation3 + $0x9c] sm:$0xf]
      %v5039 = vld [vmem:[#allocation3 + $0xa0] sm:$0xf]
      %v5040 = vld [vmem:[#allocation3 + $0xa8] sm:$0xf]
      %v5041 = vld [vmem:[#allocation3 + $0xac] sm:$0xf]
      %v5042 = vld [vmem:[#allocation3 + $0xb4] sm:$0xf]
      %v5043 = vld [vmem:[#allocation3 + $0xb8] sm:$0xf]
      %5044 = vst.msk [vmem:[#allocation4] sm:$0xf] %vm280, %v5012
      %5045 = vst.msk [vmem:[#allocation4 + $0x4] sm:$0xf] %vm280, %v5013
      %5046 = vst.msk [vmem:[#allocation4 + $0x8] sm:$0xf] %vm280, %v5014
      %5047 = vst.msk [vmem:[#allocation4 + $0xc] sm:$0xf] %vm280, %v5015
      %5048 = vst.msk [vmem:[#allocation4 + $0x10] sm:$0xf] %vm280, %v5016
      %5049 = vst.msk [vmem:[#allocation4 + $0x14] sm:$0xf] %vm280, %v5017
      %5050 = vst.msk [vmem:[#allocation4 + $0x18] sm:$0xf] %vm280, %v5018
      %5051 = vst.msk [vmem:[#allocation4 + $0x1c] sm:$0xf] %vm280, %v5019
      %5052 = vst.msk [vmem:[#allocation4 + $0x20] sm:$0xf] %vm280, %v5020
      %5053 = vst.msk [vmem:[#allocation4 + $0x24] sm:$0xf] %vm280, %v5021
      %5054 = vst.msk [vmem:[#allocation4 + $0x28] sm:$0xf] %vm280, %v5022
      %5055 = vst.msk [vmem:[#allocation4 + $0x2c] sm:$0xf] %vm280, %v5023
      %5056 = vst.msk [vmem:[#allocation4 + $0x30] sm:$0xf] %vm280, %v5024
      %5057 = vst.msk [vmem:[#allocation4 + $0x34] sm:$0xf] %vm280, %v5025
      %5058 = vst.msk [vmem:[#allocation4 + $0x38] sm:$0xf] %vm280, %v5026
      %5059 = vst.msk [vmem:[#allocation4 + $0x3c] sm:$0xf] %vm280, %v5027
      %5060 = vst.msk [vmem:[#allocation4 + $0x40] sm:$0xf] %vm280, %v5028
      %5061 = vst.msk [vmem:[#allocation4 + $0x44] sm:$0xf] %vm280, %v5029
      %5062 = vst.msk [vmem:[#allocation4 + $0x48] sm:$0xf] %vm280, %v5030
      %5063 = vst.msk [vmem:[#allocation4 + $0x4c] sm:$0xf] %vm280, %v5031
      %5064 = vst.msk [vmem:[#allocation4 + $0x50] sm:$0xf] %vm280, %v5032
      %5065 = vst.msk [vmem:[#allocation4 + $0x54] sm:$0xf] %vm280, %v5033
      %5066 = vst.msk [vmem:[#allocation4 + $0x58] sm:$0xf] %vm280, %v5034
      %5067 = vst.msk [vmem:[#allocation4 + $0x5c] sm:$0xf] %vm280, %v5035
      %5068 = vst.msk [vmem:[#allocation4 + $0x60] sm:$0xf] %vm280, %v5036
      %5069 = vst.msk [vmem:[#allocation4 + $0x64] sm:$0xf] %vm280, %v5037
      %5070 = vst.msk [vmem:[#allocation4 + $0x68] sm:$0xf] %vm280, %v5038
      %5071 = vst.msk [vmem:[#allocation4 + $0x6c] sm:$0xf] %vm280, %v5039
      %5072 = vst.msk [vmem:[#allocation4 + $0x70] sm:$0xf] %vm280, %v5040
      %5073 = vst.msk [vmem:[#allocation4 + $0x74] sm:$0xf] %vm280, %v5041
      %5074 = vst.msk [vmem:[#allocation4 + $0x78] sm:$0xf] %vm280, %v5042
      %5075 = vst.msk [vmem:[#allocation4 + $0x7c] sm:$0xf] %vm280, %v5043
      %v5076 = vld [vmem:[#allocation3] sm:$0xf]
      %v5077 = vld [vmem:[#allocation3 + $0x4] sm:$0xf]
      %v5078 = vld [vmem:[#allocation3 + $0x8] sm:$0x1]
      %v5079 = vld [vmem:[#allocation3 + $0xc] sm:$0xf]
      %v5080 = vld [vmem:[#allocation3 + $0x10] sm:$0xf]
      %v5081 = vld [vmem:[#allocation3 + $0x14] sm:$0x1]
      %v5082 = vld [vmem:[#allocation3 + $0x18] sm:$0xf]
      %v5083 = vld [vmem:[#allocation3 + $0x1c] sm:$0xf]
      %v5084 = vld [vmem:[#allocation3 + $0x20] sm:$0x1]
      %v5085 = vld [vmem:[#allocation3 + $0x24] sm:$0xf]
      %v5086 = vld [vmem:[#allocation3 + $0x28] sm:$0xf]
      %v5087 = vld [vmem:[#allocation3 + $0x2c] sm:$0x1]
      %v5088 = vld [vmem:[#allocation3 + $0x30] sm:$0xf]
      %v5089 = vld [vmem:[#allocation3 + $0x34] sm:$0xf]
      %v5090 = vld [vmem:[#allocation3 + $0x38] sm:$0x1]
      %v5091 = vld [vmem:[#allocation3 + $0x3c] sm:$0xf]
      %v5092 = vld [vmem:[#allocation3 + $0x40] sm:$0xf]
      %v5093 = vld [vmem:[#allocation3 + $0x44] sm:$0x1]
      %v5094 = vld [vmem:[#allocation3 + $0x48] sm:$0xf]
      %v5095 = vld [vmem:[#allocation3 + $0x4c] sm:$0xf]
      %v5096 = vld [vmem:[#allocation3 + $0x50] sm:$0x1]
      %v5097 = vld [vmem:[#allocation3 + $0x54] sm:$0xf]
      %v5098 = vld [vmem:[#allocation3 + $0x58] sm:$0xf]
      %v5099 = vld [vmem:[#allocation3 + $0x5c] sm:$0x1]
      %v5100 = vld [vmem:[#allocation3 + $0x60] sm:$0xf]
      %v5101 = vld [vmem:[#allocation3 + $0x64] sm:$0xf]
      %v5102 = vld [vmem:[#allocation3 + $0x68] sm:$0x1]
      %v5103 = vld [vmem:[#allocation3 + $0x6c] sm:$0xf]
      %v5104 = vld [vmem:[#allocation3 + $0x70] sm:$0xf]
      %v5105 = vld [vmem:[#allocation3 + $0x74] sm:$0x1]
      %v5106 = vld [vmem:[#allocation3 + $0x78] sm:$0xf]
      %v5107 = vld [vmem:[#allocation3 + $0x7c] sm:$0xf]
      %v5108 = vld [vmem:[#allocation3 + $0x80] sm:$0x1]
      %v5109 = vld [vmem:[#allocation3 + $0x84] sm:$0xf]
      %v5110 = vld [vmem:[#allocation3 + $0x88] sm:$0xf]
      %v5111 = vld [vmem:[#allocation3 + $0x8c] sm:$0x1]
      %v5112 = vld [vmem:[#allocation3 + $0x90] sm:$0xf]
      %v5113 = vld [vmem:[#allocation3 + $0x94] sm:$0xf]
      %v5114 = vld [vmem:[#allocation3 + $0x98] sm:$0x1]
      %v5115 = vld [vmem:[#allocation3 + $0x9c] sm:$0xf]
      %v5116 = vld [vmem:[#allocation3 + $0xa0] sm:$0xf]
      %v5117 = vld [vmem:[#allocation3 + $0xa4] sm:$0x1]
      %v5118 = vld [vmem:[#allocation3 + $0xa8] sm:$0xf]
      %v5119 = vld [vmem:[#allocation3 + $0xac] sm:$0xf]
      %v5120 = vld [vmem:[#allocation3 + $0xb0] sm:$0x1]
      %v5121 = vld [vmem:[#allocation3 + $0xb4] sm:$0xf]
      %v5122 = vld [vmem:[#allocation3 + $0xb8] sm:$0xf]
      %v5123 = vld [vmem:[#allocation3 + $0xbc] sm:$0x1]
      %v5125 = vshrl.u32 %v5076, 16
      %v5127 = vrot.slane %v5125, 4
      %v5128 = vshll.u32 %v5076, 16
      %v5130 = vrot.slane %v5128, 5
      %v5131 = vor.u32 %v5127, %v5130
      %v5132 = vrot.slane %v5131, 4
      %v5134 = vshll.u32 %v5077, 16
      %v5136 = vrot.slane %v5134, 5
      %v5137 = vsel %vm1017, %v5132, %v5136
      %v5138 = vshrl.u32 %v5077, 16
      %v5140 = vrot.slane %v5138, 4
      %v5141 = vor.u32 %v5140, %v5136
      %v5142 = vrot.slane %v5141, 4
      %v5144 = vshll.u32 %v5078, 16
      %v5146 = vrot.slane %v5144, 5
      %v5147 = vsel %vm1017, %v5142, %v5146
      %v5149 = vshrl.u32 %v5079, 16
      %v5151 = vrot.slane %v5149, 4
      %v5152 = vshll.u32 %v5079, 16
      %v5154 = vrot.slane %v5152, 5
      %v5155 = vor.u32 %v5151, %v5154
      %v5156 = vrot.slane %v5155, 4
      %v5158 = vshll.u32 %v5080, 16
      %v5160 = vrot.slane %v5158, 5
      %v5161 = vsel %vm1017, %v5156, %v5160
      %v5162 = vshrl.u32 %v5080, 16
      %v5164 = vrot.slane %v5162, 4
      %v5165 = vor.u32 %v5164, %v5160
      %v5166 = vrot.slane %v5165, 4
      %v5168 = vshll.u32 %v5081, 16
      %v5170 = vrot.slane %v5168, 5
      %v5171 = vsel %vm1017, %v5166, %v5170
      %v5173 = vshrl.u32 %v5082, 16
      %v5175 = vrot.slane %v5173, 4
      %v5176 = vshll.u32 %v5082, 16
      %v5178 = vrot.slane %v5176, 5
      %v5179 = vor.u32 %v5175, %v5178
      %v5180 = vrot.slane %v5179, 4
      %v5182 = vshll.u32 %v5083, 16
      %v5184 = vrot.slane %v5182, 5
      %v5185 = vsel %vm1017, %v5180, %v5184
      %v5186 = vshrl.u32 %v5083, 16
      %v5188 = vrot.slane %v5186, 4
      %v5189 = vor.u32 %v5188, %v5184
      %v5190 = vrot.slane %v5189, 4
      %v5192 = vshll.u32 %v5084, 16
      %v5194 = vrot.slane %v5192, 5
      %v5195 = vsel %vm1017, %v5190, %v5194
      %v5197 = vshrl.u32 %v5085, 16
      %v5199 = vrot.slane %v5197, 4
      %v5200 = vshll.u32 %v5085, 16
      %v5202 = vrot.slane %v5200, 5
      %v5203 = vor.u32 %v5199, %v5202
      %v5204 = vrot.slane %v5203, 4
      %v5206 = vshll.u32 %v5086, 16
      %v5208 = vrot.slane %v5206, 5
      %v5209 = vsel %vm1017, %v5204, %v5208
      %v5210 = vshrl.u32 %v5086, 16
      %v5212 = vrot.slane %v5210, 4
      %v5213 = vor.u32 %v5212, %v5208
      %v5214 = vrot.slane %v5213, 4
      %v5216 = vshll.u32 %v5087, 16
      %v5218 = vrot.slane %v5216, 5
      %v5219 = vsel %vm1017, %v5214, %v5218
      %v5221 = vshrl.u32 %v5088, 16
      %v5223 = vrot.slane %v5221, 4
      %v5224 = vshll.u32 %v5088, 16
      %v5226 = vrot.slane %v5224, 5
      %v5227 = vor.u32 %v5223, %v5226
      %v5228 = vrot.slane %v5227, 4
      %v5230 = vshll.u32 %v5089, 16
      %v5232 = vrot.slane %v5230, 5
      %v5233 = vsel %vm1017, %v5228, %v5232
      %v5234 = vshrl.u32 %v5089, 16
      %v5236 = vrot.slane %v5234, 4
      %v5237 = vor.u32 %v5236, %v5232
      %v5238 = vrot.slane %v5237, 4
      %v5240 = vshll.u32 %v5090, 16
      %v5242 = vrot.slane %v5240, 5
      %v5243 = vsel %vm1017, %v5238, %v5242
      %v5245 = vshrl.u32 %v5091, 16
      %v5247 = vrot.slane %v5245, 4
      %v5248 = vshll.u32 %v5091, 16
      %v5250 = vrot.slane %v5248, 5
      %v5251 = vor.u32 %v5247, %v5250
      %v5252 = vrot.slane %v5251, 4
      %v5254 = vshll.u32 %v5092, 16
      %v5256 = vrot.slane %v5254, 5
      %v5257 = vsel %vm1017, %v5252, %v5256
      %v5258 = vshrl.u32 %v5092, 16
      %v5260 = vrot.slane %v5258, 4
      %v5261 = vor.u32 %v5260, %v5256
      %v5262 = vrot.slane %v5261, 4
      %v5264 = vshll.u32 %v5093, 16
      %v5266 = vrot.slane %v5264, 5
      %v5267 = vsel %vm1017, %v5262, %v5266
      %v5269 = vshrl.u32 %v5094, 16
      %v5271 = vrot.slane %v5269, 4
      %v5272 = vshll.u32 %v5094, 16
      %v5274 = vrot.slane %v5272, 5
      %v5275 = vor.u32 %v5271, %v5274
      %v5276 = vrot.slane %v5275, 4
      %v5278 = vshll.u32 %v5095, 16
      %v5280 = vrot.slane %v5278, 5
      %v5281 = vsel %vm1017, %v5276, %v5280
      %v5282 = vshrl.u32 %v5095, 16
      %v5284 = vrot.slane %v5282, 4
      %v5285 = vor.u32 %v5284, %v5280
      %v5286 = vrot.slane %v5285, 4
      %v5288 = vshll.u32 %v5096, 16
      %v5290 = vrot.slane %v5288, 5
      %v5291 = vsel %vm1017, %v5286, %v5290
      %v5293 = vshrl.u32 %v5097, 16
      %v5295 = vrot.slane %v5293, 4
      %v5296 = vshll.u32 %v5097, 16
      %v5298 = vrot.slane %v5296, 5
      %v5299 = vor.u32 %v5295, %v5298
      %v5300 = vrot.slane %v5299, 4
      %v5302 = vshll.u32 %v5098, 16
      %v5304 = vrot.slane %v5302, 5
      %v5305 = vsel %vm1017, %v5300, %v5304
      %v5306 = vshrl.u32 %v5098, 16
      %v5308 = vrot.slane %v5306, 4
      %v5309 = vor.u32 %v5308, %v5304
      %v5310 = vrot.slane %v5309, 4
      %v5312 = vshll.u32 %v5099, 16
      %v5314 = vrot.slane %v5312, 5
      %v5315 = vsel %vm1017, %v5310, %v5314
      %v5317 = vshrl.u32 %v5100, 16
      %v5319 = vrot.slane %v5317, 4
      %v5320 = vshll.u32 %v5100, 16
      %v5322 = vrot.slane %v5320, 5
      %v5323 = vor.u32 %v5319, %v5322
      %v5324 = vrot.slane %v5323, 4
      %v5326 = vshll.u32 %v5101, 16
      %v5328 = vrot.slane %v5326, 5
      %v5329 = vsel %vm1017, %v5324, %v5328
      %v5330 = vshrl.u32 %v5101, 16
      %v5332 = vrot.slane %v5330, 4
      %v5333 = vor.u32 %v5332, %v5328
      %v5334 = vrot.slane %v5333, 4
      %v5336 = vshll.u32 %v5102, 16
      %v5338 = vrot.slane %v5336, 5
      %v5339 = vsel %vm1017, %v5334, %v5338
      %v5341 = vshrl.u32 %v5103, 16
      %v5343 = vrot.slane %v5341, 4
      %v5344 = vshll.u32 %v5103, 16
      %v5346 = vrot.slane %v5344, 5
      %v5347 = vor.u32 %v5343, %v5346
      %v5348 = vrot.slane %v5347, 4
      %v5350 = vshll.u32 %v5104, 16
      %v5352 = vrot.slane %v5350, 5
      %v5353 = vsel %vm1017, %v5348, %v5352
      %v5354 = vshrl.u32 %v5104, 16
      %v5356 = vrot.slane %v5354, 4
      %v5357 = vor.u32 %v5356, %v5352
      %v5358 = vrot.slane %v5357, 4
      %v5360 = vshll.u32 %v5105, 16
      %v5362 = vrot.slane %v5360, 5
      %v5363 = vsel %vm1017, %v5358, %v5362
      %v5365 = vshrl.u32 %v5106, 16
      %v5367 = vrot.slane %v5365, 4
      %v5368 = vshll.u32 %v5106, 16
      %v5370 = vrot.slane %v5368, 5
      %v5371 = vor.u32 %v5367, %v5370
      %v5372 = vrot.slane %v5371, 4
      %v5374 = vshll.u32 %v5107, 16
      %v5376 = vrot.slane %v5374, 5
      %v5377 = vsel %vm1017, %v5372, %v5376
      %v5378 = vshrl.u32 %v5107, 16
      %v5380 = vrot.slane %v5378, 4
      %v5381 = vor.u32 %v5380, %v5376
      %v5382 = vrot.slane %v5381, 4
      %v5384 = vshll.u32 %v5108, 16
      %v5386 = vrot.slane %v5384, 5
      %v5387 = vsel %vm1017, %v5382, %v5386
      %v5389 = vshrl.u32 %v5109, 16
      %v5391 = vrot.slane %v5389, 4
      %v5392 = vshll.u32 %v5109, 16
      %v5394 = vrot.slane %v5392, 5
      %v5395 = vor.u32 %v5391, %v5394
      %v5396 = vrot.slane %v5395, 4
      %v5398 = vshll.u32 %v5110, 16
      %v5400 = vrot.slane %v5398, 5
      %v5401 = vsel %vm1017, %v5396, %v5400
      %v5402 = vshrl.u32 %v5110, 16
      %v5404 = vrot.slane %v5402, 4
      %v5405 = vor.u32 %v5404, %v5400
      %v5406 = vrot.slane %v5405, 4
      %v5408 = vshll.u32 %v5111, 16
      %v5410 = vrot.slane %v5408, 5
      %v5411 = vsel %vm1017, %v5406, %v5410
      %v5413 = vshrl.u32 %v5112, 16
      %v5415 = vrot.slane %v5413, 4
      %v5416 = vshll.u32 %v5112, 16
      %v5418 = vrot.slane %v5416, 5
      %v5419 = vor.u32 %v5415, %v5418
      %v5420 = vrot.slane %v5419, 4
      %v5422 = vshll.u32 %v5113, 16
      %v5424 = vrot.slane %v5422, 5
      %v5425 = vsel %vm1017, %v5420, %v5424
      %v5426 = vshrl.u32 %v5113, 16
      %v5428 = vrot.slane %v5426, 4
      %v5429 = vor.u32 %v5428, %v5424
      %v5430 = vrot.slane %v5429, 4
      %v5432 = vshll.u32 %v5114, 16
      %v5434 = vrot.slane %v5432, 5
      %v5435 = vsel %vm1017, %v5430, %v5434
      %v5437 = vshrl.u32 %v5115, 16
      %v5439 = vrot.slane %v5437, 4
      %v5440 = vshll.u32 %v5115, 16
      %v5442 = vrot.slane %v5440, 5
      %v5443 = vor.u32 %v5439, %v5442
      %v5444 = vrot.slane %v5443, 4
      %v5446 = vshll.u32 %v5116, 16
      %v5448 = vrot.slane %v5446, 5
      %v5449 = vsel %vm1017, %v5444, %v5448
      %v5450 = vshrl.u32 %v5116, 16
      %v5452 = vrot.slane %v5450, 4
      %v5453 = vor.u32 %v5452, %v5448
      %v5454 = vrot.slane %v5453, 4
      %v5456 = vshll.u32 %v5117, 16
      %v5458 = vrot.slane %v5456, 5
      %v5459 = vsel %vm1017, %v5454, %v5458
      %v5461 = vshrl.u32 %v5118, 16
      %v5463 = vrot.slane %v5461, 4
      %v5464 = vshll.u32 %v5118, 16
      %v5466 = vrot.slane %v5464, 5
      %v5467 = vor.u32 %v5463, %v5466
      %v5468 = vrot.slane %v5467, 4
      %v5470 = vshll.u32 %v5119, 16
      %v5472 = vrot.slane %v5470, 5
      %v5473 = vsel %vm1017, %v5468, %v5472
      %v5474 = vshrl.u32 %v5119, 16
      %v5476 = vrot.slane %v5474, 4
      %v5477 = vor.u32 %v5476, %v5472
      %v5478 = vrot.slane %v5477, 4
      %v5480 = vshll.u32 %v5120, 16
      %v5482 = vrot.slane %v5480, 5
      %v5483 = vsel %vm1017, %v5478, %v5482
      %v5485 = vshrl.u32 %v5121, 16
      %v5487 = vrot.slane %v5485, 4
      %v5488 = vshll.u32 %v5121, 16
      %v5490 = vrot.slane %v5488, 5
      %v5491 = vor.u32 %v5487, %v5490
      %v5492 = vrot.slane %v5491, 4
      %v5494 = vshll.u32 %v5122, 16
      %v5496 = vrot.slane %v5494, 5
      %v5497 = vsel %vm1017, %v5492, %v5496
      %v5498 = vshrl.u32 %v5122, 16
      %v5500 = vrot.slane %v5498, 4
      %v5501 = vor.u32 %v5500, %v5496
      %v5502 = vrot.slane %v5501, 4
      %v5504 = vshll.u32 %v5123, 16
      %v5506 = vrot.slane %v5504, 5
      %v5507 = vsel %vm1017, %v5502, %v5506
      %5508 = vrot.lane.b32.xlu0 %v5137, 4
      %v5509 = vpop.permute.xlu0 %5508
      %5510 = vrot.lane.b32.xlu0 %v5147, 4
      %v5511 = vpop.permute.xlu0 %5510
      %5512 = vrot.lane.b32.xlu0 %v5161, 4
      %v5513 = vpop.permute.xlu0 %5512
      %5514 = vrot.lane.b32.xlu0 %v5171, 4
      %v5515 = vpop.permute.xlu0 %5514
      %5516 = vrot.lane.b32.xlu0 %v5185, 4
      %v5517 = vpop.permute.xlu0 %5516
      %5518 = vrot.lane.b32.xlu0 %v5195, 4
      %v5519 = vpop.permute.xlu0 %5518
      %5520 = vrot.lane.b32.xlu0 %v5209, 4
      %v5521 = vpop.permute.xlu0 %5520
      %5522 = vrot.lane.b32.xlu0 %v5219, 4
      %v5523 = vpop.permute.xlu0 %5522
      %5524 = vrot.lane.b32.xlu0 %v5233, 4
      %v5525 = vpop.permute.xlu0 %5524
      %5526 = vrot.lane.b32.xlu0 %v5243, 4
      %v5527 = vpop.permute.xlu0 %5526
      %5528 = vrot.lane.b32.xlu0 %v5257, 4
      %v5529 = vpop.permute.xlu0 %5528
      %5530 = vrot.lane.b32.xlu0 %v5267, 4
      %v5531 = vpop.permute.xlu0 %5530
      %5532 = vrot.lane.b32.xlu0 %v5281, 4
      %v5533 = vpop.permute.xlu0 %5532
      %5534 = vrot.lane.b32.xlu0 %v5291, 4
      %v5535 = vpop.permute.xlu0 %5534
      %5536 = vrot.lane.b32.xlu0 %v5305, 4
      %v5537 = vpop.permute.xlu0 %5536
      %5538 = vrot.lane.b32.xlu0 %v5315, 4
      %v5539 = vpop.permute.xlu0 %5538
      %5540 = vrot.lane.b32.xlu0 %v5329, 4
      %v5541 = vpop.permute.xlu0 %5540
      %5542 = vrot.lane.b32.xlu0 %v5339, 4
      %v5543 = vpop.permute.xlu0 %5542
      %5544 = vrot.lane.b32.xlu0 %v5353, 4
      %v5545 = vpop.permute.xlu0 %5544
      %5546 = vrot.lane.b32.xlu0 %v5363, 4
      %v5547 = vpop.permute.xlu0 %5546
      %5548 = vrot.lane.b32.xlu0 %v5377, 4
      %v5549 = vpop.permute.xlu0 %5548
      %5550 = vrot.lane.b32.xlu0 %v5387, 4
      %v5551 = vpop.permute.xlu0 %5550
      %5552 = vrot.lane.b32.xlu0 %v5401, 4
      %v5553 = vpop.permute.xlu0 %5552
      %5554 = vrot.lane.b32.xlu0 %v5411, 4
      %v5555 = vpop.permute.xlu0 %5554
      %5556 = vrot.lane.b32.xlu0 %v5425, 4
      %v5557 = vpop.permute.xlu0 %5556
      %5558 = vrot.lane.b32.xlu0 %v5435, 4
      %v5559 = vpop.permute.xlu0 %5558
      %5560 = vrot.lane.b32.xlu0 %v5449, 4
      %v5561 = vpop.permute.xlu0 %5560
      %5562 = vrot.lane.b32.xlu0 %v5459, 4
      %v5563 = vpop.permute.xlu0 %5562
      %5564 = vrot.lane.b32.xlu0 %v5473, 4
      %v5565 = vpop.permute.xlu0 %5564
      %5566 = vrot.lane.b32.xlu0 %v5483, 4
      %v5567 = vpop.permute.xlu0 %5566
      %5568 = vrot.lane.b32.xlu0 %v5497, 4
      %v5569 = vpop.permute.xlu0 %5568
      %5570 = vrot.lane.b32.xlu0 %v5507, 4
      %v5571 = vpop.permute.xlu0 %5570
      %5604 = vst.msk [vmem:[#allocation4] sm:$0xf] %vm1498, %v5509
      %5605 = vst.msk [vmem:[#allocation4 + $0x4] sm:$0xf] %vm1498, %v5511
      %5606 = vst.msk [vmem:[#allocation4 + $0x8] sm:$0xf] %vm1498, %v5513
      %5607 = vst.msk [vmem:[#allocation4 + $0xc] sm:$0xf] %vm1498, %v5515
      %5608 = vst.msk [vmem:[#allocation4 + $0x10] sm:$0xf] %vm1498, %v5517
      %5609 = vst.msk [vmem:[#allocation4 + $0x14] sm:$0xf] %vm1498, %v5519
      %5610 = vst.msk [vmem:[#allocation4 + $0x18] sm:$0xf] %vm1498, %v5521
      %5611 = vst.msk [vmem:[#allocation4 + $0x1c] sm:$0xf] %vm1498, %v5523
      %5612 = vst.msk [vmem:[#allocation4 + $0x20] sm:$0xf] %vm1498, %v5525
      %5613 = vst.msk [vmem:[#allocation4 + $0x24] sm:$0xf] %vm1498, %v5527
      %5614 = vst.msk [vmem:[#allocation4 + $0x28] sm:$0xf] %vm1498, %v5529
      %5615 = vst.msk [vmem:[#allocation4 + $0x2c] sm:$0xf] %vm1498, %v5531
      %5616 = vst.msk [vmem:[#allocation4 + $0x30] sm:$0xf] %vm1498, %v5533
      %5617 = vst.msk [vmem:[#allocation4 + $0x34] sm:$0xf] %vm1498, %v5535
      %5618 = vst.msk [vmem:[#allocation4 + $0x38] sm:$0xf] %vm1498, %v5537
      %5619 = vst.msk [vmem:[#allocation4 + $0x3c] sm:$0xf] %vm1498, %v5539
      %5620 = vst.msk [vmem:[#allocation4 + $0x40] sm:$0xf] %vm1498, %v5541
      %5621 = vst.msk [vmem:[#allocation4 + $0x44] sm:$0xf] %vm1498, %v5543
      %5622 = vst.msk [vmem:[#allocation4 + $0x48] sm:$0xf] %vm1498, %v5545
      %5623 = vst.msk [vmem:[#allocation4 + $0x4c] sm:$0xf] %vm1498, %v5547
      %5624 = vst.msk [vmem:[#allocation4 + $0x50] sm:$0xf] %vm1498, %v5549
      %5625 = vst.msk [vmem:[#allocation4 + $0x54] sm:$0xf] %vm1498, %v5551
      %5626 = vst.msk [vmem:[#allocation4 + $0x58] sm:$0xf] %vm1498, %v5553
      %5627 = vst.msk [vmem:[#allocation4 + $0x5c] sm:$0xf] %vm1498, %v5555
      %5628 = vst.msk [vmem:[#allocation4 + $0x60] sm:$0xf] %vm1498, %v5557
      %5629 = vst.msk [vmem:[#allocation4 + $0x64] sm:$0xf] %vm1498, %v5559
      %5630 = vst.msk [vmem:[#allocation4 + $0x68] sm:$0xf] %vm1498, %v5561
      %5631 = vst.msk [vmem:[#allocation4 + $0x6c] sm:$0xf] %vm1498, %v5563
      %5632 = vst.msk [vmem:[#allocation4 + $0x70] sm:$0xf] %vm1498, %v5565
      %5633 = vst.msk [vmem:[#allocation4 + $0x74] sm:$0xf] %vm1498, %v5567
      %5634 = vst.msk [vmem:[#allocation4 + $0x78] sm:$0xf] %vm1498, %v5569
      %5635 = vst.msk [vmem:[#allocation4 + $0x7c] sm:$0xf] %vm1498, %v5571
      %v5636 = vld [vmem:[#allocation3] sm:$0xe]
      %v5637 = vld [vmem:[#allocation3 + $0x4] sm:$0xf]
      %v5638 = vld [vmem:[#allocation3 + $0x8] sm:$0x1]
      %v5639 = vld [vmem:[#allocation3 + $0xc] sm:$0xe]
      %v5640 = vld [vmem:[#allocation3 + $0x10] sm:$0xf]
      %v5641 = vld [vmem:[#allocation3 + $0x14] sm:$0x1]
      %v5642 = vld [vmem:[#allocation3 + $0x18] sm:$0xe]
      %v5643 = vld [vmem:[#allocation3 + $0x1c] sm:$0xf]
      %v5644 = vld [vmem:[#allocation3 + $0x20] sm:$0x1]
      %v5645 = vld [vmem:[#allocation3 + $0x24] sm:$0xe]
      %v5646 = vld [vmem:[#allocation3 + $0x28] sm:$0xf]
      %v5647 = vld [vmem:[#allocation3 + $0x2c] sm:$0x1]
      %v5648 = vld [vmem:[#allocation3 + $0x30] sm:$0xe]
      %v5649 = vld [vmem:[#allocation3 + $0x34] sm:$0xf]
      %v5650 = vld [vmem:[#allocation3 + $0x38] sm:$0x1]
      %v5651 = vld [vmem:[#allocation3 + $0x3c] sm:$0xe]
      %v5652 = vld [vmem:[#allocation3 + $0x40] sm:$0xf]
      %v5653 = vld [vmem:[#allocation3 + $0x44] sm:$0x1]
      %v5654 = vld [vmem:[#allocation3 + $0x48] sm:$0xe]
      %v5655 = vld [vmem:[#allocation3 + $0x4c] sm:$0xf]
      %v5656 = vld [vmem:[#allocation3 + $0x50] sm:$0x1]
      %v5657 = vld [vmem:[#allocation3 + $0x54] sm:$0xe]
      %v5658 = vld [vmem:[#allocation3 + $0x58] sm:$0xf]
      %v5659 = vld [vmem:[#allocation3 + $0x5c] sm:$0x1]
      %v5660 = vld [vmem:[#allocation3 + $0x60] sm:$0xe]
      %v5661 = vld [vmem:[#allocation3 + $0x64] sm:$0xf]
      %v5662 = vld [vmem:[#allocation3 + $0x68] sm:$0x1]
      %v5663 = vld [vmem:[#allocation3 + $0x6c] sm:$0xe]
      %v5664 = vld [vmem:[#allocation3 + $0x70] sm:$0xf]
      %v5665 = vld [vmem:[#allocation3 + $0x74] sm:$0x1]
      %v5666 = vld [vmem:[#allocation3 + $0x78] sm:$0xe]
      %v5667 = vld [vmem:[#allocation3 + $0x7c] sm:$0xf]
      %v5668 = vld [vmem:[#allocation3 + $0x80] sm:$0x1]
      %v5669 = vld [vmem:[#allocation3 + $0x84] sm:$0xe]
      %v5670 = vld [vmem:[#allocation3 + $0x88] sm:$0xf]
      %v5671 = vld [vmem:[#allocation3 + $0x8c] sm:$0x1]
      %v5672 = vld [vmem:[#allocation3 + $0x90] sm:$0xe]
      %v5673 = vld [vmem:[#allocation3 + $0x94] sm:$0xf]
      %v5674 = vld [vmem:[#allocation3 + $0x98] sm:$0x1]
      %v5675 = vld [vmem:[#allocation3 + $0x9c] sm:$0xe]
      %v5676 = vld [vmem:[#allocation3 + $0xa0] sm:$0xf]
      %v5677 = vld [vmem:[#allocation3 + $0xa4] sm:$0x1]
      %v5678 = vld [vmem:[#allocation3 + $0xa8] sm:$0xe]
      %v5679 = vld [vmem:[#allocation3 + $0xac] sm:$0xf]
      %v5680 = vld [vmem:[#allocation3 + $0xb0] sm:$0x1]
      %v5681 = vld [vmem:[#allocation3 + $0xb4] sm:$0xe]
      %v5682 = vld [vmem:[#allocation3 + $0xb8] sm:$0xf]
      %v5683 = vld [vmem:[#allocation3 + $0xbc] sm:$0x1]
      %v5732 = vrot.slane %v5636, 5
      %v5733 = vrot.slane %v5732, 4
      %v5734 = vrot.slane %v5637, 5
      %v5735 = vsel %vm1629, %v5733, %v5734
      %v5736 = vrot.slane %v5734, 4
      %v5737 = vrot.slane %v5638, 5
      %v5738 = vsel %vm1629, %v5736, %v5737
      %v5739 = vrot.slane %v5639, 5
      %v5740 = vrot.slane %v5739, 4
      %v5741 = vrot.slane %v5640, 5
      %v5742 = vsel %vm1629, %v5740, %v5741
      %v5743 = vrot.slane %v5741, 4
      %v5744 = vrot.slane %v5641, 5
      %v5745 = vsel %vm1629, %v5743, %v5744
      %v5746 = vrot.slane %v5642, 5
      %v5747 = vrot.slane %v5746, 4
      %v5748 = vrot.slane %v5643, 5
      %v5749 = vsel %vm1629, %v5747, %v5748
      %v5750 = vrot.slane %v5748, 4
      %v5751 = vrot.slane %v5644, 5
      %v5752 = vsel %vm1629, %v5750, %v5751
      %v5753 = vrot.slane %v5645, 5
      %v5754 = vrot.slane %v5753, 4
      %v5755 = vrot.slane %v5646, 5
      %v5756 = vsel %vm1629, %v5754, %v5755
      %v5757 = vrot.slane %v5755, 4
      %v5758 = vrot.slane %v5647, 5
      %v5759 = vsel %vm1629, %v5757, %v5758
      %v5760 = vrot.slane %v5648, 5
      %v5761 = vrot.slane %v5760, 4
      %v5762 = vrot.slane %v5649, 5
      %v5763 = vsel %vm1629, %v5761, %v5762
      %v5764 = vrot.slane %v5762, 4
      %v5765 = vrot.slane %v5650, 5
      %v5766 = vsel %vm1629, %v5764, %v5765
      %v5767 = vrot.slane %v5651, 5
      %v5768 = vrot.slane %v5767, 4
      %v5769 = vrot.slane %v5652, 5
      %v5770 = vsel %vm1629, %v5768, %v5769
      %v5771 = vrot.slane %v5769, 4
      %v5772 = vrot.slane %v5653, 5
      %v5773 = vsel %vm1629, %v5771, %v5772
      %v5774 = vrot.slane %v5654, 5
      %v5775 = vrot.slane %v5774, 4
      %v5776 = vrot.slane %v5655, 5
      %v5777 = vsel %vm1629, %v5775, %v5776
      %v5778 = vrot.slane %v5776, 4
      %v5779 = vrot.slane %v5656, 5
      %v5780 = vsel %vm1629, %v5778, %v5779
      %v5781 = vrot.slane %v5657, 5
      %v5782 = vrot.slane %v5781, 4
      %v5783 = vrot.slane %v5658, 5
      %v5784 = vsel %vm1629, %v5782, %v5783
      %v5785 = vrot.slane %v5783, 4
      %v5786 = vrot.slane %v5659, 5
      %v5787 = vsel %vm1629, %v5785, %v5786
      %v5788 = vrot.slane %v5660, 5
      %v5789 = vrot.slane %v5788, 4
      %v5790 = vrot.slane %v5661, 5
      %v5791 = vsel %vm1629, %v5789, %v5790
      %v5792 = vrot.slane %v5790, 4
      %v5793 = vrot.slane %v5662, 5
      %v5794 = vsel %vm1629, %v5792, %v5793
      %v5795 = vrot.slane %v5663, 5
      %v5796 = vrot.slane %v5795, 4
      %v5797 = vrot.slane %v5664, 5
      %v5798 = vsel %vm1629, %v5796, %v5797
      %v5799 = vrot.slane %v5797, 4
      %v5800 = vrot.slane %v5665, 5
      %v5801 = vsel %vm1629, %v5799, %v5800
      %v5802 = vrot.slane %v5666, 5
      %v5803 = vrot.slane %v5802, 4
      %v5804 = vrot.slane %v5667, 5
      %v5805 = vsel %vm1629, %v5803, %v5804
      %v5806 = vrot.slane %v5804, 4
      %v5807 = vrot.slane %v5668, 5
      %v5808 = vsel %vm1629, %v5806, %v5807
      %v5809 = vrot.slane %v5669, 5
      %v5810 = vrot.slane %v5809, 4
      %v5811 = vrot.slane %v5670, 5
      %v5812 = vsel %vm1629, %v5810, %v5811
      %v5813 = vrot.slane %v5811, 4
      %v5814 = vrot.slane %v5671, 5
      %v5815 = vsel %vm1629, %v5813, %v5814
      %v5816 = vrot.slane %v5672, 5
      %v5817 = vrot.slane %v5816, 4
      %v5818 = vrot.slane %v5673, 5
      %v5819 = vsel %vm1629, %v5817, %v5818
      %v5820 = vrot.slane %v5818, 4
      %v5821 = vrot.slane %v5674, 5
      %v5822 = vsel %vm1629, %v5820, %v5821
      %v5823 = vrot.slane %v5675, 5
      %v5824 = vrot.slane %v5823, 4
      %v5825 = vrot.slane %v5676, 5
      %v5826 = vsel %vm1629, %v5824, %v5825
      %v5827 = vrot.slane %v5825, 4
      %v5828 = vrot.slane %v5677, 5
      %v5829 = vsel %vm1629, %v5827, %v5828
      %v5830 = vrot.slane %v5678, 5
      %v5831 = vrot.slane %v5830, 4
      %v5832 = vrot.slane %v5679, 5
      %v5833 = vsel %vm1629, %v5831, %v5832
      %v5834 = vrot.slane %v5832, 4
      %v5835 = vrot.slane %v5680, 5
      %v5836 = vsel %vm1629, %v5834, %v5835
      %v5837 = vrot.slane %v5681, 5
      %v5838 = vrot.slane %v5837, 4
      %v5839 = vrot.slane %v5682, 5
      %v5840 = vsel %vm1629, %v5838, %v5839
      %v5841 = vrot.slane %v5839, 4
      %v5842 = vrot.slane %v5683, 5
      %v5843 = vsel %vm1629, %v5841, %v5842
      %5844 = vrot.lane.b32.xlu0 %v5735, 8
      %v5845 = vpop.permute.xlu0 %5844
      %5846 = vrot.lane.b32.xlu0 %v5738, 8
      %v5847 = vpop.permute.xlu0 %5846
      %5848 = vrot.lane.b32.xlu0 %v5742, 8
      %v5849 = vpop.permute.xlu0 %5848
      %5850 = vrot.lane.b32.xlu0 %v5745, 8
      %v5851 = vpop.permute.xlu0 %5850
      %5852 = vrot.lane.b32.xlu0 %v5749, 8
      %v5853 = vpop.permute.xlu0 %5852
      %5854 = vrot.lane.b32.xlu0 %v5752, 8
      %v5855 = vpop.permute.xlu0 %5854
      %5856 = vrot.lane.b32.xlu0 %v5756, 8
      %v5857 = vpop.permute.xlu0 %5856
      %5858 = vrot.lane.b32.xlu0 %v5759, 8
      %v5859 = vpop.permute.xlu0 %5858
      %5860 = vrot.lane.b32.xlu0 %v5763, 8
      %v5861 = vpop.permute.xlu0 %5860
      %5862 = vrot.lane.b32.xlu0 %v5766, 8
      %v5863 = vpop.permute.xlu0 %5862
      %5864 = vrot.lane.b32.xlu0 %v5770, 8
      %v5865 = vpop.permute.xlu0 %5864
      %5866 = vrot.lane.b32.xlu0 %v5773, 8
      %v5867 = vpop.permute.xlu0 %5866
      %5868 = vrot.lane.b32.xlu0 %v5777, 8
      %v5869 = vpop.permute.xlu0 %5868
      %5870 = vrot.lane.b32.xlu0 %v5780, 8
      %v5871 = vpop.permute.xlu0 %5870
      %5872 = vrot.lane.b32.xlu0 %v5784, 8
      %v5873 = vpop.permute.xlu0 %5872
      %5874 = vrot.lane.b32.xlu0 %v5787, 8
      %v5875 = vpop.permute.xlu0 %5874
      %5876 = vrot.lane.b32.xlu0 %v5791, 8
      %v5877 = vpop.permute.xlu0 %5876
      %5878 = vrot.lane.b32.xlu0 %v5794, 8
      %v5879 = vpop.permute.xlu0 %5878
      %5880 = vrot.lane.b32.xlu0 %v5798, 8
      %v5881 = vpop.permute.xlu0 %5880
      %5882 = vrot.lane.b32.xlu0 %v5801, 8
      %v5883 = vpop.permute.xlu0 %5882
      %5884 = vrot.lane.b32.xlu0 %v5805, 8
      %v5885 = vpop.permute.xlu0 %5884
      %5886 = vrot.lane.b32.xlu0 %v5808, 8
      %v5887 = vpop.permute.xlu0 %5886
      %5888 = vrot.lane.b32.xlu0 %v5812, 8
      %v5889 = vpop.permute.xlu0 %5888
      %5890 = vrot.lane.b32.xlu0 %v5815, 8
      %v5891 = vpop.permute.xlu0 %5890
      %5892 = vrot.lane.b32.xlu0 %v5819, 8
      %v5893 = vpop.permute.xlu0 %5892
      %5894 = vrot.lane.b32.xlu0 %v5822, 8
      %v5895 = vpop.permute.xlu0 %5894
      %5896 = vrot.lane.b32.xlu0 %v5826, 8
      %v5897 = vpop.permute.xlu0 %5896
      %5898 = vrot.lane.b32.xlu0 %v5829, 8
      %v5899 = vpop.permute.xlu0 %5898
      %5900 = vrot.lane.b32.xlu0 %v5833, 8
      %v5901 = vpop.permute.xlu0 %5900
      %5902 = vrot.lane.b32.xlu0 %v5836, 8
      %v5903 = vpop.permute.xlu0 %5902
      %5904 = vrot.lane.b32.xlu0 %v5840, 8
      %v5905 = vpop.permute.xlu0 %5904
      %5906 = vrot.lane.b32.xlu0 %v5843, 8
      %v5907 = vpop.permute.xlu0 %5906
      %5940 = vst.msk [vmem:[#allocation4] sm:$0xf] %vm1838, %v5845
      %5941 = vst.msk [vmem:[#allocation4 + $0x4] sm:$0xf] %vm1838, %v5847
      %5942 = vst.msk [vmem:[#allocation4 + $0x8] sm:$0xf] %vm1838, %v5849
      %5943 = vst.msk [vmem:[#allocation4 + $0xc] sm:$0xf] %vm1838, %v5851
      %5944 = vst.msk [vmem:[#allocation4 + $0x10] sm:$0xf] %vm1838, %v5853
      %5945 = vst.msk [vmem:[#allocation4 + $0x14] sm:$0xf] %vm1838, %v5855
      %5946 = vst.msk [vmem:[#allocation4 + $0x18] sm:$0xf] %vm1838, %v5857
      %5947 = vst.msk [vmem:[#allocation4 + $0x1c] sm:$0xf] %vm1838, %v5859
      %5948 = vst.msk [vmem:[#allocation4 + $0x20] sm:$0xf] %vm1838, %v5861
      %5949 = vst.msk [vmem:[#allocation4 + $0x24] sm:$0xf] %vm1838, %v5863
      %5950 = vst.msk [vmem:[#allocation4 + $0x28] sm:$0xf] %vm1838, %v5865
      %5951 = vst.msk [vmem:[#allocation4 + $0x2c] sm:$0xf] %vm1838, %v5867
      %5952 = vst.msk [vmem:[#allocation4 + $0x30] sm:$0xf] %vm1838, %v5869
      %5953 = vst.msk [vmem:[#allocation4 + $0x34] sm:$0xf] %vm1838, %v5871
      %5954 = vst.msk [vmem:[#allocation4 + $0x38] sm:$0xf] %vm1838, %v5873
      %5955 = vst.msk [vmem:[#allocation4 + $0x3c] sm:$0xf] %vm1838, %v5875
      %5956 = vst.msk [vmem:[#allocation4 + $0x40] sm:$0xf] %vm1838, %v5877
      %5957 = vst.msk [vmem:[#allocation4 + $0x44] sm:$0xf] %vm1838, %v5879
      %5958 = vst.msk [vmem:[#allocation4 + $0x48] sm:$0xf] %vm1838, %v5881
      %5959 = vst.msk [vmem:[#allocation4 + $0x4c] sm:$0xf] %vm1838, %v5883
      %5960 = vst.msk [vmem:[#allocation4 + $0x50] sm:$0xf] %vm1838, %v5885
      %5961 = vst.msk [vmem:[#allocation4 + $0x54] sm:$0xf] %vm1838, %v5887
      %5962 = vst.msk [vmem:[#allocation4 + $0x58] sm:$0xf] %vm1838, %v5889
      %5963 = vst.msk [vmem:[#allocation4 + $0x5c] sm:$0xf] %vm1838, %v5891
      %5964 = vst.msk [vmem:[#allocation4 + $0x60] sm:$0xf] %vm1838, %v5893
      %5965 = vst.msk [vmem:[#allocation4 + $0x64] sm:$0xf] %vm1838, %v5895
      %5966 = vst.msk [vmem:[#allocation4 + $0x68] sm:$0xf] %vm1838, %v5897
      %5967 = vst.msk [vmem:[#allocation4 + $0x6c] sm:$0xf] %vm1838, %v5899
      %5968 = vst.msk [vmem:[#allocation4 + $0x70] sm:$0xf] %vm1838, %v5901
      %5969 = vst.msk [vmem:[#allocation4 + $0x74] sm:$0xf] %vm1838, %v5903
      %5970 = vst.msk [vmem:[#allocation4 + $0x78] sm:$0xf] %vm1838, %v5905
      %5971 = vst.msk [vmem:[#allocation4 + $0x7c] sm:$0xf] %vm1838, %v5907
      %v5972 = vld [vmem:[%s4899] sm:$0xf]
      %v5973 = vld [vmem:[%s4899 + $0x4] sm:$0xf]
      %v5974 = vld [vmem:[%s4899 + $0xc] sm:$0xf]
      %v5975 = vld [vmem:[%s4899 + $0x10] sm:$0xf]
      %v5976 = vld [vmem:[%s4899 + $0x18] sm:$0xf]
      %v5977 = vld [vmem:[%s4899 + $0x1c] sm:$0xf]
      %v5978 = vld [vmem:[%s4899 + $0x24] sm:$0xf]
      %v5979 = vld [vmem:[%s4899 + $0x28] sm:$0xf]
      %v5980 = vld [vmem:[%s4899 + $0x30] sm:$0xf]
      %v5981 = vld [vmem:[%s4899 + $0x34] sm:$0xf]
      %v5982 = vld [vmem:[%s4899 + $0x3c] sm:$0xf]
      %v5983 = vld [vmem:[%s4899 + $0x40] sm:$0xf]
      %v5984 = vld [vmem:[%s4899 + $0x48] sm:$0xf]
      %v5985 = vld [vmem:[%s4899 + $0x4c] sm:$0xf]
      %v5986 = vld [vmem:[%s4899 + $0x54] sm:$0xf]
      %v5987 = vld [vmem:[%s4899 + $0x58] sm:$0xf]
      %v5988 = vld [vmem:[%s4899 + $0x60] sm:$0xf]
      %v5989 = vld [vmem:[%s4899 + $0x64] sm:$0xf]
      %v5990 = vld [vmem:[%s4899 + $0x6c] sm:$0xf]
      %v5991 = vld [vmem:[%s4899 + $0x70] sm:$0xf]
      %v5992 = vld [vmem:[%s4899 + $0x78] sm:$0xf]
      %v5993 = vld [vmem:[%s4899 + $0x7c] sm:$0xf]
      %v5994 = vld [vmem:[%s4899 + $0x84] sm:$0xf]
      %v5995 = vld [vmem:[%s4899 + $0x88] sm:$0xf]
      %v5996 = vld [vmem:[%s4899 + $0x90] sm:$0xf]
      %v5997 = vld [vmem:[%s4899 + $0x94] sm:$0xf]
      %v5998 = vld [vmem:[%s4899 + $0x9c] sm:$0xf]
      %v5999 = vld [vmem:[%s4899 + $0xa0] sm:$0xf]
      %v6000 = vld [vmem:[%s4899 + $0xa8] sm:$0xf]
      %v6001 = vld [vmem:[%s4899 + $0xac] sm:$0xf]
      %v6002 = vld [vmem:[%s4899 + $0xb4] sm:$0xf]
      %v6003 = vld [vmem:[%s4899 + $0xb8] sm:$0xf]
      %6036 = vrot.lane.b32.xlu0 %v5972, 12
      %v6037 = vpop.permute.xlu0 %6036
      %6038 = vrot.lane.b32.xlu0 %v5973, 12
      %v6039 = vpop.permute.xlu0 %6038
      %6040 = vrot.lane.b32.xlu0 %v5974, 12
      %v6041 = vpop.permute.xlu0 %6040
      %6042 = vrot.lane.b32.xlu0 %v5975, 12
      %v6043 = vpop.permute.xlu0 %6042
      %6044 = vrot.lane.b32.xlu0 %v5976, 12
      %v6045 = vpop.permute.xlu0 %6044
      %6046 = vrot.lane.b32.xlu0 %v5977, 12
      %v6047 = vpop.permute.xlu0 %6046
      %6048 = vrot.lane.b32.xlu0 %v5978, 12
      %v6049 = vpop.permute.xlu0 %6048
      %6050 = vrot.lane.b32.xlu0 %v5979, 12
      %v6051 = vpop.permute.xlu0 %6050
      %6052 = vrot.lane.b32.xlu0 %v5980, 12
      %v6053 = vpop.permute.xlu0 %6052
      %6054 = vrot.lane.b32.xlu0 %v5981, 12
      %v6055 = vpop.permute.xlu0 %6054
      %6056 = vrot.lane.b32.xlu0 %v5982, 12
      %v6057 = vpop.permute.xlu0 %6056
      %6058 = vrot.lane.b32.xlu0 %v5983, 12
      %v6059 = vpop.permute.xlu0 %6058
      %6060 = vrot.lane.b32.xlu0 %v5984, 12
      %v6061 = vpop.permute.xlu0 %6060
      %6062 = vrot.lane.b32.xlu0 %v5985, 12
      %v6063 = vpop.permute.xlu0 %6062
      %6064 = vrot.lane.b32.xlu0 %v5986, 12
      %v6065 = vpop.permute.xlu0 %6064
      %6066 = vrot.lane.b32.xlu0 %v5987, 12
      %v6067 = vpop.permute.xlu0 %6066
      %6068 = vrot.lane.b32.xlu0 %v5988, 12
      %v6069 = vpop.permute.xlu0 %6068
      %6070 = vrot.lane.b32.xlu0 %v5989, 12
      %v6071 = vpop.permute.xlu0 %6070
      %6072 = vrot.lane.b32.xlu0 %v5990, 12
      %v6073 = vpop.permute.xlu0 %6072
      %6074 = vrot.lane.b32.xlu0 %v5991, 12
      %v6075 = vpop.permute.xlu0 %6074
      %6076 = vrot.lane.b32.xlu0 %v5992, 12
      %v6077 = vpop.permute.xlu0 %6076
      %6078 = vrot.lane.b32.xlu0 %v5993, 12
      %v6079 = vpop.permute.xlu0 %6078
      %6080 = vrot.lane.b32.xlu0 %v5994, 12
      %v6081 = vpop.permute.xlu0 %6080
      %6082 = vrot.lane.b32.xlu0 %v5995, 12
      %v6083 = vpop.permute.xlu0 %6082
      %6084 = vrot.lane.b32.xlu0 %v5996, 12
      %v6085 = vpop.permute.xlu0 %6084
      %6086 = vrot.lane.b32.xlu0 %v5997, 12
      %v6087 = vpop.permute.xlu0 %6086
      %6088 = vrot.lane.b32.xlu0 %v5998, 12
      %v6089 = vpop.permute.xlu0 %6088
      %6090 = vrot.lane.b32.xlu0 %v5999, 12
      %v6091 = vpop.permute.xlu0 %6090
      %6092 = vrot.lane.b32.xlu0 %v6000, 12
      %v6093 = vpop.permute.xlu0 %6092
      %6094 = vrot.lane.b32.xlu0 %v6001, 12
      %v6095 = vpop.permute.xlu0 %6094
      %6096 = vrot.lane.b32.xlu0 %v6002, 12
      %v6097 = vpop.permute.xlu0 %6096
      %6098 = vrot.lane.b32.xlu0 %v6003, 12
      %v6099 = vpop.permute.xlu0 %6098
      %6132 = vst.msk [vmem:[#allocation4] sm:$0xf] %vm2031, %v6037
      %6133 = vst.msk [vmem:[#allocation4 + $0x4] sm:$0xf] %vm2031, %v6039
      %6134 = vst.msk [vmem:[#allocation4 + $0x8] sm:$0xf] %vm2031, %v6041
      %6135 = vst.msk [vmem:[#allocation4 + $0xc] sm:$0xf] %vm2031, %v6043
      %6136 = vst.msk [vmem:[#allocation4 + $0x10] sm:$0xf] %vm2031, %v6045
      %6137 = vst.msk [vmem:[#allocation4 + $0x14] sm:$0xf] %vm2031, %v6047
      %6138 = vst.msk [vmem:[#allocation4 + $0x18] sm:$0xf] %vm2031, %v6049
      %6139 = vst.msk [vmem:[#allocation4 + $0x1c] sm:$0xf] %vm2031, %v6051
      %6140 = vst.msk [vmem:[#allocation4 + $0x20] sm:$0xf] %vm2031, %v6053
      %6141 = vst.msk [vmem:[#allocation4 + $0x24] sm:$0xf] %vm2031, %v6055
      %6142 = vst.msk [vmem:[#allocation4 + $0x28] sm:$0xf] %vm2031, %v6057
      %6143 = vst.msk [vmem:[#allocation4 + $0x2c] sm:$0xf] %vm2031, %v6059
      %6144 = vst.msk [vmem:[#allocation4 + $0x30] sm:$0xf] %vm2031, %v6061
      %6145 = vst.msk [vmem:[#allocation4 + $0x34] sm:$0xf] %vm2031, %v6063
      %6146 = vst.msk [vmem:[#allocation4 + $0x38] sm:$0xf] %vm2031, %v6065
      %6147 = vst.msk [vmem:[#allocation4 + $0x3c] sm:$0xf] %vm2031, %v6067
      %6148 = vst.msk [vmem:[#allocation4 + $0x40] sm:$0xf] %vm2031, %v6069
      %6149 = vst.msk [vmem:[#allocation4 + $0x44] sm:$0xf] %vm2031, %v6071
      %6150 = vst.msk [vmem:[#allocation4 + $0x48] sm:$0xf] %vm2031, %v6073
      %6151 = vst.msk [vmem:[#allocation4 + $0x4c] sm:$0xf] %vm2031, %v6075
      %6152 = vst.msk [vmem:[#allocation4 + $0x50] sm:$0xf] %vm2031, %v6077
      %6153 = vst.msk [vmem:[#allocation4 + $0x54] sm:$0xf] %vm2031, %v6079
      %6154 = vst.msk [vmem:[#allocation4 + $0x58] sm:$0xf] %vm2031, %v6081
      %6155 = vst.msk [vmem:[#allocation4 + $0x5c] sm:$0xf] %vm2031, %v6083
      %6156 = vst.msk [vmem:[#allocation4 + $0x60] sm:$0xf] %vm2031, %v6085
      %6157 = vst.msk [vmem:[#allocation4 + $0x64] sm:$0xf] %vm2031, %v6087
      %6158 = vst.msk [vmem:[#allocation4 + $0x68] sm:$0xf] %vm2031, %v6089
      %6159 = vst.msk [vmem:[#allocation4 + $0x6c] sm:$0xf] %vm2031, %v6091
      %6160 = vst.msk [vmem:[#allocation4 + $0x70] sm:$0xf] %vm2031, %v6093
      %6161 = vst.msk [vmem:[#allocation4 + $0x74] sm:$0xf] %vm2031, %v6095
      %6162 = vst.msk [vmem:[#allocation4 + $0x78] sm:$0xf] %vm2031, %v6097
      %6163 = vst.msk [vmem:[#allocation4 + $0x7c] sm:$0xf] %vm2031, %v6099
      %v6164 = vld [vmem:[%s4899] sm:$0xf]
      %v6165 = vld [vmem:[%s4899 + $0x4] sm:$0xf]
      %v6166 = vld [vmem:[%s4899 + $0x8] sm:$0x1]
      %v6167 = vld [vmem:[%s4899 + $0xc] sm:$0xf]
      %v6168 = vld [vmem:[%s4899 + $0x10] sm:$0xf]
      %v6169 = vld [vmem:[%s4899 + $0x14] sm:$0x1]
      %v6170 = vld [vmem:[%s4899 + $0x18] sm:$0xf]
      %v6171 = vld [vmem:[%s4899 + $0x1c] sm:$0xf]
      %v6172 = vld [vmem:[%s4899 + $0x20] sm:$0x1]
      %v6173 = vld [vmem:[%s4899 + $0x24] sm:$0xf]
      %v6174 = vld [vmem:[%s4899 + $0x28] sm:$0xf]
      %v6175 = vld [vmem:[%s4899 + $0x2c] sm:$0x1]
      %v6176 = vld [vmem:[%s4899 + $0x30] sm:$0xf]
      %v6177 = vld [vmem:[%s4899 + $0x34] sm:$0xf]
      %v6178 = vld [vmem:[%s4899 + $0x38] sm:$0x1]
      %v6179 = vld [vmem:[%s4899 + $0x3c] sm:$0xf]
      %v6180 = vld [vmem:[%s4899 + $0x40] sm:$0xf]
      %v6181 = vld [vmem:[%s4899 + $0x44] sm:$0x1]
      %v6182 = vld [vmem:[%s4899 + $0x48] sm:$0xf]
      %v6183 = vld [vmem:[%s4899 + $0x4c] sm:$0xf]
      %v6184 = vld [vmem:[%s4899 + $0x50] sm:$0x1]
      %v6185 = vld [vmem:[%s4899 + $0x54] sm:$0xf]
      %v6186 = vld [vmem:[%s4899 + $0x58] sm:$0xf]
      %v6187 = vld [vmem:[%s4899 + $0x5c] sm:$0x1]
      %v6188 = vld [vmem:[%s4899 + $0x60] sm:$0xf]
      %v6189 = vld [vmem:[%s4899 + $0x64] sm:$0xf]
      %v6190 = vld [vmem:[%s4899 + $0x68] sm:$0x1]
      %v6191 = vld [vmem:[%s4899 + $0x6c] sm:$0xf]
      %v6192 = vld [vmem:[%s4899 + $0x70] sm:$0xf]
      %v6193 = vld [vmem:[%s4899 + $0x74] sm:$0x1]
      %v6194 = vld [vmem:[%s4899 + $0x78] sm:$0xf]
      %v6195 = vld [vmem:[%s4899 + $0x7c] sm:$0xf]
      %v6196 = vld [vmem:[%s4899 + $0x80] sm:$0x1]
      %v6197 = vld [vmem:[%s4899 + $0x84] sm:$0xf]
      %v6198 = vld [vmem:[%s4899 + $0x88] sm:$0xf]
      %v6199 = vld [vmem:[%s4899 + $0x8c] sm:$0x1]
      %v6200 = vld [vmem:[%s4899 + $0x90] sm:$0xf]
      %v6201 = vld [vmem:[%s4899 + $0x94] sm:$0xf]
      %v6202 = vld [vmem:[%s4899 + $0x98] sm:$0x1]
      %v6203 = vld [vmem:[%s4899 + $0x9c] sm:$0xf]
      %v6204 = vld [vmem:[%s4899 + $0xa0] sm:$0xf]
      %v6205 = vld [vmem:[%s4899 + $0xa4] sm:$0x1]
      %v6206 = vld [vmem:[%s4899 + $0xa8] sm:$0xf]
      %v6207 = vld [vmem:[%s4899 + $0xac] sm:$0xf]
      %v6208 = vld [vmem:[%s4899 + $0xb0] sm:$0x1]
      %v6209 = vld [vmem:[%s4899 + $0xb4] sm:$0xf]
      %v6210 = vld [vmem:[%s4899 + $0xb8] sm:$0xf]
      %v6211 = vld [vmem:[%s4899 + $0xbc] sm:$0x1]
      %v6213 = vshrl.u32 %v6164, 16
      %v6215 = vrot.slane %v6213, 4
      %v6216 = vshll.u32 %v6164, 16
      %v6218 = vrot.slane %v6216, 5
      %v6219 = vor.u32 %v6215, %v6218
      %v6220 = vrot.slane %v6219, 4
      %v6222 = vshll.u32 %v6165, 16
      %v6224 = vrot.slane %v6222, 5
      %v6225 = vsel %vm1017, %v6220, %v6224
      %v6226 = vshrl.u32 %v6165, 16
      %v6228 = vrot.slane %v6226, 4
      %v6229 = vor.u32 %v6228, %v6224
      %v6230 = vrot.slane %v6229, 4
      %v6232 = vshll.u32 %v6166, 16
      %v6234 = vrot.slane %v6232, 5
      %v6235 = vsel %vm1017, %v6230, %v6234
      %v6237 = vshrl.u32 %v6167, 16
      %v6239 = vrot.slane %v6237, 4
      %v6240 = vshll.u32 %v6167, 16
      %v6242 = vrot.slane %v6240, 5
      %v6243 = vor.u32 %v6239, %v6242
      %v6244 = vrot.slane %v6243, 4
      %v6246 = vshll.u32 %v6168, 16
      %v6248 = vrot.slane %v6246, 5
      %v6249 = vsel %vm1017, %v6244, %v6248
      %v6250 = vshrl.u32 %v6168, 16
      %v6252 = vrot.slane %v6250, 4
      %v6253 = vor.u32 %v6252, %v6248
      %v6254 = vrot.slane %v6253, 4
      %v6256 = vshll.u32 %v6169, 16
      %v6258 = vrot.slane %v6256, 5
      %v6259 = vsel %vm1017, %v6254, %v6258
      %v6261 = vshrl.u32 %v6170, 16
      %v6263 = vrot.slane %v6261, 4
      %v6264 = vshll.u32 %v6170, 16
      %v6266 = vrot.slane %v6264, 5
      %v6267 = vor.u32 %v6263, %v6266
      %v6268 = vrot.slane %v6267, 4
      %v6270 = vshll.u32 %v6171, 16
      %v6272 = vrot.slane %v6270, 5
      %v6273 = vsel %vm1017, %v6268, %v6272
      %v6274 = vshrl.u32 %v6171, 16
      %v6276 = vrot.slane %v6274, 4
      %v6277 = vor.u32 %v6276, %v6272
      %v6278 = vrot.slane %v6277, 4
      %v6280 = vshll.u32 %v6172, 16
      %v6282 = vrot.slane %v6280, 5
      %v6283 = vsel %vm1017, %v6278, %v6282
      %v6285 = vshrl.u32 %v6173, 16
      %v6287 = vrot.slane %v6285, 4
      %v6288 = vshll.u32 %v6173, 16
      %v6290 = vrot.slane %v6288, 5
      %v6291 = vor.u32 %v6287, %v6290
      %v6292 = vrot.slane %v6291, 4
      %v6294 = vshll.u32 %v6174, 16
      %v6296 = vrot.slane %v6294, 5
      %v6297 = vsel %vm1017, %v6292, %v6296
      %v6298 = vshrl.u32 %v6174, 16
      %v6300 = vrot.slane %v6298, 4
      %v6301 = vor.u32 %v6300, %v6296
      %v6302 = vrot.slane %v6301, 4
      %v6304 = vshll.u32 %v6175, 16
      %v6306 = vrot.slane %v6304, 5
      %v6307 = vsel %vm1017, %v6302, %v6306
      %v6309 = vshrl.u32 %v6176, 16
      %v6311 = vrot.slane %v6309, 4
      %v6312 = vshll.u32 %v6176, 16
      %v6314 = vrot.slane %v6312, 5
      %v6315 = vor.u32 %v6311, %v6314
      %v6316 = vrot.slane %v6315, 4
      %v6318 = vshll.u32 %v6177, 16
      %v6320 = vrot.slane %v6318, 5
      %v6321 = vsel %vm1017, %v6316, %v6320
      %v6322 = vshrl.u32 %v6177, 16
      %v6324 = vrot.slane %v6322, 4
      %v6325 = vor.u32 %v6324, %v6320
      %v6326 = vrot.slane %v6325, 4
      %v6328 = vshll.u32 %v6178, 16
      %v6330 = vrot.slane %v6328, 5
      %v6331 = vsel %vm1017, %v6326, %v6330
      %v6333 = vshrl.u32 %v6179, 16
      %v6335 = vrot.slane %v6333, 4
      %v6336 = vshll.u32 %v6179, 16
      %v6338 = vrot.slane %v6336, 5
      %v6339 = vor.u32 %v6335, %v6338
      %v6340 = vrot.slane %v6339, 4
      %v6342 = vshll.u32 %v6180, 16
      %v6344 = vrot.slane %v6342, 5
      %v6345 = vsel %vm1017, %v6340, %v6344
      %v6346 = vshrl.u32 %v6180, 16
      %v6348 = vrot.slane %v6346, 4
      %v6349 = vor.u32 %v6348, %v6344
      %v6350 = vrot.slane %v6349, 4
      %v6352 = vshll.u32 %v6181, 16
      %v6354 = vrot.slane %v6352, 5
      %v6355 = vsel %vm1017, %v6350, %v6354
      %v6357 = vshrl.u32 %v6182, 16
      %v6359 = vrot.slane %v6357, 4
      %v6360 = vshll.u32 %v6182, 16
      %v6362 = vrot.slane %v6360, 5
      %v6363 = vor.u32 %v6359, %v6362
      %v6364 = vrot.slane %v6363, 4
      %v6366 = vshll.u32 %v6183, 16
      %v6368 = vrot.slane %v6366, 5
      %v6369 = vsel %vm1017, %v6364, %v6368
      %v6370 = vshrl.u32 %v6183, 16
      %v6372 = vrot.slane %v6370, 4
      %v6373 = vor.u32 %v6372, %v6368
      %v6374 = vrot.slane %v6373, 4
      %v6376 = vshll.u32 %v6184, 16
      %v6378 = vrot.slane %v6376, 5
      %v6379 = vsel %vm1017, %v6374, %v6378
      %v6381 = vshrl.u32 %v6185, 16
      %v6383 = vrot.slane %v6381, 4
      %v6384 = vshll.u32 %v6185, 16
      %v6386 = vrot.slane %v6384, 5
      %v6387 = vor.u32 %v6383, %v6386
      %v6388 = vrot.slane %v6387, 4
      %v6390 = vshll.u32 %v6186, 16
      %v6392 = vrot.slane %v6390, 5
      %v6393 = vsel %vm1017, %v6388, %v6392
      %v6394 = vshrl.u32 %v6186, 16
      %v6396 = vrot.slane %v6394, 4
      %v6397 = vor.u32 %v6396, %v6392
      %v6398 = vrot.slane %v6397, 4
      %v6400 = vshll.u32 %v6187, 16
      %v6402 = vrot.slane %v6400, 5
      %v6403 = vsel %vm1017, %v6398, %v6402
      %v6405 = vshrl.u32 %v6188, 16
      %v6407 = vrot.slane %v6405, 4
      %v6408 = vshll.u32 %v6188, 16
      %v6410 = vrot.slane %v6408, 5
      %v6411 = vor.u32 %v6407, %v6410
      %v6412 = vrot.slane %v6411, 4
      %v6414 = vshll.u32 %v6189, 16
      %v6416 = vrot.slane %v6414, 5
      %v6417 = vsel %vm1017, %v6412, %v6416
      %v6418 = vshrl.u32 %v6189, 16
      %v6420 = vrot.slane %v6418, 4
      %v6421 = vor.u32 %v6420, %v6416
      %v6422 = vrot.slane %v6421, 4
      %v6424 = vshll.u32 %v6190, 16
      %v6426 = vrot.slane %v6424, 5
      %v6427 = vsel %vm1017, %v6422, %v6426
      %v6429 = vshrl.u32 %v6191, 16
      %v6431 = vrot.slane %v6429, 4
      %v6432 = vshll.u32 %v6191, 16
      %v6434 = vrot.slane %v6432, 5
      %v6435 = vor.u32 %v6431, %v6434
      %v6436 = vrot.slane %v6435, 4
      %v6438 = vshll.u32 %v6192, 16
      %v6440 = vrot.slane %v6438, 5
      %v6441 = vsel %vm1017, %v6436, %v6440
      %v6442 = vshrl.u32 %v6192, 16
      %v6444 = vrot.slane %v6442, 4
      %v6445 = vor.u32 %v6444, %v6440
      %v6446 = vrot.slane %v6445, 4
      %v6448 = vshll.u32 %v6193, 16
      %v6450 = vrot.slane %v6448, 5
      %v6451 = vsel %vm1017, %v6446, %v6450
      %v6453 = vshrl.u32 %v6194, 16
      %v6455 = vrot.slane %v6453, 4
      %v6456 = vshll.u32 %v6194, 16
      %v6458 = vrot.slane %v6456, 5
      %v6459 = vor.u32 %v6455, %v6458
      %v6460 = vrot.slane %v6459, 4
      %v6462 = vshll.u32 %v6195, 16
      %v6464 = vrot.slane %v6462, 5
      %v6465 = vsel %vm1017, %v6460, %v6464
      %v6466 = vshrl.u32 %v6195, 16
      %v6468 = vrot.slane %v6466, 4
      %v6469 = vor.u32 %v6468, %v6464
      %v6470 = vrot.slane %v6469, 4
      %v6472 = vshll.u32 %v6196, 16
      %v6474 = vrot.slane %v6472, 5
      %v6475 = vsel %vm1017, %v6470, %v6474
      %v6477 = vshrl.u32 %v6197, 16
      %v6479 = vrot.slane %v6477, 4
      %v6480 = vshll.u32 %v6197, 16
      %v6482 = vrot.slane %v6480, 5
      %v6483 = vor.u32 %v6479, %v6482
      %v6484 = vrot.slane %v6483, 4
      %v6486 = vshll.u32 %v6198, 16
      %v6488 = vrot.slane %v6486, 5
      %v6489 = vsel %vm1017, %v6484, %v6488
      %v6490 = vshrl.u32 %v6198, 16
      %v6492 = vrot.slane %v6490, 4
      %v6493 = vor.u32 %v6492, %v6488
      %v6494 = vrot.slane %v6493, 4
      %v6496 = vshll.u32 %v6199, 16
      %v6498 = vrot.slane %v6496, 5
      %v6499 = vsel %vm1017, %v6494, %v6498
      %v6501 = vshrl.u32 %v6200, 16
      %v6503 = vrot.slane %v6501, 4
      %v6504 = vshll.u32 %v6200, 16
      %v6506 = vrot.slane %v6504, 5
      %v6507 = vor.u32 %v6503, %v6506
      %v6508 = vrot.slane %v6507, 4
      %v6510 = vshll.u32 %v6201, 16
      %v6512 = vrot.slane %v6510, 5
      %v6513 = vsel %vm1017, %v6508, %v6512
      %v6514 = vshrl.u32 %v6201, 16
      %v6516 = vrot.slane %v6514, 4
      %v6517 = vor.u32 %v6516, %v6512
      %v6518 = vrot.slane %v6517, 4
      %v6520 = vshll.u32 %v6202, 16
      %v6522 = vrot.slane %v6520, 5
      %v6523 = vsel %vm1017, %v6518, %v6522
      %v6525 = vshrl.u32 %v6203, 16
      %v6527 = vrot.slane %v6525, 4
      %v6528 = vshll.u32 %v6203, 16
      %v6530 = vrot.slane %v6528, 5
      %v6531 = vor.u32 %v6527, %v6530
      %v6532 = vrot.slane %v6531, 4
      %v6534 = vshll.u32 %v6204, 16
      %v6536 = vrot.slane %v6534, 5
      %v6537 = vsel %vm1017, %v6532, %v6536
      %v6538 = vshrl.u32 %v6204, 16
      %v6540 = vrot.slane %v6538, 4
      %v6541 = vor.u32 %v6540, %v6536
      %v6542 = vrot.slane %v6541, 4
      %v6544 = vshll.u32 %v6205, 16
      %v6546 = vrot.slane %v6544, 5
      %v6547 = vsel %vm1017, %v6542, %v6546
      %v6549 = vshrl.u32 %v6206, 16
      %v6551 = vrot.slane %v6549, 4
      %v6552 = vshll.u32 %v6206, 16
      %v6554 = vrot.slane %v6552, 5
      %v6555 = vor.u32 %v6551, %v6554
      %v6556 = vrot.slane %v6555, 4
      %v6558 = vshll.u32 %v6207, 16
      %v6560 = vrot.slane %v6558, 5
      %v6561 = vsel %vm1017, %v6556, %v6560
      %v6562 = vshrl.u32 %v6207, 16
      %v6564 = vrot.slane %v6562, 4
      %v6565 = vor.u32 %v6564, %v6560
      %v6566 = vrot.slane %v6565, 4
      %v6568 = vshll.u32 %v6208, 16
      %v6570 = vrot.slane %v6568, 5
      %v6571 = vsel %vm1017, %v6566, %v6570
      %v6573 = vshrl.u32 %v6209, 16
      %v6575 = vrot.slane %v6573, 4
      %v6576 = vshll.u32 %v6209, 16
      %v6578 = vrot.slane %v6576, 5
      %v6579 = vor.u32 %v6575, %v6578
      %v6580 = vrot.slane %v6579, 4
      %v6582 = vshll.u32 %v6210, 16
      %v6584 = vrot.slane %v6582, 5
      %v6585 = vsel %vm1017, %v6580, %v6584
      %v6586 = vshrl.u32 %v6210, 16
      %v6588 = vrot.slane %v6586, 4
      %v6589 = vor.u32 %v6588, %v6584
      %v6590 = vrot.slane %v6589, 4
      %v6592 = vshll.u32 %v6211, 16
      %v6594 = vrot.slane %v6592, 5
      %v6595 = vsel %vm1017, %v6590, %v6594
      %6596 = vrot.lane.b32.xlu0 %v6225, 16
      %v6597 = vpop.permute.xlu0 %6596
      %6598 = vrot.lane.b32.xlu0 %v6235, 16
      %v6599 = vpop.permute.xlu0 %6598
      %6600 = vrot.lane.b32.xlu0 %v6249, 16
      %v6601 = vpop.permute.xlu0 %6600
      %6602 = vrot.lane.b32.xlu0 %v6259, 16
      %v6603 = vpop.permute.xlu0 %6602
      %6604 = vrot.lane.b32.xlu0 %v6273, 16
      %v6605 = vpop.permute.xlu0 %6604
      %6606 = vrot.lane.b32.xlu0 %v6283, 16
      %v6607 = vpop.permute.xlu0 %6606
      %6608 = vrot.lane.b32.xlu0 %v6297, 16
      %v6609 = vpop.permute.xlu0 %6608
      %6610 = vrot.lane.b32.xlu0 %v6307, 16
      %v6611 = vpop.permute.xlu0 %6610
      %6612 = vrot.lane.b32.xlu0 %v6321, 16
      %v6613 = vpop.permute.xlu0 %6612
      %6614 = vrot.lane.b32.xlu0 %v6331, 16
      %v6615 = vpop.permute.xlu0 %6614
      %6616 = vrot.lane.b32.xlu0 %v6345, 16
      %v6617 = vpop.permute.xlu0 %6616
      %6618 = vrot.lane.b32.xlu0 %v6355, 16
      %v6619 = vpop.permute.xlu0 %6618
      %6620 = vrot.lane.b32.xlu0 %v6369, 16
      %v6621 = vpop.permute.xlu0 %6620
      %6622 = vrot.lane.b32.xlu0 %v6379, 16
      %v6623 = vpop.permute.xlu0 %6622
      %6624 = vrot.lane.b32.xlu0 %v6393, 16
      %v6625 = vpop.permute.xlu0 %6624
      %6626 = vrot.lane.b32.xlu0 %v6403, 16
      %v6627 = vpop.permute.xlu0 %6626
      %6628 = vrot.lane.b32.xlu0 %v6417, 16
      %v6629 = vpop.permute.xlu0 %6628
      %6630 = vrot.lane.b32.xlu0 %v6427, 16
      %v6631 = vpop.permute.xlu0 %6630
      %6632 = vrot.lane.b32.xlu0 %v6441, 16
      %v6633 = vpop.permute.xlu0 %6632
      %6634 = vrot.lane.b32.xlu0 %v6451, 16
      %v6635 = vpop.permute.xlu0 %6634
      %6636 = vrot.lane.b32.xlu0 %v6465, 16
      %v6637 = vpop.permute.xlu0 %6636
      %6638 = vrot.lane.b32.xlu0 %v6475, 16
      %v6639 = vpop.permute.xlu0 %6638
      %6640 = vrot.lane.b32.xlu0 %v6489, 16
      %v6641 = vpop.permute.xlu0 %6640
      %6642 = vrot.lane.b32.xlu0 %v6499, 16
      %v6643 = vpop.permute.xlu0 %6642
      %6644 = vrot.lane.b32.xlu0 %v6513, 16
      %v6645 = vpop.permute.xlu0 %6644
      %6646 = vrot.lane.b32.xlu0 %v6523, 16
      %v6647 = vpop.permute.xlu0 %6646
      %6648 = vrot.lane.b32.xlu0 %v6537, 16
      %v6649 = vpop.permute.xlu0 %6648
      %6650 = vrot.lane.b32.xlu0 %v6547, 16
      %v6651 = vpop.permute.xlu0 %6650
      %6652 = vrot.lane.b32.xlu0 %v6561, 16
      %v6653 = vpop.permute.xlu0 %6652
      %6654 = vrot.lane.b32.xlu0 %v6571, 16
      %v6655 = vpop.permute.xlu0 %6654
      %6656 = vrot.lane.b32.xlu0 %v6585, 16
      %v6657 = vpop.permute.xlu0 %6656
      %6658 = vrot.lane.b32.xlu0 %v6595, 16
      %v6659 = vpop.permute.xlu0 %6658
      %6692 = vst.msk [vmem:[#allocation4] sm:$0xf] %vm2592, %v6597
      %6693 = vst.msk [vmem:[#allocation4 + $0x4] sm:$0xf] %vm2592, %v6599
      %6694 = vst.msk [vmem:[#allocation4 + $0x8] sm:$0xf] %vm2592, %v6601
      %6695 = vst.msk [vmem:[#allocation4 + $0xc] sm:$0xf] %vm2592, %v6603
      %6696 = vst.msk [vmem:[#allocation4 + $0x10] sm:$0xf] %vm2592, %v6605
      %6697 = vst.msk [vmem:[#allocation4 + $0x14] sm:$0xf] %vm2592, %v6607
      %6698 = vst.msk [vmem:[#allocation4 + $0x18] sm:$0xf] %vm2592, %v6609
      %6699 = vst.msk [vmem:[#allocation4 + $0x1c] sm:$0xf] %vm2592, %v6611
      %6700 = vst.msk [vmem:[#allocation4 + $0x20] sm:$0xf] %vm2592, %v6613
      %6701 = vst.msk [vmem:[#allocation4 + $0x24] sm:$0xf] %vm2592, %v6615
      %6702 = vst.msk [vmem:[#allocation4 + $0x28] sm:$0xf] %vm2592, %v6617
      %6703 = vst.msk [vmem:[#allocation4 + $0x2c] sm:$0xf] %vm2592, %v6619
      %6704 = vst.msk [vmem:[#allocation4 + $0x30] sm:$0xf] %vm2592, %v6621
      %6705 = vst.msk [vmem:[#allocation4 + $0x34] sm:$0xf] %vm2592, %v6623
      %6706 = vst.msk [vmem:[#allocation4 + $0x38] sm:$0xf] %vm2592, %v6625
      %6707 = vst.msk [vmem:[#allocation4 + $0x3c] sm:$0xf] %vm2592, %v6627
      %6708 = vst.msk [vmem:[#allocation4 + $0x40] sm:$0xf] %vm2592, %v6629
      %6709 = vst.msk [vmem:[#allocation4 + $0x44] sm:$0xf] %vm2592, %v6631
      %6710 = vst.msk [vmem:[#allocation4 + $0x48] sm:$0xf] %vm2592, %v6633
      %6711 = vst.msk [vmem:[#allocation4 + $0x4c] sm:$0xf] %vm2592, %v6635
      %6712 = vst.msk [vmem:[#allocation4 + $0x50] sm:$0xf] %vm2592, %v6637
      %6713 = vst.msk [vmem:[#allocation4 + $0x54] sm:$0xf] %vm2592, %v6639
      %6714 = vst.msk [vmem:[#allocation4 + $0x58] sm:$0xf] %vm2592, %v6641
      %6715 = vst.msk [vmem:[#allocation4 + $0x5c] sm:$0xf] %vm2592, %v6643
      %6716 = vst.msk [vmem:[#allocation4 + $0x60] sm:$0xf] %vm2592, %v6645
      %6717 = vst.msk [vmem:[#allocation4 + $0x64] sm:$0xf] %vm2592, %v6647
      %6718 = vst.msk [vmem:[#allocation4 + $0x68] sm:$0xf] %vm2592, %v6649
      %6719 = vst.msk [vmem:[#allocation4 + $0x6c] sm:$0xf] %vm2592, %v6651
      %6720 = vst.msk [vmem:[#allocation4 + $0x70] sm:$0xf] %vm2592, %v6653
      %6721 = vst.msk [vmem:[#allocation4 + $0x74] sm:$0xf] %vm2592, %v6655
      %6722 = vst.msk [vmem:[#allocation4 + $0x78] sm:$0xf] %vm2592, %v6657
      %6723 = vst.msk [vmem:[#allocation4 + $0x7c] sm:$0xf] %vm2592, %v6659
      %v6724 = vld [vmem:[%s4899] sm:$0xe]
      %v6725 = vld [vmem:[%s4899 + $0x4] sm:$0xf]
      %v6726 = vld [vmem:[%s4899 + $0x8] sm:$0x1]
      %v6727 = vld [vmem:[%s4899 + $0xc] sm:$0xe]
      %v6728 = vld [vmem:[%s4899 + $0x10] sm:$0xf]
      %v6729 = vld [vmem:[%s4899 + $0x14] sm:$0x1]
      %v6730 = vld [vmem:[%s4899 + $0x18] sm:$0xe]
      %v6731 = vld [vmem:[%s4899 + $0x1c] sm:$0xf]
      %v6732 = vld [vmem:[%s4899 + $0x20] sm:$0x1]
      %v6733 = vld [vmem:[%s4899 + $0x24] sm:$0xe]
      %v6734 = vld [vmem:[%s4899 + $0x28] sm:$0xf]
      %v6735 = vld [vmem:[%s4899 + $0x2c] sm:$0x1]
      %v6736 = vld [vmem:[%s4899 + $0x30] sm:$0xe]
      %v6737 = vld [vmem:[%s4899 + $0x34] sm:$0xf]
      %v6738 = vld [vmem:[%s4899 + $0x38] sm:$0x1]
      %v6739 = vld [vmem:[%s4899 + $0x3c] sm:$0xe]
      %v6740 = vld [vmem:[%s4899 + $0x40] sm:$0xf]
      %v6741 = vld [vmem:[%s4899 + $0x44] sm:$0x1]
      %v6742 = vld [vmem:[%s4899 + $0x48] sm:$0xe]
      %v6743 = vld [vmem:[%s4899 + $0x4c] sm:$0xf]
      %v6744 = vld [vmem:[%s4899 + $0x50] sm:$0x1]
      %v6745 = vld [vmem:[%s4899 + $0x54] sm:$0xe]
      %v6746 = vld [vmem:[%s4899 + $0x58] sm:$0xf]
      %v6747 = vld [vmem:[%s4899 + $0x5c] sm:$0x1]
      %v6748 = vld [vmem:[%s4899 + $0x60] sm:$0xe]
      %v6749 = vld [vmem:[%s4899 + $0x64] sm:$0xf]
      %v6750 = vld [vmem:[%s4899 + $0x68] sm:$0x1]
      %v6751 = vld [vmem:[%s4899 + $0x6c] sm:$0xe]
      %v6752 = vld [vmem:[%s4899 + $0x70] sm:$0xf]
      %v6753 = vld [vmem:[%s4899 + $0x74] sm:$0x1]
      %v6754 = vld [vmem:[%s4899 + $0x78] sm:$0xe]
      %v6755 = vld [vmem:[%s4899 + $0x7c] sm:$0xf]
      %v6756 = vld [vmem:[%s4899 + $0x80] sm:$0x1]
      %v6757 = vld [vmem:[%s4899 + $0x84] sm:$0xe]
      %v6758 = vld [vmem:[%s4899 + $0x88] sm:$0xf]
      %v6759 = vld [vmem:[%s4899 + $0x8c] sm:$0x1]
      %v6760 = vld [vmem:[%s4899 + $0x90] sm:$0xe]
      %v6761 = vld [vmem:[%s4899 + $0x94] sm:$0xf]
      %v6762 = vld [vmem:[%s4899 + $0x98] sm:$0x1]
      %v6763 = vld [vmem:[%s4899 + $0x9c] sm:$0xe]
      %v6764 = vld [vmem:[%s4899 + $0xa0] sm:$0xf]
      %v6765 = vld [vmem:[%s4899 + $0xa4] sm:$0x1]
      %v6766 = vld [vmem:[%s4899 + $0xa8] sm:$0xe]
      %v6767 = vld [vmem:[%s4899 + $0xac] sm:$0xf]
      %v6768 = vld [vmem:[%s4899 + $0xb0] sm:$0x1]
      %v6769 = vld [vmem:[%s4899 + $0xb4] sm:$0xe]
      %v6770 = vld [vmem:[%s4899 + $0xb8] sm:$0xf]
      %v6771 = vld [vmem:[%s4899 + $0xbc] sm:$0x1]
      %v6820 = vrot.slane %v6724, 5
      %v6821 = vrot.slane %v6820, 4
      %v6822 = vrot.slane %v6725, 5
      %v6823 = vsel %vm1629, %v6821, %v6822
      %v6824 = vrot.slane %v6822, 4
      %v6825 = vrot.slane %v6726, 5
      %v6826 = vsel %vm1629, %v6824, %v6825
      %v6827 = vrot.slane %v6727, 5
      %v6828 = vrot.slane %v6827, 4
      %v6829 = vrot.slane %v6728, 5
      %v6830 = vsel %vm1629, %v6828, %v6829
      %v6831 = vrot.slane %v6829, 4
      %v6832 = vrot.slane %v6729, 5
      %v6833 = vsel %vm1629, %v6831, %v6832
      %v6834 = vrot.slane %v6730, 5
      %v6835 = vrot.slane %v6834, 4
      %v6836 = vrot.slane %v6731, 5
      %v6837 = vsel %vm1629, %v6835, %v6836
      %v6838 = vrot.slane %v6836, 4
      %v6839 = vrot.slane %v6732, 5
      %v6840 = vsel %vm1629, %v6838, %v6839
      %v6841 = vrot.slane %v6733, 5
      %v6842 = vrot.slane %v6841, 4
      %v6843 = vrot.slane %v6734, 5
      %v6844 = vsel %vm1629, %v6842, %v6843
      %v6845 = vrot.slane %v6843, 4
      %v6846 = vrot.slane %v6735, 5
      %v6847 = vsel %vm1629, %v6845, %v6846
      %v6848 = vrot.slane %v6736, 5
      %v6849 = vrot.slane %v6848, 4
      %v6850 = vrot.slane %v6737, 5
      %v6851 = vsel %vm1629, %v6849, %v6850
      %v6852 = vrot.slane %v6850, 4
      %v6853 = vrot.slane %v6738, 5
      %v6854 = vsel %vm1629, %v6852, %v6853
      %v6855 = vrot.slane %v6739, 5
      %v6856 = vrot.slane %v6855, 4
      %v6857 = vrot.slane %v6740, 5
      %v6858 = vsel %vm1629, %v6856, %v6857
      %v6859 = vrot.slane %v6857, 4
      %v6860 = vrot.slane %v6741, 5
      %v6861 = vsel %vm1629, %v6859, %v6860
      %v6862 = vrot.slane %v6742, 5
      %v6863 = vrot.slane %v6862, 4
      %v6864 = vrot.slane %v6743, 5
      %v6865 = vsel %vm1629, %v6863, %v6864
      %v6866 = vrot.slane %v6864, 4
      %v6867 = vrot.slane %v6744, 5
      %v6868 = vsel %vm1629, %v6866, %v6867
      %v6869 = vrot.slane %v6745, 5
      %v6870 = vrot.slane %v6869, 4
      %v6871 = vrot.slane %v6746, 5
      %v6872 = vsel %vm1629, %v6870, %v6871
      %v6873 = vrot.slane %v6871, 4
      %v6874 = vrot.slane %v6747, 5
      %v6875 = vsel %vm1629, %v6873, %v6874
      %v6876 = vrot.slane %v6748, 5
      %v6877 = vrot.slane %v6876, 4
      %v6878 = vrot.slane %v6749, 5
      %v6879 = vsel %vm1629, %v6877, %v6878
      %v6880 = vrot.slane %v6878, 4
      %v6881 = vrot.slane %v6750, 5
      %v6882 = vsel %vm1629, %v6880, %v6881
      %v6883 = vrot.slane %v6751, 5
      %v6884 = vrot.slane %v6883, 4
      %v6885 = vrot.slane %v6752, 5
      %v6886 = vsel %vm1629, %v6884, %v6885
      %v6887 = vrot.slane %v6885, 4
      %v6888 = vrot.slane %v6753, 5
      %v6889 = vsel %vm1629, %v6887, %v6888
      %v6890 = vrot.slane %v6754, 5
      %v6891 = vrot.slane %v6890, 4
      %v6892 = vrot.slane %v6755, 5
      %v6893 = vsel %vm1629, %v6891, %v6892
      %v6894 = vrot.slane %v6892, 4
      %v6895 = vrot.slane %v6756, 5
      %v6896 = vsel %vm1629, %v6894, %v6895
      %v6897 = vrot.slane %v6757, 5
      %v6898 = vrot.slane %v6897, 4
      %v6899 = vrot.slane %v6758, 5
      %v6900 = vsel %vm1629, %v6898, %v6899
      %v6901 = vrot.slane %v6899, 4
      %v6902 = vrot.slane %v6759, 5
      %v6903 = vsel %vm1629, %v6901, %v6902
      %v6904 = vrot.slane %v6760, 5
      %v6905 = vrot.slane %v6904, 4
      %v6906 = vrot.slane %v6761, 5
      %v6907 = vsel %vm1629, %v6905, %v6906
      %v6908 = vrot.slane %v6906, 4
      %v6909 = vrot.slane %v6762, 5
      %v6910 = vsel %vm1629, %v6908, %v6909
      %v6911 = vrot.slane %v6763, 5
      %v6912 = vrot.slane %v6911, 4
      %v6913 = vrot.slane %v6764, 5
      %v6914 = vsel %vm1629, %v6912, %v6913
      %v6915 = vrot.slane %v6913, 4
      %v6916 = vrot.slane %v6765, 5
      %v6917 = vsel %vm1629, %v6915, %v6916
      %v6918 = vrot.slane %v6766, 5
      %v6919 = vrot.slane %v6918, 4
      %v6920 = vrot.slane %v6767, 5
      %v6921 = vsel %vm1629, %v6919, %v6920
      %v6922 = vrot.slane %v6920, 4
      %v6923 = vrot.slane %v6768, 5
      %v6924 = vsel %vm1629, %v6922, %v6923
      %v6925 = vrot.slane %v6769, 5
      %v6926 = vrot.slane %v6925, 4
      %v6927 = vrot.slane %v6770, 5
      %v6928 = vsel %vm1629, %v6926, %v6927
      %v6929 = vrot.slane %v6927, 4
      %v6930 = vrot.slane %v6771, 5
      %v6931 = vsel %vm1629, %v6929, %v6930
      %6932 = vrot.lane.b32.xlu0 %v6823, 20
      %v6933 = vpop.permute.xlu0 %6932
      %6934 = vrot.lane.b32.xlu0 %v6826, 20
      %v6935 = vpop.permute.xlu0 %6934
      %6936 = vrot.lane.b32.xlu0 %v6830, 20
      %v6937 = vpop.permute.xlu0 %6936
      %6938 = vrot.lane.b32.xlu0 %v6833, 20
      %v6939 = vpop.permute.xlu0 %6938
      %6940 = vrot.lane.b32.xlu0 %v6837, 20
      %v6941 = vpop.permute.xlu0 %6940
      %6942 = vrot.lane.b32.xlu0 %v6840, 20
      %v6943 = vpop.permute.xlu0 %6942
      %6944 = vrot.lane.b32.xlu0 %v6844, 20
      %v6945 = vpop.permute.xlu0 %6944
      %6946 = vrot.lane.b32.xlu0 %v6847, 20
      %v6947 = vpop.permute.xlu0 %6946
      %6948 = vrot.lane.b32.xlu0 %v6851, 20
      %v6949 = vpop.permute.xlu0 %6948
      %6950 = vrot.lane.b32.xlu0 %v6854, 20
      %v6951 = vpop.permute.xlu0 %6950
      %6952 = vrot.lane.b32.xlu0 %v6858, 20
      %v6953 = vpop.permute.xlu0 %6952
      %6954 = vrot.lane.b32.xlu0 %v6861, 20
      %v6955 = vpop.permute.xlu0 %6954
      %6956 = vrot.lane.b32.xlu0 %v6865, 20
      %v6957 = vpop.permute.xlu0 %6956
      %6958 = vrot.lane.b32.xlu0 %v6868, 20
      %v6959 = vpop.permute.xlu0 %6958
      %6960 = vrot.lane.b32.xlu0 %v6872, 20
      %v6961 = vpop.permute.xlu0 %6960
      %6962 = vrot.lane.b32.xlu0 %v6875, 20
      %v6963 = vpop.permute.xlu0 %6962
      %6964 = vrot.lane.b32.xlu0 %v6879, 20
      %v6965 = vpop.permute.xlu0 %6964
      %6966 = vrot.lane.b32.xlu0 %v6882, 20
      %v6967 = vpop.permute.xlu0 %6966
      %6968 = vrot.lane.b32.xlu0 %v6886, 20
      %v6969 = vpop.permute.xlu0 %6968
      %6970 = vrot.lane.b32.xlu0 %v6889, 20
      %v6971 = vpop.permute.xlu0 %6970
      %6972 = vrot.lane.b32.xlu0 %v6893, 20
      %v6973 = vpop.permute.xlu0 %6972
      %6974 = vrot.lane.b32.xlu0 %v6896, 20
      %v6975 = vpop.permute.xlu0 %6974
      %6976 = vrot.lane.b32.xlu0 %v6900, 20
      %v6977 = vpop.permute.xlu0 %6976
      %6978 = vrot.lane.b32.xlu0 %v6903, 20
      %v6979 = vpop.permute.xlu0 %6978
      %6980 = vrot.lane.b32.xlu0 %v6907, 20
      %v6981 = vpop.permute.xlu0 %6980
      %6982 = vrot.lane.b32.xlu0 %v6910, 20
      %v6983 = vpop.permute.xlu0 %6982
      %6984 = vrot.lane.b32.xlu0 %v6914, 20
      %v6985 = vpop.permute.xlu0 %6984
      %6986 = vrot.lane.b32.xlu0 %v6917, 20
      %v6987 = vpop.permute.xlu0 %6986
      %6988 = vrot.lane.b32.xlu0 %v6921, 20
      %v6989 = vpop.permute.xlu0 %6988
      %6990 = vrot.lane.b32.xlu0 %v6924, 20
      %v6991 = vpop.permute.xlu0 %6990
      %6992 = vrot.lane.b32.xlu0 %v6928, 20
      %v6993 = vpop.permute.xlu0 %6992
      %6994 = vrot.lane.b32.xlu0 %v6931, 20
      %v6995 = vpop.permute.xlu0 %6994
      %7028 = vst.msk [vmem:[#allocation4] sm:$0xf] %vm2929, %v6933
      %7029 = vst.msk [vmem:[#allocation4 + $0x4] sm:$0xf] %vm2929, %v6935
      %7030 = vst.msk [vmem:[#allocation4 + $0x8] sm:$0xf] %vm2929, %v6937
      %7031 = vst.msk [vmem:[#allocation4 + $0xc] sm:$0xf] %vm2929, %v6939
      %7032 = vst.msk [vmem:[#allocation4 + $0x10] sm:$0xf] %vm2929, %v6941
      %7033 = vst.msk [vmem:[#allocation4 + $0x14] sm:$0xf] %vm2929, %v6943
      %7034 = vst.msk [vmem:[#allocation4 + $0x18] sm:$0xf] %vm2929, %v6945
      %7035 = vst.msk [vmem:[#allocation4 + $0x1c] sm:$0xf] %vm2929, %v6947
      %7036 = vst.msk [vmem:[#allocation4 + $0x20] sm:$0xf] %vm2929, %v6949
      %7037 = vst.msk [vmem:[#allocation4 + $0x24] sm:$0xf] %vm2929, %v6951
      %7038 = vst.msk [vmem:[#allocation4 + $0x28] sm:$0xf] %vm2929, %v6953
      %7039 = vst.msk [vmem:[#allocation4 + $0x2c] sm:$0xf] %vm2929, %v6955
      %7040 = vst.msk [vmem:[#allocation4 + $0x30] sm:$0xf] %vm2929, %v6957
      %7041 = vst.msk [vmem:[#allocation4 + $0x34] sm:$0xf] %vm2929, %v6959
      %7042 = vst.msk [vmem:[#allocation4 + $0x38] sm:$0xf] %vm2929, %v6961
      %7043 = vst.msk [vmem:[#allocation4 + $0x3c] sm:$0xf] %vm2929, %v6963
      %7044 = vst.msk [vmem:[#allocation4 + $0x40] sm:$0xf] %vm2929, %v6965
      %7045 = vst.msk [vmem:[#allocation4 + $0x44] sm:$0xf] %vm2929, %v6967
      %7046 = vst.msk [vmem:[#allocation4 + $0x48] sm:$0xf] %vm2929, %v6969
      %7047 = vst.msk [vmem:[#allocation4 + $0x4c] sm:$0xf] %vm2929, %v6971
      %7048 = vst.msk [vmem:[#allocation4 + $0x50] sm:$0xf] %vm2929, %v6973
      %7049 = vst.msk [vmem:[#allocation4 + $0x54] sm:$0xf] %vm2929, %v6975
      %7050 = vst.msk [vmem:[#allocation4 + $0x58] sm:$0xf] %vm2929, %v6977
      %7051 = vst.msk [vmem:[#allocation4 + $0x5c] sm:$0xf] %vm2929, %v6979
      %7052 = vst.msk [vmem:[#allocation4 + $0x60] sm:$0xf] %vm2929, %v6981
      %7053 = vst.msk [vmem:[#allocation4 + $0x64] sm:$0xf] %vm2929, %v6983
      %7054 = vst.msk [vmem:[#allocation4 + $0x68] sm:$0xf] %vm2929, %v6985
      %7055 = vst.msk [vmem:[#allocation4 + $0x6c] sm:$0xf] %vm2929, %v6987
      %7056 = vst.msk [vmem:[#allocation4 + $0x70] sm:$0xf] %vm2929, %v6989
      %7057 = vst.msk [vmem:[#allocation4 + $0x74] sm:$0xf] %vm2929, %v6991
      %7058 = vst.msk [vmem:[#allocation4 + $0x78] sm:$0xf] %vm2929, %v6993
      %7059 = vst.msk [vmem:[#allocation4 + $0x7c] sm:$0xf] %vm2929, %v6995
      %s7060 = scalar_lea.vmem [#allocation3], 24
      %v7061 = vld [vmem:[%s7060] sm:$0xf]
      %v7062 = vld [vmem:[%s7060 + $0x4] sm:$0xf]
      %v7063 = vld [vmem:[%s7060 + $0xc] sm:$0xf]
      %v7064 = vld [vmem:[%s7060 + $0x10] sm:$0xf]
      %v7065 = vld [vmem:[%s7060 + $0x18] sm:$0xf]
      %v7066 = vld [vmem:[%s7060 + $0x1c] sm:$0xf]
      %v7067 = vld [vmem:[%s7060 + $0x24] sm:$0xf]
      %v7068 = vld [vmem:[%s7060 + $0x28] sm:$0xf]
      %v7069 = vld [vmem:[%s7060 + $0x30] sm:$0xf]
      %v7070 = vld [vmem:[%s7060 + $0x34] sm:$0xf]
      %v7071 = vld [vmem:[%s7060 + $0x3c] sm:$0xf]
      %v7072 = vld [vmem:[%s7060 + $0x40] sm:$0xf]
      %v7073 = vld [vmem:[%s7060 + $0x48] sm:$0xf]
      %v7074 = vld [vmem:[%s7060 + $0x4c] sm:$0xf]
      %v7075 = vld [vmem:[%s7060 + $0x54] sm:$0xf]
      %v7076 = vld [vmem:[%s7060 + $0x58] sm:$0xf]
      %v7077 = vld [vmem:[%s7060 + $0x60] sm:$0xf]
      %v7078 = vld [vmem:[%s7060 + $0x64] sm:$0xf]
      %v7079 = vld [vmem:[%s7060 + $0x6c] sm:$0xf]
      %v7080 = vld [vmem:[%s7060 + $0x70] sm:$0xf]
      %v7081 = vld [vmem:[%s7060 + $0x78] sm:$0xf]
      %v7082 = vld [vmem:[%s7060 + $0x7c] sm:$0xf]
      %v7083 = vld [vmem:[%s7060 + $0x84] sm:$0xf]
      %v7084 = vld [vmem:[%s7060 + $0x88] sm:$0xf]
      %v7085 = vld [vmem:[%s7060 + $0x90] sm:$0xf]
      %v7086 = vld [vmem:[%s7060 + $0x94] sm:$0xf]
      %v7087 = vld [vmem:[%s7060 + $0x9c] sm:$0xf]
      %v7088 = vld [vmem:[%s7060 + $0xa0] sm:$0xf]
      %v7089 = vld [vmem:[%s7060 + $0xa8] sm:$0xf]
      %v7090 = vld [vmem:[%s7060 + $0xac] sm:$0xf]
      %v7091 = vld [vmem:[%s7060 + $0xb4] sm:$0xf]
      %v7092 = vld [vmem:[%s7060 + $0xb8] sm:$0xf]
      %7125 = vrot.lane.b32.xlu0 %v7061, 24
      %v7126 = vpop.permute.xlu0 %7125
      %7127 = vrot.lane.b32.xlu0 %v7062, 24
      %v7128 = vpop.permute.xlu0 %7127
      %7129 = vrot.lane.b32.xlu0 %v7063, 24
      %v7130 = vpop.permute.xlu0 %7129
      %7131 = vrot.lane.b32.xlu0 %v7064, 24
      %v7132 = vpop.permute.xlu0 %7131
      %7133 = vrot.lane.b32.xlu0 %v7065, 24
      %v7134 = vpop.permute.xlu0 %7133
      %7135 = vrot.lane.b32.xlu0 %v7066, 24
      %v7136 = vpop.permute.xlu0 %7135
      %7137 = vrot.lane.b32.xlu0 %v7067, 24
      %v7138 = vpop.permute.xlu0 %7137
      %7139 = vrot.lane.b32.xlu0 %v7068, 24
      %v7140 = vpop.permute.xlu0 %7139
      %7141 = vrot.lane.b32.xlu0 %v7069, 24
      %v7142 = vpop.permute.xlu0 %7141
      %7143 = vrot.lane.b32.xlu0 %v7070, 24
      %v7144 = vpop.permute.xlu0 %7143
      %7145 = vrot.lane.b32.xlu0 %v7071, 24
      %v7146 = vpop.permute.xlu0 %7145
      %7147 = vrot.lane.b32.xlu0 %v7072, 24
      %v7148 = vpop.permute.xlu0 %7147
      %7149 = vrot.lane.b32.xlu0 %v7073, 24
      %v7150 = vpop.permute.xlu0 %7149
      %7151 = vrot.lane.b32.xlu0 %v7074, 24
      %v7152 = vpop.permute.xlu0 %7151
      %7153 = vrot.lane.b32.xlu0 %v7075, 24
      %v7154 = vpop.permute.xlu0 %7153
      %7155 = vrot.lane.b32.xlu0 %v7076, 24
      %v7156 = vpop.permute.xlu0 %7155
      %7157 = vrot.lane.b32.xlu0 %v7077, 24
      %v7158 = vpop.permute.xlu0 %7157
      %7159 = vrot.lane.b32.xlu0 %v7078, 24
      %v7160 = vpop.permute.xlu0 %7159
      %7161 = vrot.lane.b32.xlu0 %v7079, 24
      %v7162 = vpop.permute.xlu0 %7161
      %7163 = vrot.lane.b32.xlu0 %v7080, 24
      %v7164 = vpop.permute.xlu0 %7163
      %7165 = vrot.lane.b32.xlu0 %v7081, 24
      %v7166 = vpop.permute.xlu0 %7165
      %7167 = vrot.lane.b32.xlu0 %v7082, 24
      %v7168 = vpop.permute.xlu0 %7167
      %7169 = vrot.lane.b32.xlu0 %v7083, 24
      %v7170 = vpop.permute.xlu0 %7169
      %7171 = vrot.lane.b32.xlu0 %v7084, 24
      %v7172 = vpop.permute.xlu0 %7171
      %7173 = vrot.lane.b32.xlu0 %v7085, 24
      %v7174 = vpop.permute.xlu0 %7173
      %7175 = vrot.lane.b32.xlu0 %v7086, 24
      %v7176 = vpop.permute.xlu0 %7175
      %7177 = vrot.lane.b32.xlu0 %v7087, 24
      %v7178 = vpop.permute.xlu0 %7177
      %7179 = vrot.lane.b32.xlu0 %v7088, 24
      %v7180 = vpop.permute.xlu0 %7179
      %7181 = vrot.lane.b32.xlu0 %v7089, 24
      %v7182 = vpop.permute.xlu0 %7181
      %7183 = vrot.lane.b32.xlu0 %v7090, 24
      %v7184 = vpop.permute.xlu0 %7183
      %7185 = vrot.lane.b32.xlu0 %v7091, 24
      %v7186 = vpop.permute.xlu0 %7185
      %7187 = vrot.lane.b32.xlu0 %v7092, 24
      %v7188 = vpop.permute.xlu0 %7187
      %7221 = vst.msk [vmem:[#allocation4] sm:$0xf] %vm3123, %v7126
      %7222 = vst.msk [vmem:[#allocation4 + $0x4] sm:$0xf] %vm3123, %v7128
      %7223 = vst.msk [vmem:[#allocation4 + $0x8] sm:$0xf] %vm3123, %v7130
      %7224 = vst.msk [vmem:[#allocation4 + $0xc] sm:$0xf] %vm3123, %v7132
      %7225 = vst.msk [vmem:[#allocation4 + $0x10] sm:$0xf] %vm3123, %v7134
      %7226 = vst.msk [vmem:[#allocation4 + $0x14] sm:$0xf] %vm3123, %v7136
      %7227 = vst.msk [vmem:[#allocation4 + $0x18] sm:$0xf] %vm3123, %v7138
      %7228 = vst.msk [vmem:[#allocation4 + $0x1c] sm:$0xf] %vm3123, %v7140
      %7229 = vst.msk [vmem:[#allocation4 + $0x20] sm:$0xf] %vm3123, %v7142
      %7230 = vst.msk [vmem:[#allocation4 + $0x24] sm:$0xf] %vm3123, %v7144
      %7231 = vst.msk [vmem:[#allocation4 + $0x28] sm:$0xf] %vm3123, %v7146
      %7232 = vst.msk [vmem:[#allocation4 + $0x2c] sm:$0xf] %vm3123, %v7148
      %7233 = vst.msk [vmem:[#allocation4 + $0x30] sm:$0xf] %vm3123, %v7150
      %7234 = vst.msk [vmem:[#allocation4 + $0x34] sm:$0xf] %vm3123, %v7152
      %7235 = vst.msk [vmem:[#allocation4 + $0x38] sm:$0xf] %vm3123, %v7154
      %7236 = vst.msk [vmem:[#allocation4 + $0x3c] sm:$0xf] %vm3123, %v7156
      %7237 = vst.msk [vmem:[#allocation4 + $0x40] sm:$0xf] %vm3123, %v7158
      %7238 = vst.msk [vmem:[#allocation4 + $0x44] sm:$0xf] %vm3123, %v7160
      %7239 = vst.msk [vmem:[#allocation4 + $0x48] sm:$0xf] %vm3123, %v7162
      %7240 = vst.msk [vmem:[#allocation4 + $0x4c] sm:$0xf] %vm3123, %v7164
      %7241 = vst.msk [vmem:[#allocation4 + $0x50] sm:$0xf] %vm3123, %v7166
      %7242 = vst.msk [vmem:[#allocation4 + $0x54] sm:$0xf] %vm3123, %v7168
      %7243 = vst.msk [vmem:[#allocation4 + $0x58] sm:$0xf] %vm3123, %v7170
      %7244 = vst.msk [vmem:[#allocation4 + $0x5c] sm:$0xf] %vm3123, %v7172
      %7245 = vst.msk [vmem:[#allocation4 + $0x60] sm:$0xf] %vm3123, %v7174
      %7246 = vst.msk [vmem:[#allocation4 + $0x64] sm:$0xf] %vm3123, %v7176
      %7247 = vst.msk [vmem:[#allocation4 + $0x68] sm:$0xf] %vm3123, %v7178
      %7248 = vst.msk [vmem:[#allocation4 + $0x6c] sm:$0xf] %vm3123, %v7180
      %7249 = vst.msk [vmem:[#allocation4 + $0x70] sm:$0xf] %vm3123, %v7182
      %7250 = vst.msk [vmem:[#allocation4 + $0x74] sm:$0xf] %vm3123, %v7184
      %7251 = vst.msk [vmem:[#allocation4 + $0x78] sm:$0xf] %vm3123, %v7186
      %7252 = vst.msk [vmem:[#allocation4 + $0x7c] sm:$0xf] %vm3123, %v7188
      %v7253 = vld [vmem:[%s7060] sm:$0xf]
      %v7254 = vld [vmem:[%s7060 + $0x4] sm:$0xf]
      %v7255 = vld [vmem:[%s7060 + $0x8] sm:$0x1]
      %v7256 = vld [vmem:[%s7060 + $0xc] sm:$0xf]
      %v7257 = vld [vmem:[%s7060 + $0x10] sm:$0xf]
      %v7258 = vld [vmem:[%s7060 + $0x14] sm:$0x1]
      %v7259 = vld [vmem:[%s7060 + $0x18] sm:$0xf]
      %v7260 = vld [vmem:[%s7060 + $0x1c] sm:$0xf]
      %v7261 = vld [vmem:[%s7060 + $0x20] sm:$0x1]
      %v7262 = vld [vmem:[%s7060 + $0x24] sm:$0xf]
      %v7263 = vld [vmem:[%s7060 + $0x28] sm:$0xf]
      %v7264 = vld [vmem:[%s7060 + $0x2c] sm:$0x1]
      %v7265 = vld [vmem:[%s7060 + $0x30] sm:$0xf]
      %v7266 = vld [vmem:[%s7060 + $0x34] sm:$0xf]
      %v7267 = vld [vmem:[%s7060 + $0x38] sm:$0x1]
      %v7268 = vld [vmem:[%s7060 + $0x3c] sm:$0xf]
      %v7269 = vld [vmem:[%s7060 + $0x40] sm:$0xf]
      %v7270 = vld [vmem:[%s7060 + $0x44] sm:$0x1]
      %v7271 = vld [vmem:[%s7060 + $0x48] sm:$0xf]
      %v7272 = vld [vmem:[%s7060 + $0x4c] sm:$0xf]
      %v7273 = vld [vmem:[%s7060 + $0x50] sm:$0x1]
      %v7274 = vld [vmem:[%s7060 + $0x54] sm:$0xf]
      %v7275 = vld [vmem:[%s7060 + $0x58] sm:$0xf]
      %v7276 = vld [vmem:[%s7060 + $0x5c] sm:$0x1]
      %v7277 = vld [vmem:[%s7060 + $0x60] sm:$0xf]
      %v7278 = vld [vmem:[%s7060 + $0x64] sm:$0xf]
      %v7279 = vld [vmem:[%s7060 + $0x68] sm:$0x1]
      %v7280 = vld [vmem:[%s7060 + $0x6c] sm:$0xf]
      %v7281 = vld [vmem:[%s7060 + $0x70] sm:$0xf]
      %v7282 = vld [vmem:[%s7060 + $0x74] sm:$0x1]
      %v7283 = vld [vmem:[%s7060 + $0x78] sm:$0xf]
      %v7284 = vld [vmem:[%s7060 + $0x7c] sm:$0xf]
      %v7285 = vld [vmem:[%s7060 + $0x80] sm:$0x1]
      %v7286 = vld [vmem:[%s7060 + $0x84] sm:$0xf]
      %v7287 = vld [vmem:[%s7060 + $0x88] sm:$0xf]
      %v7288 = vld [vmem:[%s7060 + $0x8c] sm:$0x1]
      %v7289 = vld [vmem:[%s7060 + $0x90] sm:$0xf]
      %v7290 = vld [vmem:[%s7060 + $0x94] sm:$0xf]
      %v7291 = vld [vmem:[%s7060 + $0x98] sm:$0x1]
      %v7292 = vld [vmem:[%s7060 + $0x9c] sm:$0xf]
      %v7293 = vld [vmem:[%s7060 + $0xa0] sm:$0xf]
      %v7294 = vld [vmem:[%s7060 + $0xa4] sm:$0x1]
      %v7295 = vld [vmem:[%s7060 + $0xa8] sm:$0xf]
      %v7296 = vld [vmem:[%s7060 + $0xac] sm:$0xf]
      %v7297 = vld [vmem:[%s7060 + $0xb0] sm:$0x1]
      %v7298 = vld [vmem:[%s7060 + $0xb4] sm:$0xf]
      %v7299 = vld [vmem:[%s7060 + $0xb8] sm:$0xf]
      %v7300 = vld [vmem:[%s7060 + $0xbc] sm:$0x1]
      %v7302 = vshrl.u32 %v7253, 16
      %v7304 = vrot.slane %v7302, 4
      %v7305 = vshll.u32 %v7253, 16
      %v7307 = vrot.slane %v7305, 5
      %v7308 = vor.u32 %v7304, %v7307
      %v7309 = vrot.slane %v7308, 4
      %v7311 = vshll.u32 %v7254, 16
      %v7313 = vrot.slane %v7311, 5
      %v7314 = vsel %vm1017, %v7309, %v7313
      %v7315 = vshrl.u32 %v7254, 16
      %v7317 = vrot.slane %v7315, 4
      %v7318 = vor.u32 %v7317, %v7313
      %v7319 = vrot.slane %v7318, 4
      %v7321 = vshll.u32 %v7255, 16
      %v7323 = vrot.slane %v7321, 5
      %v7324 = vsel %vm1017, %v7319, %v7323
      %v7326 = vshrl.u32 %v7256, 16
      %v7328 = vrot.slane %v7326, 4
      %v7329 = vshll.u32 %v7256, 16
      %v7331 = vrot.slane %v7329, 5
      %v7332 = vor.u32 %v7328, %v7331
      %v7333 = vrot.slane %v7332, 4
      %v7335 = vshll.u32 %v7257, 16
      %v7337 = vrot.slane %v7335, 5
      %v7338 = vsel %vm1017, %v7333, %v7337
      %v7339 = vshrl.u32 %v7257, 16
      %v7341 = vrot.slane %v7339, 4
      %v7342 = vor.u32 %v7341, %v7337
      %v7343 = vrot.slane %v7342, 4
      %v7345 = vshll.u32 %v7258, 16
      %v7347 = vrot.slane %v7345, 5
      %v7348 = vsel %vm1017, %v7343, %v7347
      %v7350 = vshrl.u32 %v7259, 16
      %v7352 = vrot.slane %v7350, 4
      %v7353 = vshll.u32 %v7259, 16
      %v7355 = vrot.slane %v7353, 5
      %v7356 = vor.u32 %v7352, %v7355
      %v7357 = vrot.slane %v7356, 4
      %v7359 = vshll.u32 %v7260, 16
      %v7361 = vrot.slane %v7359, 5
      %v7362 = vsel %vm1017, %v7357, %v7361
      %v7363 = vshrl.u32 %v7260, 16
      %v7365 = vrot.slane %v7363, 4
      %v7366 = vor.u32 %v7365, %v7361
      %v7367 = vrot.slane %v7366, 4
      %v7369 = vshll.u32 %v7261, 16
      %v7371 = vrot.slane %v7369, 5
      %v7372 = vsel %vm1017, %v7367, %v7371
      %v7374 = vshrl.u32 %v7262, 16
      %v7376 = vrot.slane %v7374, 4
      %v7377 = vshll.u32 %v7262, 16
      %v7379 = vrot.slane %v7377, 5
      %v7380 = vor.u32 %v7376, %v7379
      %v7381 = vrot.slane %v7380, 4
      %v7383 = vshll.u32 %v7263, 16
      %v7385 = vrot.slane %v7383, 5
      %v7386 = vsel %vm1017, %v7381, %v7385
      %v7387 = vshrl.u32 %v7263, 16
      %v7389 = vrot.slane %v7387, 4
      %v7390 = vor.u32 %v7389, %v7385
      %v7391 = vrot.slane %v7390, 4
      %v7393 = vshll.u32 %v7264, 16
      %v7395 = vrot.slane %v7393, 5
      %v7396 = vsel %vm1017, %v7391, %v7395
      %v7398 = vshrl.u32 %v7265, 16
      %v7400 = vrot.slane %v7398, 4
      %v7401 = vshll.u32 %v7265, 16
      %v7403 = vrot.slane %v7401, 5
      %v7404 = vor.u32 %v7400, %v7403
      %v7405 = vrot.slane %v7404, 4
      %v7407 = vshll.u32 %v7266, 16
      %v7409 = vrot.slane %v7407, 5
      %v7410 = vsel %vm1017, %v7405, %v7409
      %v7411 = vshrl.u32 %v7266, 16
      %v7413 = vrot.slane %v7411, 4
      %v7414 = vor.u32 %v7413, %v7409
      %v7415 = vrot.slane %v7414, 4
      %v7417 = vshll.u32 %v7267, 16
      %v7419 = vrot.slane %v7417, 5
      %v7420 = vsel %vm1017, %v7415, %v7419
      %v7422 = vshrl.u32 %v7268, 16
      %v7424 = vrot.slane %v7422, 4
      %v7425 = vshll.u32 %v7268, 16
      %v7427 = vrot.slane %v7425, 5
      %v7428 = vor.u32 %v7424, %v7427
      %v7429 = vrot.slane %v7428, 4
      %v7431 = vshll.u32 %v7269, 16
      %v7433 = vrot.slane %v7431, 5
      %v7434 = vsel %vm1017, %v7429, %v7433
      %v7435 = vshrl.u32 %v7269, 16
      %v7437 = vrot.slane %v7435, 4
      %v7438 = vor.u32 %v7437, %v7433
      %v7439 = vrot.slane %v7438, 4
      %v7441 = vshll.u32 %v7270, 16
      %v7443 = vrot.slane %v7441, 5
      %v7444 = vsel %vm1017, %v7439, %v7443
      %v7446 = vshrl.u32 %v7271, 16
      %v7448 = vrot.slane %v7446, 4
      %v7449 = vshll.u32 %v7271, 16
      %v7451 = vrot.slane %v7449, 5
      %v7452 = vor.u32 %v7448, %v7451
      %v7453 = vrot.slane %v7452, 4
      %v7455 = vshll.u32 %v7272, 16
      %v7457 = vrot.slane %v7455, 5
      %v7458 = vsel %vm1017, %v7453, %v7457
      %v7459 = vshrl.u32 %v7272, 16
      %v7461 = vrot.slane %v7459, 4
      %v7462 = vor.u32 %v7461, %v7457
      %v7463 = vrot.slane %v7462, 4
      %v7465 = vshll.u32 %v7273, 16
      %v7467 = vrot.slane %v7465, 5
      %v7468 = vsel %vm1017, %v7463, %v7467
      %v7470 = vshrl.u32 %v7274, 16
      %v7472 = vrot.slane %v7470, 4
      %v7473 = vshll.u32 %v7274, 16
      %v7475 = vrot.slane %v7473, 5
      %v7476 = vor.u32 %v7472, %v7475
      %v7477 = vrot.slane %v7476, 4
      %v7479 = vshll.u32 %v7275, 16
      %v7481 = vrot.slane %v7479, 5
      %v7482 = vsel %vm1017, %v7477, %v7481
      %v7483 = vshrl.u32 %v7275, 16
      %v7485 = vrot.slane %v7483, 4
      %v7486 = vor.u32 %v7485, %v7481
      %v7487 = vrot.slane %v7486, 4
      %v7489 = vshll.u32 %v7276, 16
      %v7491 = vrot.slane %v7489, 5
      %v7492 = vsel %vm1017, %v7487, %v7491
      %v7494 = vshrl.u32 %v7277, 16
      %v7496 = vrot.slane %v7494, 4
      %v7497 = vshll.u32 %v7277, 16
      %v7499 = vrot.slane %v7497, 5
      %v7500 = vor.u32 %v7496, %v7499
      %v7501 = vrot.slane %v7500, 4
      %v7503 = vshll.u32 %v7278, 16
      %v7505 = vrot.slane %v7503, 5
      %v7506 = vsel %vm1017, %v7501, %v7505
      %v7507 = vshrl.u32 %v7278, 16
      %v7509 = vrot.slane %v7507, 4
      %v7510 = vor.u32 %v7509, %v7505
      %v7511 = vrot.slane %v7510, 4
      %v7513 = vshll.u32 %v7279, 16
      %v7515 = vrot.slane %v7513, 5
      %v7516 = vsel %vm1017, %v7511, %v7515
      %v7518 = vshrl.u32 %v7280, 16
      %v7520 = vrot.slane %v7518, 4
      %v7521 = vshll.u32 %v7280, 16
      %v7523 = vrot.slane %v7521, 5
      %v7524 = vor.u32 %v7520, %v7523
      %v7525 = vrot.slane %v7524, 4
      %v7527 = vshll.u32 %v7281, 16
      %v7529 = vrot.slane %v7527, 5
      %v7530 = vsel %vm1017, %v7525, %v7529
      %v7531 = vshrl.u32 %v7281, 16
      %v7533 = vrot.slane %v7531, 4
      %v7534 = vor.u32 %v7533, %v7529
      %v7535 = vrot.slane %v7534, 4
      %v7537 = vshll.u32 %v7282, 16
      %v7539 = vrot.slane %v7537, 5
      %v7540 = vsel %vm1017, %v7535, %v7539
      %v7542 = vshrl.u32 %v7283, 16
      %v7544 = vrot.slane %v7542, 4
      %v7545 = vshll.u32 %v7283, 16
      %v7547 = vrot.slane %v7545, 5
      %v7548 = vor.u32 %v7544, %v7547
      %v7549 = vrot.slane %v7548, 4
      %v7551 = vshll.u32 %v7284, 16
      %v7553 = vrot.slane %v7551, 5
      %v7554 = vsel %vm1017, %v7549, %v7553
      %v7555 = vshrl.u32 %v7284, 16
      %v7557 = vrot.slane %v7555, 4
      %v7558 = vor.u32 %v7557, %v7553
      %v7559 = vrot.slane %v7558, 4
      %v7561 = vshll.u32 %v7285, 16
      %v7563 = vrot.slane %v7561, 5
      %v7564 = vsel %vm1017, %v7559, %v7563
      %v7566 = vshrl.u32 %v7286, 16
      %v7568 = vrot.slane %v7566, 4
      %v7569 = vshll.u32 %v7286, 16
      %v7571 = vrot.slane %v7569, 5
      %v7572 = vor.u32 %v7568, %v7571
      %v7573 = vrot.slane %v7572, 4
      %v7575 = vshll.u32 %v7287, 16
      %v7577 = vrot.slane %v7575, 5
      %v7578 = vsel %vm1017, %v7573, %v7577
      %v7579 = vshrl.u32 %v7287, 16
      %v7581 = vrot.slane %v7579, 4
      %v7582 = vor.u32 %v7581, %v7577
      %v7583 = vrot.slane %v7582, 4
      %v7585 = vshll.u32 %v7288, 16
      %v7587 = vrot.slane %v7585, 5
      %v7588 = vsel %vm1017, %v7583, %v7587
      %v7590 = vshrl.u32 %v7289, 16
      %v7592 = vrot.slane %v7590, 4
      %v7593 = vshll.u32 %v7289, 16
      %v7595 = vrot.slane %v7593, 5
      %v7596 = vor.u32 %v7592, %v7595
      %v7597 = vrot.slane %v7596, 4
      %v7599 = vshll.u32 %v7290, 16
      %v7601 = vrot.slane %v7599, 5
      %v7602 = vsel %vm1017, %v7597, %v7601
      %v7603 = vshrl.u32 %v7290, 16
      %v7605 = vrot.slane %v7603, 4
      %v7606 = vor.u32 %v7605, %v7601
      %v7607 = vrot.slane %v7606, 4
      %v7609 = vshll.u32 %v7291, 16
      %v7611 = vrot.slane %v7609, 5
      %v7612 = vsel %vm1017, %v7607, %v7611
      %v7614 = vshrl.u32 %v7292, 16
      %v7616 = vrot.slane %v7614, 4
      %v7617 = vshll.u32 %v7292, 16
      %v7619 = vrot.slane %v7617, 5
      %v7620 = vor.u32 %v7616, %v7619
      %v7621 = vrot.slane %v7620, 4
      %v7623 = vshll.u32 %v7293, 16
      %v7625 = vrot.slane %v7623, 5
      %v7626 = vsel %vm1017, %v7621, %v7625
      %v7627 = vshrl.u32 %v7293, 16
      %v7629 = vrot.slane %v7627, 4
      %v7630 = vor.u32 %v7629, %v7625
      %v7631 = vrot.slane %v7630, 4
      %v7633 = vshll.u32 %v7294, 16
      %v7635 = vrot.slane %v7633, 5
      %v7636 = vsel %vm1017, %v7631, %v7635
      %v7638 = vshrl.u32 %v7295, 16
      %v7640 = vrot.slane %v7638, 4
      %v7641 = vshll.u32 %v7295, 16
      %v7643 = vrot.slane %v7641, 5
      %v7644 = vor.u32 %v7640, %v7643
      %v7645 = vrot.slane %v7644, 4
      %v7647 = vshll.u32 %v7296, 16
      %v7649 = vrot.slane %v7647, 5
      %v7650 = vsel %vm1017, %v7645, %v7649
      %v7651 = vshrl.u32 %v7296, 16
      %v7653 = vrot.slane %v7651, 4
      %v7654 = vor.u32 %v7653, %v7649
      %v7655 = vrot.slane %v7654, 4
      %v7657 = vshll.u32 %v7297, 16
      %v7659 = vrot.slane %v7657, 5
      %v7660 = vsel %vm1017, %v7655, %v7659
      %v7662 = vshrl.u32 %v7298, 16
      %v7664 = vrot.slane %v7662, 4
      %v7665 = vshll.u32 %v7298, 16
      %v7667 = vrot.slane %v7665, 5
      %v7668 = vor.u32 %v7664, %v7667
      %v7669 = vrot.slane %v7668, 4
      %v7671 = vshll.u32 %v7299, 16
      %v7673 = vrot.slane %v7671, 5
      %v7674 = vsel %vm1017, %v7669, %v7673
      %v7675 = vshrl.u32 %v7299, 16
      %v7677 = vrot.slane %v7675, 4
      %v7678 = vor.u32 %v7677, %v7673
      %v7679 = vrot.slane %v7678, 4
      %v7681 = vshll.u32 %v7300, 16
      %v7683 = vrot.slane %v7681, 5
      %v7684 = vsel %vm1017, %v7679, %v7683
      %7685 = vrot.lane.b32.xlu0 %v7314, 28
      %v7686 = vpop.permute.xlu0 %7685
      %7687 = vrot.lane.b32.xlu0 %v7324, 28
      %v7688 = vpop.permute.xlu0 %7687
      %7689 = vrot.lane.b32.xlu0 %v7338, 28
      %v7690 = vpop.permute.xlu0 %7689
      %7691 = vrot.lane.b32.xlu0 %v7348, 28
      %v7692 = vpop.permute.xlu0 %7691
      %7693 = vrot.lane.b32.xlu0 %v7362, 28
      %v7694 = vpop.permute.xlu0 %7693
      %7695 = vrot.lane.b32.xlu0 %v7372, 28
      %v7696 = vpop.permute.xlu0 %7695
      %7697 = vrot.lane.b32.xlu0 %v7386, 28
      %v7698 = vpop.permute.xlu0 %7697
      %7699 = vrot.lane.b32.xlu0 %v7396, 28
      %v7700 = vpop.permute.xlu0 %7699
      %7701 = vrot.lane.b32.xlu0 %v7410, 28
      %v7702 = vpop.permute.xlu0 %7701
      %7703 = vrot.lane.b32.xlu0 %v7420, 28
      %v7704 = vpop.permute.xlu0 %7703
      %7705 = vrot.lane.b32.xlu0 %v7434, 28
      %v7706 = vpop.permute.xlu0 %7705
      %7707 = vrot.lane.b32.xlu0 %v7444, 28
      %v7708 = vpop.permute.xlu0 %7707
      %7709 = vrot.lane.b32.xlu0 %v7458, 28
      %v7710 = vpop.permute.xlu0 %7709
      %7711 = vrot.lane.b32.xlu0 %v7468, 28
      %v7712 = vpop.permute.xlu0 %7711
      %7713 = vrot.lane.b32.xlu0 %v7482, 28
      %v7714 = vpop.permute.xlu0 %7713
      %7715 = vrot.lane.b32.xlu0 %v7492, 28
      %v7716 = vpop.permute.xlu0 %7715
      %7717 = vrot.lane.b32.xlu0 %v7506, 28
      %v7718 = vpop.permute.xlu0 %7717
      %7719 = vrot.lane.b32.xlu0 %v7516, 28
      %v7720 = vpop.permute.xlu0 %7719
      %7721 = vrot.lane.b32.xlu0 %v7530, 28
      %v7722 = vpop.permute.xlu0 %7721
      %7723 = vrot.lane.b32.xlu0 %v7540, 28
      %v7724 = vpop.permute.xlu0 %7723
      %7725 = vrot.lane.b32.xlu0 %v7554, 28
      %v7726 = vpop.permute.xlu0 %7725
      %7727 = vrot.lane.b32.xlu0 %v7564, 28
      %v7728 = vpop.permute.xlu0 %7727
      %7729 = vrot.lane.b32.xlu0 %v7578, 28
      %v7730 = vpop.permute.xlu0 %7729
      %7731 = vrot.lane.b32.xlu0 %v7588, 28
      %v7732 = vpop.permute.xlu0 %7731
      %7733 = vrot.lane.b32.xlu0 %v7602, 28
      %v7734 = vpop.permute.xlu0 %7733
      %7735 = vrot.lane.b32.xlu0 %v7612, 28
      %v7736 = vpop.permute.xlu0 %7735
      %7737 = vrot.lane.b32.xlu0 %v7626, 28
      %v7738 = vpop.permute.xlu0 %7737
      %7739 = vrot.lane.b32.xlu0 %v7636, 28
      %v7740 = vpop.permute.xlu0 %7739
      %7741 = vrot.lane.b32.xlu0 %v7650, 28
      %v7742 = vpop.permute.xlu0 %7741
      %7743 = vrot.lane.b32.xlu0 %v7660, 28
      %v7744 = vpop.permute.xlu0 %7743
      %7745 = vrot.lane.b32.xlu0 %v7674, 28
      %v7746 = vpop.permute.xlu0 %7745
      %7747 = vrot.lane.b32.xlu0 %v7684, 28
      %v7748 = vpop.permute.xlu0 %7747
      %7781 = vst.msk [vmem:[#allocation4] sm:$0xf] %vm3684, %v7686
      %7782 = vst.msk [vmem:[#allocation4 + $0x4] sm:$0xf] %vm3684, %v7688
      %7783 = vst.msk [vmem:[#allocation4 + $0x8] sm:$0xf] %vm3684, %v7690
      %7784 = vst.msk [vmem:[#allocation4 + $0xc] sm:$0xf] %vm3684, %v7692
      %7785 = vst.msk [vmem:[#allocation4 + $0x10] sm:$0xf] %vm3684, %v7694
      %7786 = vst.msk [vmem:[#allocation4 + $0x14] sm:$0xf] %vm3684, %v7696
      %7787 = vst.msk [vmem:[#allocation4 + $0x18] sm:$0xf] %vm3684, %v7698
      %7788 = vst.msk [vmem:[#allocation4 + $0x1c] sm:$0xf] %vm3684, %v7700
      %7789 = vst.msk [vmem:[#allocation4 + $0x20] sm:$0xf] %vm3684, %v7702
      %7790 = vst.msk [vmem:[#allocation4 + $0x24] sm:$0xf] %vm3684, %v7704
      %7791 = vst.msk [vmem:[#allocation4 + $0x28] sm:$0xf] %vm3684, %v7706
      %7792 = vst.msk [vmem:[#allocation4 + $0x2c] sm:$0xf] %vm3684, %v7708
      %7793 = vst.msk [vmem:[#allocation4 + $0x30] sm:$0xf] %vm3684, %v7710
      %7794 = vst.msk [vmem:[#allocation4 + $0x34] sm:$0xf] %vm3684, %v7712
      %7795 = vst.msk [vmem:[#allocation4 + $0x38] sm:$0xf] %vm3684, %v7714
      %7796 = vst.msk [vmem:[#allocation4 + $0x3c] sm:$0xf] %vm3684, %v7716
      %7797 = vst.msk [vmem:[#allocation4 + $0x40] sm:$0xf] %vm3684, %v7718
      %7798 = vst.msk [vmem:[#allocation4 + $0x44] sm:$0xf] %vm3684, %v7720
      %7799 = vst.msk [vmem:[#allocation4 + $0x48] sm:$0xf] %vm3684, %v7722
      %7800 = vst.msk [vmem:[#allocation4 + $0x4c] sm:$0xf] %vm3684, %v7724
      %7801 = vst.msk [vmem:[#allocation4 + $0x50] sm:$0xf] %vm3684, %v7726
      %7802 = vst.msk [vmem:[#allocation4 + $0x54] sm:$0xf] %vm3684, %v7728
      %7803 = vst.msk [vmem:[#allocation4 + $0x58] sm:$0xf] %vm3684, %v7730
      %7804 = vst.msk [vmem:[#allocation4 + $0x5c] sm:$0xf] %vm3684, %v7732
      %7805 = vst.msk [vmem:[#allocation4 + $0x60] sm:$0xf] %vm3684, %v7734
      %7806 = vst.msk [vmem:[#allocation4 + $0x64] sm:$0xf] %vm3684, %v7736
      %7807 = vst.msk [vmem:[#allocation4 + $0x68] sm:$0xf] %vm3684, %v7738
      %7808 = vst.msk [vmem:[#allocation4 + $0x6c] sm:$0xf] %vm3684, %v7740
      %7809 = vst.msk [vmem:[#allocation4 + $0x70] sm:$0xf] %vm3684, %v7742
      %7810 = vst.msk [vmem:[#allocation4 + $0x74] sm:$0xf] %vm3684, %v7744
      %7811 = vst.msk [vmem:[#allocation4 + $0x78] sm:$0xf] %vm3684, %v7746
      %7812 = vst.msk [vmem:[#allocation4 + $0x7c] sm:$0xf] %vm3684, %v7748
      %v7813 = vld [vmem:[%s7060] sm:$0xe]
      %v7814 = vld [vmem:[%s7060 + $0x4] sm:$0xf]
      %v7815 = vld [vmem:[%s7060 + $0x8] sm:$0x1]
      %v7816 = vld [vmem:[%s7060 + $0xc] sm:$0xe]
      %v7817 = vld [vmem:[%s7060 + $0x10] sm:$0xf]
      %v7818 = vld [vmem:[%s7060 + $0x14] sm:$0x1]
      %v7819 = vld [vmem:[%s7060 + $0x18] sm:$0xe]
      %v7820 = vld [vmem:[%s7060 + $0x1c] sm:$0xf]
      %v7821 = vld [vmem:[%s7060 + $0x20] sm:$0x1]
      %v7822 = vld [vmem:[%s7060 + $0x24] sm:$0xe]
      %v7823 = vld [vmem:[%s7060 + $0x28] sm:$0xf]
      %v7824 = vld [vmem:[%s7060 + $0x2c] sm:$0x1]
      %v7825 = vld [vmem:[%s7060 + $0x30] sm:$0xe]
      %v7826 = vld [vmem:[%s7060 + $0x34] sm:$0xf]
      %v7827 = vld [vmem:[%s7060 + $0x38] sm:$0x1]
      %v7828 = vld [vmem:[%s7060 + $0x3c] sm:$0xe]
      %v7829 = vld [vmem:[%s7060 + $0x40] sm:$0xf]
      %v7830 = vld [vmem:[%s7060 + $0x44] sm:$0x1]
      %v7831 = vld [vmem:[%s7060 + $0x48] sm:$0xe]
      %v7832 = vld [vmem:[%s7060 + $0x4c] sm:$0xf]
      %v7833 = vld [vmem:[%s7060 + $0x50] sm:$0x1]
      %v7834 = vld [vmem:[%s7060 + $0x54] sm:$0xe]
      %v7835 = vld [vmem:[%s7060 + $0x58] sm:$0xf]
      %v7836 = vld [vmem:[%s7060 + $0x5c] sm:$0x1]
      %v7837 = vld [vmem:[%s7060 + $0x60] sm:$0xe]
      %v7838 = vld [vmem:[%s7060 + $0x64] sm:$0xf]
      %v7839 = vld [vmem:[%s7060 + $0x68] sm:$0x1]
      %v7840 = vld [vmem:[%s7060 + $0x6c] sm:$0xe]
      %v7841 = vld [vmem:[%s7060 + $0x70] sm:$0xf]
      %v7842 = vld [vmem:[%s7060 + $0x74] sm:$0x1]
      %v7843 = vld [vmem:[%s7060 + $0x78] sm:$0xe]
      %v7844 = vld [vmem:[%s7060 + $0x7c] sm:$0xf]
      %v7845 = vld [vmem:[%s7060 + $0x80] sm:$0x1]
      %v7846 = vld [vmem:[%s7060 + $0x84] sm:$0xe]
      %v7847 = vld [vmem:[%s7060 + $0x88] sm:$0xf]
      %v7848 = vld [vmem:[%s7060 + $0x8c] sm:$0x1]
      %v7849 = vld [vmem:[%s7060 + $0x90] sm:$0xe]
      %v7850 = vld [vmem:[%s7060 + $0x94] sm:$0xf]
      %v7851 = vld [vmem:[%s7060 + $0x98] sm:$0x1]
      %v7852 = vld [vmem:[%s7060 + $0x9c] sm:$0xe]
      %v7853 = vld [vmem:[%s7060 + $0xa0] sm:$0xf]
      %v7854 = vld [vmem:[%s7060 + $0xa4] sm:$0x1]
      %v7855 = vld [vmem:[%s7060 + $0xa8] sm:$0xe]
      %v7856 = vld [vmem:[%s7060 + $0xac] sm:$0xf]
      %v7857 = vld [vmem:[%s7060 + $0xb0] sm:$0x1]
      %v7858 = vld [vmem:[%s7060 + $0xb4] sm:$0xe]
      %v7859 = vld [vmem:[%s7060 + $0xb8] sm:$0xf]
      %v7860 = vld [vmem:[%s7060 + $0xbc] sm:$0x1]
      %v7909 = vrot.slane %v7813, 5
      %v7910 = vrot.slane %v7909, 4
      %v7911 = vrot.slane %v7814, 5
      %v7912 = vsel %vm1629, %v7910, %v7911
      %v7913 = vrot.slane %v7911, 4
      %v7914 = vrot.slane %v7815, 5
      %v7915 = vsel %vm1629, %v7913, %v7914
      %v7916 = vrot.slane %v7816, 5
      %v7917 = vrot.slane %v7916, 4
      %v7918 = vrot.slane %v7817, 5
      %v7919 = vsel %vm1629, %v7917, %v7918
      %v7920 = vrot.slane %v7918, 4
      %v7921 = vrot.slane %v7818, 5
      %v7922 = vsel %vm1629, %v7920, %v7921
      %v7923 = vrot.slane %v7819, 5
      %v7924 = vrot.slane %v7923, 4
      %v7925 = vrot.slane %v7820, 5
      %v7926 = vsel %vm1629, %v7924, %v7925
      %v7927 = vrot.slane %v7925, 4
      %v7928 = vrot.slane %v7821, 5
      %v7929 = vsel %vm1629, %v7927, %v7928
      %v7930 = vrot.slane %v7822, 5
      %v7931 = vrot.slane %v7930, 4
      %v7932 = vrot.slane %v7823, 5
      %v7933 = vsel %vm1629, %v7931, %v7932
      %v7934 = vrot.slane %v7932, 4
      %v7935 = vrot.slane %v7824, 5
      %v7936 = vsel %vm1629, %v7934, %v7935
      %v7937 = vrot.slane %v7825, 5
      %v7938 = vrot.slane %v7937, 4
      %v7939 = vrot.slane %v7826, 5
      %v7940 = vsel %vm1629, %v7938, %v7939
      %v7941 = vrot.slane %v7939, 4
      %v7942 = vrot.slane %v7827, 5
      %v7943 = vsel %vm1629, %v7941, %v7942
      %v7944 = vrot.slane %v7828, 5
      %v7945 = vrot.slane %v7944, 4
      %v7946 = vrot.slane %v7829, 5
      %v7947 = vsel %vm1629, %v7945, %v7946
      %v7948 = vrot.slane %v7946, 4
      %v7949 = vrot.slane %v7830, 5
      %v7950 = vsel %vm1629, %v7948, %v7949
      %v7951 = vrot.slane %v7831, 5
      %v7952 = vrot.slane %v7951, 4
      %v7953 = vrot.slane %v7832, 5
      %v7954 = vsel %vm1629, %v7952, %v7953
      %v7955 = vrot.slane %v7953, 4
      %v7956 = vrot.slane %v7833, 5
      %v7957 = vsel %vm1629, %v7955, %v7956
      %v7958 = vrot.slane %v7834, 5
      %v7959 = vrot.slane %v7958, 4
      %v7960 = vrot.slane %v7835, 5
      %v7961 = vsel %vm1629, %v7959, %v7960
      %v7962 = vrot.slane %v7960, 4
      %v7963 = vrot.slane %v7836, 5
      %v7964 = vsel %vm1629, %v7962, %v7963
      %v7965 = vrot.slane %v7837, 5
      %v7966 = vrot.slane %v7965, 4
      %v7967 = vrot.slane %v7838, 5
      %v7968 = vsel %vm1629, %v7966, %v7967
      %v7969 = vrot.slane %v7967, 4
      %v7970 = vrot.slane %v7839, 5
      %v7971 = vsel %vm1629, %v7969, %v7970
      %v7972 = vrot.slane %v7840, 5
      %v7973 = vrot.slane %v7972, 4
      %v7974 = vrot.slane %v7841, 5
      %v7975 = vsel %vm1629, %v7973, %v7974
      %v7976 = vrot.slane %v7974, 4
      %v7977 = vrot.slane %v7842, 5
      %v7978 = vsel %vm1629, %v7976, %v7977
      %v7979 = vrot.slane %v7843, 5
      %v7980 = vrot.slane %v7979, 4
      %v7981 = vrot.slane %v7844, 5
      %v7982 = vsel %vm1629, %v7980, %v7981
      %v7983 = vrot.slane %v7981, 4
      %v7984 = vrot.slane %v7845, 5
      %v7985 = vsel %vm1629, %v7983, %v7984
      %v7986 = vrot.slane %v7846, 5
      %v7987 = vrot.slane %v7986, 4
      %v7988 = vrot.slane %v7847, 5
      %v7989 = vsel %vm1629, %v7987, %v7988
      %v7990 = vrot.slane %v7988, 4
      %v7991 = vrot.slane %v7848, 5
      %v7992 = vsel %vm1629, %v7990, %v7991
      %v7993 = vrot.slane %v7849, 5
      %v7994 = vrot.slane %v7993, 4
      %v7995 = vrot.slane %v7850, 5
      %v7996 = vsel %vm1629, %v7994, %v7995
      %v7997 = vrot.slane %v7995, 4
      %v7998 = vrot.slane %v7851, 5
      %v7999 = vsel %vm1629, %v7997, %v7998
      %v8000 = vrot.slane %v7852, 5
      %v8001 = vrot.slane %v8000, 4
      %v8002 = vrot.slane %v7853, 5
      %v8003 = vsel %vm1629, %v8001, %v8002
      %v8004 = vrot.slane %v8002, 4
      %v8005 = vrot.slane %v7854, 5
      %v8006 = vsel %vm1629, %v8004, %v8005
      %v8007 = vrot.slane %v7855, 5
      %v8008 = vrot.slane %v8007, 4
      %v8009 = vrot.slane %v7856, 5
      %v8010 = vsel %vm1629, %v8008, %v8009
      %v8011 = vrot.slane %v8009, 4
      %v8012 = vrot.slane %v7857, 5
      %v8013 = vsel %vm1629, %v8011, %v8012
      %v8014 = vrot.slane %v7858, 5
      %v8015 = vrot.slane %v8014, 4
      %v8016 = vrot.slane %v7859, 5
      %v8017 = vsel %vm1629, %v8015, %v8016
      %v8018 = vrot.slane %v8016, 4
      %v8019 = vrot.slane %v7860, 5
      %v8020 = vsel %vm1629, %v8018, %v8019
      %8021 = vrot.lane.b32.xlu0 %v7912, 32
      %v8022 = vpop.permute.xlu0 %8021
      %8023 = vrot.lane.b32.xlu0 %v7915, 32
      %v8024 = vpop.permute.xlu0 %8023
      %8025 = vrot.lane.b32.xlu0 %v7919, 32
      %v8026 = vpop.permute.xlu0 %8025
      %8027 = vrot.lane.b32.xlu0 %v7922, 32
      %v8028 = vpop.permute.xlu0 %8027
      %8029 = vrot.lane.b32.xlu0 %v7926, 32
      %v8030 = vpop.permute.xlu0 %8029
      %8031 = vrot.lane.b32.xlu0 %v7929, 32
      %v8032 = vpop.permute.xlu0 %8031
      %8033 = vrot.lane.b32.xlu0 %v7933, 32
      %v8034 = vpop.permute.xlu0 %8033
      %8035 = vrot.lane.b32.xlu0 %v7936, 32
      %v8036 = vpop.permute.xlu0 %8035
      %8037 = vrot.lane.b32.xlu0 %v7940, 32
      %v8038 = vpop.permute.xlu0 %8037
      %8039 = vrot.lane.b32.xlu0 %v7943, 32
      %v8040 = vpop.permute.xlu0 %8039
      %8041 = vrot.lane.b32.xlu0 %v7947, 32
      %v8042 = vpop.permute.xlu0 %8041
      %8043 = vrot.lane.b32.xlu0 %v7950, 32
      %v8044 = vpop.permute.xlu0 %8043
      %8045 = vrot.lane.b32.xlu0 %v7954, 32
      %v8046 = vpop.permute.xlu0 %8045
      %8047 = vrot.lane.b32.xlu0 %v7957, 32
      %v8048 = vpop.permute.xlu0 %8047
      %8049 = vrot.lane.b32.xlu0 %v7961, 32
      %v8050 = vpop.permute.xlu0 %8049
      %8051 = vrot.lane.b32.xlu0 %v7964, 32
      %v8052 = vpop.permute.xlu0 %8051
      %8053 = vrot.lane.b32.xlu0 %v7968, 32
      %v8054 = vpop.permute.xlu0 %8053
      %8055 = vrot.lane.b32.xlu0 %v7971, 32
      %v8056 = vpop.permute.xlu0 %8055
      %8057 = vrot.lane.b32.xlu0 %v7975, 32
      %v8058 = vpop.permute.xlu0 %8057
      %8059 = vrot.lane.b32.xlu0 %v7978, 32
      %v8060 = vpop.permute.xlu0 %8059
      %8061 = vrot.lane.b32.xlu0 %v7982, 32
      %v8062 = vpop.permute.xlu0 %8061
      %8063 = vrot.lane.b32.xlu0 %v7985, 32
      %v8064 = vpop.permute.xlu0 %8063
      %8065 = vrot.lane.b32.xlu0 %v7989, 32
      %v8066 = vpop.permute.xlu0 %8065
      %8067 = vrot.lane.b32.xlu0 %v7992, 32
      %v8068 = vpop.permute.xlu0 %8067
      %8069 = vrot.lane.b32.xlu0 %v7996, 32
      %v8070 = vpop.permute.xlu0 %8069
      %8071 = vrot.lane.b32.xlu0 %v7999, 32
      %v8072 = vpop.permute.xlu0 %8071
      %8073 = vrot.lane.b32.xlu0 %v8003, 32
      %v8074 = vpop.permute.xlu0 %8073
      %8075 = vrot.lane.b32.xlu0 %v8006, 32
      %v8076 = vpop.permute.xlu0 %8075
      %8077 = vrot.lane.b32.xlu0 %v8010, 32
      %v8078 = vpop.permute.xlu0 %8077
      %8079 = vrot.lane.b32.xlu0 %v8013, 32
      %v8080 = vpop.permute.xlu0 %8079
      %8081 = vrot.lane.b32.xlu0 %v8017, 32
      %v8082 = vpop.permute.xlu0 %8081
      %8083 = vrot.lane.b32.xlu0 %v8020, 32
      %v8084 = vpop.permute.xlu0 %8083
      %8117 = vst.msk [vmem:[#allocation4] sm:$0xf] %vm4021, %v8022
      %8118 = vst.msk [vmem:[#allocation4 + $0x4] sm:$0xf] %vm4021, %v8024
      %8119 = vst.msk [vmem:[#allocation4 + $0x8] sm:$0xf] %vm4021, %v8026
      %8120 = vst.msk [vmem:[#allocation4 + $0xc] sm:$0xf] %vm4021, %v8028
      %8121 = vst.msk [vmem:[#allocation4 + $0x10] sm:$0xf] %vm4021, %v8030
      %8122 = vst.msk [vmem:[#allocation4 + $0x14] sm:$0xf] %vm4021, %v8032
      %8123 = vst.msk [vmem:[#allocation4 + $0x18] sm:$0xf] %vm4021, %v8034
      %8124 = vst.msk [vmem:[#allocation4 + $0x1c] sm:$0xf] %vm4021, %v8036
      %8125 = vst.msk [vmem:[#allocation4 + $0x20] sm:$0xf] %vm4021, %v8038
      %8126 = vst.msk [vmem:[#allocation4 + $0x24] sm:$0xf] %vm4021, %v8040
      %8127 = vst.msk [vmem:[#allocation4 + $0x28] sm:$0xf] %vm4021, %v8042
      %8128 = vst.msk [vmem:[#allocation4 + $0x2c] sm:$0xf] %vm4021, %v8044
      %8129 = vst.msk [vmem:[#allocation4 + $0x30] sm:$0xf] %vm4021, %v8046
      %8130 = vst.msk [vmem:[#allocation4 + $0x34] sm:$0xf] %vm4021, %v8048
      %8131 = vst.msk [vmem:[#allocation4 + $0x38] sm:$0xf] %vm4021, %v8050
      %8132 = vst.msk [vmem:[#allocation4 + $0x3c] sm:$0xf] %vm4021, %v8052
      %8133 = vst.msk [vmem:[#allocation4 + $0x40] sm:$0xf] %vm4021, %v8054
      %8134 = vst.msk [vmem:[#allocation4 + $0x44] sm:$0xf] %vm4021, %v8056
      %8135 = vst.msk [vmem:[#allocation4 + $0x48] sm:$0xf] %vm4021, %v8058
      %8136 = vst.msk [vmem:[#allocation4 + $0x4c] sm:$0xf] %vm4021, %v8060
      %8137 = vst.msk [vmem:[#allocation4 + $0x50] sm:$0xf] %vm4021, %v8062
      %8138 = vst.msk [vmem:[#allocation4 + $0x54] sm:$0xf] %vm4021, %v8064
      %8139 = vst.msk [vmem:[#allocation4 + $0x58] sm:$0xf] %vm4021, %v8066
      %8140 = vst.msk [vmem:[#allocation4 + $0x5c] sm:$0xf] %vm4021, %v8068
      %8141 = vst.msk [vmem:[#allocation4 + $0x60] sm:$0xf] %vm4021, %v8070
      %8142 = vst.msk [vmem:[#allocation4 + $0x64] sm:$0xf] %vm4021, %v8072
      %8143 = vst.msk [vmem:[#allocation4 + $0x68] sm:$0xf] %vm4021, %v8074
      %8144 = vst.msk [vmem:[#allocation4 + $0x6c] sm:$0xf] %vm4021, %v8076
      %8145 = vst.msk [vmem:[#allocation4 + $0x70] sm:$0xf] %vm4021, %v8078
      %8146 = vst.msk [vmem:[#allocation4 + $0x74] sm:$0xf] %vm4021, %v8080
      %8147 = vst.msk [vmem:[#allocation4 + $0x78] sm:$0xf] %vm4021, %v8082
      %8148 = vst.msk [vmem:[#allocation4 + $0x7c] sm:$0xf] %vm4021, %v8084
      %v8149 = vld [vmem:[#allocation4] sm:$0xf]
      %v8150 = vld [vmem:[#allocation4 + $0x4] sm:$0xf]
      %v8151 = vld [vmem:[#allocation4 + $0x8] sm:$0xf]
      %v8152 = vld [vmem:[#allocation4 + $0xc] sm:$0xf]
      %v8153 = vld [vmem:[#allocation4 + $0x10] sm:$0xf]
      %v8154 = vld [vmem:[#allocation4 + $0x14] sm:$0xf]
      %v8155 = vld [vmem:[#allocation4 + $0x18] sm:$0xf]
      %v8156 = vld [vmem:[#allocation4 + $0x1c] sm:$0xf]
      %v8157 = vld [vmem:[#allocation4 + $0x20] sm:$0xf]
      %v8158 = vld [vmem:[#allocation4 + $0x24] sm:$0xf]
      %v8159 = vld [vmem:[#allocation4 + $0x28] sm:$0xf]
      %v8160 = vld [vmem:[#allocation4 + $0x2c] sm:$0xf]
      %v8161 = vld [vmem:[#allocation4 + $0x30] sm:$0xf]
      %v8162 = vld [vmem:[#allocation4 + $0x34] sm:$0xf]
      %v8163 = vld [vmem:[#allocation4 + $0x38] sm:$0xf]
      %v8164 = vld [vmem:[#allocation4 + $0x3c] sm:$0xf]
      %v8165 = vld [vmem:[#allocation4 + $0x40] sm:$0xf]
      %v8166 = vld [vmem:[#allocation4 + $0x44] sm:$0xf]
      %v8167 = vld [vmem:[#allocation4 + $0x48] sm:$0xf]
      %v8168 = vld [vmem:[#allocation4 + $0x4c] sm:$0xf]
      %v8169 = vld [vmem:[#allocation4 + $0x50] sm:$0xf]
      %v8170 = vld [vmem:[#allocation4 + $0x54] sm:$0xf]
      %v8171 = vld [vmem:[#allocation4 + $0x58] sm:$0xf]
      %v8172 = vld [vmem:[#allocation4 + $0x5c] sm:$0xf]
      %v8173 = vld [vmem:[#allocation4 + $0x60] sm:$0xf]
      %v8174 = vld [vmem:[#allocation4 + $0x64] sm:$0xf]
      %v8175 = vld [vmem:[#allocation4 + $0x68] sm:$0xf]
      %v8176 = vld [vmem:[#allocation4 + $0x6c] sm:$0xf]
      %v8177 = vld [vmem:[#allocation4 + $0x70] sm:$0xf]
      %v8178 = vld [vmem:[#allocation4 + $0x74] sm:$0xf]
      %v8179 = vld [vmem:[#allocation4 + $0x78] sm:$0xf]
      %v8180 = vld [vmem:[#allocation4 + $0x7c] sm:$0xf]
      %v8181 = vld [vmem:[%s4] sm:$0xf]
      %v8182 = vld [vmem:[%s4 + $0x4] sm:$0xf]
      %v8183 = vld [vmem:[%s4 + $0x8] sm:$0xf]
      %v8184 = vld [vmem:[%s4 + $0xc] sm:$0xf]
      %v8185 = vld [vmem:[%s4 + $0x10] sm:$0x3]
      %v8218 = vunpack.c.l.b16 %v8149
      %v8219 = vunpack.c.l.b16 %v8150
      %v8220 = vunpack.c.l.b16 %v8151
      %v8221 = vunpack.c.l.b16 %v8152
      %v8222 = vunpack.c.l.b16 %v8153
      %v8223 = vunpack.c.l.b16 %v8154
      %v8224 = vunpack.c.l.b16 %v8155
      %v8225 = vunpack.c.l.b16 %v8156
      %v8226 = vunpack.c.l.b16 %v8157
      %v8227 = vunpack.c.l.b16 %v8158
      %v8228 = vunpack.c.l.b16 %v8159
      %v8229 = vunpack.c.l.b16 %v8160
      %v8230 = vunpack.c.l.b16 %v8161
      %v8231 = vunpack.c.l.b16 %v8162
      %v8232 = vunpack.c.l.b16 %v8163
      %v8233 = vunpack.c.l.b16 %v8164
      %v8234 = vunpack.c.l.b16 %v8165
      %v8235 = vunpack.c.l.b16 %v8166
      %v8236 = vunpack.c.l.b16 %v8167
      %v8237 = vunpack.c.l.b16 %v8168
      %v8238 = vunpack.c.l.b16 %v8169
      %v8239 = vunpack.c.l.b16 %v8170
      %v8240 = vunpack.c.l.b16 %v8171
      %v8241 = vunpack.c.l.b16 %v8172
      %v8242 = vunpack.c.l.b16 %v8173
      %v8243 = vunpack.c.l.b16 %v8174
      %v8244 = vunpack.c.l.b16 %v8175
      %v8245 = vunpack.c.l.b16 %v8176
      %v8246 = vunpack.c.l.b16 %v8177
      %v8247 = vunpack.c.l.b16 %v8178
      %v8248 = vunpack.c.l.b16 %v8179
      %v8249 = vunpack.c.l.b16 %v8180
      %v8250 = vpack.c.b16 %v8219, %v8218
      %v8251 = vpack.c.b16 %v8221, %v8220
      %v8252 = vpack.c.b16 %v8223, %v8222
      %v8253 = vpack.c.b16 %v8225, %v8224
      %v8254 = vpack.c.b16 %v8227, %v8226
      %v8255 = vpack.c.b16 %v8229, %v8228
      %v8256 = vpack.c.b16 %v8231, %v8230
      %v8257 = vpack.c.b16 %v8233, %v8232
      %v8258 = vpack.c.b16 %v8235, %v8234
      %v8259 = vpack.c.b16 %v8237, %v8236
      %v8260 = vpack.c.b16 %v8239, %v8238
      %v8261 = vpack.c.b16 %v8241, %v8240
      %v8262 = vpack.c.b16 %v8243, %v8242
      %v8263 = vpack.c.b16 %v8245, %v8244
      %v8264 = vpack.c.b16 %v8247, %v8246
      %v8265 = vpack.c.b16 %v8249, %v8248
      %v8271 = vunpack.c.l.b16 %v8181
      %v8272 = vunpack.c.l.b16 %v8182
      %v8273 = vunpack.c.l.b16 %v8183
      %v8274 = vunpack.c.l.b16 %v8184
      %v8275 = vunpack.c.l.b16 %v8185
      %v8276 = vpack.c.b16 %v8272, %v8271
      %v8277 = vpack.c.b16 %v8274, %v8273
      %v8278 = vpack.c.b16 %v8275, %v8275
      %v8282 = vsel %vm4186, %v8250, 0
      %v8285 = vsel %vm4186, %v8251, 0
      %v8288 = vsel %vm4186, %v8252, 0
      %v8291 = vsel %vm4186, %v8253, 0
      %v8294 = vsel %vm4186, %v8254, 0
      %v8297 = vsel %vm4186, %v8255, 0
      %v8300 = vsel %vm4186, %v8256, 0
      %v8303 = vsel %vm4186, %v8257, 0
      %v8306 = vsel %vm4186, %v8258, 0
      %v8309 = vsel %vm4186, %v8259, 0
      %v8312 = vsel %vm4186, %v8260, 0
      %v8315 = vsel %vm4186, %v8261, 0
      %v8318 = vsel %vm4186, %v8262, 0
      %v8321 = vsel %vm4186, %v8263, 0
      %v8324 = vsel %vm4186, %v8264, 0
      %v8327 = vsel %vm4186, %v8265, 0
      %v8330 = vsel %vm4235, %v8278, 0
      %8332 = vmatpush.bf16.msra.mxu0 0
      %8333 = vmatpush.bf16.msra.mxu0 0
      %8334 = vmatpush.bf16.msra.mxu0 0
      %8335 = vmatpush.bf16.msra.mxu0 0
      %8336 = vmatpush.bf16.msra.mxu0 0
      %8337 = vmatpush.bf16.msra.mxu0 %v8330
      %8338 = vmatpush.bf16.msra.mxu0 %v8277
      %8339 = vmatpush.bf16.msra.mxu0 %v8276
      %8340 = vmatmul.bf16.gmra.mxu0 %v8282
      %v8341 = vpop.f32.mrf.mxu0
      %v8342 = vadd.f32 0.0, %v8341
      %v8343 = vpop.f32.mrf.mxu0
      %v8344 = vadd.f32 0.0, %v8343
      %8345 = vmatmul.bf16.gmra.mxu0 %v8285
      %v8346 = vpop.f32.mrf.mxu0
      %v8347 = vadd.f32 0.0, %v8346
      %v8348 = vpop.f32.mrf.mxu0
      %v8349 = vadd.f32 0.0, %v8348
      %8350 = vmatmul.bf16.gmra.mxu0 %v8288
      %v8351 = vpop.f32.mrf.mxu0
      %v8352 = vadd.f32 0.0, %v8351
      %v8353 = vpop.f32.mrf.mxu0
      %v8354 = vadd.f32 0.0, %v8353
      %8355 = vmatmul.bf16.gmra.mxu0 %v8291
      %v8356 = vpop.f32.mrf.mxu0
      %v8357 = vadd.f32 0.0, %v8356
      %v8358 = vpop.f32.mrf.mxu0
      %v8359 = vadd.f32 0.0, %v8358
      %8360 = vmatmul.bf16.gmra.mxu0 %v8294
      %v8361 = vpop.f32.mrf.mxu0
      %v8362 = vadd.f32 0.0, %v8361
      %v8363 = vpop.f32.mrf.mxu0
      %v8364 = vadd.f32 0.0, %v8363
      %8365 = vmatmul.bf16.gmra.mxu0 %v8297
      %v8366 = vpop.f32.mrf.mxu0
      %v8367 = vadd.f32 0.0, %v8366
      %v8368 = vpop.f32.mrf.mxu0
      %v8369 = vadd.f32 0.0, %v8368
      %8370 = vmatmul.bf16.gmra.mxu0 %v8300
      %v8371 = vpop.f32.mrf.mxu0
      %v8372 = vadd.f32 0.0, %v8371
      %v8373 = vpop.f32.mrf.mxu0
      %v8374 = vadd.f32 0.0, %v8373
      %8375 = vmatmul.bf16.gmra.mxu0 %v8303
      %v8376 = vpop.f32.mrf.mxu0
      %v8377 = vadd.f32 0.0, %v8376
      %v8378 = vpop.f32.mrf.mxu0
      %v8379 = vadd.f32 0.0, %v8378
      %8380 = vmatmul.bf16.gmra.mxu0 %v8306
      %v8381 = vpop.f32.mrf.mxu0
      %v8382 = vadd.f32 0.0, %v8381
      %v8383 = vpop.f32.mrf.mxu0
      %v8384 = vadd.f32 0.0, %v8383
      %8385 = vmatmul.bf16.gmra.mxu0 %v8309
      %v8386 = vpop.f32.mrf.mxu0
      %v8387 = vadd.f32 0.0, %v8386
      %v8388 = vpop.f32.mrf.mxu0
      %v8389 = vadd.f32 0.0, %v8388
      %8390 = vmatmul.bf16.gmra.mxu0 %v8312
      %v8391 = vpop.f32.mrf.mxu0
      %v8392 = vadd.f32 0.0, %v8391
      %v8393 = vpop.f32.mrf.mxu0
      %v8394 = vadd.f32 0.0, %v8393
      %8395 = vmatmul.bf16.gmra.mxu0 %v8315
      %v8396 = vpop.f32.mrf.mxu0
      %v8397 = vadd.f32 0.0, %v8396
      %v8398 = vpop.f32.mrf.mxu0
      %v8399 = vadd.f32 0.0, %v8398
      %8400 = vmatmul.bf16.gmra.mxu0 %v8318
      %v8401 = vpop.f32.mrf.mxu0
      %v8402 = vadd.f32 0.0, %v8401
      %v8403 = vpop.f32.mrf.mxu0
      %v8404 = vadd.f32 0.0, %v8403
      %8405 = vmatmul.bf16.gmra.mxu0 %v8321
      %v8406 = vpop.f32.mrf.mxu0
      %v8407 = vadd.f32 0.0, %v8406
      %v8408 = vpop.f32.mrf.mxu0
      %v8409 = vadd.f32 0.0, %v8408
      %8410 = vmatmul.bf16.gmra.mxu0 %v8324
      %v8411 = vpop.f32.mrf.mxu0
      %v8412 = vadd.f32 0.0, %v8411
      %v8413 = vpop.f32.mrf.mxu0
      %v8414 = vadd.f32 0.0, %v8413
      %8415 = vmatmul.bf16.gmra.mxu0 %v8327
      %v8416 = vpop.f32.mrf.mxu0
      %v8417 = vadd.f32 0.0, %v8416
      %v8418 = vpop.f32.mrf.mxu0
      %v8419 = vadd.f32 0.0, %v8418
      %8420 = vdwg.mxu0
      %v8421 = vld [vmem:[%s5] sm:$0x1]
      %v8423 = vperm.slane %v8421, 0
      %v8425 = vmul.f32 %v8342, %v8423
      %v8426 = vmul.f32 %v8344, %v8423
      %v8427 = vmul.f32 %v8347, %v8423
      %v8428 = vmul.f32 %v8349, %v8423
      %v8429 = vmul.f32 %v8352, %v8423
      %v8430 = vmul.f32 %v8354, %v8423
      %v8431 = vmul.f32 %v8357, %v8423
      %v8432 = vmul.f32 %v8359, %v8423
      %v8433 = vmul.f32 %v8362, %v8423
      %v8434 = vmul.f32 %v8364, %v8423
      %v8435 = vmul.f32 %v8367, %v8423
      %v8436 = vmul.f32 %v8369, %v8423
      %v8437 = vmul.f32 %v8372, %v8423
      %v8438 = vmul.f32 %v8374, %v8423
      %v8439 = vmul.f32 %v8377, %v8423
      %v8440 = vmul.f32 %v8379, %v8423
      %v8441 = vmul.f32 %v8382, %v8423
      %v8442 = vmul.f32 %v8384, %v8423
      %v8443 = vmul.f32 %v8387, %v8423
      %v8444 = vmul.f32 %v8389, %v8423
      %v8445 = vmul.f32 %v8392, %v8423
      %v8446 = vmul.f32 %v8394, %v8423
      %v8447 = vmul.f32 %v8397, %v8423
      %v8448 = vmul.f32 %v8399, %v8423
      %v8449 = vmul.f32 %v8402, %v8423
      %v8450 = vmul.f32 %v8404, %v8423
      %v8451 = vmul.f32 %v8407, %v8423
      %v8452 = vmul.f32 %v8409, %v8423
      %v8453 = vmul.f32 %v8412, %v8423
      %v8454 = vmul.f32 %v8414, %v8423
      %v8455 = vmul.f32 %v8417, %v8423
      %v8456 = vmul.f32 %v8419, %v8423
      %v8457 = vld [vmem:[%s6] sm:$0x1]
      %v8459 = vperm.slane %v8457, 0
      %v8461 = vadd.f32 %v8425, %v8459
      %v8462 = vadd.f32 %v8426, %v8459
      %v8463 = vadd.f32 %v8427, %v8459
      %v8464 = vadd.f32 %v8428, %v8459
      %v8465 = vadd.f32 %v8429, %v8459
      %v8466 = vadd.f32 %v8430, %v8459
      %v8467 = vadd.f32 %v8431, %v8459
      %v8468 = vadd.f32 %v8432, %v8459
      %v8469 = vadd.f32 %v8433, %v8459
      %v8470 = vadd.f32 %v8434, %v8459
      %v8471 = vadd.f32 %v8435, %v8459
      %v8472 = vadd.f32 %v8436, %v8459
      %v8473 = vadd.f32 %v8437, %v8459
      %v8474 = vadd.f32 %v8438, %v8459
      %v8475 = vadd.f32 %v8439, %v8459
      %v8476 = vadd.f32 %v8440, %v8459
      %v8477 = vadd.f32 %v8441, %v8459
      %v8478 = vadd.f32 %v8442, %v8459
      %v8479 = vadd.f32 %v8443, %v8459
      %v8480 = vadd.f32 %v8444, %v8459
      %v8481 = vadd.f32 %v8445, %v8459
      %v8482 = vadd.f32 %v8446, %v8459
      %v8483 = vadd.f32 %v8447, %v8459
      %v8484 = vadd.f32 %v8448, %v8459
      %v8485 = vadd.f32 %v8449, %v8459
      %v8486 = vadd.f32 %v8450, %v8459
      %v8487 = vadd.f32 %v8451, %v8459
      %v8488 = vadd.f32 %v8452, %v8459
      %v8489 = vadd.f32 %v8453, %v8459
      %v8490 = vadd.f32 %v8454, %v8459
      %v8491 = vadd.f32 %v8455, %v8459
      %v8492 = vadd.f32 %v8456, %v8459
      %v8493 = vld [vmem:[%s273] sm:$0xff]
      %v8494 = vld [vmem:[%s273 + $0x8] sm:$0xff]
      %v8495 = vld [vmem:[%s273 + $0x10] sm:$0xff]
      %v8496 = vld [vmem:[%s273 + $0x18] sm:$0xff]
      %v8497 = vld [vmem:[%s273 + $0x20] sm:$0xff]
      %v8498 = vld [vmem:[%s273 + $0x28] sm:$0xff]
      %v8499 = vld [vmem:[%s273 + $0x30] sm:$0xff]
      %v8500 = vld [vmem:[%s273 + $0x38] sm:$0xff]
      %v8501 = vld [vmem:[%s273 + $0x40] sm:$0xff]
      %v8502 = vld [vmem:[%s273 + $0x48] sm:$0xff]
      %v8503 = vld [vmem:[%s273 + $0x50] sm:$0xff]
      %v8504 = vld [vmem:[%s273 + $0x58] sm:$0xff]
      %v8505 = vld [vmem:[%s273 + $0x60] sm:$0xff]
      %v8506 = vld [vmem:[%s273 + $0x68] sm:$0xff]
      %v8507 = vld [vmem:[%s273 + $0x70] sm:$0xff]
      %v8508 = vld [vmem:[%s273 + $0x78] sm:$0xff]
      %v8509 = vld [vmem:[%s273 + $0x80] sm:$0xff]
      %v8510 = vld [vmem:[%s273 + $0x88] sm:$0xff]
      %v8511 = vld [vmem:[%s273 + $0x90] sm:$0xff]
      %v8512 = vld [vmem:[%s273 + $0x98] sm:$0xff]
      %v8513 = vld [vmem:[%s273 + $0xa0] sm:$0xff]
      %v8514 = vld [vmem:[%s273 + $0xa8] sm:$0xff]
      %v8515 = vld [vmem:[%s273 + $0xb0] sm:$0xff]
      %v8516 = vld [vmem:[%s273 + $0xb8] sm:$0xff]
      %v8517 = vld [vmem:[%s273 + $0xc0] sm:$0xff]
      %v8518 = vld [vmem:[%s273 + $0xc8] sm:$0xff]
      %v8519 = vld [vmem:[%s273 + $0xd0] sm:$0xff]
      %v8520 = vld [vmem:[%s273 + $0xd8] sm:$0xff]
      %v8521 = vld [vmem:[%s273 + $0xe0] sm:$0xff]
      %v8522 = vld [vmem:[%s273 + $0xe8] sm:$0xff]
      %v8523 = vld [vmem:[%s273 + $0xf0] sm:$0xff]
      %v8524 = vld [vmem:[%s273 + $0xf8] sm:$0xff]
      %v8525 = vadd.f32 %v8461, %v8493
      %v8526 = vadd.f32 %v8462, %v8494
      %v8527 = vadd.f32 %v8463, %v8495
      %v8528 = vadd.f32 %v8464, %v8496
      %v8529 = vadd.f32 %v8465, %v8497
      %v8530 = vadd.f32 %v8466, %v8498
      %v8531 = vadd.f32 %v8467, %v8499
      %v8532 = vadd.f32 %v8468, %v8500
      %v8533 = vadd.f32 %v8469, %v8501
      %v8534 = vadd.f32 %v8470, %v8502
      %v8535 = vadd.f32 %v8471, %v8503
      %v8536 = vadd.f32 %v8472, %v8504
      %v8537 = vadd.f32 %v8473, %v8505
      %v8538 = vadd.f32 %v8474, %v8506
      %v8539 = vadd.f32 %v8475, %v8507
      %v8540 = vadd.f32 %v8476, %v8508
      %v8541 = vadd.f32 %v8477, %v8509
      %v8542 = vadd.f32 %v8478, %v8510
      %v8543 = vadd.f32 %v8479, %v8511
      %v8544 = vadd.f32 %v8480, %v8512
      %v8545 = vadd.f32 %v8481, %v8513
      %v8546 = vadd.f32 %v8482, %v8514
      %v8547 = vadd.f32 %v8483, %v8515
      %v8548 = vadd.f32 %v8484, %v8516
      %v8549 = vadd.f32 %v8485, %v8517
      %v8550 = vadd.f32 %v8486, %v8518
      %v8551 = vadd.f32 %v8487, %v8519
      %v8552 = vadd.f32 %v8488, %v8520
      %v8553 = vadd.f32 %v8489, %v8521
      %v8554 = vadd.f32 %v8490, %v8522
      %v8555 = vadd.f32 %v8491, %v8523
      %v8556 = vadd.f32 %v8492, %v8524
      %v8557 = vmax.f32 %v8525, 0.0
      %v8558 = vmax.f32 %v8526, 0.0
      %v8559 = vmax.f32 %v8527, 0.0
      %v8560 = vmax.f32 %v8528, 0.0
      %v8561 = vmax.f32 %v8529, 0.0
      %v8562 = vmax.f32 %v8530, 0.0
      %v8563 = vmax.f32 %v8531, 0.0
      %v8564 = vmax.f32 %v8532, 0.0
      %v8565 = vmax.f32 %v8533, 0.0
      %v8566 = vmax.f32 %v8534, 0.0
      %v8567 = vmax.f32 %v8535, 0.0
      %v8568 = vmax.f32 %v8536, 0.0
      %v8569 = vmax.f32 %v8537, 0.0
      %v8570 = vmax.f32 %v8538, 0.0
      %v8571 = vmax.f32 %v8539, 0.0
      %v8572 = vmax.f32 %v8540, 0.0
      %v8573 = vmax.f32 %v8541, 0.0
      %v8574 = vmax.f32 %v8542, 0.0
      %v8575 = vmax.f32 %v8543, 0.0
      %v8576 = vmax.f32 %v8544, 0.0
      %v8577 = vmax.f32 %v8545, 0.0
      %v8578 = vmax.f32 %v8546, 0.0
      %v8579 = vmax.f32 %v8547, 0.0
      %v8580 = vmax.f32 %v8548, 0.0
      %v8581 = vmax.f32 %v8549, 0.0
      %v8582 = vmax.f32 %v8550, 0.0
      %v8583 = vmax.f32 %v8551, 0.0
      %v8584 = vmax.f32 %v8552, 0.0
      %v8585 = vmax.f32 %v8553, 0.0
      %v8586 = vmax.f32 %v8554, 0.0
      %v8587 = vmax.f32 %v8555, 0.0
      %v8588 = vmax.f32 %v8556, 0.0
      %vm8589 = vcmask 31744
      %8590 = vst.msk [vmem:[%s278] sm:$0xff] %vm8589, %v8557
      %8591 = vst.msk [vmem:[%s278 + $0x8] sm:$0xff] %vm8589, %v8558
      %8592 = vst.msk [vmem:[%s278 + $0x10] sm:$0xff] %vm8589, %v8559
      %8593 = vst.msk [vmem:[%s278 + $0x18] sm:$0xff] %vm8589, %v8560
      %8594 = vst.msk [vmem:[%s278 + $0x20] sm:$0xff] %vm8589, %v8561
      %8595 = vst.msk [vmem:[%s278 + $0x28] sm:$0xff] %vm8589, %v8562
      %8596 = vst.msk [vmem:[%s278 + $0x30] sm:$0xff] %vm8589, %v8563
      %8597 = vst.msk [vmem:[%s278 + $0x38] sm:$0xff] %vm8589, %v8564
      %8598 = vst.msk [vmem:[%s278 + $0x40] sm:$0xff] %vm8589, %v8565
      %8599 = vst.msk [vmem:[%s278 + $0x48] sm:$0xff] %vm8589, %v8566
      %8600 = vst.msk [vmem:[%s278 + $0x50] sm:$0xff] %vm8589, %v8567
      %8601 = vst.msk [vmem:[%s278 + $0x58] sm:$0xff] %vm8589, %v8568
      %8602 = vst.msk [vmem:[%s278 + $0x60] sm:$0xff] %vm8589, %v8569
      %8603 = vst.msk [vmem:[%s278 + $0x68] sm:$0xff] %vm8589, %v8570
      %8604 = vst.msk [vmem:[%s278 + $0x70] sm:$0xff] %vm8589, %v8571
      %8605 = vst.msk [vmem:[%s278 + $0x78] sm:$0xff] %vm8589, %v8572
      %8606 = vst.msk [vmem:[%s278 + $0x80] sm:$0xff] %vm8589, %v8573
      %8607 = vst.msk [vmem:[%s278 + $0x88] sm:$0xff] %vm8589, %v8574
      %8608 = vst.msk [vmem:[%s278 + $0x90] sm:$0xff] %vm8589, %v8575
      %8609 = vst.msk [vmem:[%s278 + $0x98] sm:$0xff] %vm8589, %v8576
      %8610 = vst.msk [vmem:[%s278 + $0xa0] sm:$0xff] %vm8589, %v8577
      %8611 = vst.msk [vmem:[%s278 + $0xa8] sm:$0xff] %vm8589, %v8578
      %8612 = vst.msk [vmem:[%s278 + $0xb0] sm:$0xff] %vm8589, %v8579
      %8613 = vst.msk [vmem:[%s278 + $0xb8] sm:$0xff] %vm8589, %v8580
      %8614 = vst.msk [vmem:[%s278 + $0xc0] sm:$0xff] %vm8589, %v8581
      %8615 = vst.msk [vmem:[%s278 + $0xc8] sm:$0xff] %vm8589, %v8582
      %8616 = vst.msk [vmem:[%s278 + $0xd0] sm:$0xff] %vm8589, %v8583
      %8617 = vst.msk [vmem:[%s278 + $0xd8] sm:$0xff] %vm8589, %v8584
      %8618 = vst.msk [vmem:[%s278 + $0xe0] sm:$0xff] %vm8589, %v8585
      %8619 = vst.msk [vmem:[%s278 + $0xe8] sm:$0xff] %vm8589, %v8586
      %8620 = vst.msk [vmem:[%s278 + $0xf0] sm:$0xff] %vm8589, %v8587
      %8621 = vst.msk [vmem:[%s278 + $0xf8] sm:$0xff] %vm8589, %v8588
      %p8622 = scmp.lt.s32.totalorder %s18, 1
      %s8623 = scalar_select %p8622, %s18, 1
      %s8624 = smul.addr %s8623, 32
      %s8625 = smul.addr %s8624, 8
      %s8626 = scalar_lea.vmem %s7, %s8625
      // Predicated region
      $region49: #{basic_block_forward.1} parent=47 // pred_check
        %p8627 = pneg %p188
      $region50: #{basic_block_forward.1} parent=47 // pred_check_branch
        %8629 = sbr.rel (%p8627) target = $region52
      $region51: #{basic_block_forward.1} parent=47 // pred_region
        _
      $region52: #{basic_block_forward.1} parent=47 // pred_fallthru
        _
    $region48: #{basic_block_forward.1} parent=5 // pred_fallthru
      _
    %p8630 = scmp.le.s32.totalorder 2, %s13
    // Predicated region
    $region53: #{basic_block_forward.1} parent=5 // pred_check
      %p8631 = pneg %p8630
    $region54: #{basic_block_forward.1} parent=5 // pred_check_branch
      %8633 = sbr.rel (%p8631) target = $region56
    $region55: #{basic_block_forward.1} parent=5 // pred_region
      %s8634 = ssub.s32 %s13, 2
      // Predicated region
      $region57: #{basic_block_forward.1} parent=55 // pred_check
        %p8635 = pneg %p194
      $region58: #{basic_block_forward.1} parent=55 // pred_check_branch
        %8637 = sbr.rel (%p8635) target = $region60
      $region59: #{basic_block_forward.1} parent=55 // pred_region
        %p8638 = scmp.lt.s32.totalorder %s19, 1
        %s8639 = scalar_select %p8638, %s19, 1
        %s8640 = smul.addr %s8639, 32
        %s8641 = smul.addr %s8640, 8
        %s8642 = scalar_lea.vmem %s7, %s8641
      $region60: #{basic_block_forward.1} parent=55 // pred_fallthru
        _
    $region56: #{basic_block_forward.1} parent=5 // pred_fallthru
      _
  $region6: #{basic_block_forward.1} parent=0 // loop_footer
    %s17 = sadd.s32 1, %s13
  $region7: #{basic_block_forward.1} parent=0 // loop_footer_branch
    %12 = sbr.rel target = $region3
  $region8: #{basic_block_forward.1} parent=0 // loop_exit
    _

</llo_original>
